<compile_context>
chip_gen: v7x
topology: tpu7x:2x2x1
jax: 0.10.0
libtpu: 0.0.40
codegen_flags: <defaults>
</compile_context>

<pallas_src>
import functools

import jax
import jax.numpy as jnp
from jax.experimental import pallas as pl
from jax.experimental.pallas import tpu as pltpu

HIDDEN1 = 1024
HIDDEN2 = 2048
LANE = 128            # vreg lane width
SUBLANE = 8           # f32 sublane count
BLOCK_B_CAP = 512     # max batch-rows per grid step (~6 MiB f32 intermediates)
VMEM_LIMIT_BYTES = 32 * 1024 * 1024  # ~footprint (+headroom); fits v5e/v6e/v7x


def _round_up(x, m):
    return ((x + m - 1) // m) * m


def _gelu_exact(x):
    # Matches torch.nn.GELU() default: 0.5 * x * (1 + erf(x / sqrt(2)))
    return 0.5 * x * (1.0 + jax.lax.erf(x * jnp.float32(0.7071067811865476)))


def _actor_kernel(x_ref, w1_ref, b1_ref, w2_ref, b2_ref, w3_ref, b3_ref, o_ref):
    h1 = jnp.dot(x_ref[...], w1_ref[...], preferred_element_type=jnp.float32)
    h1 = _gelu_exact(h1 + b1_ref[...])
    # .astype(w_ref.dtype) is a no-op for the default f32 weights; it only
    # matters for the opt-in bf16 fc2/fc3 path (bf16 MXU operands, f32 acc).
    h2 = jnp.dot(h1.astype(w2_ref.dtype), w2_ref[...],
                 preferred_element_type=jnp.float32) + b2_ref[...]
    out = jnp.dot(h2.astype(w3_ref.dtype), w3_ref[...],
                  preferred_element_type=jnp.float32) + b3_ref[...]
    o_ref[...] = out.astype(o_ref.dtype)


def _check_buffered_supported():
    """One-time, construction-only check that pipeline_mode=pl.Buffered(1)
    exists on this JAX (no probe compiles, nothing masked at run time)."""
    try:
        pl.BlockSpec((SUBLANE, LANE), lambda i: (0, 0), pipeline_mode=pl.Buffered(1))
        return True
    except Exception:
        return False


_BUFFERED_OK = _check_buffered_supported()


@functools.lru_cache(maxsize=1)
def _num_tensorcores():
    """Best-effort TensorCore count (v7x has 2 per chip). Queried once."""
    try:
        info = pltpu.get_tpu_info()
        for name in ("num_cores", "num_tensorcores", "tensorcore_count",
                     "cores_per_chip"):
            v = getattr(info, name, None)
            if isinstance(v, int) and v > 0:
                return v
    except Exception:
        pass
    try:
        v = getattr(jax.devices()[0], "num_cores", None)
        if isinstance(v, int) and v > 0:
            return v
    except Exception:
        pass
    return 1  # conservative: never duplicate the weight DMA across cores


def _pick_block_b(batch, num_cores):
    """Batch-row tile (multiple of 8, <= 512).

    Single grid step whenever the batch fits: on single-TC chips (v5e/v6e)
    splitting only adds per-step overhead and shrinks the MXU M-dim; on v7x a
    per-core split is used only when the padded batch is >= 256, since for
    tiny batches the kernel is bound by streaming ~9.5 MiB of weights and a
    split makes both cores fetch the full weight set."""
    padded = _round_up(max(batch, 1), SUBLANE)
    if num_cores >= 2 and padded >= 2 * LANE:
        per_core = _round_up((padded + num_cores - 1) // num_cores, SUBLANE)
        return min(per_core, BLOCK_B_CAP)
    return min(padded, BLOCK_B_CAP)


@functools.partial(jax.jit, static_argnames=("block_b", "out_size"))
def _actor_forward_padded(x, w1, b1, w2, b2, w3, b3, *, block_b, out_size):
    """x pad -> pallas_call -> slice, all inside one jitted executable."""
    B, in_size = x.shape
    in_pad = w1.shape[0]        # pre-padded to a multiple of 128
    out_pad = w3.shape[1]       # pre-padded to a multiple of 128
    bp = _round_up(max(B, block_b), block_b)

    x_p = jnp.pad(x, ((0, bp - B), (0, in_pad - in_size)))

    # Grid-invariant operands: constant index_map; single pipeline buffer so
    # the ~9.5 MiB of f32 weights are not double-buffered.
    const_kwargs = {"pipeline_mode": pl.Buffered(1)} if _BUFFERED_OK else {}

    def const_spec(shape):
        return pl.BlockSpec(shape, lambda i: (0,) * len(shape), **const_kwargs)

    weight_bytes = sum(int(a.size) * a.dtype.itemsize
                       for a in (w1, b1, w2, b2, w3, b3))
    cost = pl.CostEstimate(
        flops=2 * bp * (in_pad * HIDDEN1 + HIDDEN1 * HIDDEN2 + HIDDEN2 * out_pad),
        transcendentals=bp * HIDDEN1,
        bytes_accessed=weight_bytes + bp * in_pad * 4 + bp * out_pad * 4,
    )

    out = pl.pallas_call(
        _actor_kernel,
        out_shape=jax.ShapeDtypeStruct((bp, out_pad), jnp.float32),
        grid=(bp // block_b,),
        in_specs=[
            pl.BlockSpec((block_b, in_pad), lambda i: (i, 0)),   # x rows (tiled)
            const_spec((in_pad, HIDDEN1)),                       # W1
            const_spec((1, HIDDEN1)),                            # b1
            const_spec((HIDDEN1, HIDDEN2)),                      # W2
            const_spec((1, HIDDEN2)),                            # b2
            const_spec((HIDDEN2, out_pad)),                      # W3
            const_spec((1, out_pad)),                            # b3
        ],
        out_specs=pl.BlockSpec((block_b, out_pad), lambda i: (i, 0)),
        compiler_params=pltpu.CompilerParams(
            dimension_semantics=("parallel",),
            vmem_limit_bytes=VMEM_LIMIT_BYTES,
        ),
        cost_estimate=cost,
    )(x_p, w1, b1, w2, b2, w3, b3)
    return out[:B, :out_size]


def init_actor_params(key, input_size, output_size):
    """Deterministic PyTorch-nn.Linear-style init: U(-1/sqrt(fan_in), 1/sqrt(fan_in))."""
    ks = jax.random.split(key, 6)

    def linear(kw, kb, fan_in, fan_out):
        bound = 1.0 / jnp.sqrt(jnp.float32(fan_in))
        w = jax.random.uniform(kw, (fan_in, fan_out), jnp.float32, -bound, bound)
        b = jax.random.uniform(kb, (1, fan_out), jnp.float32, -bound, bound)
        return w, b

    w1, b1 = linear(ks[0], ks[1], input_size, HIDDEN1)
    w2, b2 = linear(ks[2], ks[3], HIDDEN1, HIDDEN2)
    w3, b3 = linear(ks[4], ks[5], HIDDEN2, output_size)
    return (w1, b1, w2, b2, w3, b3)


def prepare_actor_params(raw_params, *, bf16_fc23=False):
    """One-time padding of weights to hardware-friendly shapes (hoisted out of
    the per-call hot path). Zero rows of W1 / zero columns of W3 keep the math
    identical but make x loads and output stores full-lane.

    bf16_fc23=True is OPT-IN and numerics-affecting: stores W2/W3 in bf16 and
    feeds bf16 MXU operands to fc2/fc3 (f32 accumulate). Default keeps f32 to
    match the PyTorch module exactly."""
    w1, b1, w2, b2, w3, b3 = raw_params
    in_size = w1.shape[0]
    out_size = w3.shape[1]
    in_pad = _round_up(in_size, LANE)
    out_pad = _round_up(out_size, LANE)

    w1_p = jnp.pad(w1, ((0, in_pad - in_size), (0, 0)))
    w3_p = jnp.pad(w3, ((0, 0), (0, out_pad - out_size)))
    b3_p = jnp.pad(b3, ((0, 0), (0, out_pad - out_size)))
    if bf16_fc23:
        w2 = w2.astype(jnp.bfloat16)
        w3_p = w3_p.astype(jnp.bfloat16)

    arrays = jax.device_put((w1_p, b1, w2, b2, w3_p, b3_p))
    return arrays, out_size


def actor_forward(x, prepared_params, out_size, *, block_b=None):
    """Actor forward: x [B, input_size] f32 -> logits [B, output_size] f32."""
    if block_b is None:
        block_b = _pick_block_b(x.shape[0], _num_tensorcores())
    return _actor_forward_padded(x, *prepared_params,
                                 block_b=block_b, out_size=out_size)


def reference_forward(x, w1, b1, w2, b2, w3, b3):
    h1 = _gelu_exact(x @ w1 + b1)
    h2 = h1 @ w2 + b2
    return h2 @ w3 + b3


if __name__ == "__main__":
    key = jax.random.PRNGKey(0)
    k_params, k_x = jax.random.split(key)

    batch = 16        # small batch of RL states
    input_size = 48   # small state vector (non-multiple of 128 -> exercises padding)
    output_size = 6   # small discrete action space

    raw_params = init_actor_params(k_params, input_size, output_size)
    prepared_params, out_size = prepare_actor_params(raw_params)
    x = jax.random.normal(k_x, (batch, input_size), jnp.float32)

    out = actor_forward(x, prepared_params, out_size)
    out = jax.block_until_ready(out)

    ref = reference_forward(x, *raw_params)
    assert out.shape == (batch, output_size)
    assert jnp.allclose(out, ref, atol=2e-4, rtol=2e-4), "mismatch vs JAX reference"

    print("KERNEL_OK")
</pallas_src>

<mosaic_0001>
module attributes {stable_mosaic.version = 11 : i64} {
  func.func @_actor_kernel(%arg0: i32, %arg1: memref<16x128xf32, #tpu.memory_space<vmem>>, %arg2: memref<128x1024xf32, #tpu.memory_space<vmem>>, %arg3: memref<1x1024xf32, #tpu.memory_space<vmem>>, %arg4: memref<1024x2048xf32, #tpu.memory_space<vmem>>, %arg5: memref<1x2048xf32, #tpu.memory_space<vmem>>, %arg6: memref<2048x128xf32, #tpu.memory_space<vmem>>, %arg7: memref<1x128xf32, #tpu.memory_space<vmem>>, %arg8: memref<16x128xf32, #tpu.memory_space<vmem>>) attributes {dimension_semantics = [#tpu.dimension_semantics<parallel>], iteration_bounds = array<i64: 1>, scalar_prefetch = 0 : i64, scratch_operands = 0 : i64, tpu.core_type = #tpu.core_type<tc>, window_params = [{transform_indices = @transform_0, window_bounds = array<i64: 16, 128>}, {pipeline_mode = #tpu.pipeline_mode<synchronous>, transform_indices = @transform_1, window_bounds = array<i64: 128, 1024>}, {pipeline_mode = #tpu.pipeline_mode<synchronous>, transform_indices = @transform_2, window_bounds = array<i64: 1, 1024>}, {pipeline_mode = #tpu.pipeline_mode<synchronous>, transform_indices = @transform_3, window_bounds = array<i64: 1024, 2048>}, {pipeline_mode = #tpu.pipeline_mode<synchronous>, transform_indices = @transform_4, window_bounds = array<i64: 1, 2048>}, {pipeline_mode = #tpu.pipeline_mode<synchronous>, transform_indices = @transform_5, window_bounds = array<i64: 2048, 128>}, {pipeline_mode = #tpu.pipeline_mode<synchronous>, transform_indices = @transform_6, window_bounds = array<i64: 1, 128>}, {transform_indices = @transform_7, window_bounds = array<i64: 16, 128>}]} {
    %c0 = arith.constant 0 : index
    %c0_0 = arith.constant 0 : index
    %0 = vector.load %arg1[%c0, %c0_0] : memref<16x128xf32, #tpu.memory_space<vmem>>, vector<16x128xf32>
    %c0_1 = arith.constant 0 : index
    %c0_2 = arith.constant 0 : index
    %1 = vector.load %arg2[%c0_1, %c0_2] : memref<128x1024xf32, #tpu.memory_space<vmem>>, vector<128x1024xf32>
    %cst = arith.constant dense<0.000000e+00> : vector<16x1024xf32>
    %2 = tpu.matmul %0, %1, %cst {dimension_numbers = #tpu.dot_dimension_numbers<[1], [0], [0], [1], [0, 0, 1, 1], [], []>} : vector<16x128xf32>, vector<128x1024xf32>, vector<16x1024xf32> -> vector<16x1024xf32>
    %c0_3 = arith.constant 0 : index
    %c0_4 = arith.constant 0 : index
    %3 = vector.load %arg3[%c0_3, %c0_4] : memref<1x1024xf32, #tpu.memory_space<vmem>>, vector<1x1024xf32>
    %4 = vector.broadcast %3 : vector<1x1024xf32> to vector<16x1024xf32>
    %5 = arith.addf %2, %4 : vector<16x1024xf32>
    %cst_5 = arith.constant 5.000000e-01 : f32
    %6 = vector.broadcast %cst_5 : f32 to vector<16x1024xf32>
    %7 = arith.mulf %6, %5 : vector<16x1024xf32>
    %cst_6 = arith.constant 0.707106769 : f32
    %8 = vector.broadcast %cst_6 : f32 to vector<16x1024xf32>
    %9 = arith.mulf %5, %8 : vector<16x1024xf32>
    %10 = math.erf %9 : vector<16x1024xf32>
    %cst_7 = arith.constant 1.000000e+00 : f32
    %11 = vector.broadcast %cst_7 : f32 to vector<16x1024xf32>
    %12 = arith.addf %11, %10 : vector<16x1024xf32>
    %13 = arith.mulf %7, %12 : vector<16x1024xf32>
    %c0_8 = arith.constant 0 : index
    %c0_9 = arith.constant 0 : index
    %14 = vector.load %arg4[%c0_8, %c0_9] : memref<1024x2048xf32, #tpu.memory_space<vmem>>, vector<1024x2048xf32>
    %cst_10 = arith.constant dense<0.000000e+00> : vector<16x2048xf32>
    %15 = tpu.matmul %13, %14, %cst_10 {dimension_numbers = #tpu.dot_dimension_numbers<[1], [0], [0], [1], [0, 0, 1, 1], [], []>} : vector<16x1024xf32>, vector<1024x2048xf32>, vector<16x2048xf32> -> vector<16x2048xf32>
    %c0_11 = arith.constant 0 : index
    %c0_12 = arith.constant 0 : index
    %16 = vector.load %arg5[%c0_11, %c0_12] : memref<1x2048xf32, #tpu.memory_space<vmem>>, vector<1x2048xf32>
    %17 = vector.broadcast %16 : vector<1x2048xf32> to vector<16x2048xf32>
    %18 = arith.addf %15, %17 : vector<16x2048xf32>
    %c0_13 = arith.constant 0 : index
    %c0_14 = arith.constant 0 : index
    %19 = vector.load %arg6[%c0_13, %c0_14] : memref<2048x128xf32, #tpu.memory_space<vmem>>, vector<2048x128xf32>
    %cst_15 = arith.constant dense<0.000000e+00> : vector<16x128xf32>
    %20 = tpu.matmul %18, %19, %cst_15 {dimension_numbers = #tpu.dot_dimension_numbers<[1], [0], [0], [1], [0, 0, 1, 1], [], []>} : vector<16x2048xf32>, vector<2048x128xf32>, vector<16x128xf32> -> vector<16x128xf32>
    %c0_16 = arith.constant 0 : index
    %c0_17 = arith.constant 0 : index
    %21 = vector.load %arg7[%c0_16, %c0_17] : memref<1x128xf32, #tpu.memory_space<vmem>>, vector<1x128xf32>
    %22 = vector.broadcast %21 : vector<1x128xf32> to vector<16x128xf32>
    %23 = arith.addf %20, %22 : vector<16x128xf32>
    %c0_18 = arith.constant 0 : index
    %c0_19 = arith.constant 0 : index
    %24 = vector.load %arg8[%c0_18, %c0_19] : memref<16x128xf32, #tpu.memory_space<vmem>>, vector<16x128xf32>
    tpu.vector_store %arg8[%c0_18, %c0_19], %23 {strides = array<i32>} : memref<16x128xf32, #tpu.memory_space<vmem>>, vector<16x128xf32>,
    return
  }
  func.func @transform_0(%arg0: i32) -> (i32, i32) {
    %c0_i32 = arith.constant 0 : i32
    %c0_i32_0 = arith.constant 0 : i32
    return %arg0, %c0_i32 : i32, i32
  }
  func.func @transform_1(%arg0: i32) -> (i32, i32) {
    %c0_i32 = arith.constant 0 : i32
    %c0_i32_0 = arith.constant 0 : i32
    %c0_i32_1 = arith.constant 0 : i32
    return %c0_i32, %c0_i32_0 : i32, i32
  }
  func.func @transform_2(%arg0: i32) -> (i32, i32) {
    %c0_i32 = arith.constant 0 : i32
    %c0_i32_0 = arith.constant 0 : i32
    %c0_i32_1 = arith.constant 0 : i32
    return %c0_i32, %c0_i32_0 : i32, i32
  }
  func.func @transform_3(%arg0: i32) -> (i32, i32) {
    %c0_i32 = arith.constant 0 : i32
    %c0_i32_0 = arith.constant 0 : i32
    %c0_i32_1 = arith.constant 0 : i32
    return %c0_i32, %c0_i32_0 : i32, i32
  }
  func.func @transform_4(%arg0: i32) -> (i32, i32) {
    %c0_i32 = arith.constant 0 : i32
    %c0_i32_0 = arith.constant 0 : i32
    %c0_i32_1 = arith.constant 0 : i32
    return %c0_i32, %c0_i32_0 : i32, i32
  }
  func.func @transform_5(%arg0: i32) -> (i32, i32) {
    %c0_i32 = arith.constant 0 : i32
    %c0_i32_0 = arith.constant 0 : i32
    %c0_i32_1 = arith.constant 0 : i32
    return %c0_i32, %c0_i32_0 : i32, i32
  }
  func.func @transform_6(%arg0: i32) -> (i32, i32) {
    %c0_i32 = arith.constant 0 : i32
    %c0_i32_0 = arith.constant 0 : i32
    %c0_i32_1 = arith.constant 0 : i32
    return %c0_i32, %c0_i32_0 : i32, i32
  }
  func.func @transform_7(%arg0: i32) -> (i32, i32) {
    %c0_i32 = arith.constant 0 : i32
    %c0_i32_0 = arith.constant 0 : i32
    return %arg0, %c0_i32 : i32, i32
  }
}

</mosaic_0001>

<llo_original>
// kernel: _actor_forward_padded.1
$region0: #{_actor_forward_padded.1}
  #allocation0 [shape = 'u32[]', space=smem, size = 0x4, offset = 0x4, fixed_abs, tag = 'smem constant byte address 0x4 - core index']
  #allocation1 [shape = 'u32[144,128]{1,0:T(1,128)}', space=vmem, size = 0x12000, scoped, tag = 'internal scratch']
  %s0 = inlined_call_operand.vmem [shape: f32[16,128], index: 0, kind: input, shape index: {}]
  %s1 = inlined_call_operand.hbm [shape: f32[128,1024], index: 1, kind: input, shape index: {}]
  %s2 = inlined_call_operand.hbm [shape: f32[1,1024], index: 2, kind: input, shape index: {}]
  %s3 = inlined_call_operand.hbm [shape: f32[1024,2048], index: 3, kind: input, shape index: {}]
  %s4 = inlined_call_operand.hbm [shape: f32[1,2048], index: 4, kind: input, shape index: {}]
  %s5 = inlined_call_operand.hbm [shape: f32[2048,128], index: 5, kind: input, shape index: {}]
  %s6 = inlined_call_operand.hbm [shape: f32[1,128], index: 6, kind: input, shape index: {}]
  %s7 = inlined_call_operand.vmem [shape: f32[16,128], index: 7, kind: output, shape index: {}]
  %s8 = sld [smem:[#allocation0]]
  $region62: #{_actor_forward_padded.1} parent=0
    _
  %s10 = ssub.s32 1, %s8
  %s11 = scalar_select 0, %s10, %s8
  $region1: #{_actor_forward_padded.1} parent=0
    #allocation2 [shape = 'u8[524288]{0}', space=vmem, size = 0x80000, scoped, tag = 'input window, operand 1, single buffered']
    #allocation3 [shape = 's32[1]{0}', space=sflag, size = 0x4, scoped, tag = 'scoped memory for _actor_forward_padded.1']
    #allocation4 [shape = 'u8[4096]{0}', space=vmem, size = 0x1000, scoped, tag = 'input window, operand 2, single buffered']
    #allocation5 [shape = 's32[1]{0}', space=sflag, size = 0x4, scoped, tag = 'scoped memory for _actor_forward_padded.1']
    #allocation6 [shape = 'u8[8388608]{0}', space=vmem, size = 0x800000, scoped, tag = 'input window, operand 3, single buffered']
    #allocation7 [shape = 'u8[8192]{0}', space=vmem, size = 0x2000, scoped, tag = 'input window, operand 4, single buffered']
    #allocation8 [shape = 's32[1]{0}', space=sflag, size = 0x4, scoped, tag = 'scoped memory for _actor_forward_padded.1']
    #allocation9 [shape = 'u8[1048576]{0}', space=vmem, size = 0x100000, scoped, tag = 'input window, operand 5, single buffered']
    #allocation10 [shape = 'u8[512]{0}', space=vmem, size = 0x400, scoped, tag = 'input window, operand 6, single buffered']
    #allocation11 [shape = 's32[1]{0}', space=sflag, size = 0x4, scoped, tag = 'scoped memory for _actor_forward_padded.1']
    %12 = vsyncpa [#allocation3], 0
    %13 = vsyncpa [#allocation5], 0
    %14 = vsyncpa [#allocation8], 0
    %15 = vsyncpa [#allocation11], 0
    // Predicated region
    $region2: #{_actor_forward_padded.1} parent=1 // pred_check
      _
    $region3: #{_actor_forward_padded.1} parent=1 // pred_check_branch
      %17 = sbr.rel (0) target = $region5
    $region4: #{_actor_forward_padded.1} parent=1 // pred_region
      _
    $region5: #{_actor_forward_padded.1} parent=1 // pred_fallthru
      _
    // Predicated region
    $region6: #{_actor_forward_padded.1} parent=1 // pred_check
      _
    $region7: #{_actor_forward_padded.1} parent=1 // pred_check_branch
      %19 = sbr.rel (0) target = $region9
    $region8: #{_actor_forward_padded.1} parent=1 // pred_region
      %s21 = ssub.s32 16384, 16384
      %22 = vsyncadd [#allocation3], %s21
      %s23 = sshll.u32 [#allocation2], 4
      %s24 = int_to_ptr.vmem [resolvable:$true] %s23
      %29 = dma.hbm_to_vmem [thread:$0]  %s1, 16384, %s24, [#allocation3], 1024, 1024, 64
    $region9: #{_actor_forward_padded.1} parent=1 // pred_fallthru
      _
    // Predicated region
    $region10: #{_actor_forward_padded.1} parent=1 // pred_check
      _
    $region11: #{_actor_forward_padded.1} parent=1 // pred_check_branch
      %31 = sbr.rel (0) target = $region13
    $region12: #{_actor_forward_padded.1} parent=1 // pred_region
      %s33 = ssub.s32 128, 128
      %34 = vsyncadd [#allocation5], %s33
      %s36 = sshll.u32 [#allocation4], 4
      %s37 = int_to_ptr.vmem [resolvable:$true] %s36
      %39 = dma.hbm_to_vmem [thread:$0]  %s2, 128, %s37, [#allocation5]
    $region13: #{_actor_forward_padded.1} parent=1 // pred_fallthru
      _
    // Predicated region
    $region14: #{_actor_forward_padded.1} parent=1 // pred_check
      _
    $region15: #{_actor_forward_padded.1} parent=1 // pred_check_branch
      %41 = sbr.rel (0) target = $region17
    $region16: #{_actor_forward_padded.1} parent=1 // pred_region
      %s43 = ssub.s32 262144, 262144
      %44 = vsyncadd [#allocation5], %s43
      %s45 = sshll.u32 [#allocation6], 4
      %s46 = int_to_ptr.vmem [resolvable:$true] %s45
      %51 = dma.hbm_to_vmem [thread:$0]  %s3, 262144, %s46, [#allocation5], 2048, 2048, 128
    $region17: #{_actor_forward_padded.1} parent=1 // pred_fallthru
      _
    // Predicated region
    $region18: #{_actor_forward_padded.1} parent=1 // pred_check
      _
    $region19: #{_actor_forward_padded.1} parent=1 // pred_check_branch
      %53 = sbr.rel (0) target = $region21
    $region20: #{_actor_forward_padded.1} parent=1 // pred_region
      %s55 = ssub.s32 256, 256
      %56 = vsyncadd [#allocation8], %s55
      %s58 = sshll.u32 [#allocation7], 4
      %s59 = int_to_ptr.vmem [resolvable:$true] %s58
      %61 = dma.hbm_to_vmem [thread:$0]  %s4, 256, %s59, [#allocation8]
    $region21: #{_actor_forward_padded.1} parent=1 // pred_fallthru
      _
    // Predicated region
    $region22: #{_actor_forward_padded.1} parent=1 // pred_check
      _
    $region23: #{_actor_forward_padded.1} parent=1 // pred_check_branch
      %63 = sbr.rel (0) target = $region25
    $region24: #{_actor_forward_padded.1} parent=1 // pred_region
      %s65 = ssub.s32 32768, 32768
      %66 = vsyncadd [#allocation8], %s65
      %s67 = sshll.u32 [#allocation9], 4
      %s68 = int_to_ptr.vmem [resolvable:$true] %s67
      %73 = dma.hbm_to_vmem [thread:$0]  %s5, 32768, %s68, [#allocation8], 128, 128, 8
    $region25: #{_actor_forward_padded.1} parent=1 // pred_fallthru
      _
    // Predicated region
    $region26: #{_actor_forward_padded.1} parent=1 // pred_check
      _
    $region27: #{_actor_forward_padded.1} parent=1 // pred_check_branch
      %75 = sbr.rel (0) target = $region29
    $region28: #{_actor_forward_padded.1} parent=1 // pred_region
      %s77 = ssub.s32 16, 16
      %78 = vsyncadd [#allocation11], %s77
      %s80 = sshll.u32 [#allocation10], 4
      %s81 = int_to_ptr.vmem [resolvable:$true] %s80
      %83 = dma.hbm_to_vmem [thread:$0]  %s6, 16, %s81, [#allocation11]
    $region29: #{_actor_forward_padded.1} parent=1 // pred_fallthru
      _
    // Predicated region
    $region30: #{_actor_forward_padded.1} parent=1 // pred_check
      _
    $region31: #{_actor_forward_padded.1} parent=1 // pred_check_branch
      %85 = sbr.rel (0) target = $region33
    $region32: #{_actor_forward_padded.1} parent=1 // pred_region
      %86 = dma.done [#allocation3], 16384
    $region33: #{_actor_forward_padded.1} parent=1 // pred_fallthru
      _
    // Predicated region
    $region34: #{_actor_forward_padded.1} parent=1 // pred_check
      _
    $region35: #{_actor_forward_padded.1} parent=1 // pred_check_branch
      %88 = sbr.rel (0) target = $region37
    $region36: #{_actor_forward_padded.1} parent=1 // pred_region
      %89 = dma.done [#allocation5], 128
    $region37: #{_actor_forward_padded.1} parent=1 // pred_fallthru
      _
    // Predicated region
    $region38: #{_actor_forward_padded.1} parent=1 // pred_check
      _
    $region39: #{_actor_forward_padded.1} parent=1 // pred_check_branch
      %91 = sbr.rel (0) target = $region41
    $region40: #{_actor_forward_padded.1} parent=1 // pred_region
      %92 = dma.done [#allocation5], 262144
    $region41: #{_actor_forward_padded.1} parent=1 // pred_fallthru
      _
    // Predicated region
    $region42: #{_actor_forward_padded.1} parent=1 // pred_check
      _
    $region43: #{_actor_forward_padded.1} parent=1 // pred_check_branch
      %94 = sbr.rel (0) target = $region45
    $region44: #{_actor_forward_padded.1} parent=1 // pred_region
      %95 = dma.done [#allocation8], 256
    $region45: #{_actor_forward_padded.1} parent=1 // pred_fallthru
      _
    // Predicated region
    $region46: #{_actor_forward_padded.1} parent=1 // pred_check
      _
    $region47: #{_actor_forward_padded.1} parent=1 // pred_check_branch
      %97 = sbr.rel (0) target = $region49
    $region48: #{_actor_forward_padded.1} parent=1 // pred_region
      %98 = dma.done [#allocation8], 32768
    $region49: #{_actor_forward_padded.1} parent=1 // pred_fallthru
      _
    // Predicated region
    $region50: #{_actor_forward_padded.1} parent=1 // pred_check
      _
    $region51: #{_actor_forward_padded.1} parent=1 // pred_check_branch
      %100 = sbr.rel (0) target = $region53
    $region52: #{_actor_forward_padded.1} parent=1 // pred_region
      %101 = dma.done [#allocation11], 16
    $region53: #{_actor_forward_padded.1} parent=1 // pred_fallthru
      _
    %v102 = vld [vmem:[%s0] sm:$0xff]
    %v103 = vld [vmem:[%s0 + $0x8] sm:$0xff]
    %v104 = vld [vmem:[#allocation2] sm:$0xff]
    %v105 = vld [vmem:[#allocation2 + $0x8] sm:$0xff]
    %v106 = vld [vmem:[#allocation2 + $0x10] sm:$0xff]
    %v107 = vld [vmem:[#allocation2 + $0x18] sm:$0xff]
    %v108 = vld [vmem:[#allocation2 + $0x20] sm:$0xff]
    %v109 = vld [vmem:[#allocation2 + $0x28] sm:$0xff]
    %v110 = vld [vmem:[#allocation2 + $0x30] sm:$0xff]
    %v111 = vld [vmem:[#allocation2 + $0x38] sm:$0xff]
    %v112 = vld [vmem:[#allocation2 + $0x40] sm:$0xff]
    %v113 = vld [vmem:[#allocation2 + $0x48] sm:$0xff]
    %v114 = vld [vmem:[#allocation2 + $0x50] sm:$0xff]
    %v115 = vld [vmem:[#allocation2 + $0x58] sm:$0xff]
    %v116 = vld [vmem:[#allocation2 + $0x60] sm:$0xff]
    %v117 = vld [vmem:[#allocation2 + $0x68] sm:$0xff]
    %v118 = vld [vmem:[#allocation2 + $0x70] sm:$0xff]
    %v119 = vld [vmem:[#allocation2 + $0x78] sm:$0xff]
    %v120 = vld [vmem:[#allocation2 + $0x80] sm:$0xff]
    %v121 = vld [vmem:[#allocation2 + $0x88] sm:$0xff]
    %v122 = vld [vmem:[#allocation2 + $0x90] sm:$0xff]
    %v123 = vld [vmem:[#allocation2 + $0x98] sm:$0xff]
    %v124 = vld [vmem:[#allocation2 + $0xa0] sm:$0xff]
    %v125 = vld [vmem:[#allocation2 + $0xa8] sm:$0xff]
    %v126 = vld [vmem:[#allocation2 + $0xb0] sm:$0xff]
    %v127 = vld [vmem:[#allocation2 + $0xb8] sm:$0xff]
    %v128 = vld [vmem:[#allocation2 + $0xc0] sm:$0xff]
    %v129 = vld [vmem:[#allocation2 + $0xc8] sm:$0xff]
    %v130 = vld [vmem:[#allocation2 + $0xd0] sm:$0xff]
    %v131 = vld [vmem:[#allocation2 + $0xd8] sm:$0xff]
    %v132 = vld [vmem:[#allocation2 + $0xe0] sm:$0xff]
    %v133 = vld [vmem:[#allocation2 + $0xe8] sm:$0xff]
    %v134 = vld [vmem:[#allocation2 + $0xf0] sm:$0xff]
    %v135 = vld [vmem:[#allocation2 + $0xf8] sm:$0xff]
    %v136 = vld [vmem:[#allocation2 + $0x100] sm:$0xff]
    %v137 = vld [vmem:[#allocation2 + $0x108] sm:$0xff]
    %v138 = vld [vmem:[#allocation2 + $0x110] sm:$0xff]
    %v139 = vld [vmem:[#allocation2 + $0x118] sm:$0xff]
    %v140 = vld [vmem:[#allocation2 + $0x120] sm:$0xff]
    %v141 = vld [vmem:[#allocation2 + $0x128] sm:$0xff]
    %v142 = vld [vmem:[#allocation2 + $0x130] sm:$0xff]
    %v143 = vld [vmem:[#allocation2 + $0x138] sm:$0xff]
    %v144 = vld [vmem:[#allocation2 + $0x140] sm:$0xff]
    %v145 = vld [vmem:[#allocation2 + $0x148] sm:$0xff]
    %v146 = vld [vmem:[#allocation2 + $0x150] sm:$0xff]
    %v147 = vld [vmem:[#allocation2 + $0x158] sm:$0xff]
    %v148 = vld [vmem:[#allocation2 + $0x160] sm:$0xff]
    %v149 = vld [vmem:[#allocation2 + $0x168] sm:$0xff]
    %v150 = vld [vmem:[#allocation2 + $0x170] sm:$0xff]
    %v151 = vld [vmem:[#allocation2 + $0x178] sm:$0xff]
    %v152 = vld [vmem:[#allocation2 + $0x180] sm:$0xff]
    %v153 = vld [vmem:[#allocation2 + $0x188] sm:$0xff]
    %v154 = vld [vmem:[#allocation2 + $0x190] sm:$0xff]
    %v155 = vld [vmem:[#allocation2 + $0x198] sm:$0xff]
    %v156 = vld [vmem:[#allocation2 + $0x1a0] sm:$0xff]
    %v157 = vld [vmem:[#allocation2 + $0x1a8] sm:$0xff]
    %v158 = vld [vmem:[#allocation2 + $0x1b0] sm:$0xff]
    %v159 = vld [vmem:[#allocation2 + $0x1b8] sm:$0xff]
    %v160 = vld [vmem:[#allocation2 + $0x1c0] sm:$0xff]
    %v161 = vld [vmem:[#allocation2 + $0x1c8] sm:$0xff]
    %v162 = vld [vmem:[#allocation2 + $0x1d0] sm:$0xff]
    %v163 = vld [vmem:[#allocation2 + $0x1d8] sm:$0xff]
    %v164 = vld [vmem:[#allocation2 + $0x1e0] sm:$0xff]
    %v165 = vld [vmem:[#allocation2 + $0x1e8] sm:$0xff]
    %v166 = vld [vmem:[#allocation2 + $0x1f0] sm:$0xff]
    %v167 = vld [vmem:[#allocation2 + $0x1f8] sm:$0xff]
    %v168 = vld [vmem:[#allocation2 + $0x200] sm:$0xff]
    %v169 = vld [vmem:[#allocation2 + $0x208] sm:$0xff]
    %v170 = vld [vmem:[#allocation2 + $0x210] sm:$0xff]
    %v171 = vld [vmem:[#allocation2 + $0x218] sm:$0xff]
    %v172 = vld [vmem:[#allocation2 + $0x220] sm:$0xff]
    %v173 = vld [vmem:[#allocation2 + $0x228] sm:$0xff]
    %v174 = vld [vmem:[#allocation2 + $0x230] sm:$0xff]
    %v175 = vld [vmem:[#allocation2 + $0x238] sm:$0xff]
    %v176 = vld [vmem:[#allocation2 + $0x240] sm:$0xff]
    %v177 = vld [vmem:[#allocation2 + $0x248] sm:$0xff]
    %v178 = vld [vmem:[#allocation2 + $0x250] sm:$0xff]
    %v179 = vld [vmem:[#allocation2 + $0x258] sm:$0xff]
    %v180 = vld [vmem:[#allocation2 + $0x260] sm:$0xff]
    %v181 = vld [vmem:[#allocation2 + $0x268] sm:$0xff]
    %v182 = vld [vmem:[#allocation2 + $0x270] sm:$0xff]
    %v183 = vld [vmem:[#allocation2 + $0x278] sm:$0xff]
    %v184 = vld [vmem:[#allocation2 + $0x280] sm:$0xff]
    %v185 = vld [vmem:[#allocation2 + $0x288] sm:$0xff]
    %v186 = vld [vmem:[#allocation2 + $0x290] sm:$0xff]
    %v187 = vld [vmem:[#allocation2 + $0x298] sm:$0xff]
    %v188 = vld [vmem:[#allocation2 + $0x2a0] sm:$0xff]
    %v189 = vld [vmem:[#allocation2 + $0x2a8] sm:$0xff]
    %v190 = vld [vmem:[#allocation2 + $0x2b0] sm:$0xff]
    %v191 = vld [vmem:[#allocation2 + $0x2b8] sm:$0xff]
    %v192 = vld [vmem:[#allocation2 + $0x2c0] sm:$0xff]
    %v193 = vld [vmem:[#allocation2 + $0x2c8] sm:$0xff]
    %v194 = vld [vmem:[#allocation2 + $0x2d0] sm:$0xff]
    %v195 = vld [vmem:[#allocation2 + $0x2d8] sm:$0xff]
    %v196 = vld [vmem:[#allocation2 + $0x2e0] sm:$0xff]
    %v197 = vld [vmem:[#allocation2 + $0x2e8] sm:$0xff]
    %v198 = vld [vmem:[#allocation2 + $0x2f0] sm:$0xff]
    %v199 = vld [vmem:[#allocation2 + $0x2f8] sm:$0xff]
    %v200 = vld [vmem:[#allocation2 + $0x300] sm:$0xff]
    %v201 = vld [vmem:[#allocation2 + $0x308] sm:$0xff]
    %v202 = vld [vmem:[#allocation2 + $0x310] sm:$0xff]
    %v203 = vld [vmem:[#allocation2 + $0x318] sm:$0xff]
    %v204 = vld [vmem:[#allocation2 + $0x320] sm:$0xff]
    %v205 = vld [vmem:[#allocation2 + $0x328] sm:$0xff]
    %v206 = vld [vmem:[#allocation2 + $0x330] sm:$0xff]
    %v207 = vld [vmem:[#allocation2 + $0x338] sm:$0xff]
    %v208 = vld [vmem:[#allocation2 + $0x340] sm:$0xff]
    %v209 = vld [vmem:[#allocation2 + $0x348] sm:$0xff]
    %v210 = vld [vmem:[#allocation2 + $0x350] sm:$0xff]
    %v211 = vld [vmem:[#allocation2 + $0x358] sm:$0xff]
    %v212 = vld [vmem:[#allocation2 + $0x360] sm:$0xff]
    %v213 = vld [vmem:[#allocation2 + $0x368] sm:$0xff]
    %v214 = vld [vmem:[#allocation2 + $0x370] sm:$0xff]
    %v215 = vld [vmem:[#allocation2 + $0x378] sm:$0xff]
    %v216 = vld [vmem:[#allocation2 + $0x380] sm:$0xff]
    %v217 = vld [vmem:[#allocation2 + $0x388] sm:$0xff]
    %v218 = vld [vmem:[#allocation2 + $0x390] sm:$0xff]
    %v219 = vld [vmem:[#allocation2 + $0x398] sm:$0xff]
    %v220 = vld [vmem:[#allocation2 + $0x3a0] sm:$0xff]
    %v221 = vld [vmem:[#allocation2 + $0x3a8] sm:$0xff]
    %v222 = vld [vmem:[#allocation2 + $0x3b0] sm:$0xff]
    %v223 = vld [vmem:[#allocation2 + $0x3b8] sm:$0xff]
    %v224 = vld [vmem:[#allocation2 + $0x3c0] sm:$0xff]
    %v225 = vld [vmem:[#allocation2 + $0x3c8] sm:$0xff]
    %v226 = vld [vmem:[#allocation2 + $0x3d0] sm:$0xff]
    %v227 = vld [vmem:[#allocation2 + $0x3d8] sm:$0xff]
    %v228 = vld [vmem:[#allocation2 + $0x3e0] sm:$0xff]
    %v229 = vld [vmem:[#allocation2 + $0x3e8] sm:$0xff]
    %v230 = vld [vmem:[#allocation2 + $0x3f0] sm:$0xff]
    %v231 = vld [vmem:[#allocation2 + $0x3f8] sm:$0xff]
    %v232 = vld [vmem:[#allocation4] sm:$0xff]
    %v234 = vlaneseq
    %v235 = vshrl.u32 %v234, 7
    %v236 = vsub.s32 0, %v235
    %v237 = vrot.slane %v232, %v236
    %v238 = vlaneseq
    %v239 = vshrl.u32 %v238, 7
    %v240 = vsub.s32 1, %v239
    %v241 = vrot.slane %v232, %v240
    %v242 = vlaneseq
    %v243 = vshrl.u32 %v242, 7
    %v244 = vsub.s32 2, %v243
    %v245 = vrot.slane %v232, %v244
    %v246 = vlaneseq
    %v247 = vshrl.u32 %v246, 7
    %v248 = vsub.s32 3, %v247
    %v249 = vrot.slane %v232, %v248
    %v250 = vlaneseq
    %v251 = vshrl.u32 %v250, 7
    %v252 = vsub.s32 4, %v251
    %v253 = vrot.slane %v232, %v252
    %v254 = vlaneseq
    %v255 = vshrl.u32 %v254, 7
    %v256 = vsub.s32 5, %v255
    %v257 = vrot.slane %v232, %v256
    %v258 = vlaneseq
    %v259 = vshrl.u32 %v258, 7
    %v260 = vsub.s32 6, %v259
    %v261 = vrot.slane %v232, %v260
    %v262 = vlaneseq
    %v263 = vshrl.u32 %v262, 7
    %v264 = vsub.s32 7, %v263
    %v265 = vrot.slane %v232, %v264
    %274 = vmatprep.subr.mxu0 %v105
    %275 = vmatpush1.msra.mxu0 %v104
    %276 = vmatprep.subr.mxu0 %v113
    %277 = vmatpush1.msra.mxu0 %v112
    %278 = vmatprep.subr.mxu0 %v121
    %279 = vmatpush1.msra.mxu0 %v120
    %280 = vmatprep.subr.mxu0 %v129
    %281 = vmatpush1.msra.mxu0 %v128
    %282 = vmatprep.subr.mxu0 %v137
    %283 = vmatpush1.msra.mxu0 %v136
    %284 = vmatprep.subr.mxu0 %v145
    %285 = vmatpush1.msra.mxu0 %v144
    %286 = vmatprep.subr.mxu0 %v153
    %287 = vmatpush1.msra.mxu0 %v152
    %288 = vmatprep.subr.mxu0 %v161
    %289 = vmatpush1.msra.mxu0 %v160
    %290 = vmatprep.subr.mxu0 %v169
    %291 = vmatpush1.msra.mxu0 %v168
    %292 = vmatprep.subr.mxu0 %v177
    %293 = vmatpush1.msra.mxu0 %v176
    %294 = vmatprep.subr.mxu0 %v185
    %295 = vmatpush1.msra.mxu0 %v184
    %296 = vmatprep.subr.mxu0 %v193
    %297 = vmatpush1.msra.mxu0 %v192
    %298 = vmatprep.subr.mxu0 %v201
    %299 = vmatpush1.msra.mxu0 %v200
    %300 = vmatprep.subr.mxu0 %v209
    %301 = vmatpush1.msra.mxu0 %v208
    %302 = vmatprep.subr.mxu0 %v217
    %303 = vmatpush1.msra.mxu0 %v216
    %304 = vmatprep.subr.mxu0 %v225
    %305 = vmatpush1.msra.mxu0 %v224
    %306 = vmatprep.subr.mxu0 0.0
    %307 = vmatpush1.msra.mxu0 0.0
    %308 = vmatprep.subr.mxu0 0.0
    %309 = vmatpush1.msra.mxu0 0.0
    %310 = vmatprep.subr.mxu0 0.0
    %311 = vmatpush1.msra.mxu0 0.0
    %312 = vmatprep.subr.mxu0 0.0
    %313 = vmatpush1.msra.mxu0 0.0
    %314 = vmatprep.subr.mxu0 0.0
    %315 = vmatpush1.msra.mxu0 0.0
    %316 = vmatprep.subr.mxu0 0.0
    %317 = vmatpush1.msra.mxu0 0.0
    %318 = vmatprep.subr.mxu0 0.0
    %319 = vmatpush1.msra.mxu0 0.0
    %320 = vmatprep.subr.mxu0 0.0
    %321 = vmatpush1.msra.mxu0 0.0
    %322 = vmatprep.subr.mxu0 0.0
    %323 = vmatpush1.msra.mxu0 0.0
    %324 = vmatprep.subr.mxu0 0.0
    %325 = vmatpush1.msra.mxu0 0.0
    %326 = vmatprep.subr.mxu0 0.0
    %327 = vmatpush1.msra.mxu0 0.0
    %328 = vmatprep.subr.mxu0 0.0
    %329 = vmatpush1.msra.mxu0 0.0
    %330 = vmatprep.subr.mxu0 0.0
    %331 = vmatpush1.msra.mxu0 0.0
    %332 = vmatprep.subr.mxu0 0.0
    %333 = vmatpush1.msra.mxu0 0.0
    %334 = vmatprep.subr.mxu0 0.0
    %335 = vmatpush1.msra.mxu0 0.0
    %336 = vmatprep.subr.mxu0 0.0
    %337 = vmatpush1.msra.mxu0 0.0
    %338 = vmatprep.mubr.f32.mxu0 0.0
    %339 = vmatmul.mubr.f32.gmra.mrb[0].mxu0 %v102
    %v340 = vpop.f32.mrb[0].mxu0
    %v341 = vadd.f32 %v237, %v340
    %v342 = vpop.f32.mrb[0].mxu0
    %v343 = vadd.f32 %v241, %v342
    %344 = vmatprep.mubr.f32.mxu0 0.0
    %345 = vmatmul.mubr.f32.gmra.mrb[0].mxu0 %v103
    %v346 = vpop.f32.mrb[0].mxu0
    %v347 = vadd.f32 %v237, %v346
    %v348 = vpop.f32.mrb[0].mxu0
    %v349 = vadd.f32 %v241, %v348
    %350 = vdwg.mxu0
    %351 = vmatprep.subr.mxu0 %v107
    %352 = vmatpush1.msra.mxu0 %v106
    %353 = vmatprep.subr.mxu0 %v115
    %354 = vmatpush1.msra.mxu0 %v114
    %355 = vmatprep.subr.mxu0 %v123
    %356 = vmatpush1.msra.mxu0 %v122
    %357 = vmatprep.subr.mxu0 %v131
    %358 = vmatpush1.msra.mxu0 %v130
    %359 = vmatprep.subr.mxu0 %v139
    %360 = vmatpush1.msra.mxu0 %v138
    %361 = vmatprep.subr.mxu0 %v147
    %362 = vmatpush1.msra.mxu0 %v146
    %363 = vmatprep.subr.mxu0 %v155
    %364 = vmatpush1.msra.mxu0 %v154
    %365 = vmatprep.subr.mxu0 %v163
    %366 = vmatpush1.msra.mxu0 %v162
    %367 = vmatprep.subr.mxu0 %v171
    %368 = vmatpush1.msra.mxu0 %v170
    %369 = vmatprep.subr.mxu0 %v179
    %370 = vmatpush1.msra.mxu0 %v178
    %371 = vmatprep.subr.mxu0 %v187
    %372 = vmatpush1.msra.mxu0 %v186
    %373 = vmatprep.subr.mxu0 %v195
    %374 = vmatpush1.msra.mxu0 %v194
    %375 = vmatprep.subr.mxu0 %v203
    %376 = vmatpush1.msra.mxu0 %v202
    %377 = vmatprep.subr.mxu0 %v211
    %378 = vmatpush1.msra.mxu0 %v210
    %379 = vmatprep.subr.mxu0 %v219
    %380 = vmatpush1.msra.mxu0 %v218
    %381 = vmatprep.subr.mxu0 %v227
    %382 = vmatpush1.msra.mxu0 %v226
    %383 = vmatprep.subr.mxu0 0.0
    %384 = vmatpush1.msra.mxu0 0.0
    %385 = vmatprep.subr.mxu0 0.0
    %386 = vmatpush1.msra.mxu0 0.0
    %387 = vmatprep.subr.mxu0 0.0
    %388 = vmatpush1.msra.mxu0 0.0
    %389 = vmatprep.subr.mxu0 0.0
    %390 = vmatpush1.msra.mxu0 0.0
    %391 = vmatprep.subr.mxu0 0.0
    %392 = vmatpush1.msra.mxu0 0.0
    %393 = vmatprep.subr.mxu0 0.0
    %394 = vmatpush1.msra.mxu0 0.0
    %395 = vmatprep.subr.mxu0 0.0
    %396 = vmatpush1.msra.mxu0 0.0
    %397 = vmatprep.subr.mxu0 0.0
    %398 = vmatpush1.msra.mxu0 0.0
    %399 = vmatprep.subr.mxu0 0.0
    %400 = vmatpush1.msra.mxu0 0.0
    %401 = vmatprep.subr.mxu0 0.0
    %402 = vmatpush1.msra.mxu0 0.0
    %403 = vmatprep.subr.mxu0 0.0
    %404 = vmatpush1.msra.mxu0 0.0
    %405 = vmatprep.subr.mxu0 0.0
    %406 = vmatpush1.msra.mxu0 0.0
    %407 = vmatprep.subr.mxu0 0.0
    %408 = vmatpush1.msra.mxu0 0.0
    %409 = vmatprep.subr.mxu0 0.0
    %410 = vmatpush1.msra.mxu0 0.0
    %411 = vmatprep.subr.mxu0 0.0
    %412 = vmatpush1.msra.mxu0 0.0
    %413 = vmatprep.subr.mxu0 0.0
    %414 = vmatpush1.msra.mxu0 0.0
    %415 = vmatprep.mubr.f32.mxu0 0.0
    %416 = vmatmul.mubr.f32.gmra.mrb[0].mxu0 %v102
    %v417 = vpop.f32.mrb[0].mxu0
    %v418 = vadd.f32 %v245, %v417
    %v419 = vpop.f32.mrb[0].mxu0
    %v420 = vadd.f32 %v249, %v419
    %421 = vmatprep.mubr.f32.mxu0 0.0
    %422 = vmatmul.mubr.f32.gmra.mrb[0].mxu0 %v103
    %v423 = vpop.f32.mrb[0].mxu0
    %v424 = vadd.f32 %v245, %v423
    %v425 = vpop.f32.mrb[0].mxu0
    %v426 = vadd.f32 %v249, %v425
    %427 = vdwg.mxu0
    %428 = vmatprep.subr.mxu0 %v109
    %429 = vmatpush1.msra.mxu0 %v108
    %430 = vmatprep.subr.mxu0 %v117
    %431 = vmatpush1.msra.mxu0 %v116
    %432 = vmatprep.subr.mxu0 %v125
    %433 = vmatpush1.msra.mxu0 %v124
    %434 = vmatprep.subr.mxu0 %v133
    %435 = vmatpush1.msra.mxu0 %v132
    %436 = vmatprep.subr.mxu0 %v141
    %437 = vmatpush1.msra.mxu0 %v140
    %438 = vmatprep.subr.mxu0 %v149
    %439 = vmatpush1.msra.mxu0 %v148
    %440 = vmatprep.subr.mxu0 %v157
    %441 = vmatpush1.msra.mxu0 %v156
    %442 = vmatprep.subr.mxu0 %v165
    %443 = vmatpush1.msra.mxu0 %v164
    %444 = vmatprep.subr.mxu0 %v173
    %445 = vmatpush1.msra.mxu0 %v172
    %446 = vmatprep.subr.mxu0 %v181
    %447 = vmatpush1.msra.mxu0 %v180
    %448 = vmatprep.subr.mxu0 %v189
    %449 = vmatpush1.msra.mxu0 %v188
    %450 = vmatprep.subr.mxu0 %v197
    %451 = vmatpush1.msra.mxu0 %v196
    %452 = vmatprep.subr.mxu0 %v205
    %453 = vmatpush1.msra.mxu0 %v204
    %454 = vmatprep.subr.mxu0 %v213
    %455 = vmatpush1.msra.mxu0 %v212
    %456 = vmatprep.subr.mxu0 %v221
    %457 = vmatpush1.msra.mxu0 %v220
    %458 = vmatprep.subr.mxu0 %v229
    %459 = vmatpush1.msra.mxu0 %v228
    %460 = vmatprep.subr.mxu0 0.0
    %461 = vmatpush1.msra.mxu0 0.0
    %462 = vmatprep.subr.mxu0 0.0
    %463 = vmatpush1.msra.mxu0 0.0
    %464 = vmatprep.subr.mxu0 0.0
    %465 = vmatpush1.msra.mxu0 0.0
    %466 = vmatprep.subr.mxu0 0.0
    %467 = vmatpush1.msra.mxu0 0.0
    %468 = vmatprep.subr.mxu0 0.0
    %469 = vmatpush1.msra.mxu0 0.0
    %470 = vmatprep.subr.mxu0 0.0
    %471 = vmatpush1.msra.mxu0 0.0
    %472 = vmatprep.subr.mxu0 0.0
    %473 = vmatpush1.msra.mxu0 0.0
    %474 = vmatprep.subr.mxu0 0.0
    %475 = vmatpush1.msra.mxu0 0.0
    %476 = vmatprep.subr.mxu0 0.0
    %477 = vmatpush1.msra.mxu0 0.0
    %478 = vmatprep.subr.mxu0 0.0
    %479 = vmatpush1.msra.mxu0 0.0
    %480 = vmatprep.subr.mxu0 0.0
    %481 = vmatpush1.msra.mxu0 0.0
    %482 = vmatprep.subr.mxu0 0.0
    %483 = vmatpush1.msra.mxu0 0.0
    %484 = vmatprep.subr.mxu0 0.0
    %485 = vmatpush1.msra.mxu0 0.0
    %486 = vmatprep.subr.mxu0 0.0
    %487 = vmatpush1.msra.mxu0 0.0
    %488 = vmatprep.subr.mxu0 0.0
    %489 = vmatpush1.msra.mxu0 0.0
    %490 = vmatprep.subr.mxu0 0.0
    %491 = vmatpush1.msra.mxu0 0.0
    %492 = vmatprep.mubr.f32.mxu0 0.0
    %493 = vmatmul.mubr.f32.gmra.mrb[0].mxu0 %v102
    %v494 = vpop.f32.mrb[0].mxu0
    %v495 = vadd.f32 %v253, %v494
    %v496 = vpop.f32.mrb[0].mxu0
    %v497 = vadd.f32 %v257, %v496
    %498 = vmatprep.mubr.f32.mxu0 0.0
    %499 = vmatmul.mubr.f32.gmra.mrb[0].mxu0 %v103
    %v500 = vpop.f32.mrb[0].mxu0
    %v501 = vadd.f32 %v253, %v500
    %v502 = vpop.f32.mrb[0].mxu0
    %v503 = vadd.f32 %v257, %v502
    %504 = vdwg.mxu0
    %505 = vmatprep.subr.mxu0 %v111
    %506 = vmatpush1.msra.mxu0 %v110
    %507 = vmatprep.subr.mxu0 %v119
    %508 = vmatpush1.msra.mxu0 %v118
    %509 = vmatprep.subr.mxu0 %v127
    %510 = vmatpush1.msra.mxu0 %v126
    %511 = vmatprep.subr.mxu0 %v135
    %512 = vmatpush1.msra.mxu0 %v134
    %513 = vmatprep.subr.mxu0 %v143
    %514 = vmatpush1.msra.mxu0 %v142
    %515 = vmatprep.subr.mxu0 %v151
    %516 = vmatpush1.msra.mxu0 %v150
    %517 = vmatprep.subr.mxu0 %v159
    %518 = vmatpush1.msra.mxu0 %v158
    %519 = vmatprep.subr.mxu0 %v167
    %520 = vmatpush1.msra.mxu0 %v166
    %521 = vmatprep.subr.mxu0 %v175
    %522 = vmatpush1.msra.mxu0 %v174
    %523 = vmatprep.subr.mxu0 %v183
    %524 = vmatpush1.msra.mxu0 %v182
    %525 = vmatprep.subr.mxu0 %v191
    %526 = vmatpush1.msra.mxu0 %v190
    %527 = vmatprep.subr.mxu0 %v199
    %528 = vmatpush1.msra.mxu0 %v198
    %529 = vmatprep.subr.mxu0 %v207
    %530 = vmatpush1.msra.mxu0 %v206
    %531 = vmatprep.subr.mxu0 %v215
    %532 = vmatpush1.msra.mxu0 %v214
    %533 = vmatprep.subr.mxu0 %v223
    %534 = vmatpush1.msra.mxu0 %v222
    %535 = vmatprep.subr.mxu0 %v231
    %536 = vmatpush1.msra.mxu0 %v230
    %537 = vmatprep.subr.mxu0 0.0
    %538 = vmatpush1.msra.mxu0 0.0
    %539 = vmatprep.subr.mxu0 0.0
    %540 = vmatpush1.msra.mxu0 0.0
    %541 = vmatprep.subr.mxu0 0.0
    %542 = vmatpush1.msra.mxu0 0.0
    %543 = vmatprep.subr.mxu0 0.0
    %544 = vmatpush1.msra.mxu0 0.0
    %545 = vmatprep.subr.mxu0 0.0
    %546 = vmatpush1.msra.mxu0 0.0
    %547 = vmatprep.subr.mxu0 0.0
    %548 = vmatpush1.msra.mxu0 0.0
    %549 = vmatprep.subr.mxu0 0.0
    %550 = vmatpush1.msra.mxu0 0.0
    %551 = vmatprep.subr.mxu0 0.0
    %552 = vmatpush1.msra.mxu0 0.0
    %553 = vmatprep.subr.mxu0 0.0
    %554 = vmatpush1.msra.mxu0 0.0
    %555 = vmatprep.subr.mxu0 0.0
    %556 = vmatpush1.msra.mxu0 0.0
    %557 = vmatprep.subr.mxu0 0.0
    %558 = vmatpush1.msra.mxu0 0.0
    %559 = vmatprep.subr.mxu0 0.0
    %560 = vmatpush1.msra.mxu0 0.0
    %561 = vmatprep.subr.mxu0 0.0
    %562 = vmatpush1.msra.mxu0 0.0
    %563 = vmatprep.subr.mxu0 0.0
    %564 = vmatpush1.msra.mxu0 0.0
    %565 = vmatprep.subr.mxu0 0.0
    %566 = vmatpush1.msra.mxu0 0.0
    %567 = vmatprep.subr.mxu0 0.0
    %568 = vmatpush1.msra.mxu0 0.0
    %569 = vmatprep.mubr.f32.mxu0 0.0
    %570 = vmatmul.mubr.f32.gmra.mrb[0].mxu0 %v102
    %v571 = vpop.f32.mrb[0].mxu0
    %v572 = vadd.f32 %v261, %v571
    %v573 = vpop.f32.mrb[0].mxu0
    %v574 = vadd.f32 %v265, %v573
    %575 = vmatprep.mubr.f32.mxu0 0.0
    %576 = vmatmul.mubr.f32.gmra.mrb[0].mxu0 %v103
    %v577 = vpop.f32.mrb[0].mxu0
    %v578 = vadd.f32 %v261, %v577
    %v579 = vpop.f32.mrb[0].mxu0
    %v580 = vadd.f32 %v265, %v579
    %581 = vdwg.mxu0
    %v582 = vmul.f32 %v341, 0.5
    %v583 = vmul.f32 %v343, 0.5
    %v584 = vmul.f32 %v418, 0.5
    %v585 = vmul.f32 %v420, 0.5
    %v586 = vmul.f32 %v495, 0.5
    %v587 = vmul.f32 %v497, 0.5
    %v588 = vmul.f32 %v572, 0.5
    %v589 = vmul.f32 %v574, 0.5
    %v590 = vmul.f32 %v347, 0.5
    %v591 = vmul.f32 %v349, 0.5
    %v592 = vmul.f32 %v424, 0.5
    %v593 = vmul.f32 %v426, 0.5
    %v594 = vmul.f32 %v501, 0.5
    %v595 = vmul.f32 %v503, 0.5
    %v596 = vmul.f32 %v578, 0.5
    %v597 = vmul.f32 %v580, 0.5
    %v598 = vmul.f32 %v341, 0.70710677
    %v599 = vmul.f32 %v343, 0.70710677
    %v600 = vmul.f32 %v418, 0.70710677
    %v601 = vmul.f32 %v420, 0.70710677
    %v602 = vmul.f32 %v495, 0.70710677
    %v603 = vmul.f32 %v497, 0.70710677
    %v604 = vmul.f32 %v572, 0.70710677
    %v605 = vmul.f32 %v574, 0.70710677
    %v606 = vmul.f32 %v347, 0.70710677
    %v607 = vmul.f32 %v349, 0.70710677
    %v608 = vmul.f32 %v424, 0.70710677
    %v609 = vmul.f32 %v426, 0.70710677
    %v610 = vmul.f32 %v501, 0.70710677
    %v611 = vmul.f32 %v503, 0.70710677
    %v612 = vmul.f32 %v578, 0.70710677
    %v613 = vmul.f32 %v580, 0.70710677
    %v614 = verf.f32.pop %v598
    %v615 = verf.f32.pop %v599
    %v616 = verf.f32.pop %v600
    %v617 = verf.f32.pop %v601
    %v618 = verf.f32.pop %v602
    %v619 = verf.f32.pop %v603
    %v620 = verf.f32.pop %v604
    %v621 = verf.f32.pop %v605
    %v622 = verf.f32.pop %v606
    %v623 = verf.f32.pop %v607
    %v624 = verf.f32.pop %v608
    %v625 = verf.f32.pop %v609
    %v626 = verf.f32.pop %v610
    %v627 = verf.f32.pop %v611
    %v628 = verf.f32.pop %v612
    %v629 = verf.f32.pop %v613
    %v630 = vadd.f32 %v614, 1.0
    %v631 = vadd.f32 %v615, 1.0
    %v632 = vadd.f32 %v616, 1.0
    %v633 = vadd.f32 %v617, 1.0
    %v634 = vadd.f32 %v618, 1.0
    %v635 = vadd.f32 %v619, 1.0
    %v636 = vadd.f32 %v620, 1.0
    %v637 = vadd.f32 %v621, 1.0
    %v638 = vadd.f32 %v622, 1.0
    %v639 = vadd.f32 %v623, 1.0
    %v640 = vadd.f32 %v624, 1.0
    %v641 = vadd.f32 %v625, 1.0
    %v642 = vadd.f32 %v626, 1.0
    %v643 = vadd.f32 %v627, 1.0
    %v644 = vadd.f32 %v628, 1.0
    %v645 = vadd.f32 %v629, 1.0
    %v646 = vmul.f32 %v582, %v630
    %v647 = vmul.f32 %v583, %v631
    %v648 = vmul.f32 %v584, %v632
    %v649 = vmul.f32 %v585, %v633
    %v650 = vmul.f32 %v586, %v634
    %v651 = vmul.f32 %v587, %v635
    %v652 = vmul.f32 %v588, %v636
    %v653 = vmul.f32 %v589, %v637
    %v654 = vmul.f32 %v590, %v638
    %v655 = vmul.f32 %v591, %v639
    %v656 = vmul.f32 %v592, %v640
    %v657 = vmul.f32 %v593, %v641
    %v658 = vmul.f32 %v594, %v642
    %v659 = vmul.f32 %v595, %v643
    %v660 = vmul.f32 %v596, %v644
    %v661 = vmul.f32 %v597, %v645
    %v662 = vld [vmem:[#allocation6] sm:$0xff]
    %v663 = vld [vmem:[#allocation6 + $0x8] sm:$0xff]
    %v664 = vld [vmem:[#allocation6 + $0x10] sm:$0xff]
    %v665 = vld [vmem:[#allocation6 + $0x18] sm:$0xff]
    %v666 = vld [vmem:[#allocation6 + $0x20] sm:$0xff]
    %v667 = vld [vmem:[#allocation6 + $0x28] sm:$0xff]
    %v668 = vld [vmem:[#allocation6 + $0x30] sm:$0xff]
    %v669 = vld [vmem:[#allocation6 + $0x38] sm:$0xff]
    %v670 = vld [vmem:[#allocation6 + $0x40] sm:$0xff]
    %v671 = vld [vmem:[#allocation6 + $0x48] sm:$0xff]
    %v672 = vld [vmem:[#allocation6 + $0x50] sm:$0xff]
    %v673 = vld [vmem:[#allocation6 + $0x58] sm:$0xff]
    %v674 = vld [vmem:[#allocation6 + $0x60] sm:$0xff]
    %v675 = vld [vmem:[#allocation6 + $0x68] sm:$0xff]
    %v676 = vld [vmem:[#allocation6 + $0x70] sm:$0xff]
    %v677 = vld [vmem:[#allocation6 + $0x78] sm:$0xff]
    %v678 = vld [vmem:[#allocation6 + $0x80] sm:$0xff]
    %v679 = vld [vmem:[#allocation6 + $0x88] sm:$0xff]
    %v680 = vld [vmem:[#allocation6 + $0x90] sm:$0xff]
    %v681 = vld [vmem:[#allocation6 + $0x98] sm:$0xff]
    %v682 = vld [vmem:[#allocation6 + $0xa0] sm:$0xff]
    %v683 = vld [vmem:[#allocation6 + $0xa8] sm:$0xff]
    %v684 = vld [vmem:[#allocation6 + $0xb0] sm:$0xff]
    %v685 = vld [vmem:[#allocation6 + $0xb8] sm:$0xff]
    %v686 = vld [vmem:[#allocation6 + $0xc0] sm:$0xff]
    %v687 = vld [vmem:[#allocation6 + $0xc8] sm:$0xff]
    %v688 = vld [vmem:[#allocation6 + $0xd0] sm:$0xff]
    %v689 = vld [vmem:[#allocation6 + $0xd8] sm:$0xff]
    %v690 = vld [vmem:[#allocation6 + $0xe0] sm:$0xff]
    %v691 = vld [vmem:[#allocation6 + $0xe8] sm:$0xff]
    %v692 = vld [vmem:[#allocation6 + $0xf0] sm:$0xff]
    %v693 = vld [vmem:[#allocation6 + $0xf8] sm:$0xff]
    %v694 = vld [vmem:[#allocation6 + $0x100] sm:$0xff]
    %v695 = vld [vmem:[#allocation6 + $0x108] sm:$0xff]
    %v696 = vld [vmem:[#allocation6 + $0x110] sm:$0xff]
    %v697 = vld [vmem:[#allocation6 + $0x118] sm:$0xff]
    %v698 = vld [vmem:[#allocation6 + $0x120] sm:$0xff]
    %v699 = vld [vmem:[#allocation6 + $0x128] sm:$0xff]
    %v700 = vld [vmem:[#allocation6 + $0x130] sm:$0xff]
    %v701 = vld [vmem:[#allocation6 + $0x138] sm:$0xff]
    %v702 = vld [vmem:[#allocation6 + $0x140] sm:$0xff]
    %v703 = vld [vmem:[#allocation6 + $0x148] sm:$0xff]
    %v704 = vld [vmem:[#allocation6 + $0x150] sm:$0xff]
    %v705 = vld [vmem:[#allocation6 + $0x158] sm:$0xff]
    %v706 = vld [vmem:[#allocation6 + $0x160] sm:$0xff]
    %v707 = vld [vmem:[#allocation6 + $0x168] sm:$0xff]
    %v708 = vld [vmem:[#allocation6 + $0x170] sm:$0xff]
    %v709 = vld [vmem:[#allocation6 + $0x178] sm:$0xff]
    %v710 = vld [vmem:[#allocation6 + $0x180] sm:$0xff]
    %v711 = vld [vmem:[#allocation6 + $0x188] sm:$0xff]
    %v712 = vld [vmem:[#allocation6 + $0x190] sm:$0xff]
    %v713 = vld [vmem:[#allocation6 + $0x198] sm:$0xff]
    %v714 = vld [vmem:[#allocation6 + $0x1a0] sm:$0xff]
    %v715 = vld [vmem:[#allocation6 + $0x1a8] sm:$0xff]
    %v716 = vld [vmem:[#allocation6 + $0x1b0] sm:$0xff]
    %v717 = vld [vmem:[#allocation6 + $0x1b8] sm:$0xff]
    %v718 = vld [vmem:[#allocation6 + $0x1c0] sm:$0xff]
    %v719 = vld [vmem:[#allocation6 + $0x1c8] sm:$0xff]
    %v720 = vld [vmem:[#allocation6 + $0x1d0] sm:$0xff]
    %v721 = vld [vmem:[#allocation6 + $0x1d8] sm:$0xff]
    %v722 = vld [vmem:[#allocation6 + $0x1e0] sm:$0xff]
    %v723 = vld [vmem:[#allocation6 + $0x1e8] sm:$0xff]
    %v724 = vld [vmem:[#allocation6 + $0x1f0] sm:$0xff]
    %v725 = vld [vmem:[#allocation6 + $0x1f8] sm:$0xff]
    %v726 = vld [vmem:[#allocation6 + $0x200] sm:$0xff]
    %v727 = vld [vmem:[#allocation6 + $0x208] sm:$0xff]
    %v728 = vld [vmem:[#allocation6 + $0x210] sm:$0xff]
    %v729 = vld [vmem:[#allocation6 + $0x218] sm:$0xff]
    %v730 = vld [vmem:[#allocation6 + $0x220] sm:$0xff]
    %v731 = vld [vmem:[#allocation6 + $0x228] sm:$0xff]
    %v732 = vld [vmem:[#allocation6 + $0x230] sm:$0xff]
    %v733 = vld [vmem:[#allocation6 + $0x238] sm:$0xff]
    %v734 = vld [vmem:[#allocation6 + $0x240] sm:$0xff]
    %v735 = vld [vmem:[#allocation6 + $0x248] sm:$0xff]
    %v736 = vld [vmem:[#allocation6 + $0x250] sm:$0xff]
    %v737 = vld [vmem:[#allocation6 + $0x258] sm:$0xff]
    %v738 = vld [vmem:[#allocation6 + $0x260] sm:$0xff]
    %v739 = vld [vmem:[#allocation6 + $0x268] sm:$0xff]
    %v740 = vld [vmem:[#allocation6 + $0x270] sm:$0xff]
    %v741 = vld [vmem:[#allocation6 + $0x278] sm:$0xff]
    %v742 = vld [vmem:[#allocation6 + $0x280] sm:$0xff]
    %v743 = vld [vmem:[#allocation6 + $0x288] sm:$0xff]
    %v744 = vld [vmem:[#allocation6 + $0x290] sm:$0xff]
    %v745 = vld [vmem:[#allocation6 + $0x298] sm:$0xff]
    %v746 = vld [vmem:[#allocation6 + $0x2a0] sm:$0xff]
    %v747 = vld [vmem:[#allocation6 + $0x2a8] sm:$0xff]
    %v748 = vld [vmem:[#allocation6 + $0x2b0] sm:$0xff]
    %v749 = vld [vmem:[#allocation6 + $0x2b8] sm:$0xff]
    %v750 = vld [vmem:[#allocation6 + $0x2c0] sm:$0xff]
    %v751 = vld [vmem:[#allocation6 + $0x2c8] sm:$0xff]
    %v752 = vld [vmem:[#allocation6 + $0x2d0] sm:$0xff]
    %v753 = vld [vmem:[#allocation6 + $0x2d8] sm:$0xff]
    %v754 = vld [vmem:[#allocation6 + $0x2e0] sm:$0xff]
    %v755 = vld [vmem:[#allocation6 + $0x2e8] sm:$0xff]
    %v756 = vld [vmem:[#allocation6 + $0x2f0] sm:$0xff]
    %v757 = vld [vmem:[#allocation6 + $0x2f8] sm:$0xff]
    %v758 = vld [vmem:[#allocation6 + $0x300] sm:$0xff]
    %v759 = vld [vmem:[#allocation6 + $0x308] sm:$0xff]
    %v760 = vld [vmem:[#allocation6 + $0x310] sm:$0xff]
    %v761 = vld [vmem:[#allocation6 + $0x318] sm:$0xff]
    %v762 = vld [vmem:[#allocation6 + $0x320] sm:$0xff]
    %v763 = vld [vmem:[#allocation6 + $0x328] sm:$0xff]
    %v764 = vld [vmem:[#allocation6 + $0x330] sm:$0xff]
    %v765 = vld [vmem:[#allocation6 + $0x338] sm:$0xff]
    %v766 = vld [vmem:[#allocation6 + $0x340] sm:$0xff]
    %v767 = vld [vmem:[#allocation6 + $0x348] sm:$0xff]
    %v768 = vld [vmem:[#allocation6 + $0x350] sm:$0xff]
    %v769 = vld [vmem:[#allocation6 + $0x358] sm:$0xff]
    %v770 = vld [vmem:[#allocation6 + $0x360] sm:$0xff]
    %v771 = vld [vmem:[#allocation6 + $0x368] sm:$0xff]
    %v772 = vld [vmem:[#allocation6 + $0x370] sm:$0xff]
    %v773 = vld [vmem:[#allocation6 + $0x378] sm:$0xff]
    %v774 = vld [vmem:[#allocation6 + $0x380] sm:$0xff]
    %v775 = vld [vmem:[#allocation6 + $0x388] sm:$0xff]
    %v776 = vld [vmem:[#allocation6 + $0x390] sm:$0xff]
    %v777 = vld [vmem:[#allocation6 + $0x398] sm:$0xff]
    %v778 = vld [vmem:[#allocation6 + $0x3a0] sm:$0xff]
    %v779 = vld [vmem:[#allocation6 + $0x3a8] sm:$0xff]
    %v780 = vld [vmem:[#allocation6 + $0x3b0] sm:$0xff]
    %v781 = vld [vmem:[#allocation6 + $0x3b8] sm:$0xff]
    %v782 = vld [vmem:[#allocation6 + $0x3c0] sm:$0xff]
    %v783 = vld [vmem:[#allocation6 + $0x3c8] sm:$0xff]
    %v784 = vld [vmem:[#allocation6 + $0x3d0] sm:$0xff]
    %v785 = vld [vmem:[#allocation6 + $0x3d8] sm:$0xff]
    %v786 = vld [vmem:[#allocation6 + $0x3e0] sm:$0xff]
    %v787 = vld [vmem:[#allocation6 + $0x3e8] sm:$0xff]
    %v788 = vld [vmem:[#allocation6 + $0x3f0] sm:$0xff]
    %v789 = vld [vmem:[#allocation6 + $0x3f8] sm:$0xff]
    %v790 = vld [vmem:[#allocation6 + $0x400] sm:$0xff]
    %v791 = vld [vmem:[#allocation6 + $0x408] sm:$0xff]
    %v792 = vld [vmem:[#allocation6 + $0x410] sm:$0xff]
    %v793 = vld [vmem:[#allocation6 + $0x418] sm:$0xff]
    %v794 = vld [vmem:[#allocation6 + $0x420] sm:$0xff]
    %v795 = vld [vmem:[#allocation6 + $0x428] sm:$0xff]
    %v796 = vld [vmem:[#allocation6 + $0x430] sm:$0xff]
    %v797 = vld [vmem:[#allocation6 + $0x438] sm:$0xff]
    %v798 = vld [vmem:[#allocation6 + $0x440] sm:$0xff]
    %v799 = vld [vmem:[#allocation6 + $0x448] sm:$0xff]
    %v800 = vld [vmem:[#allocation6 + $0x450] sm:$0xff]
    %v801 = vld [vmem:[#allocation6 + $0x458] sm:$0xff]
    %v802 = vld [vmem:[#allocation6 + $0x460] sm:$0xff]
    %v803 = vld [vmem:[#allocation6 + $0x468] sm:$0xff]
    %v804 = vld [vmem:[#allocation6 + $0x470] sm:$0xff]
    %v805 = vld [vmem:[#allocation6 + $0x478] sm:$0xff]
    %v806 = vld [vmem:[#allocation6 + $0x480] sm:$0xff]
    %v807 = vld [vmem:[#allocation6 + $0x488] sm:$0xff]
    %v808 = vld [vmem:[#allocation6 + $0x490] sm:$0xff]
    %v809 = vld [vmem:[#allocation6 + $0x498] sm:$0xff]
    %v810 = vld [vmem:[#allocation6 + $0x4a0] sm:$0xff]
    %v811 = vld [vmem:[#allocation6 + $0x4a8] sm:$0xff]
    %v812 = vld [vmem:[#allocation6 + $0x4b0] sm:$0xff]
    %v813 = vld [vmem:[#allocation6 + $0x4b8] sm:$0xff]
    %v814 = vld [vmem:[#allocation6 + $0x4c0] sm:$0xff]
    %v815 = vld [vmem:[#allocation6 + $0x4c8] sm:$0xff]
    %v816 = vld [vmem:[#allocation6 + $0x4d0] sm:$0xff]
    %v817 = vld [vmem:[#allocation6 + $0x4d8] sm:$0xff]
    %v818 = vld [vmem:[#allocation6 + $0x4e0] sm:$0xff]
    %v819 = vld [vmem:[#allocation6 + $0x4e8] sm:$0xff]
    %v820 = vld [vmem:[#allocation6 + $0x4f0] sm:$0xff]
    %v821 = vld [vmem:[#allocation6 + $0x4f8] sm:$0xff]
    %v822 = vld [vmem:[#allocation6 + $0x500] sm:$0xff]
    %v823 = vld [vmem:[#allocation6 + $0x508] sm:$0xff]
    %v824 = vld [vmem:[#allocation6 + $0x510] sm:$0xff]
    %v825 = vld [vmem:[#allocation6 + $0x518] sm:$0xff]
    %v826 = vld [vmem:[#allocation6 + $0x520] sm:$0xff]
    %v827 = vld [vmem:[#allocation6 + $0x528] sm:$0xff]
    %v828 = vld [vmem:[#allocation6 + $0x530] sm:$0xff]
    %v829 = vld [vmem:[#allocation6 + $0x538] sm:$0xff]
    %v830 = vld [vmem:[#allocation6 + $0x540] sm:$0xff]
    %v831 = vld [vmem:[#allocation6 + $0x548] sm:$0xff]
    %v832 = vld [vmem:[#allocation6 + $0x550] sm:$0xff]
    %v833 = vld [vmem:[#allocation6 + $0x558] sm:$0xff]
    %v834 = vld [vmem:[#allocation6 + $0x560] sm:$0xff]
    %v835 = vld [vmem:[#allocation6 + $0x568] sm:$0xff]
    %v836 = vld [vmem:[#allocation6 + $0x570] sm:$0xff]
    %v837 = vld [vmem:[#allocation6 + $0x578] sm:$0xff]
    %v838 = vld [vmem:[#allocation6 + $0x580] sm:$0xff]
    %v839 = vld [vmem:[#allocation6 + $0x588] sm:$0xff]
    %v840 = vld [vmem:[#allocation6 + $0x590] sm:$0xff]
    %v841 = vld [vmem:[#allocation6 + $0x598] sm:$0xff]
    %v842 = vld [vmem:[#allocation6 + $0x5a0] sm:$0xff]
    %v843 = vld [vmem:[#allocation6 + $0x5a8] sm:$0xff]
    %v844 = vld [vmem:[#allocation6 + $0x5b0] sm:$0xff]
    %v845 = vld [vmem:[#allocation6 + $0x5b8] sm:$0xff]
    %v846 = vld [vmem:[#allocation6 + $0x5c0] sm:$0xff]
    %v847 = vld [vmem:[#allocation6 + $0x5c8] sm:$0xff]
    %v848 = vld [vmem:[#allocation6 + $0x5d0] sm:$0xff]
    %v849 = vld [vmem:[#allocation6 + $0x5d8] sm:$0xff]
    %v850 = vld [vmem:[#allocation6 + $0x5e0] sm:$0xff]
    %v851 = vld [vmem:[#allocation6 + $0x5e8] sm:$0xff]
    %v852 = vld [vmem:[#allocation6 + $0x5f0] sm:$0xff]
    %v853 = vld [vmem:[#allocation6 + $0x5f8] sm:$0xff]
    %v854 = vld [vmem:[#allocation6 + $0x600] sm:$0xff]
    %v855 = vld [vmem:[#allocation6 + $0x608] sm:$0xff]
    %v856 = vld [vmem:[#allocation6 + $0x610] sm:$0xff]
    %v857 = vld [vmem:[#allocation6 + $0x618] sm:$0xff]
    %v858 = vld [vmem:[#allocation6 + $0x620] sm:$0xff]
    %v859 = vld [vmem:[#allocation6 + $0x628] sm:$0xff]
    %v860 = vld [vmem:[#allocation6 + $0x630] sm:$0xff]
    %v861 = vld [vmem:[#allocation6 + $0x638] sm:$0xff]
    %v862 = vld [vmem:[#allocation6 + $0x640] sm:$0xff]
    %v863 = vld [vmem:[#allocation6 + $0x648] sm:$0xff]
    %v864 = vld [vmem:[#allocation6 + $0x650] sm:$0xff]
    %v865 = vld [vmem:[#allocation6 + $0x658] sm:$0xff]
    %v866 = vld [vmem:[#allocation6 + $0x660] sm:$0xff]
    %v867 = vld [vmem:[#allocation6 + $0x668] sm:$0xff]
    %v868 = vld [vmem:[#allocation6 + $0x670] sm:$0xff]
    %v869 = vld [vmem:[#allocation6 + $0x678] sm:$0xff]
    %v870 = vld [vmem:[#allocation6 + $0x680] sm:$0xff]
    %v871 = vld [vmem:[#allocation6 + $0x688] sm:$0xff]
    %v872 = vld [vmem:[#allocation6 + $0x690] sm:$0xff]
    %v873 = vld [vmem:[#allocation6 + $0x698] sm:$0xff]
    %v874 = vld [vmem:[#allocation6 + $0x6a0] sm:$0xff]
    %v875 = vld [vmem:[#allocation6 + $0x6a8] sm:$0xff]
    %v876 = vld [vmem:[#allocation6 + $0x6b0] sm:$0xff]
    %v877 = vld [vmem:[#allocation6 + $0x6b8] sm:$0xff]
    %v878 = vld [vmem:[#allocation6 + $0x6c0] sm:$0xff]
    %v879 = vld [vmem:[#allocation6 + $0x6c8] sm:$0xff]
    %v880 = vld [vmem:[#allocation6 + $0x6d0] sm:$0xff]
    %v881 = vld [vmem:[#allocation6 + $0x6d8] sm:$0xff]
    %v882 = vld [vmem:[#allocation6 + $0x6e0] sm:$0xff]
    %v883 = vld [vmem:[#allocation6 + $0x6e8] sm:$0xff]
    %v884 = vld [vmem:[#allocation6 + $0x6f0] sm:$0xff]
    %v885 = vld [vmem:[#allocation6 + $0x6f8] sm:$0xff]
    %v886 = vld [vmem:[#allocation6 + $0x700] sm:$0xff]
    %v887 = vld [vmem:[#allocation6 + $0x708] sm:$0xff]
    %v888 = vld [vmem:[#allocation6 + $0x710] sm:$0xff]
    %v889 = vld [vmem:[#allocation6 + $0x718] sm:$0xff]
    %v890 = vld [vmem:[#allocation6 + $0x720] sm:$0xff]
    %v891 = vld [vmem:[#allocation6 + $0x728] sm:$0xff]
    %v892 = vld [vmem:[#allocation6 + $0x730] sm:$0xff]
    %v893 = vld [vmem:[#allocation6 + $0x738] sm:$0xff]
    %v894 = vld [vmem:[#allocation6 + $0x740] sm:$0xff]
    %v895 = vld [vmem:[#allocation6 + $0x748] sm:$0xff]
    %v896 = vld [vmem:[#allocation6 + $0x750] sm:$0xff]
    %v897 = vld [vmem:[#allocation6 + $0x758] sm:$0xff]
    %v898 = vld [vmem:[#allocation6 + $0x760] sm:$0xff]
    %v899 = vld [vmem:[#allocation6 + $0x768] sm:$0xff]
    %v900 = vld [vmem:[#allocation6 + $0x770] sm:$0xff]
    %v901 = vld [vmem:[#allocation6 + $0x778] sm:$0xff]
    %v902 = vld [vmem:[#allocation6 + $0x780] sm:$0xff]
    %v903 = vld [vmem:[#allocation6 + $0x788] sm:$0xff]
    %v904 = vld [vmem:[#allocation6 + $0x790] sm:$0xff]
    %v905 = vld [vmem:[#allocation6 + $0x798] sm:$0xff]
    %v906 = vld [vmem:[#allocation6 + $0x7a0] sm:$0xff]
    %v907 = vld [vmem:[#allocation6 + $0x7a8] sm:$0xff]
    %v908 = vld [vmem:[#allocation6 + $0x7b0] sm:$0xff]
    %v909 = vld [vmem:[#allocation6 + $0x7b8] sm:$0xff]
    %v910 = vld [vmem:[#allocation6 + $0x7c0] sm:$0xff]
    %v911 = vld [vmem:[#allocation6 + $0x7c8] sm:$0xff]
    %v912 = vld [vmem:[#allocation6 + $0x7d0] sm:$0xff]
    %v913 = vld [vmem:[#allocation6 + $0x7d8] sm:$0xff]
    %v914 = vld [vmem:[#allocation6 + $0x7e0] sm:$0xff]
    %v915 = vld [vmem:[#allocation6 + $0x7e8] sm:$0xff]
    %v916 = vld [vmem:[#allocation6 + $0x7f0] sm:$0xff]
    %v917 = vld [vmem:[#allocation6 + $0x7f8] sm:$0xff]
    %v918 = vld [vmem:[#allocation6 + $0x800] sm:$0xff]
    %v919 = vld [vmem:[#allocation6 + $0x808] sm:$0xff]
    %v920 = vld [vmem:[#allocation6 + $0x810] sm:$0xff]
    %v921 = vld [vmem:[#allocation6 + $0x818] sm:$0xff]
    %v922 = vld [vmem:[#allocation6 + $0x820] sm:$0xff]
    %v923 = vld [vmem:[#allocation6 + $0x828] sm:$0xff]
    %v924 = vld [vmem:[#allocation6 + $0x830] sm:$0xff]
    %v925 = vld [vmem:[#allocation6 + $0x838] sm:$0xff]
    %v926 = vld [vmem:[#allocation6 + $0x840] sm:$0xff]
    %v927 = vld [vmem:[#allocation6 + $0x848] sm:$0xff]
    %v928 = vld [vmem:[#allocation6 + $0x850] sm:$0xff]
    %v929 = vld [vmem:[#allocation6 + $0x858] sm:$0xff]
    %v930 = vld [vmem:[#allocation6 + $0x860] sm:$0xff]
    %v931 = vld [vmem:[#allocation6 + $0x868] sm:$0xff]
    %v932 = vld [vmem:[#allocation6 + $0x870] sm:$0xff]
    %v933 = vld [vmem:[#allocation6 + $0x878] sm:$0xff]
    %v934 = vld [vmem:[#allocation6 + $0x880] sm:$0xff]
    %v935 = vld [vmem:[#allocation6 + $0x888] sm:$0xff]
    %v936 = vld [vmem:[#allocation6 + $0x890] sm:$0xff]
    %v937 = vld [vmem:[#allocation6 + $0x898] sm:$0xff]
    %v938 = vld [vmem:[#allocation6 + $0x8a0] sm:$0xff]
    %v939 = vld [vmem:[#allocation6 + $0x8a8] sm:$0xff]
    %v940 = vld [vmem:[#allocation6 + $0x8b0] sm:$0xff]
    %v941 = vld [vmem:[#allocation6 + $0x8b8] sm:$0xff]
    %v942 = vld [vmem:[#allocation6 + $0x8c0] sm:$0xff]
    %v943 = vld [vmem:[#allocation6 + $0x8c8] sm:$0xff]
    %v944 = vld [vmem:[#allocation6 + $0x8d0] sm:$0xff]
    %v945 = vld [vmem:[#allocation6 + $0x8d8] sm:$0xff]
    %v946 = vld [vmem:[#allocation6 + $0x8e0] sm:$0xff]
    %v947 = vld [vmem:[#allocation6 + $0x8e8] sm:$0xff]
    %v948 = vld [vmem:[#allocation6 + $0x8f0] sm:$0xff]
    %v949 = vld [vmem:[#allocation6 + $0x8f8] sm:$0xff]
    %v950 = vld [vmem:[#allocation6 + $0x900] sm:$0xff]
    %v951 = vld [vmem:[#allocation6 + $0x908] sm:$0xff]
    %v952 = vld [vmem:[#allocation6 + $0x910] sm:$0xff]
    %v953 = vld [vmem:[#allocation6 + $0x918] sm:$0xff]
    %v954 = vld [vmem:[#allocation6 + $0x920] sm:$0xff]
    %v955 = vld [vmem:[#allocation6 + $0x928] sm:$0xff]
    %v956 = vld [vmem:[#allocation6 + $0x930] sm:$0xff]
    %v957 = vld [vmem:[#allocation6 + $0x938] sm:$0xff]
    %v958 = vld [vmem:[#allocation6 + $0x940] sm:$0xff]
    %v959 = vld [vmem:[#allocation6 + $0x948] sm:$0xff]
    %v960 = vld [vmem:[#allocation6 + $0x950] sm:$0xff]
    %v961 = vld [vmem:[#allocation6 + $0x958] sm:$0xff]
    %v962 = vld [vmem:[#allocation6 + $0x960] sm:$0xff]
    %v963 = vld [vmem:[#allocation6 + $0x968] sm:$0xff]
    %v964 = vld [vmem:[#allocation6 + $0x970] sm:$0xff]
    %v965 = vld [vmem:[#allocation6 + $0x978] sm:$0xff]
    %v966 = vld [vmem:[#allocation6 + $0x980] sm:$0xff]
    %v967 = vld [vmem:[#allocation6 + $0x988] sm:$0xff]
    %v968 = vld [vmem:[#allocation6 + $0x990] sm:$0xff]
    %v969 = vld [vmem:[#allocation6 + $0x998] sm:$0xff]
    %v970 = vld [vmem:[#allocation6 + $0x9a0] sm:$0xff]
    %v971 = vld [vmem:[#allocation6 + $0x9a8] sm:$0xff]
    %v972 = vld [vmem:[#allocation6 + $0x9b0] sm:$0xff]
    %v973 = vld [vmem:[#allocation6 + $0x9b8] sm:$0xff]
    %v974 = vld [vmem:[#allocation6 + $0x9c0] sm:$0xff]
    %v975 = vld [vmem:[#allocation6 + $0x9c8] sm:$0xff]
    %v976 = vld [vmem:[#allocation6 + $0x9d0] sm:$0xff]
    %v977 = vld [vmem:[#allocation6 + $0x9d8] sm:$0xff]
    %v978 = vld [vmem:[#allocation6 + $0x9e0] sm:$0xff]
    %v979 = vld [vmem:[#allocation6 + $0x9e8] sm:$0xff]
    %v980 = vld [vmem:[#allocation6 + $0x9f0] sm:$0xff]
    %v981 = vld [vmem:[#allocation6 + $0x9f8] sm:$0xff]
    %v982 = vld [vmem:[#allocation6 + $0xa00] sm:$0xff]
    %v983 = vld [vmem:[#allocation6 + $0xa08] sm:$0xff]
    %v984 = vld [vmem:[#allocation6 + $0xa10] sm:$0xff]
    %v985 = vld [vmem:[#allocation6 + $0xa18] sm:$0xff]
    %v986 = vld [vmem:[#allocation6 + $0xa20] sm:$0xff]
    %v987 = vld [vmem:[#allocation6 + $0xa28] sm:$0xff]
    %v988 = vld [vmem:[#allocation6 + $0xa30] sm:$0xff]
    %v989 = vld [vmem:[#allocation6 + $0xa38] sm:$0xff]
    %v990 = vld [vmem:[#allocation6 + $0xa40] sm:$0xff]
    %v991 = vld [vmem:[#allocation6 + $0xa48] sm:$0xff]
    %v992 = vld [vmem:[#allocation6 + $0xa50] sm:$0xff]
    %v993 = vld [vmem:[#allocation6 + $0xa58] sm:$0xff]
    %v994 = vld [vmem:[#allocation6 + $0xa60] sm:$0xff]
    %v995 = vld [vmem:[#allocation6 + $0xa68] sm:$0xff]
    %v996 = vld [vmem:[#allocation6 + $0xa70] sm:$0xff]
    %v997 = vld [vmem:[#allocation6 + $0xa78] sm:$0xff]
    %v998 = vld [vmem:[#allocation6 + $0xa80] sm:$0xff]
    %v999 = vld [vmem:[#allocation6 + $0xa88] sm:$0xff]
    %v1000 = vld [vmem:[#allocation6 + $0xa90] sm:$0xff]
    %v1001 = vld [vmem:[#allocation6 + $0xa98] sm:$0xff]
    %v1002 = vld [vmem:[#allocation6 + $0xaa0] sm:$0xff]
    %v1003 = vld [vmem:[#allocation6 + $0xaa8] sm:$0xff]
    %v1004 = vld [vmem:[#allocation6 + $0xab0] sm:$0xff]
    %v1005 = vld [vmem:[#allocation6 + $0xab8] sm:$0xff]
    %v1006 = vld [vmem:[#allocation6 + $0xac0] sm:$0xff]
    %v1007 = vld [vmem:[#allocation6 + $0xac8] sm:$0xff]
    %v1008 = vld [vmem:[#allocation6 + $0xad0] sm:$0xff]
    %v1009 = vld [vmem:[#allocation6 + $0xad8] sm:$0xff]
    %v1010 = vld [vmem:[#allocation6 + $0xae0] sm:$0xff]
    %v1011 = vld [vmem:[#allocation6 + $0xae8] sm:$0xff]
    %v1012 = vld [vmem:[#allocation6 + $0xaf0] sm:$0xff]
    %v1013 = vld [vmem:[#allocation6 + $0xaf8] sm:$0xff]
    %v1014 = vld [vmem:[#allocation6 + $0xb00] sm:$0xff]
    %v1015 = vld [vmem:[#allocation6 + $0xb08] sm:$0xff]
    %v1016 = vld [vmem:[#allocation6 + $0xb10] sm:$0xff]
    %v1017 = vld [vmem:[#allocation6 + $0xb18] sm:$0xff]
    %v1018 = vld [vmem:[#allocation6 + $0xb20] sm:$0xff]
    %v1019 = vld [vmem:[#allocation6 + $0xb28] sm:$0xff]
    %v1020 = vld [vmem:[#allocation6 + $0xb30] sm:$0xff]
    %v1021 = vld [vmem:[#allocation6 + $0xb38] sm:$0xff]
    %v1022 = vld [vmem:[#allocation6 + $0xb40] sm:$0xff]
    %v1023 = vld [vmem:[#allocation6 + $0xb48] sm:$0xff]
    %v1024 = vld [vmem:[#allocation6 + $0xb50] sm:$0xff]
    %v1025 = vld [vmem:[#allocation6 + $0xb58] sm:$0xff]
    %v1026 = vld [vmem:[#allocation6 + $0xb60] sm:$0xff]
    %v1027 = vld [vmem:[#allocation6 + $0xb68] sm:$0xff]
    %v1028 = vld [vmem:[#allocation6 + $0xb70] sm:$0xff]
    %v1029 = vld [vmem:[#allocation6 + $0xb78] sm:$0xff]
    %v1030 = vld [vmem:[#allocation6 + $0xb80] sm:$0xff]
    %v1031 = vld [vmem:[#allocation6 + $0xb88] sm:$0xff]
    %v1032 = vld [vmem:[#allocation6 + $0xb90] sm:$0xff]
    %v1033 = vld [vmem:[#allocation6 + $0xb98] sm:$0xff]
    %v1034 = vld [vmem:[#allocation6 + $0xba0] sm:$0xff]
    %v1035 = vld [vmem:[#allocation6 + $0xba8] sm:$0xff]
    %v1036 = vld [vmem:[#allocation6 + $0xbb0] sm:$0xff]
    %v1037 = vld [vmem:[#allocation6 + $0xbb8] sm:$0xff]
    %v1038 = vld [vmem:[#allocation6 + $0xbc0] sm:$0xff]
    %v1039 = vld [vmem:[#allocation6 + $0xbc8] sm:$0xff]
    %v1040 = vld [vmem:[#allocation6 + $0xbd0] sm:$0xff]
    %v1041 = vld [vmem:[#allocation6 + $0xbd8] sm:$0xff]
    %v1042 = vld [vmem:[#allocation6 + $0xbe0] sm:$0xff]
    %v1043 = vld [vmem:[#allocation6 + $0xbe8] sm:$0xff]
    %v1044 = vld [vmem:[#allocation6 + $0xbf0] sm:$0xff]
    %v1045 = vld [vmem:[#allocation6 + $0xbf8] sm:$0xff]
    %v1046 = vld [vmem:[#allocation6 + $0xc00] sm:$0xff]
    %v1047 = vld [vmem:[#allocation6 + $0xc08] sm:$0xff]
    %v1048 = vld [vmem:[#allocation6 + $0xc10] sm:$0xff]
    %v1049 = vld [vmem:[#allocation6 + $0xc18] sm:$0xff]
    %v1050 = vld [vmem:[#allocation6 + $0xc20] sm:$0xff]
    %v1051 = vld [vmem:[#allocation6 + $0xc28] sm:$0xff]
    %v1052 = vld [vmem:[#allocation6 + $0xc30] sm:$0xff]
    %v1053 = vld [vmem:[#allocation6 + $0xc38] sm:$0xff]
    %v1054 = vld [vmem:[#allocation6 + $0xc40] sm:$0xff]
    %v1055 = vld [vmem:[#allocation6 + $0xc48] sm:$0xff]
    %v1056 = vld [vmem:[#allocation6 + $0xc50] sm:$0xff]
    %v1057 = vld [vmem:[#allocation6 + $0xc58] sm:$0xff]
    %v1058 = vld [vmem:[#allocation6 + $0xc60] sm:$0xff]
    %v1059 = vld [vmem:[#allocation6 + $0xc68] sm:$0xff]
    %v1060 = vld [vmem:[#allocation6 + $0xc70] sm:$0xff]
    %v1061 = vld [vmem:[#allocation6 + $0xc78] sm:$0xff]
    %v1062 = vld [vmem:[#allocation6 + $0xc80] sm:$0xff]
    %v1063 = vld [vmem:[#allocation6 + $0xc88] sm:$0xff]
    %v1064 = vld [vmem:[#allocation6 + $0xc90] sm:$0xff]
    %v1065 = vld [vmem:[#allocation6 + $0xc98] sm:$0xff]
    %v1066 = vld [vmem:[#allocation6 + $0xca0] sm:$0xff]
    %v1067 = vld [vmem:[#allocation6 + $0xca8] sm:$0xff]
    %v1068 = vld [vmem:[#allocation6 + $0xcb0] sm:$0xff]
    %v1069 = vld [vmem:[#allocation6 + $0xcb8] sm:$0xff]
    %v1070 = vld [vmem:[#allocation6 + $0xcc0] sm:$0xff]
    %v1071 = vld [vmem:[#allocation6 + $0xcc8] sm:$0xff]
    %v1072 = vld [vmem:[#allocation6 + $0xcd0] sm:$0xff]
    %v1073 = vld [vmem:[#allocation6 + $0xcd8] sm:$0xff]
    %v1074 = vld [vmem:[#allocation6 + $0xce0] sm:$0xff]
    %v1075 = vld [vmem:[#allocation6 + $0xce8] sm:$0xff]
    %v1076 = vld [vmem:[#allocation6 + $0xcf0] sm:$0xff]
    %v1077 = vld [vmem:[#allocation6 + $0xcf8] sm:$0xff]
    %v1078 = vld [vmem:[#allocation6 + $0xd00] sm:$0xff]
    %v1079 = vld [vmem:[#allocation6 + $0xd08] sm:$0xff]
    %v1080 = vld [vmem:[#allocation6 + $0xd10] sm:$0xff]
    %v1081 = vld [vmem:[#allocation6 + $0xd18] sm:$0xff]
    %v1082 = vld [vmem:[#allocation6 + $0xd20] sm:$0xff]
    %v1083 = vld [vmem:[#allocation6 + $0xd28] sm:$0xff]
    %v1084 = vld [vmem:[#allocation6 + $0xd30] sm:$0xff]
    %v1085 = vld [vmem:[#allocation6 + $0xd38] sm:$0xff]
    %v1086 = vld [vmem:[#allocation6 + $0xd40] sm:$0xff]
    %v1087 = vld [vmem:[#allocation6 + $0xd48] sm:$0xff]
    %v1088 = vld [vmem:[#allocation6 + $0xd50] sm:$0xff]
    %v1089 = vld [vmem:[#allocation6 + $0xd58] sm:$0xff]
    %v1090 = vld [vmem:[#allocation6 + $0xd60] sm:$0xff]
    %v1091 = vld [vmem:[#allocation6 + $0xd68] sm:$0xff]
    %v1092 = vld [vmem:[#allocation6 + $0xd70] sm:$0xff]
    %v1093 = vld [vmem:[#allocation6 + $0xd78] sm:$0xff]
    %v1094 = vld [vmem:[#allocation6 + $0xd80] sm:$0xff]
    %v1095 = vld [vmem:[#allocation6 + $0xd88] sm:$0xff]
    %v1096 = vld [vmem:[#allocation6 + $0xd90] sm:$0xff]
    %v1097 = vld [vmem:[#allocation6 + $0xd98] sm:$0xff]
    %v1098 = vld [vmem:[#allocation6 + $0xda0] sm:$0xff]
    %v1099 = vld [vmem:[#allocation6 + $0xda8] sm:$0xff]
    %v1100 = vld [vmem:[#allocation6 + $0xdb0] sm:$0xff]
    %v1101 = vld [vmem:[#allocation6 + $0xdb8] sm:$0xff]
    %v1102 = vld [vmem:[#allocation6 + $0xdc0] sm:$0xff]
    %v1103 = vld [vmem:[#allocation6 + $0xdc8] sm:$0xff]
    %v1104 = vld [vmem:[#allocation6 + $0xdd0] sm:$0xff]
    %v1105 = vld [vmem:[#allocation6 + $0xdd8] sm:$0xff]
    %v1106 = vld [vmem:[#allocation6 + $0xde0] sm:$0xff]
    %v1107 = vld [vmem:[#allocation6 + $0xde8] sm:$0xff]
    %v1108 = vld [vmem:[#allocation6 + $0xdf0] sm:$0xff]
    %v1109 = vld [vmem:[#allocation6 + $0xdf8] sm:$0xff]
    %v1110 = vld [vmem:[#allocation6 + $0xe00] sm:$0xff]
    %v1111 = vld [vmem:[#allocation6 + $0xe08] sm:$0xff]
    %v1112 = vld [vmem:[#allocation6 + $0xe10] sm:$0xff]
    %v1113 = vld [vmem:[#allocation6 + $0xe18] sm:$0xff]
    %v1114 = vld [vmem:[#allocation6 + $0xe20] sm:$0xff]
    %v1115 = vld [vmem:[#allocation6 + $0xe28] sm:$0xff]
    %v1116 = vld [vmem:[#allocation6 + $0xe30] sm:$0xff]
    %v1117 = vld [vmem:[#allocation6 + $0xe38] sm:$0xff]
    %v1118 = vld [vmem:[#allocation6 + $0xe40] sm:$0xff]
    %v1119 = vld [vmem:[#allocation6 + $0xe48] sm:$0xff]
    %v1120 = vld [vmem:[#allocation6 + $0xe50] sm:$0xff]
    %v1121 = vld [vmem:[#allocation6 + $0xe58] sm:$0xff]
    %v1122 = vld [vmem:[#allocation6 + $0xe60] sm:$0xff]
    %v1123 = vld [vmem:[#allocation6 + $0xe68] sm:$0xff]
    %v1124 = vld [vmem:[#allocation6 + $0xe70] sm:$0xff]
    %v1125 = vld [vmem:[#allocation6 + $0xe78] sm:$0xff]
    %v1126 = vld [vmem:[#allocation6 + $0xe80] sm:$0xff]
    %v1127 = vld [vmem:[#allocation6 + $0xe88] sm:$0xff]
    %v1128 = vld [vmem:[#allocation6 + $0xe90] sm:$0xff]
    %v1129 = vld [vmem:[#allocation6 + $0xe98] sm:$0xff]
    %v1130 = vld [vmem:[#allocation6 + $0xea0] sm:$0xff]
    %v1131 = vld [vmem:[#allocation6 + $0xea8] sm:$0xff]
    %v1132 = vld [vmem:[#allocation6 + $0xeb0] sm:$0xff]
    %v1133 = vld [vmem:[#allocation6 + $0xeb8] sm:$0xff]
    %v1134 = vld [vmem:[#allocation6 + $0xec0] sm:$0xff]
    %v1135 = vld [vmem:[#allocation6 + $0xec8] sm:$0xff]
    %v1136 = vld [vmem:[#allocation6 + $0xed0] sm:$0xff]
    %v1137 = vld [vmem:[#allocation6 + $0xed8] sm:$0xff]
    %v1138 = vld [vmem:[#allocation6 + $0xee0] sm:$0xff]
    %v1139 = vld [vmem:[#allocation6 + $0xee8] sm:$0xff]
    %v1140 = vld [vmem:[#allocation6 + $0xef0] sm:$0xff]
    %v1141 = vld [vmem:[#allocation6 + $0xef8] sm:$0xff]
    %v1142 = vld [vmem:[#allocation6 + $0xf00] sm:$0xff]
    %v1143 = vld [vmem:[#allocation6 + $0xf08] sm:$0xff]
    %v1144 = vld [vmem:[#allocation6 + $0xf10] sm:$0xff]
    %v1145 = vld [vmem:[#allocation6 + $0xf18] sm:$0xff]
    %v1146 = vld [vmem:[#allocation6 + $0xf20] sm:$0xff]
    %v1147 = vld [vmem:[#allocation6 + $0xf28] sm:$0xff]
    %v1148 = vld [vmem:[#allocation6 + $0xf30] sm:$0xff]
    %v1149 = vld [vmem:[#allocation6 + $0xf38] sm:$0xff]
    %v1150 = vld [vmem:[#allocation6 + $0xf40] sm:$0xff]
    %v1151 = vld [vmem:[#allocation6 + $0xf48] sm:$0xff]
    %v1152 = vld [vmem:[#allocation6 + $0xf50] sm:$0xff]
    %v1153 = vld [vmem:[#allocation6 + $0xf58] sm:$0xff]
    %v1154 = vld [vmem:[#allocation6 + $0xf60] sm:$0xff]
    %v1155 = vld [vmem:[#allocation6 + $0xf68] sm:$0xff]
    %v1156 = vld [vmem:[#allocation6 + $0xf70] sm:$0xff]
    %v1157 = vld [vmem:[#allocation6 + $0xf78] sm:$0xff]
    %v1158 = vld [vmem:[#allocation6 + $0xf80] sm:$0xff]
    %v1159 = vld [vmem:[#allocation6 + $0xf88] sm:$0xff]
    %v1160 = vld [vmem:[#allocation6 + $0xf90] sm:$0xff]
    %v1161 = vld [vmem:[#allocation6 + $0xf98] sm:$0xff]
    %v1162 = vld [vmem:[#allocation6 + $0xfa0] sm:$0xff]
    %v1163 = vld [vmem:[#allocation6 + $0xfa8] sm:$0xff]
    %v1164 = vld [vmem:[#allocation6 + $0xfb0] sm:$0xff]
    %v1165 = vld [vmem:[#allocation6 + $0xfb8] sm:$0xff]
    %v1166 = vld [vmem:[#allocation6 + $0xfc0] sm:$0xff]
    %v1167 = vld [vmem:[#allocation6 + $0xfc8] sm:$0xff]
    %v1168 = vld [vmem:[#allocation6 + $0xfd0] sm:$0xff]
    %v1169 = vld [vmem:[#allocation6 + $0xfd8] sm:$0xff]
    %v1170 = vld [vmem:[#allocation6 + $0xfe0] sm:$0xff]
    %v1171 = vld [vmem:[#allocation6 + $0xfe8] sm:$0xff]
    %v1172 = vld [vmem:[#allocation6 + $0xff0] sm:$0xff]
    %v1173 = vld [vmem:[#allocation6 + $0xff8] sm:$0xff]
    %v1174 = vld [vmem:[#allocation6 + $0x1000] sm:$0xff]
    %v1175 = vld [vmem:[#allocation6 + $0x1008] sm:$0xff]
    %v1176 = vld [vmem:[#allocation6 + $0x1010] sm:$0xff]
    %v1177 = vld [vmem:[#allocation6 + $0x1018] sm:$0xff]
    %v1178 = vld [vmem:[#allocation6 + $0x1020] sm:$0xff]
    %v1179 = vld [vmem:[#allocation6 + $0x1028] sm:$0xff]
    %v1180 = vld [vmem:[#allocation6 + $0x1030] sm:$0xff]
    %v1181 = vld [vmem:[#allocation6 + $0x1038] sm:$0xff]
    %v1182 = vld [vmem:[#allocation6 + $0x1040] sm:$0xff]
    %v1183 = vld [vmem:[#allocation6 + $0x1048] sm:$0xff]
    %v1184 = vld [vmem:[#allocation6 + $0x1050] sm:$0xff]
    %v1185 = vld [vmem:[#allocation6 + $0x1058] sm:$0xff]
    %v1186 = vld [vmem:[#allocation6 + $0x1060] sm:$0xff]
    %v1187 = vld [vmem:[#allocation6 + $0x1068] sm:$0xff]
    %v1188 = vld [vmem:[#allocation6 + $0x1070] sm:$0xff]
    %v1189 = vld [vmem:[#allocation6 + $0x1078] sm:$0xff]
    %v1190 = vld [vmem:[#allocation6 + $0x1080] sm:$0xff]
    %v1191 = vld [vmem:[#allocation6 + $0x1088] sm:$0xff]
    %v1192 = vld [vmem:[#allocation6 + $0x1090] sm:$0xff]
    %v1193 = vld [vmem:[#allocation6 + $0x1098] sm:$0xff]
    %v1194 = vld [vmem:[#allocation6 + $0x10a0] sm:$0xff]
    %v1195 = vld [vmem:[#allocation6 + $0x10a8] sm:$0xff]
    %v1196 = vld [vmem:[#allocation6 + $0x10b0] sm:$0xff]
    %v1197 = vld [vmem:[#allocation6 + $0x10b8] sm:$0xff]
    %v1198 = vld [vmem:[#allocation6 + $0x10c0] sm:$0xff]
    %v1199 = vld [vmem:[#allocation6 + $0x10c8] sm:$0xff]
    %v1200 = vld [vmem:[#allocation6 + $0x10d0] sm:$0xff]
    %v1201 = vld [vmem:[#allocation6 + $0x10d8] sm:$0xff]
    %v1202 = vld [vmem:[#allocation6 + $0x10e0] sm:$0xff]
    %v1203 = vld [vmem:[#allocation6 + $0x10e8] sm:$0xff]
    %v1204 = vld [vmem:[#allocation6 + $0x10f0] sm:$0xff]
    %v1205 = vld [vmem:[#allocation6 + $0x10f8] sm:$0xff]
    %v1206 = vld [vmem:[#allocation6 + $0x1100] sm:$0xff]
    %v1207 = vld [vmem:[#allocation6 + $0x1108] sm:$0xff]
    %v1208 = vld [vmem:[#allocation6 + $0x1110] sm:$0xff]
    %v1209 = vld [vmem:[#allocation6 + $0x1118] sm:$0xff]
    %v1210 = vld [vmem:[#allocation6 + $0x1120] sm:$0xff]
    %v1211 = vld [vmem:[#allocation6 + $0x1128] sm:$0xff]
    %v1212 = vld [vmem:[#allocation6 + $0x1130] sm:$0xff]
    %v1213 = vld [vmem:[#allocation6 + $0x1138] sm:$0xff]
    %v1214 = vld [vmem:[#allocation6 + $0x1140] sm:$0xff]
    %v1215 = vld [vmem:[#allocation6 + $0x1148] sm:$0xff]
    %v1216 = vld [vmem:[#allocation6 + $0x1150] sm:$0xff]
    %v1217 = vld [vmem:[#allocation6 + $0x1158] sm:$0xff]
    %v1218 = vld [vmem:[#allocation6 + $0x1160] sm:$0xff]
    %v1219 = vld [vmem:[#allocation6 + $0x1168] sm:$0xff]
    %v1220 = vld [vmem:[#allocation6 + $0x1170] sm:$0xff]
    %v1221 = vld [vmem:[#allocation6 + $0x1178] sm:$0xff]
    %v1222 = vld [vmem:[#allocation6 + $0x1180] sm:$0xff]
    %v1223 = vld [vmem:[#allocation6 + $0x1188] sm:$0xff]
    %v1224 = vld [vmem:[#allocation6 + $0x1190] sm:$0xff]
    %v1225 = vld [vmem:[#allocation6 + $0x1198] sm:$0xff]
    %v1226 = vld [vmem:[#allocation6 + $0x11a0] sm:$0xff]
    %v1227 = vld [vmem:[#allocation6 + $0x11a8] sm:$0xff]
    %v1228 = vld [vmem:[#allocation6 + $0x11b0] sm:$0xff]
    %v1229 = vld [vmem:[#allocation6 + $0x11b8] sm:$0xff]
    %v1230 = vld [vmem:[#allocation6 + $0x11c0] sm:$0xff]
    %v1231 = vld [vmem:[#allocation6 + $0x11c8] sm:$0xff]
    %v1232 = vld [vmem:[#allocation6 + $0x11d0] sm:$0xff]
    %v1233 = vld [vmem:[#allocation6 + $0x11d8] sm:$0xff]
    %v1234 = vld [vmem:[#allocation6 + $0x11e0] sm:$0xff]
    %v1235 = vld [vmem:[#allocation6 + $0x11e8] sm:$0xff]
    %v1236 = vld [vmem:[#allocation6 + $0x11f0] sm:$0xff]
    %v1237 = vld [vmem:[#allocation6 + $0x11f8] sm:$0xff]
    %v1238 = vld [vmem:[#allocation6 + $0x1200] sm:$0xff]
    %v1239 = vld [vmem:[#allocation6 + $0x1208] sm:$0xff]
    %v1240 = vld [vmem:[#allocation6 + $0x1210] sm:$0xff]
    %v1241 = vld [vmem:[#allocation6 + $0x1218] sm:$0xff]
    %v1242 = vld [vmem:[#allocation6 + $0x1220] sm:$0xff]
    %v1243 = vld [vmem:[#allocation6 + $0x1228] sm:$0xff]
    %v1244 = vld [vmem:[#allocation6 + $0x1230] sm:$0xff]
    %v1245 = vld [vmem:[#allocation6 + $0x1238] sm:$0xff]
    %v1246 = vld [vmem:[#allocation6 + $0x1240] sm:$0xff]
    %v1247 = vld [vmem:[#allocation6 + $0x1248] sm:$0xff]
    %v1248 = vld [vmem:[#allocation6 + $0x1250] sm:$0xff]
    %v1249 = vld [vmem:[#allocation6 + $0x1258] sm:$0xff]
    %v1250 = vld [vmem:[#allocation6 + $0x1260] sm:$0xff]
    %v1251 = vld [vmem:[#allocation6 + $0x1268] sm:$0xff]
    %v1252 = vld [vmem:[#allocation6 + $0x1270] sm:$0xff]
    %v1253 = vld [vmem:[#allocation6 + $0x1278] sm:$0xff]
    %v1254 = vld [vmem:[#allocation6 + $0x1280] sm:$0xff]
    %v1255 = vld [vmem:[#allocation6 + $0x1288] sm:$0xff]
    %v1256 = vld [vmem:[#allocation6 + $0x1290] sm:$0xff]
    %v1257 = vld [vmem:[#allocation6 + $0x1298] sm:$0xff]
    %v1258 = vld [vmem:[#allocation6 + $0x12a0] sm:$0xff]
    %v1259 = vld [vmem:[#allocation6 + $0x12a8] sm:$0xff]
    %v1260 = vld [vmem:[#allocation6 + $0x12b0] sm:$0xff]
    %v1261 = vld [vmem:[#allocation6 + $0x12b8] sm:$0xff]
    %v1262 = vld [vmem:[#allocation6 + $0x12c0] sm:$0xff]
    %v1263 = vld [vmem:[#allocation6 + $0x12c8] sm:$0xff]
    %v1264 = vld [vmem:[#allocation6 + $0x12d0] sm:$0xff]
    %v1265 = vld [vmem:[#allocation6 + $0x12d8] sm:$0xff]
    %v1266 = vld [vmem:[#allocation6 + $0x12e0] sm:$0xff]
    %v1267 = vld [vmem:[#allocation6 + $0x12e8] sm:$0xff]
    %v1268 = vld [vmem:[#allocation6 + $0x12f0] sm:$0xff]
    %v1269 = vld [vmem:[#allocation6 + $0x12f8] sm:$0xff]
    %v1270 = vld [vmem:[#allocation6 + $0x1300] sm:$0xff]
    %v1271 = vld [vmem:[#allocation6 + $0x1308] sm:$0xff]
    %v1272 = vld [vmem:[#allocation6 + $0x1310] sm:$0xff]
    %v1273 = vld [vmem:[#allocation6 + $0x1318] sm:$0xff]
    %v1274 = vld [vmem:[#allocation6 + $0x1320] sm:$0xff]
    %v1275 = vld [vmem:[#allocation6 + $0x1328] sm:$0xff]
    %v1276 = vld [vmem:[#allocation6 + $0x1330] sm:$0xff]
    %v1277 = vld [vmem:[#allocation6 + $0x1338] sm:$0xff]
    %v1278 = vld [vmem:[#allocation6 + $0x1340] sm:$0xff]
    %v1279 = vld [vmem:[#allocation6 + $0x1348] sm:$0xff]
    %v1280 = vld [vmem:[#allocation6 + $0x1350] sm:$0xff]
    %v1281 = vld [vmem:[#allocation6 + $0x1358] sm:$0xff]
    %v1282 = vld [vmem:[#allocation6 + $0x1360] sm:$0xff]
    %v1283 = vld [vmem:[#allocation6 + $0x1368] sm:$0xff]
    %v1284 = vld [vmem:[#allocation6 + $0x1370] sm:$0xff]
    %v1285 = vld [vmem:[#allocation6 + $0x1378] sm:$0xff]
    %v1286 = vld [vmem:[#allocation6 + $0x1380] sm:$0xff]
    %v1287 = vld [vmem:[#allocation6 + $0x1388] sm:$0xff]
    %v1288 = vld [vmem:[#allocation6 + $0x1390] sm:$0xff]
    %v1289 = vld [vmem:[#allocation6 + $0x1398] sm:$0xff]
    %v1290 = vld [vmem:[#allocation6 + $0x13a0] sm:$0xff]
    %v1291 = vld [vmem:[#allocation6 + $0x13a8] sm:$0xff]
    %v1292 = vld [vmem:[#allocation6 + $0x13b0] sm:$0xff]
    %v1293 = vld [vmem:[#allocation6 + $0x13b8] sm:$0xff]
    %v1294 = vld [vmem:[#allocation6 + $0x13c0] sm:$0xff]
    %v1295 = vld [vmem:[#allocation6 + $0x13c8] sm:$0xff]
    %v1296 = vld [vmem:[#allocation6 + $0x13d0] sm:$0xff]
    %v1297 = vld [vmem:[#allocation6 + $0x13d8] sm:$0xff]
    %v1298 = vld [vmem:[#allocation6 + $0x13e0] sm:$0xff]
    %v1299 = vld [vmem:[#allocation6 + $0x13e8] sm:$0xff]
    %v1300 = vld [vmem:[#allocation6 + $0x13f0] sm:$0xff]
    %v1301 = vld [vmem:[#allocation6 + $0x13f8] sm:$0xff]
    %v1302 = vld [vmem:[#allocation6 + $0x1400] sm:$0xff]
    %v1303 = vld [vmem:[#allocation6 + $0x1408] sm:$0xff]
    %v1304 = vld [vmem:[#allocation6 + $0x1410] sm:$0xff]
    %v1305 = vld [vmem:[#allocation6 + $0x1418] sm:$0xff]
    %v1306 = vld [vmem:[#allocation6 + $0x1420] sm:$0xff]
    %v1307 = vld [vmem:[#allocation6 + $0x1428] sm:$0xff]
    %v1308 = vld [vmem:[#allocation6 + $0x1430] sm:$0xff]
    %v1309 = vld [vmem:[#allocation6 + $0x1438] sm:$0xff]
    %v1310 = vld [vmem:[#allocation6 + $0x1440] sm:$0xff]
    %v1311 = vld [vmem:[#allocation6 + $0x1448] sm:$0xff]
    %v1312 = vld [vmem:[#allocation6 + $0x1450] sm:$0xff]
    %v1313 = vld [vmem:[#allocation6 + $0x1458] sm:$0xff]
    %v1314 = vld [vmem:[#allocation6 + $0x1460] sm:$0xff]
    %v1315 = vld [vmem:[#allocation6 + $0x1468] sm:$0xff]
    %v1316 = vld [vmem:[#allocation6 + $0x1470] sm:$0xff]
    %v1317 = vld [vmem:[#allocation6 + $0x1478] sm:$0xff]
    %v1318 = vld [vmem:[#allocation6 + $0x1480] sm:$0xff]
    %v1319 = vld [vmem:[#allocation6 + $0x1488] sm:$0xff]
    %v1320 = vld [vmem:[#allocation6 + $0x1490] sm:$0xff]
    %v1321 = vld [vmem:[#allocation6 + $0x1498] sm:$0xff]
    %v1322 = vld [vmem:[#allocation6 + $0x14a0] sm:$0xff]
    %v1323 = vld [vmem:[#allocation6 + $0x14a8] sm:$0xff]
    %v1324 = vld [vmem:[#allocation6 + $0x14b0] sm:$0xff]
    %v1325 = vld [vmem:[#allocation6 + $0x14b8] sm:$0xff]
    %v1326 = vld [vmem:[#allocation6 + $0x14c0] sm:$0xff]
    %v1327 = vld [vmem:[#allocation6 + $0x14c8] sm:$0xff]
    %v1328 = vld [vmem:[#allocation6 + $0x14d0] sm:$0xff]
    %v1329 = vld [vmem:[#allocation6 + $0x14d8] sm:$0xff]
    %v1330 = vld [vmem:[#allocation6 + $0x14e0] sm:$0xff]
    %v1331 = vld [vmem:[#allocation6 + $0x14e8] sm:$0xff]
    %v1332 = vld [vmem:[#allocation6 + $0x14f0] sm:$0xff]
    %v1333 = vld [vmem:[#allocation6 + $0x14f8] sm:$0xff]
    %v1334 = vld [vmem:[#allocation6 + $0x1500] sm:$0xff]
    %v1335 = vld [vmem:[#allocation6 + $0x1508] sm:$0xff]
    %v1336 = vld [vmem:[#allocation6 + $0x1510] sm:$0xff]
    %v1337 = vld [vmem:[#allocation6 + $0x1518] sm:$0xff]
    %v1338 = vld [vmem:[#allocation6 + $0x1520] sm:$0xff]
    %v1339 = vld [vmem:[#allocation6 + $0x1528] sm:$0xff]
    %v1340 = vld [vmem:[#allocation6 + $0x1530] sm:$0xff]
    %v1341 = vld [vmem:[#allocation6 + $0x1538] sm:$0xff]
    %v1342 = vld [vmem:[#allocation6 + $0x1540] sm:$0xff]
    %v1343 = vld [vmem:[#allocation6 + $0x1548] sm:$0xff]
    %v1344 = vld [vmem:[#allocation6 + $0x1550] sm:$0xff]
    %v1345 = vld [vmem:[#allocation6 + $0x1558] sm:$0xff]
    %v1346 = vld [vmem:[#allocation6 + $0x1560] sm:$0xff]
    %v1347 = vld [vmem:[#allocation6 + $0x1568] sm:$0xff]
    %v1348 = vld [vmem:[#allocation6 + $0x1570] sm:$0xff]
    %v1349 = vld [vmem:[#allocation6 + $0x1578] sm:$0xff]
    %v1350 = vld [vmem:[#allocation6 + $0x1580] sm:$0xff]
    %v1351 = vld [vmem:[#allocation6 + $0x1588] sm:$0xff]
    %v1352 = vld [vmem:[#allocation6 + $0x1590] sm:$0xff]
    %v1353 = vld [vmem:[#allocation6 + $0x1598] sm:$0xff]
    %v1354 = vld [vmem:[#allocation6 + $0x15a0] sm:$0xff]
    %v1355 = vld [vmem:[#allocation6 + $0x15a8] sm:$0xff]
    %v1356 = vld [vmem:[#allocation6 + $0x15b0] sm:$0xff]
    %v1357 = vld [vmem:[#allocation6 + $0x15b8] sm:$0xff]
    %v1358 = vld [vmem:[#allocation6 + $0x15c0] sm:$0xff]
    %v1359 = vld [vmem:[#allocation6 + $0x15c8] sm:$0xff]
    %v1360 = vld [vmem:[#allocation6 + $0x15d0] sm:$0xff]
    %v1361 = vld [vmem:[#allocation6 + $0x15d8] sm:$0xff]
    %v1362 = vld [vmem:[#allocation6 + $0x15e0] sm:$0xff]
    %v1363 = vld [vmem:[#allocation6 + $0x15e8] sm:$0xff]
    %v1364 = vld [vmem:[#allocation6 + $0x15f0] sm:$0xff]
    %v1365 = vld [vmem:[#allocation6 + $0x15f8] sm:$0xff]
    %v1366 = vld [vmem:[#allocation6 + $0x1600] sm:$0xff]
    %v1367 = vld [vmem:[#allocation6 + $0x1608] sm:$0xff]
    %v1368 = vld [vmem:[#allocation6 + $0x1610] sm:$0xff]
    %v1369 = vld [vmem:[#allocation6 + $0x1618] sm:$0xff]
    %v1370 = vld [vmem:[#allocation6 + $0x1620] sm:$0xff]
    %v1371 = vld [vmem:[#allocation6 + $0x1628] sm:$0xff]
    %v1372 = vld [vmem:[#allocation6 + $0x1630] sm:$0xff]
    %v1373 = vld [vmem:[#allocation6 + $0x1638] sm:$0xff]
    %v1374 = vld [vmem:[#allocation6 + $0x1640] sm:$0xff]
    %v1375 = vld [vmem:[#allocation6 + $0x1648] sm:$0xff]
    %v1376 = vld [vmem:[#allocation6 + $0x1650] sm:$0xff]
    %v1377 = vld [vmem:[#allocation6 + $0x1658] sm:$0xff]
    %v1378 = vld [vmem:[#allocation6 + $0x1660] sm:$0xff]
    %v1379 = vld [vmem:[#allocation6 + $0x1668] sm:$0xff]
    %v1380 = vld [vmem:[#allocation6 + $0x1670] sm:$0xff]
    %v1381 = vld [vmem:[#allocation6 + $0x1678] sm:$0xff]
    %v1382 = vld [vmem:[#allocation6 + $0x1680] sm:$0xff]
    %v1383 = vld [vmem:[#allocation6 + $0x1688] sm:$0xff]
    %v1384 = vld [vmem:[#allocation6 + $0x1690] sm:$0xff]
    %v1385 = vld [vmem:[#allocation6 + $0x1698] sm:$0xff]
    %v1386 = vld [vmem:[#allocation6 + $0x16a0] sm:$0xff]
    %v1387 = vld [vmem:[#allocation6 + $0x16a8] sm:$0xff]
    %v1388 = vld [vmem:[#allocation6 + $0x16b0] sm:$0xff]
    %v1389 = vld [vmem:[#allocation6 + $0x16b8] sm:$0xff]
    %v1390 = vld [vmem:[#allocation6 + $0x16c0] sm:$0xff]
    %v1391 = vld [vmem:[#allocation6 + $0x16c8] sm:$0xff]
    %v1392 = vld [vmem:[#allocation6 + $0x16d0] sm:$0xff]
    %v1393 = vld [vmem:[#allocation6 + $0x16d8] sm:$0xff]
    %v1394 = vld [vmem:[#allocation6 + $0x16e0] sm:$0xff]
    %v1395 = vld [vmem:[#allocation6 + $0x16e8] sm:$0xff]
    %v1396 = vld [vmem:[#allocation6 + $0x16f0] sm:$0xff]
    %v1397 = vld [vmem:[#allocation6 + $0x16f8] sm:$0xff]
    %v1398 = vld [vmem:[#allocation6 + $0x1700] sm:$0xff]
    %v1399 = vld [vmem:[#allocation6 + $0x1708] sm:$0xff]
    %v1400 = vld [vmem:[#allocation6 + $0x1710] sm:$0xff]
    %v1401 = vld [vmem:[#allocation6 + $0x1718] sm:$0xff]
    %v1402 = vld [vmem:[#allocation6 + $0x1720] sm:$0xff]
    %v1403 = vld [vmem:[#allocation6 + $0x1728] sm:$0xff]
    %v1404 = vld [vmem:[#allocation6 + $0x1730] sm:$0xff]
    %v1405 = vld [vmem:[#allocation6 + $0x1738] sm:$0xff]
    %v1406 = vld [vmem:[#allocation6 + $0x1740] sm:$0xff]
    %v1407 = vld [vmem:[#allocation6 + $0x1748] sm:$0xff]
    %v1408 = vld [vmem:[#allocation6 + $0x1750] sm:$0xff]
    %v1409 = vld [vmem:[#allocation6 + $0x1758] sm:$0xff]
    %v1410 = vld [vmem:[#allocation6 + $0x1760] sm:$0xff]
    %v1411 = vld [vmem:[#allocation6 + $0x1768] sm:$0xff]
    %v1412 = vld [vmem:[#allocation6 + $0x1770] sm:$0xff]
    %v1413 = vld [vmem:[#allocation6 + $0x1778] sm:$0xff]
    %v1414 = vld [vmem:[#allocation6 + $0x1780] sm:$0xff]
    %v1415 = vld [vmem:[#allocation6 + $0x1788] sm:$0xff]
    %v1416 = vld [vmem:[#allocation6 + $0x1790] sm:$0xff]
    %v1417 = vld [vmem:[#allocation6 + $0x1798] sm:$0xff]
    %v1418 = vld [vmem:[#allocation6 + $0x17a0] sm:$0xff]
    %v1419 = vld [vmem:[#allocation6 + $0x17a8] sm:$0xff]
    %v1420 = vld [vmem:[#allocation6 + $0x17b0] sm:$0xff]
    %v1421 = vld [vmem:[#allocation6 + $0x17b8] sm:$0xff]
    %v1422 = vld [vmem:[#allocation6 + $0x17c0] sm:$0xff]
    %v1423 = vld [vmem:[#allocation6 + $0x17c8] sm:$0xff]
    %v1424 = vld [vmem:[#allocation6 + $0x17d0] sm:$0xff]
    %v1425 = vld [vmem:[#allocation6 + $0x17d8] sm:$0xff]
    %v1426 = vld [vmem:[#allocation6 + $0x17e0] sm:$0xff]
    %v1427 = vld [vmem:[#allocation6 + $0x17e8] sm:$0xff]
    %v1428 = vld [vmem:[#allocation6 + $0x17f0] sm:$0xff]
    %v1429 = vld [vmem:[#allocation6 + $0x17f8] sm:$0xff]
    %v1430 = vld [vmem:[#allocation6 + $0x1800] sm:$0xff]
    %v1431 = vld [vmem:[#allocation6 + $0x1808] sm:$0xff]
    %v1432 = vld [vmem:[#allocation6 + $0x1810] sm:$0xff]
    %v1433 = vld [vmem:[#allocation6 + $0x1818] sm:$0xff]
    %v1434 = vld [vmem:[#allocation6 + $0x1820] sm:$0xff]
    %v1435 = vld [vmem:[#allocation6 + $0x1828] sm:$0xff]
    %v1436 = vld [vmem:[#allocation6 + $0x1830] sm:$0xff]
    %v1437 = vld [vmem:[#allocation6 + $0x1838] sm:$0xff]
    %v1438 = vld [vmem:[#allocation6 + $0x1840] sm:$0xff]
    %v1439 = vld [vmem:[#allocation6 + $0x1848] sm:$0xff]
    %v1440 = vld [vmem:[#allocation6 + $0x1850] sm:$0xff]
    %v1441 = vld [vmem:[#allocation6 + $0x1858] sm:$0xff]
    %v1442 = vld [vmem:[#allocation6 + $0x1860] sm:$0xff]
    %v1443 = vld [vmem:[#allocation6 + $0x1868] sm:$0xff]
    %v1444 = vld [vmem:[#allocation6 + $0x1870] sm:$0xff]
    %v1445 = vld [vmem:[#allocation6 + $0x1878] sm:$0xff]
    %v1446 = vld [vmem:[#allocation6 + $0x1880] sm:$0xff]
    %v1447 = vld [vmem:[#allocation6 + $0x1888] sm:$0xff]
    %v1448 = vld [vmem:[#allocation6 + $0x1890] sm:$0xff]
    %v1449 = vld [vmem:[#allocation6 + $0x1898] sm:$0xff]
    %v1450 = vld [vmem:[#allocation6 + $0x18a0] sm:$0xff]
    %v1451 = vld [vmem:[#allocation6 + $0x18a8] sm:$0xff]
    %v1452 = vld [vmem:[#allocation6 + $0x18b0] sm:$0xff]
    %v1453 = vld [vmem:[#allocation6 + $0x18b8] sm:$0xff]
    %v1454 = vld [vmem:[#allocation6 + $0x18c0] sm:$0xff]
    %v1455 = vld [vmem:[#allocation6 + $0x18c8] sm:$0xff]
    %v1456 = vld [vmem:[#allocation6 + $0x18d0] sm:$0xff]
    %v1457 = vld [vmem:[#allocation6 + $0x18d8] sm:$0xff]
    %v1458 = vld [vmem:[#allocation6 + $0x18e0] sm:$0xff]
    %v1459 = vld [vmem:[#allocation6 + $0x18e8] sm:$0xff]
    %v1460 = vld [vmem:[#allocation6 + $0x18f0] sm:$0xff]
    %v1461 = vld [vmem:[#allocation6 + $0x18f8] sm:$0xff]
    %v1462 = vld [vmem:[#allocation6 + $0x1900] sm:$0xff]
    %v1463 = vld [vmem:[#allocation6 + $0x1908] sm:$0xff]
    %v1464 = vld [vmem:[#allocation6 + $0x1910] sm:$0xff]
    %v1465 = vld [vmem:[#allocation6 + $0x1918] sm:$0xff]
    %v1466 = vld [vmem:[#allocation6 + $0x1920] sm:$0xff]
    %v1467 = vld [vmem:[#allocation6 + $0x1928] sm:$0xff]
    %v1468 = vld [vmem:[#allocation6 + $0x1930] sm:$0xff]
    %v1469 = vld [vmem:[#allocation6 + $0x1938] sm:$0xff]
    %v1470 = vld [vmem:[#allocation6 + $0x1940] sm:$0xff]
    %v1471 = vld [vmem:[#allocation6 + $0x1948] sm:$0xff]
    %v1472 = vld [vmem:[#allocation6 + $0x1950] sm:$0xff]
    %v1473 = vld [vmem:[#allocation6 + $0x1958] sm:$0xff]
    %v1474 = vld [vmem:[#allocation6 + $0x1960] sm:$0xff]
    %v1475 = vld [vmem:[#allocation6 + $0x1968] sm:$0xff]
    %v1476 = vld [vmem:[#allocation6 + $0x1970] sm:$0xff]
    %v1477 = vld [vmem:[#allocation6 + $0x1978] sm:$0xff]
    %v1478 = vld [vmem:[#allocation6 + $0x1980] sm:$0xff]
    %v1479 = vld [vmem:[#allocation6 + $0x1988] sm:$0xff]
    %v1480 = vld [vmem:[#allocation6 + $0x1990] sm:$0xff]
    %v1481 = vld [vmem:[#allocation6 + $0x1998] sm:$0xff]
    %v1482 = vld [vmem:[#allocation6 + $0x19a0] sm:$0xff]
    %v1483 = vld [vmem:[#allocation6 + $0x19a8] sm:$0xff]
    %v1484 = vld [vmem:[#allocation6 + $0x19b0] sm:$0xff]
    %v1485 = vld [vmem:[#allocation6 + $0x19b8] sm:$0xff]
    %v1486 = vld [vmem:[#allocation6 + $0x19c0] sm:$0xff]
    %v1487 = vld [vmem:[#allocation6 + $0x19c8] sm:$0xff]
    %v1488 = vld [vmem:[#allocation6 + $0x19d0] sm:$0xff]
    %v1489 = vld [vmem:[#allocation6 + $0x19d8] sm:$0xff]
    %v1490 = vld [vmem:[#allocation6 + $0x19e0] sm:$0xff]
    %v1491 = vld [vmem:[#allocation6 + $0x19e8] sm:$0xff]
    %v1492 = vld [vmem:[#allocation6 + $0x19f0] sm:$0xff]
    %v1493 = vld [vmem:[#allocation6 + $0x19f8] sm:$0xff]
    %v1494 = vld [vmem:[#allocation6 + $0x1a00] sm:$0xff]
    %v1495 = vld [vmem:[#allocation6 + $0x1a08] sm:$0xff]
    %v1496 = vld [vmem:[#allocation6 + $0x1a10] sm:$0xff]
    %v1497 = vld [vmem:[#allocation6 + $0x1a18] sm:$0xff]
    %v1498 = vld [vmem:[#allocation6 + $0x1a20] sm:$0xff]
    %v1499 = vld [vmem:[#allocation6 + $0x1a28] sm:$0xff]
    %v1500 = vld [vmem:[#allocation6 + $0x1a30] sm:$0xff]
    %v1501 = vld [vmem:[#allocation6 + $0x1a38] sm:$0xff]
    %v1502 = vld [vmem:[#allocation6 + $0x1a40] sm:$0xff]
    %v1503 = vld [vmem:[#allocation6 + $0x1a48] sm:$0xff]
    %v1504 = vld [vmem:[#allocation6 + $0x1a50] sm:$0xff]
    %v1505 = vld [vmem:[#allocation6 + $0x1a58] sm:$0xff]
    %v1506 = vld [vmem:[#allocation6 + $0x1a60] sm:$0xff]
    %v1507 = vld [vmem:[#allocation6 + $0x1a68] sm:$0xff]
    %v1508 = vld [vmem:[#allocation6 + $0x1a70] sm:$0xff]
    %v1509 = vld [vmem:[#allocation6 + $0x1a78] sm:$0xff]
    %v1510 = vld [vmem:[#allocation6 + $0x1a80] sm:$0xff]
    %v1511 = vld [vmem:[#allocation6 + $0x1a88] sm:$0xff]
    %v1512 = vld [vmem:[#allocation6 + $0x1a90] sm:$0xff]
    %v1513 = vld [vmem:[#allocation6 + $0x1a98] sm:$0xff]
    %v1514 = vld [vmem:[#allocation6 + $0x1aa0] sm:$0xff]
    %v1515 = vld [vmem:[#allocation6 + $0x1aa8] sm:$0xff]
    %v1516 = vld [vmem:[#allocation6 + $0x1ab0] sm:$0xff]
    %v1517 = vld [vmem:[#allocation6 + $0x1ab8] sm:$0xff]
    %v1518 = vld [vmem:[#allocation6 + $0x1ac0] sm:$0xff]
    %v1519 = vld [vmem:[#allocation6 + $0x1ac8] sm:$0xff]
    %v1520 = vld [vmem:[#allocation6 + $0x1ad0] sm:$0xff]
    %v1521 = vld [vmem:[#allocation6 + $0x1ad8] sm:$0xff]
    %v1522 = vld [vmem:[#allocation6 + $0x1ae0] sm:$0xff]
    %v1523 = vld [vmem:[#allocation6 + $0x1ae8] sm:$0xff]
    %v1524 = vld [vmem:[#allocation6 + $0x1af0] sm:$0xff]
    %v1525 = vld [vmem:[#allocation6 + $0x1af8] sm:$0xff]
    %v1526 = vld [vmem:[#allocation6 + $0x1b00] sm:$0xff]
    %v1527 = vld [vmem:[#allocation6 + $0x1b08] sm:$0xff]
    %v1528 = vld [vmem:[#allocation6 + $0x1b10] sm:$0xff]
    %v1529 = vld [vmem:[#allocation6 + $0x1b18] sm:$0xff]
    %v1530 = vld [vmem:[#allocation6 + $0x1b20] sm:$0xff]
    %v1531 = vld [vmem:[#allocation6 + $0x1b28] sm:$0xff]
    %v1532 = vld [vmem:[#allocation6 + $0x1b30] sm:$0xff]
    %v1533 = vld [vmem:[#allocation6 + $0x1b38] sm:$0xff]
    %v1534 = vld [vmem:[#allocation6 + $0x1b40] sm:$0xff]
    %v1535 = vld [vmem:[#allocation6 + $0x1b48] sm:$0xff]
    %v1536 = vld [vmem:[#allocation6 + $0x1b50] sm:$0xff]
    %v1537 = vld [vmem:[#allocation6 + $0x1b58] sm:$0xff]
    %v1538 = vld [vmem:[#allocation6 + $0x1b60] sm:$0xff]
    %v1539 = vld [vmem:[#allocation6 + $0x1b68] sm:$0xff]
    %v1540 = vld [vmem:[#allocation6 + $0x1b70] sm:$0xff]
    %v1541 = vld [vmem:[#allocation6 + $0x1b78] sm:$0xff]
    %v1542 = vld [vmem:[#allocation6 + $0x1b80] sm:$0xff]
    %v1543 = vld [vmem:[#allocation6 + $0x1b88] sm:$0xff]
    %v1544 = vld [vmem:[#allocation6 + $0x1b90] sm:$0xff]
    %v1545 = vld [vmem:[#allocation6 + $0x1b98] sm:$0xff]
    %v1546 = vld [vmem:[#allocation6 + $0x1ba0] sm:$0xff]
    %v1547 = vld [vmem:[#allocation6 + $0x1ba8] sm:$0xff]
    %v1548 = vld [vmem:[#allocation6 + $0x1bb0] sm:$0xff]
    %v1549 = vld [vmem:[#allocation6 + $0x1bb8] sm:$0xff]
    %v1550 = vld [vmem:[#allocation6 + $0x1bc0] sm:$0xff]
    %v1551 = vld [vmem:[#allocation6 + $0x1bc8] sm:$0xff]
    %v1552 = vld [vmem:[#allocation6 + $0x1bd0] sm:$0xff]
    %v1553 = vld [vmem:[#allocation6 + $0x1bd8] sm:$0xff]
    %v1554 = vld [vmem:[#allocation6 + $0x1be0] sm:$0xff]
    %v1555 = vld [vmem:[#allocation6 + $0x1be8] sm:$0xff]
    %v1556 = vld [vmem:[#allocation6 + $0x1bf0] sm:$0xff]
    %v1557 = vld [vmem:[#allocation6 + $0x1bf8] sm:$0xff]
    %v1558 = vld [vmem:[#allocation6 + $0x1c00] sm:$0xff]
    %v1559 = vld [vmem:[#allocation6 + $0x1c08] sm:$0xff]
    %v1560 = vld [vmem:[#allocation6 + $0x1c10] sm:$0xff]
    %v1561 = vld [vmem:[#allocation6 + $0x1c18] sm:$0xff]
    %v1562 = vld [vmem:[#allocation6 + $0x1c20] sm:$0xff]
    %v1563 = vld [vmem:[#allocation6 + $0x1c28] sm:$0xff]
    %v1564 = vld [vmem:[#allocation6 + $0x1c30] sm:$0xff]
    %v1565 = vld [vmem:[#allocation6 + $0x1c38] sm:$0xff]
    %v1566 = vld [vmem:[#allocation6 + $0x1c40] sm:$0xff]
    %v1567 = vld [vmem:[#allocation6 + $0x1c48] sm:$0xff]
    %v1568 = vld [vmem:[#allocation6 + $0x1c50] sm:$0xff]
    %v1569 = vld [vmem:[#allocation6 + $0x1c58] sm:$0xff]
    %v1570 = vld [vmem:[#allocation6 + $0x1c60] sm:$0xff]
    %v1571 = vld [vmem:[#allocation6 + $0x1c68] sm:$0xff]
    %v1572 = vld [vmem:[#allocation6 + $0x1c70] sm:$0xff]
    %v1573 = vld [vmem:[#allocation6 + $0x1c78] sm:$0xff]
    %v1574 = vld [vmem:[#allocation6 + $0x1c80] sm:$0xff]
    %v1575 = vld [vmem:[#allocation6 + $0x1c88] sm:$0xff]
    %v1576 = vld [vmem:[#allocation6 + $0x1c90] sm:$0xff]
    %v1577 = vld [vmem:[#allocation6 + $0x1c98] sm:$0xff]
    %v1578 = vld [vmem:[#allocation6 + $0x1ca0] sm:$0xff]
    %v1579 = vld [vmem:[#allocation6 + $0x1ca8] sm:$0xff]
    %v1580 = vld [vmem:[#allocation6 + $0x1cb0] sm:$0xff]
    %v1581 = vld [vmem:[#allocation6 + $0x1cb8] sm:$0xff]
    %v1582 = vld [vmem:[#allocation6 + $0x1cc0] sm:$0xff]
    %v1583 = vld [vmem:[#allocation6 + $0x1cc8] sm:$0xff]
    %v1584 = vld [vmem:[#allocation6 + $0x1cd0] sm:$0xff]
    %v1585 = vld [vmem:[#allocation6 + $0x1cd8] sm:$0xff]
    %v1586 = vld [vmem:[#allocation6 + $0x1ce0] sm:$0xff]
    %v1587 = vld [vmem:[#allocation6 + $0x1ce8] sm:$0xff]
    %v1588 = vld [vmem:[#allocation6 + $0x1cf0] sm:$0xff]
    %v1589 = vld [vmem:[#allocation6 + $0x1cf8] sm:$0xff]
    %v1590 = vld [vmem:[#allocation6 + $0x1d00] sm:$0xff]
    %v1591 = vld [vmem:[#allocation6 + $0x1d08] sm:$0xff]
    %v1592 = vld [vmem:[#allocation6 + $0x1d10] sm:$0xff]
    %v1593 = vld [vmem:[#allocation6 + $0x1d18] sm:$0xff]
    %v1594 = vld [vmem:[#allocation6 + $0x1d20] sm:$0xff]
    %v1595 = vld [vmem:[#allocation6 + $0x1d28] sm:$0xff]
    %v1596 = vld [vmem:[#allocation6 + $0x1d30] sm:$0xff]
    %v1597 = vld [vmem:[#allocation6 + $0x1d38] sm:$0xff]
    %v1598 = vld [vmem:[#allocation6 + $0x1d40] sm:$0xff]
    %v1599 = vld [vmem:[#allocation6 + $0x1d48] sm:$0xff]
    %v1600 = vld [vmem:[#allocation6 + $0x1d50] sm:$0xff]
    %v1601 = vld [vmem:[#allocation6 + $0x1d58] sm:$0xff]
    %v1602 = vld [vmem:[#allocation6 + $0x1d60] sm:$0xff]
    %v1603 = vld [vmem:[#allocation6 + $0x1d68] sm:$0xff]
    %v1604 = vld [vmem:[#allocation6 + $0x1d70] sm:$0xff]
    %v1605 = vld [vmem:[#allocation6 + $0x1d78] sm:$0xff]
    %v1606 = vld [vmem:[#allocation6 + $0x1d80] sm:$0xff]
    %v1607 = vld [vmem:[#allocation6 + $0x1d88] sm:$0xff]
    %v1608 = vld [vmem:[#allocation6 + $0x1d90] sm:$0xff]
    %v1609 = vld [vmem:[#allocation6 + $0x1d98] sm:$0xff]
    %v1610 = vld [vmem:[#allocation6 + $0x1da0] sm:$0xff]
    %v1611 = vld [vmem:[#allocation6 + $0x1da8] sm:$0xff]
    %v1612 = vld [vmem:[#allocation6 + $0x1db0] sm:$0xff]
    %v1613 = vld [vmem:[#allocation6 + $0x1db8] sm:$0xff]
    %v1614 = vld [vmem:[#allocation6 + $0x1dc0] sm:$0xff]
    %v1615 = vld [vmem:[#allocation6 + $0x1dc8] sm:$0xff]
    %v1616 = vld [vmem:[#allocation6 + $0x1dd0] sm:$0xff]
    %v1617 = vld [vmem:[#allocation6 + $0x1dd8] sm:$0xff]
    %v1618 = vld [vmem:[#allocation6 + $0x1de0] sm:$0xff]
    %v1619 = vld [vmem:[#allocation6 + $0x1de8] sm:$0xff]
    %v1620 = vld [vmem:[#allocation6 + $0x1df0] sm:$0xff]
    %v1621 = vld [vmem:[#allocation6 + $0x1df8] sm:$0xff]
    %v1622 = vld [vmem:[#allocation6 + $0x1e00] sm:$0xff]
    %v1623 = vld [vmem:[#allocation6 + $0x1e08] sm:$0xff]
    %v1624 = vld [vmem:[#allocation6 + $0x1e10] sm:$0xff]
    %v1625 = vld [vmem:[#allocation6 + $0x1e18] sm:$0xff]
    %v1626 = vld [vmem:[#allocation6 + $0x1e20] sm:$0xff]
    %v1627 = vld [vmem:[#allocation6 + $0x1e28] sm:$0xff]
    %v1628 = vld [vmem:[#allocation6 + $0x1e30] sm:$0xff]
    %v1629 = vld [vmem:[#allocation6 + $0x1e38] sm:$0xff]
    %v1630 = vld [vmem:[#allocation6 + $0x1e40] sm:$0xff]
    %v1631 = vld [vmem:[#allocation6 + $0x1e48] sm:$0xff]
    %v1632 = vld [vmem:[#allocation6 + $0x1e50] sm:$0xff]
    %v1633 = vld [vmem:[#allocation6 + $0x1e58] sm:$0xff]
    %v1634 = vld [vmem:[#allocation6 + $0x1e60] sm:$0xff]
    %v1635 = vld [vmem:[#allocation6 + $0x1e68] sm:$0xff]
    %v1636 = vld [vmem:[#allocation6 + $0x1e70] sm:$0xff]
    %v1637 = vld [vmem:[#allocation6 + $0x1e78] sm:$0xff]
    %v1638 = vld [vmem:[#allocation6 + $0x1e80] sm:$0xff]
    %v1639 = vld [vmem:[#allocation6 + $0x1e88] sm:$0xff]
    %v1640 = vld [vmem:[#allocation6 + $0x1e90] sm:$0xff]
    %v1641 = vld [vmem:[#allocation6 + $0x1e98] sm:$0xff]
    %v1642 = vld [vmem:[#allocation6 + $0x1ea0] sm:$0xff]
    %v1643 = vld [vmem:[#allocation6 + $0x1ea8] sm:$0xff]
    %v1644 = vld [vmem:[#allocation6 + $0x1eb0] sm:$0xff]
    %v1645 = vld [vmem:[#allocation6 + $0x1eb8] sm:$0xff]
    %v1646 = vld [vmem:[#allocation6 + $0x1ec0] sm:$0xff]
    %v1647 = vld [vmem:[#allocation6 + $0x1ec8] sm:$0xff]
    %v1648 = vld [vmem:[#allocation6 + $0x1ed0] sm:$0xff]
    %v1649 = vld [vmem:[#allocation6 + $0x1ed8] sm:$0xff]
    %v1650 = vld [vmem:[#allocation6 + $0x1ee0] sm:$0xff]
    %v1651 = vld [vmem:[#allocation6 + $0x1ee8] sm:$0xff]
    %v1652 = vld [vmem:[#allocation6 + $0x1ef0] sm:$0xff]
    %v1653 = vld [vmem:[#allocation6 + $0x1ef8] sm:$0xff]
    %v1654 = vld [vmem:[#allocation6 + $0x1f00] sm:$0xff]
    %v1655 = vld [vmem:[#allocation6 + $0x1f08] sm:$0xff]
    %v1656 = vld [vmem:[#allocation6 + $0x1f10] sm:$0xff]
    %v1657 = vld [vmem:[#allocation6 + $0x1f18] sm:$0xff]
    %v1658 = vld [vmem:[#allocation6 + $0x1f20] sm:$0xff]
    %v1659 = vld [vmem:[#allocation6 + $0x1f28] sm:$0xff]
    %v1660 = vld [vmem:[#allocation6 + $0x1f30] sm:$0xff]
    %v1661 = vld [vmem:[#allocation6 + $0x1f38] sm:$0xff]
    %v1662 = vld [vmem:[#allocation6 + $0x1f40] sm:$0xff]
    %v1663 = vld [vmem:[#allocation6 + $0x1f48] sm:$0xff]
    %v1664 = vld [vmem:[#allocation6 + $0x1f50] sm:$0xff]
    %v1665 = vld [vmem:[#allocation6 + $0x1f58] sm:$0xff]
    %v1666 = vld [vmem:[#allocation6 + $0x1f60] sm:$0xff]
    %v1667 = vld [vmem:[#allocation6 + $0x1f68] sm:$0xff]
    %v1668 = vld [vmem:[#allocation6 + $0x1f70] sm:$0xff]
    %v1669 = vld [vmem:[#allocation6 + $0x1f78] sm:$0xff]
    %v1670 = vld [vmem:[#allocation6 + $0x1f80] sm:$0xff]
    %v1671 = vld [vmem:[#allocation6 + $0x1f88] sm:$0xff]
    %v1672 = vld [vmem:[#allocation6 + $0x1f90] sm:$0xff]
    %v1673 = vld [vmem:[#allocation6 + $0x1f98] sm:$0xff]
    %v1674 = vld [vmem:[#allocation6 + $0x1fa0] sm:$0xff]
    %v1675 = vld [vmem:[#allocation6 + $0x1fa8] sm:$0xff]
    %v1676 = vld [vmem:[#allocation6 + $0x1fb0] sm:$0xff]
    %v1677 = vld [vmem:[#allocation6 + $0x1fb8] sm:$0xff]
    %v1678 = vld [vmem:[#allocation6 + $0x1fc0] sm:$0xff]
    %v1679 = vld [vmem:[#allocation6 + $0x1fc8] sm:$0xff]
    %v1680 = vld [vmem:[#allocation6 + $0x1fd0] sm:$0xff]
    %v1681 = vld [vmem:[#allocation6 + $0x1fd8] sm:$0xff]
    %v1682 = vld [vmem:[#allocation6 + $0x1fe0] sm:$0xff]
    %v1683 = vld [vmem:[#allocation6 + $0x1fe8] sm:$0xff]
    %v1684 = vld [vmem:[#allocation6 + $0x1ff0] sm:$0xff]
    %v1685 = vld [vmem:[#allocation6 + $0x1ff8] sm:$0xff]
    %v1686 = vld [vmem:[#allocation6 + $0x2000] sm:$0xff]
    %v1687 = vld [vmem:[#allocation6 + $0x2008] sm:$0xff]
    %v1688 = vld [vmem:[#allocation6 + $0x2010] sm:$0xff]
    %v1689 = vld [vmem:[#allocation6 + $0x2018] sm:$0xff]
    %v1690 = vld [vmem:[#allocation6 + $0x2020] sm:$0xff]
    %v1691 = vld [vmem:[#allocation6 + $0x2028] sm:$0xff]
    %v1692 = vld [vmem:[#allocation6 + $0x2030] sm:$0xff]
    %v1693 = vld [vmem:[#allocation6 + $0x2038] sm:$0xff]
    %v1694 = vld [vmem:[#allocation6 + $0x2040] sm:$0xff]
    %v1695 = vld [vmem:[#allocation6 + $0x2048] sm:$0xff]
    %v1696 = vld [vmem:[#allocation6 + $0x2050] sm:$0xff]
    %v1697 = vld [vmem:[#allocation6 + $0x2058] sm:$0xff]
    %v1698 = vld [vmem:[#allocation6 + $0x2060] sm:$0xff]
    %v1699 = vld [vmem:[#allocation6 + $0x2068] sm:$0xff]
    %v1700 = vld [vmem:[#allocation6 + $0x2070] sm:$0xff]
    %v1701 = vld [vmem:[#allocation6 + $0x2078] sm:$0xff]
    %v1702 = vld [vmem:[#allocation6 + $0x2080] sm:$0xff]
    %v1703 = vld [vmem:[#allocation6 + $0x2088] sm:$0xff]
    %v1704 = vld [vmem:[#allocation6 + $0x2090] sm:$0xff]
    %v1705 = vld [vmem:[#allocation6 + $0x2098] sm:$0xff]
    %v1706 = vld [vmem:[#allocation6 + $0x20a0] sm:$0xff]
    %v1707 = vld [vmem:[#allocation6 + $0x20a8] sm:$0xff]
    %v1708 = vld [vmem:[#allocation6 + $0x20b0] sm:$0xff]
    %v1709 = vld [vmem:[#allocation6 + $0x20b8] sm:$0xff]
    %v1710 = vld [vmem:[#allocation6 + $0x20c0] sm:$0xff]
    %v1711 = vld [vmem:[#allocation6 + $0x20c8] sm:$0xff]
    %v1712 = vld [vmem:[#allocation6 + $0x20d0] sm:$0xff]
    %v1713 = vld [vmem:[#allocation6 + $0x20d8] sm:$0xff]
    %v1714 = vld [vmem:[#allocation6 + $0x20e0] sm:$0xff]
    %v1715 = vld [vmem:[#allocation6 + $0x20e8] sm:$0xff]
    %v1716 = vld [vmem:[#allocation6 + $0x20f0] sm:$0xff]
    %v1717 = vld [vmem:[#allocation6 + $0x20f8] sm:$0xff]
    %v1718 = vld [vmem:[#allocation6 + $0x2100] sm:$0xff]
    %v1719 = vld [vmem:[#allocation6 + $0x2108] sm:$0xff]
    %v1720 = vld [vmem:[#allocation6 + $0x2110] sm:$0xff]
    %v1721 = vld [vmem:[#allocation6 + $0x2118] sm:$0xff]
    %v1722 = vld [vmem:[#allocation6 + $0x2120] sm:$0xff]
    %v1723 = vld [vmem:[#allocation6 + $0x2128] sm:$0xff]
    %v1724 = vld [vmem:[#allocation6 + $0x2130] sm:$0xff]
    %v1725 = vld [vmem:[#allocation6 + $0x2138] sm:$0xff]
    %v1726 = vld [vmem:[#allocation6 + $0x2140] sm:$0xff]
    %v1727 = vld [vmem:[#allocation6 + $0x2148] sm:$0xff]
    %v1728 = vld [vmem:[#allocation6 + $0x2150] sm:$0xff]
    %v1729 = vld [vmem:[#allocation6 + $0x2158] sm:$0xff]
    %v1730 = vld [vmem:[#allocation6 + $0x2160] sm:$0xff]
    %v1731 = vld [vmem:[#allocation6 + $0x2168] sm:$0xff]
    %v1732 = vld [vmem:[#allocation6 + $0x2170] sm:$0xff]
    %v1733 = vld [vmem:[#allocation6 + $0x2178] sm:$0xff]
    %v1734 = vld [vmem:[#allocation6 + $0x2180] sm:$0xff]
    %v1735 = vld [vmem:[#allocation6 + $0x2188] sm:$0xff]
    %v1736 = vld [vmem:[#allocation6 + $0x2190] sm:$0xff]
    %v1737 = vld [vmem:[#allocation6 + $0x2198] sm:$0xff]
    %v1738 = vld [vmem:[#allocation6 + $0x21a0] sm:$0xff]
    %v1739 = vld [vmem:[#allocation6 + $0x21a8] sm:$0xff]
    %v1740 = vld [vmem:[#allocation6 + $0x21b0] sm:$0xff]
    %v1741 = vld [vmem:[#allocation6 + $0x21b8] sm:$0xff]
    %v1742 = vld [vmem:[#allocation6 + $0x21c0] sm:$0xff]
    %v1743 = vld [vmem:[#allocation6 + $0x21c8] sm:$0xff]
    %v1744 = vld [vmem:[#allocation6 + $0x21d0] sm:$0xff]
    %v1745 = vld [vmem:[#allocation6 + $0x21d8] sm:$0xff]
    %v1746 = vld [vmem:[#allocation6 + $0x21e0] sm:$0xff]
    %v1747 = vld [vmem:[#allocation6 + $0x21e8] sm:$0xff]
    %v1748 = vld [vmem:[#allocation6 + $0x21f0] sm:$0xff]
    %v1749 = vld [vmem:[#allocation6 + $0x21f8] sm:$0xff]
    %v1750 = vld [vmem:[#allocation6 + $0x2200] sm:$0xff]
    %v1751 = vld [vmem:[#allocation6 + $0x2208] sm:$0xff]
    %v1752 = vld [vmem:[#allocation6 + $0x2210] sm:$0xff]
    %v1753 = vld [vmem:[#allocation6 + $0x2218] sm:$0xff]
    %v1754 = vld [vmem:[#allocation6 + $0x2220] sm:$0xff]
    %v1755 = vld [vmem:[#allocation6 + $0x2228] sm:$0xff]
    %v1756 = vld [vmem:[#allocation6 + $0x2230] sm:$0xff]
    %v1757 = vld [vmem:[#allocation6 + $0x2238] sm:$0xff]
    %v1758 = vld [vmem:[#allocation6 + $0x2240] sm:$0xff]
    %v1759 = vld [vmem:[#allocation6 + $0x2248] sm:$0xff]
    %v1760 = vld [vmem:[#allocation6 + $0x2250] sm:$0xff]
    %v1761 = vld [vmem:[#allocation6 + $0x2258] sm:$0xff]
    %v1762 = vld [vmem:[#allocation6 + $0x2260] sm:$0xff]
    %v1763 = vld [vmem:[#allocation6 + $0x2268] sm:$0xff]
    %v1764 = vld [vmem:[#allocation6 + $0x2270] sm:$0xff]
    %v1765 = vld [vmem:[#allocation6 + $0x2278] sm:$0xff]
    %v1766 = vld [vmem:[#allocation6 + $0x2280] sm:$0xff]
    %v1767 = vld [vmem:[#allocation6 + $0x2288] sm:$0xff]
    %v1768 = vld [vmem:[#allocation6 + $0x2290] sm:$0xff]
    %v1769 = vld [vmem:[#allocation6 + $0x2298] sm:$0xff]
    %v1770 = vld [vmem:[#allocation6 + $0x22a0] sm:$0xff]
    %v1771 = vld [vmem:[#allocation6 + $0x22a8] sm:$0xff]
    %v1772 = vld [vmem:[#allocation6 + $0x22b0] sm:$0xff]
    %v1773 = vld [vmem:[#allocation6 + $0x22b8] sm:$0xff]
    %v1774 = vld [vmem:[#allocation6 + $0x22c0] sm:$0xff]
    %v1775 = vld [vmem:[#allocation6 + $0x22c8] sm:$0xff]
    %v1776 = vld [vmem:[#allocation6 + $0x22d0] sm:$0xff]
    %v1777 = vld [vmem:[#allocation6 + $0x22d8] sm:$0xff]
    %v1778 = vld [vmem:[#allocation6 + $0x22e0] sm:$0xff]
    %v1779 = vld [vmem:[#allocation6 + $0x22e8] sm:$0xff]
    %v1780 = vld [vmem:[#allocation6 + $0x22f0] sm:$0xff]
    %v1781 = vld [vmem:[#allocation6 + $0x22f8] sm:$0xff]
    %v1782 = vld [vmem:[#allocation6 + $0x2300] sm:$0xff]
    %v1783 = vld [vmem:[#allocation6 + $0x2308] sm:$0xff]
    %v1784 = vld [vmem:[#allocation6 + $0x2310] sm:$0xff]
    %v1785 = vld [vmem:[#allocation6 + $0x2318] sm:$0xff]
    %v1786 = vld [vmem:[#allocation6 + $0x2320] sm:$0xff]
    %v1787 = vld [vmem:[#allocation6 + $0x2328] sm:$0xff]
    %v1788 = vld [vmem:[#allocation6 + $0x2330] sm:$0xff]
    %v1789 = vld [vmem:[#allocation6 + $0x2338] sm:$0xff]
    %v1790 = vld [vmem:[#allocation6 + $0x2340] sm:$0xff]
    %v1791 = vld [vmem:[#allocation6 + $0x2348] sm:$0xff]
    %v1792 = vld [vmem:[#allocation6 + $0x2350] sm:$0xff]
    %v1793 = vld [vmem:[#allocation6 + $0x2358] sm:$0xff]
    %v1794 = vld [vmem:[#allocation6 + $0x2360] sm:$0xff]
    %v1795 = vld [vmem:[#allocation6 + $0x2368] sm:$0xff]
    %v1796 = vld [vmem:[#allocation6 + $0x2370] sm:$0xff]
    %v1797 = vld [vmem:[#allocation6 + $0x2378] sm:$0xff]
    %v1798 = vld [vmem:[#allocation6 + $0x2380] sm:$0xff]
    %v1799 = vld [vmem:[#allocation6 + $0x2388] sm:$0xff]
    %v1800 = vld [vmem:[#allocation6 + $0x2390] sm:$0xff]
    %v1801 = vld [vmem:[#allocation6 + $0x2398] sm:$0xff]
    %v1802 = vld [vmem:[#allocation6 + $0x23a0] sm:$0xff]
    %v1803 = vld [vmem:[#allocation6 + $0x23a8] sm:$0xff]
    %v1804 = vld [vmem:[#allocation6 + $0x23b0] sm:$0xff]
    %v1805 = vld [vmem:[#allocation6 + $0x23b8] sm:$0xff]
    %v1806 = vld [vmem:[#allocation6 + $0x23c0] sm:$0xff]
    %v1807 = vld [vmem:[#allocation6 + $0x23c8] sm:$0xff]
    %v1808 = vld [vmem:[#allocation6 + $0x23d0] sm:$0xff]
    %v1809 = vld [vmem:[#allocation6 + $0x23d8] sm:$0xff]
    %v1810 = vld [vmem:[#allocation6 + $0x23e0] sm:$0xff]
    %v1811 = vld [vmem:[#allocation6 + $0x23e8] sm:$0xff]
    %v1812 = vld [vmem:[#allocation6 + $0x23f0] sm:$0xff]
    %v1813 = vld [vmem:[#allocation6 + $0x23f8] sm:$0xff]
    %v1814 = vld [vmem:[#allocation6 + $0x2400] sm:$0xff]
    %v1815 = vld [vmem:[#allocation6 + $0x2408] sm:$0xff]
    %v1816 = vld [vmem:[#allocation6 + $0x2410] sm:$0xff]
    %v1817 = vld [vmem:[#allocation6 + $0x2418] sm:$0xff]
    %v1818 = vld [vmem:[#allocation6 + $0x2420] sm:$0xff]
    %v1819 = vld [vmem:[#allocation6 + $0x2428] sm:$0xff]
    %v1820 = vld [vmem:[#allocation6 + $0x2430] sm:$0xff]
    %v1821 = vld [vmem:[#allocation6 + $0x2438] sm:$0xff]
    %v1822 = vld [vmem:[#allocation6 + $0x2440] sm:$0xff]
    %v1823 = vld [vmem:[#allocation6 + $0x2448] sm:$0xff]
    %v1824 = vld [vmem:[#allocation6 + $0x2450] sm:$0xff]
    %v1825 = vld [vmem:[#allocation6 + $0x2458] sm:$0xff]
    %v1826 = vld [vmem:[#allocation6 + $0x2460] sm:$0xff]
    %v1827 = vld [vmem:[#allocation6 + $0x2468] sm:$0xff]
    %v1828 = vld [vmem:[#allocation6 + $0x2470] sm:$0xff]
    %v1829 = vld [vmem:[#allocation6 + $0x2478] sm:$0xff]
    %v1830 = vld [vmem:[#allocation6 + $0x2480] sm:$0xff]
    %v1831 = vld [vmem:[#allocation6 + $0x2488] sm:$0xff]
    %v1832 = vld [vmem:[#allocation6 + $0x2490] sm:$0xff]
    %v1833 = vld [vmem:[#allocation6 + $0x2498] sm:$0xff]
    %v1834 = vld [vmem:[#allocation6 + $0x24a0] sm:$0xff]
    %v1835 = vld [vmem:[#allocation6 + $0x24a8] sm:$0xff]
    %v1836 = vld [vmem:[#allocation6 + $0x24b0] sm:$0xff]
    %v1837 = vld [vmem:[#allocation6 + $0x24b8] sm:$0xff]
    %v1838 = vld [vmem:[#allocation6 + $0x24c0] sm:$0xff]
    %v1839 = vld [vmem:[#allocation6 + $0x24c8] sm:$0xff]
    %v1840 = vld [vmem:[#allocation6 + $0x24d0] sm:$0xff]
    %v1841 = vld [vmem:[#allocation6 + $0x24d8] sm:$0xff]
    %v1842 = vld [vmem:[#allocation6 + $0x24e0] sm:$0xff]
    %v1843 = vld [vmem:[#allocation6 + $0x24e8] sm:$0xff]
    %v1844 = vld [vmem:[#allocation6 + $0x24f0] sm:$0xff]
    %v1845 = vld [vmem:[#allocation6 + $0x24f8] sm:$0xff]
    %v1846 = vld [vmem:[#allocation6 + $0x2500] sm:$0xff]
    %v1847 = vld [vmem:[#allocation6 + $0x2508] sm:$0xff]
    %v1848 = vld [vmem:[#allocation6 + $0x2510] sm:$0xff]
    %v1849 = vld [vmem:[#allocation6 + $0x2518] sm:$0xff]
    %v1850 = vld [vmem:[#allocation6 + $0x2520] sm:$0xff]
    %v1851 = vld [vmem:[#allocation6 + $0x2528] sm:$0xff]
    %v1852 = vld [vmem:[#allocation6 + $0x2530] sm:$0xff]
    %v1853 = vld [vmem:[#allocation6 + $0x2538] sm:$0xff]
    %v1854 = vld [vmem:[#allocation6 + $0x2540] sm:$0xff]
    %v1855 = vld [vmem:[#allocation6 + $0x2548] sm:$0xff]
    %v1856 = vld [vmem:[#allocation6 + $0x2550] sm:$0xff]
    %v1857 = vld [vmem:[#allocation6 + $0x2558] sm:$0xff]
    %v1858 = vld [vmem:[#allocation6 + $0x2560] sm:$0xff]
    %v1859 = vld [vmem:[#allocation6 + $0x2568] sm:$0xff]
    %v1860 = vld [vmem:[#allocation6 + $0x2570] sm:$0xff]
    %v1861 = vld [vmem:[#allocation6 + $0x2578] sm:$0xff]
    %v1862 = vld [vmem:[#allocation6 + $0x2580] sm:$0xff]
    %v1863 = vld [vmem:[#allocation6 + $0x2588] sm:$0xff]
    %v1864 = vld [vmem:[#allocation6 + $0x2590] sm:$0xff]
    %v1865 = vld [vmem:[#allocation6 + $0x2598] sm:$0xff]
    %v1866 = vld [vmem:[#allocation6 + $0x25a0] sm:$0xff]
    %v1867 = vld [vmem:[#allocation6 + $0x25a8] sm:$0xff]
    %v1868 = vld [vmem:[#allocation6 + $0x25b0] sm:$0xff]
    %v1869 = vld [vmem:[#allocation6 + $0x25b8] sm:$0xff]
    %v1870 = vld [vmem:[#allocation6 + $0x25c0] sm:$0xff]
    %v1871 = vld [vmem:[#allocation6 + $0x25c8] sm:$0xff]
    %v1872 = vld [vmem:[#allocation6 + $0x25d0] sm:$0xff]
    %v1873 = vld [vmem:[#allocation6 + $0x25d8] sm:$0xff]
    %v1874 = vld [vmem:[#allocation6 + $0x25e0] sm:$0xff]
    %v1875 = vld [vmem:[#allocation6 + $0x25e8] sm:$0xff]
    %v1876 = vld [vmem:[#allocation6 + $0x25f0] sm:$0xff]
    %v1877 = vld [vmem:[#allocation6 + $0x25f8] sm:$0xff]
    %v1878 = vld [vmem:[#allocation6 + $0x2600] sm:$0xff]
    %v1879 = vld [vmem:[#allocation6 + $0x2608] sm:$0xff]
    %v1880 = vld [vmem:[#allocation6 + $0x2610] sm:$0xff]
    %v1881 = vld [vmem:[#allocation6 + $0x2618] sm:$0xff]
    %v1882 = vld [vmem:[#allocation6 + $0x2620] sm:$0xff]
    %v1883 = vld [vmem:[#allocation6 + $0x2628] sm:$0xff]
    %v1884 = vld [vmem:[#allocation6 + $0x2630] sm:$0xff]
    %v1885 = vld [vmem:[#allocation6 + $0x2638] sm:$0xff]
    %v1886 = vld [vmem:[#allocation6 + $0x2640] sm:$0xff]
    %v1887 = vld [vmem:[#allocation6 + $0x2648] sm:$0xff]
    %v1888 = vld [vmem:[#allocation6 + $0x2650] sm:$0xff]
    %v1889 = vld [vmem:[#allocation6 + $0x2658] sm:$0xff]
    %v1890 = vld [vmem:[#allocation6 + $0x2660] sm:$0xff]
    %v1891 = vld [vmem:[#allocation6 + $0x2668] sm:$0xff]
    %v1892 = vld [vmem:[#allocation6 + $0x2670] sm:$0xff]
    %v1893 = vld [vmem:[#allocation6 + $0x2678] sm:$0xff]
    %v1894 = vld [vmem:[#allocation6 + $0x2680] sm:$0xff]
    %v1895 = vld [vmem:[#allocation6 + $0x2688] sm:$0xff]
    %v1896 = vld [vmem:[#allocation6 + $0x2690] sm:$0xff]
    %v1897 = vld [vmem:[#allocation6 + $0x2698] sm:$0xff]
    %v1898 = vld [vmem:[#allocation6 + $0x26a0] sm:$0xff]
    %v1899 = vld [vmem:[#allocation6 + $0x26a8] sm:$0xff]
    %v1900 = vld [vmem:[#allocation6 + $0x26b0] sm:$0xff]
    %v1901 = vld [vmem:[#allocation6 + $0x26b8] sm:$0xff]
    %v1902 = vld [vmem:[#allocation6 + $0x26c0] sm:$0xff]
    %v1903 = vld [vmem:[#allocation6 + $0x26c8] sm:$0xff]
    %v1904 = vld [vmem:[#allocation6 + $0x26d0] sm:$0xff]
    %v1905 = vld [vmem:[#allocation6 + $0x26d8] sm:$0xff]
    %v1906 = vld [vmem:[#allocation6 + $0x26e0] sm:$0xff]
    %v1907 = vld [vmem:[#allocation6 + $0x26e8] sm:$0xff]
    %v1908 = vld [vmem:[#allocation6 + $0x26f0] sm:$0xff]
    %v1909 = vld [vmem:[#allocation6 + $0x26f8] sm:$0xff]
    %v1910 = vld [vmem:[#allocation6 + $0x2700] sm:$0xff]
    %v1911 = vld [vmem:[#allocation6 + $0x2708] sm:$0xff]
    %v1912 = vld [vmem:[#allocation6 + $0x2710] sm:$0xff]
    %v1913 = vld [vmem:[#allocation6 + $0x2718] sm:$0xff]
    %v1914 = vld [vmem:[#allocation6 + $0x2720] sm:$0xff]
    %v1915 = vld [vmem:[#allocation6 + $0x2728] sm:$0xff]
    %v1916 = vld [vmem:[#allocation6 + $0x2730] sm:$0xff]
    %v1917 = vld [vmem:[#allocation6 + $0x2738] sm:$0xff]
    %v1918 = vld [vmem:[#allocation6 + $0x2740] sm:$0xff]
    %v1919 = vld [vmem:[#allocation6 + $0x2748] sm:$0xff]
    %v1920 = vld [vmem:[#allocation6 + $0x2750] sm:$0xff]
    %v1921 = vld [vmem:[#allocation6 + $0x2758] sm:$0xff]
    %v1922 = vld [vmem:[#allocation6 + $0x2760] sm:$0xff]
    %v1923 = vld [vmem:[#allocation6 + $0x2768] sm:$0xff]
    %v1924 = vld [vmem:[#allocation6 + $0x2770] sm:$0xff]
    %v1925 = vld [vmem:[#allocation6 + $0x2778] sm:$0xff]
    %v1926 = vld [vmem:[#allocation6 + $0x2780] sm:$0xff]
    %v1927 = vld [vmem:[#allocation6 + $0x2788] sm:$0xff]
    %v1928 = vld [vmem:[#allocation6 + $0x2790] sm:$0xff]
    %v1929 = vld [vmem:[#allocation6 + $0x2798] sm:$0xff]
    %v1930 = vld [vmem:[#allocation6 + $0x27a0] sm:$0xff]
    %v1931 = vld [vmem:[#allocation6 + $0x27a8] sm:$0xff]
    %v1932 = vld [vmem:[#allocation6 + $0x27b0] sm:$0xff]
    %v1933 = vld [vmem:[#allocation6 + $0x27b8] sm:$0xff]
    %v1934 = vld [vmem:[#allocation6 + $0x27c0] sm:$0xff]
    %v1935 = vld [vmem:[#allocation6 + $0x27c8] sm:$0xff]
    %v1936 = vld [vmem:[#allocation6 + $0x27d0] sm:$0xff]
    %v1937 = vld [vmem:[#allocation6 + $0x27d8] sm:$0xff]
    %v1938 = vld [vmem:[#allocation6 + $0x27e0] sm:$0xff]
    %v1939 = vld [vmem:[#allocation6 + $0x27e8] sm:$0xff]
    %v1940 = vld [vmem:[#allocation6 + $0x27f0] sm:$0xff]
    %v1941 = vld [vmem:[#allocation6 + $0x27f8] sm:$0xff]
    %v1942 = vld [vmem:[#allocation6 + $0x2800] sm:$0xff]
    %v1943 = vld [vmem:[#allocation6 + $0x2808] sm:$0xff]
    %v1944 = vld [vmem:[#allocation6 + $0x2810] sm:$0xff]
    %v1945 = vld [vmem:[#allocation6 + $0x2818] sm:$0xff]
    %v1946 = vld [vmem:[#allocation6 + $0x2820] sm:$0xff]
    %v1947 = vld [vmem:[#allocation6 + $0x2828] sm:$0xff]
    %v1948 = vld [vmem:[#allocation6 + $0x2830] sm:$0xff]
    %v1949 = vld [vmem:[#allocation6 + $0x2838] sm:$0xff]
    %v1950 = vld [vmem:[#allocation6 + $0x2840] sm:$0xff]
    %v1951 = vld [vmem:[#allocation6 + $0x2848] sm:$0xff]
    %v1952 = vld [vmem:[#allocation6 + $0x2850] sm:$0xff]
    %v1953 = vld [vmem:[#allocation6 + $0x2858] sm:$0xff]
    %v1954 = vld [vmem:[#allocation6 + $0x2860] sm:$0xff]
    %v1955 = vld [vmem:[#allocation6 + $0x2868] sm:$0xff]
    %v1956 = vld [vmem:[#allocation6 + $0x2870] sm:$0xff]
    %v1957 = vld [vmem:[#allocation6 + $0x2878] sm:$0xff]
    %v1958 = vld [vmem:[#allocation6 + $0x2880] sm:$0xff]
    %v1959 = vld [vmem:[#allocation6 + $0x2888] sm:$0xff]
    %v1960 = vld [vmem:[#allocation6 + $0x2890] sm:$0xff]
    %v1961 = vld [vmem:[#allocation6 + $0x2898] sm:$0xff]
    %v1962 = vld [vmem:[#allocation6 + $0x28a0] sm:$0xff]
    %v1963 = vld [vmem:[#allocation6 + $0x28a8] sm:$0xff]
    %v1964 = vld [vmem:[#allocation6 + $0x28b0] sm:$0xff]
    %v1965 = vld [vmem:[#allocation6 + $0x28b8] sm:$0xff]
    %v1966 = vld [vmem:[#allocation6 + $0x28c0] sm:$0xff]
    %v1967 = vld [vmem:[#allocation6 + $0x28c8] sm:$0xff]
    %v1968 = vld [vmem:[#allocation6 + $0x28d0] sm:$0xff]
    %v1969 = vld [vmem:[#allocation6 + $0x28d8] sm:$0xff]
    %v1970 = vld [vmem:[#allocation6 + $0x28e0] sm:$0xff]
    %v1971 = vld [vmem:[#allocation6 + $0x28e8] sm:$0xff]
    %v1972 = vld [vmem:[#allocation6 + $0x28f0] sm:$0xff]
    %v1973 = vld [vmem:[#allocation6 + $0x28f8] sm:$0xff]
    %v1974 = vld [vmem:[#allocation6 + $0x2900] sm:$0xff]
    %v1975 = vld [vmem:[#allocation6 + $0x2908] sm:$0xff]
    %v1976 = vld [vmem:[#allocation6 + $0x2910] sm:$0xff]
    %v1977 = vld [vmem:[#allocation6 + $0x2918] sm:$0xff]
    %v1978 = vld [vmem:[#allocation6 + $0x2920] sm:$0xff]
    %v1979 = vld [vmem:[#allocation6 + $0x2928] sm:$0xff]
    %v1980 = vld [vmem:[#allocation6 + $0x2930] sm:$0xff]
    %v1981 = vld [vmem:[#allocation6 + $0x2938] sm:$0xff]
    %v1982 = vld [vmem:[#allocation6 + $0x2940] sm:$0xff]
    %v1983 = vld [vmem:[#allocation6 + $0x2948] sm:$0xff]
    %v1984 = vld [vmem:[#allocation6 + $0x2950] sm:$0xff]
    %v1985 = vld [vmem:[#allocation6 + $0x2958] sm:$0xff]
    %v1986 = vld [vmem:[#allocation6 + $0x2960] sm:$0xff]
    %v1987 = vld [vmem:[#allocation6 + $0x2968] sm:$0xff]
    %v1988 = vld [vmem:[#allocation6 + $0x2970] sm:$0xff]
    %v1989 = vld [vmem:[#allocation6 + $0x2978] sm:$0xff]
    %v1990 = vld [vmem:[#allocation6 + $0x2980] sm:$0xff]
    %v1991 = vld [vmem:[#allocation6 + $0x2988] sm:$0xff]
    %v1992 = vld [vmem:[#allocation6 + $0x2990] sm:$0xff]
    %v1993 = vld [vmem:[#allocation6 + $0x2998] sm:$0xff]
    %v1994 = vld [vmem:[#allocation6 + $0x29a0] sm:$0xff]
    %v1995 = vld [vmem:[#allocation6 + $0x29a8] sm:$0xff]
    %v1996 = vld [vmem:[#allocation6 + $0x29b0] sm:$0xff]
    %v1997 = vld [vmem:[#allocation6 + $0x29b8] sm:$0xff]
    %v1998 = vld [vmem:[#allocation6 + $0x29c0] sm:$0xff]
    %v1999 = vld [vmem:[#allocation6 + $0x29c8] sm:$0xff]
    %v2000 = vld [vmem:[#allocation6 + $0x29d0] sm:$0xff]
    %v2001 = vld [vmem:[#allocation6 + $0x29d8] sm:$0xff]
    %v2002 = vld [vmem:[#allocation6 + $0x29e0] sm:$0xff]
    %v2003 = vld [vmem:[#allocation6 + $0x29e8] sm:$0xff]
    %v2004 = vld [vmem:[#allocation6 + $0x29f0] sm:$0xff]
    %v2005 = vld [vmem:[#allocation6 + $0x29f8] sm:$0xff]
    %v2006 = vld [vmem:[#allocation6 + $0x2a00] sm:$0xff]
    %v2007 = vld [vmem:[#allocation6 + $0x2a08] sm:$0xff]
    %v2008 = vld [vmem:[#allocation6 + $0x2a10] sm:$0xff]
    %v2009 = vld [vmem:[#allocation6 + $0x2a18] sm:$0xff]
    %v2010 = vld [vmem:[#allocation6 + $0x2a20] sm:$0xff]
    %v2011 = vld [vmem:[#allocation6 + $0x2a28] sm:$0xff]
    %v2012 = vld [vmem:[#allocation6 + $0x2a30] sm:$0xff]
    %v2013 = vld [vmem:[#allocation6 + $0x2a38] sm:$0xff]
    %v2014 = vld [vmem:[#allocation6 + $0x2a40] sm:$0xff]
    %v2015 = vld [vmem:[#allocation6 + $0x2a48] sm:$0xff]
    %v2016 = vld [vmem:[#allocation6 + $0x2a50] sm:$0xff]
    %v2017 = vld [vmem:[#allocation6 + $0x2a58] sm:$0xff]
    %v2018 = vld [vmem:[#allocation6 + $0x2a60] sm:$0xff]
    %v2019 = vld [vmem:[#allocation6 + $0x2a68] sm:$0xff]
    %v2020 = vld [vmem:[#allocation6 + $0x2a70] sm:$0xff]
    %v2021 = vld [vmem:[#allocation6 + $0x2a78] sm:$0xff]
    %v2022 = vld [vmem:[#allocation6 + $0x2a80] sm:$0xff]
    %v2023 = vld [vmem:[#allocation6 + $0x2a88] sm:$0xff]
    %v2024 = vld [vmem:[#allocation6 + $0x2a90] sm:$0xff]
    %v2025 = vld [vmem:[#allocation6 + $0x2a98] sm:$0xff]
    %v2026 = vld [vmem:[#allocation6 + $0x2aa0] sm:$0xff]
    %v2027 = vld [vmem:[#allocation6 + $0x2aa8] sm:$0xff]
    %v2028 = vld [vmem:[#allocation6 + $0x2ab0] sm:$0xff]
    %v2029 = vld [vmem:[#allocation6 + $0x2ab8] sm:$0xff]
    %v2030 = vld [vmem:[#allocation6 + $0x2ac0] sm:$0xff]
    %v2031 = vld [vmem:[#allocation6 + $0x2ac8] sm:$0xff]
    %v2032 = vld [vmem:[#allocation6 + $0x2ad0] sm:$0xff]
    %v2033 = vld [vmem:[#allocation6 + $0x2ad8] sm:$0xff]
    %v2034 = vld [vmem:[#allocation6 + $0x2ae0] sm:$0xff]
    %v2035 = vld [vmem:[#allocation6 + $0x2ae8] sm:$0xff]
    %v2036 = vld [vmem:[#allocation6 + $0x2af0] sm:$0xff]
    %v2037 = vld [vmem:[#allocation6 + $0x2af8] sm:$0xff]
    %v2038 = vld [vmem:[#allocation6 + $0x2b00] sm:$0xff]
    %v2039 = vld [vmem:[#allocation6 + $0x2b08] sm:$0xff]
    %v2040 = vld [vmem:[#allocation6 + $0x2b10] sm:$0xff]
    %v2041 = vld [vmem:[#allocation6 + $0x2b18] sm:$0xff]
    %v2042 = vld [vmem:[#allocation6 + $0x2b20] sm:$0xff]
    %v2043 = vld [vmem:[#allocation6 + $0x2b28] sm:$0xff]
    %v2044 = vld [vmem:[#allocation6 + $0x2b30] sm:$0xff]
    %v2045 = vld [vmem:[#allocation6 + $0x2b38] sm:$0xff]
    %v2046 = vld [vmem:[#allocation6 + $0x2b40] sm:$0xff]
    %v2047 = vld [vmem:[#allocation6 + $0x2b48] sm:$0xff]
    %v2048 = vld [vmem:[#allocation6 + $0x2b50] sm:$0xff]
    %v2049 = vld [vmem:[#allocation6 + $0x2b58] sm:$0xff]
    %v2050 = vld [vmem:[#allocation6 + $0x2b60] sm:$0xff]
    %v2051 = vld [vmem:[#allocation6 + $0x2b68] sm:$0xff]
    %v2052 = vld [vmem:[#allocation6 + $0x2b70] sm:$0xff]
    %v2053 = vld [vmem:[#allocation6 + $0x2b78] sm:$0xff]
    %v2054 = vld [vmem:[#allocation6 + $0x2b80] sm:$0xff]
    %v2055 = vld [vmem:[#allocation6 + $0x2b88] sm:$0xff]
    %v2056 = vld [vmem:[#allocation6 + $0x2b90] sm:$0xff]
    %v2057 = vld [vmem:[#allocation6 + $0x2b98] sm:$0xff]
    %v2058 = vld [vmem:[#allocation6 + $0x2ba0] sm:$0xff]
    %v2059 = vld [vmem:[#allocation6 + $0x2ba8] sm:$0xff]
    %v2060 = vld [vmem:[#allocation6 + $0x2bb0] sm:$0xff]
    %v2061 = vld [vmem:[#allocation6 + $0x2bb8] sm:$0xff]
    %v2062 = vld [vmem:[#allocation6 + $0x2bc0] sm:$0xff]
    %v2063 = vld [vmem:[#allocation6 + $0x2bc8] sm:$0xff]
    %v2064 = vld [vmem:[#allocation6 + $0x2bd0] sm:$0xff]
    %v2065 = vld [vmem:[#allocation6 + $0x2bd8] sm:$0xff]
    %v2066 = vld [vmem:[#allocation6 + $0x2be0] sm:$0xff]
    %v2067 = vld [vmem:[#allocation6 + $0x2be8] sm:$0xff]
    %v2068 = vld [vmem:[#allocation6 + $0x2bf0] sm:$0xff]
    %v2069 = vld [vmem:[#allocation6 + $0x2bf8] sm:$0xff]
    %v2070 = vld [vmem:[#allocation6 + $0x2c00] sm:$0xff]
    %v2071 = vld [vmem:[#allocation6 + $0x2c08] sm:$0xff]
    %v2072 = vld [vmem:[#allocation6 + $0x2c10] sm:$0xff]
    %v2073 = vld [vmem:[#allocation6 + $0x2c18] sm:$0xff]
    %v2074 = vld [vmem:[#allocation6 + $0x2c20] sm:$0xff]
    %v2075 = vld [vmem:[#allocation6 + $0x2c28] sm:$0xff]
    %v2076 = vld [vmem:[#allocation6 + $0x2c30] sm:$0xff]
    %v2077 = vld [vmem:[#allocation6 + $0x2c38] sm:$0xff]
    %v2078 = vld [vmem:[#allocation6 + $0x2c40] sm:$0xff]
    %v2079 = vld [vmem:[#allocation6 + $0x2c48] sm:$0xff]
    %v2080 = vld [vmem:[#allocation6 + $0x2c50] sm:$0xff]
    %v2081 = vld [vmem:[#allocation6 + $0x2c58] sm:$0xff]
    %v2082 = vld [vmem:[#allocation6 + $0x2c60] sm:$0xff]
    %v2083 = vld [vmem:[#allocation6 + $0x2c68] sm:$0xff]
    %v2084 = vld [vmem:[#allocation6 + $0x2c70] sm:$0xff]
    %v2085 = vld [vmem:[#allocation6 + $0x2c78] sm:$0xff]
    %v2086 = vld [vmem:[#allocation6 + $0x2c80] sm:$0xff]
    %v2087 = vld [vmem:[#allocation6 + $0x2c88] sm:$0xff]
    %v2088 = vld [vmem:[#allocation6 + $0x2c90] sm:$0xff]
    %v2089 = vld [vmem:[#allocation6 + $0x2c98] sm:$0xff]
    %v2090 = vld [vmem:[#allocation6 + $0x2ca0] sm:$0xff]
    %v2091 = vld [vmem:[#allocation6 + $0x2ca8] sm:$0xff]
    %v2092 = vld [vmem:[#allocation6 + $0x2cb0] sm:$0xff]
    %v2093 = vld [vmem:[#allocation6 + $0x2cb8] sm:$0xff]
    %v2094 = vld [vmem:[#allocation6 + $0x2cc0] sm:$0xff]
    %v2095 = vld [vmem:[#allocation6 + $0x2cc8] sm:$0xff]
    %v2096 = vld [vmem:[#allocation6 + $0x2cd0] sm:$0xff]
    %v2097 = vld [vmem:[#allocation6 + $0x2cd8] sm:$0xff]
    %v2098 = vld [vmem:[#allocation6 + $0x2ce0] sm:$0xff]
    %v2099 = vld [vmem:[#allocation6 + $0x2ce8] sm:$0xff]
    %v2100 = vld [vmem:[#allocation6 + $0x2cf0] sm:$0xff]
    %v2101 = vld [vmem:[#allocation6 + $0x2cf8] sm:$0xff]
    %v2102 = vld [vmem:[#allocation6 + $0x2d00] sm:$0xff]
    %v2103 = vld [vmem:[#allocation6 + $0x2d08] sm:$0xff]
    %v2104 = vld [vmem:[#allocation6 + $0x2d10] sm:$0xff]
    %v2105 = vld [vmem:[#allocation6 + $0x2d18] sm:$0xff]
    %v2106 = vld [vmem:[#allocation6 + $0x2d20] sm:$0xff]
    %v2107 = vld [vmem:[#allocation6 + $0x2d28] sm:$0xff]
    %v2108 = vld [vmem:[#allocation6 + $0x2d30] sm:$0xff]
    %v2109 = vld [vmem:[#allocation6 + $0x2d38] sm:$0xff]
    %v2110 = vld [vmem:[#allocation6 + $0x2d40] sm:$0xff]
    %v2111 = vld [vmem:[#allocation6 + $0x2d48] sm:$0xff]
    %v2112 = vld [vmem:[#allocation6 + $0x2d50] sm:$0xff]
    %v2113 = vld [vmem:[#allocation6 + $0x2d58] sm:$0xff]
    %v2114 = vld [vmem:[#allocation6 + $0x2d60] sm:$0xff]
    %v2115 = vld [vmem:[#allocation6 + $0x2d68] sm:$0xff]
    %v2116 = vld [vmem:[#allocation6 + $0x2d70] sm:$0xff]
    %v2117 = vld [vmem:[#allocation6 + $0x2d78] sm:$0xff]
    %v2118 = vld [vmem:[#allocation6 + $0x2d80] sm:$0xff]
    %v2119 = vld [vmem:[#allocation6 + $0x2d88] sm:$0xff]
    %v2120 = vld [vmem:[#allocation6 + $0x2d90] sm:$0xff]
    %v2121 = vld [vmem:[#allocation6 + $0x2d98] sm:$0xff]
    %v2122 = vld [vmem:[#allocation6 + $0x2da0] sm:$0xff]
    %v2123 = vld [vmem:[#allocation6 + $0x2da8] sm:$0xff]
    %v2124 = vld [vmem:[#allocation6 + $0x2db0] sm:$0xff]
    %v2125 = vld [vmem:[#allocation6 + $0x2db8] sm:$0xff]
    %v2126 = vld [vmem:[#allocation6 + $0x2dc0] sm:$0xff]
    %v2127 = vld [vmem:[#allocation6 + $0x2dc8] sm:$0xff]
    %v2128 = vld [vmem:[#allocation6 + $0x2dd0] sm:$0xff]
    %v2129 = vld [vmem:[#allocation6 + $0x2dd8] sm:$0xff]
    %v2130 = vld [vmem:[#allocation6 + $0x2de0] sm:$0xff]
    %v2131 = vld [vmem:[#allocation6 + $0x2de8] sm:$0xff]
    %v2132 = vld [vmem:[#allocation6 + $0x2df0] sm:$0xff]
    %v2133 = vld [vmem:[#allocation6 + $0x2df8] sm:$0xff]
    %v2134 = vld [vmem:[#allocation6 + $0x2e00] sm:$0xff]
    %v2135 = vld [vmem:[#allocation6 + $0x2e08] sm:$0xff]
    %v2136 = vld [vmem:[#allocation6 + $0x2e10] sm:$0xff]
    %v2137 = vld [vmem:[#allocation6 + $0x2e18] sm:$0xff]
    %v2138 = vld [vmem:[#allocation6 + $0x2e20] sm:$0xff]
    %v2139 = vld [vmem:[#allocation6 + $0x2e28] sm:$0xff]
    %v2140 = vld [vmem:[#allocation6 + $0x2e30] sm:$0xff]
    %v2141 = vld [vmem:[#allocation6 + $0x2e38] sm:$0xff]
    %v2142 = vld [vmem:[#allocation6 + $0x2e40] sm:$0xff]
    %v2143 = vld [vmem:[#allocation6 + $0x2e48] sm:$0xff]
    %v2144 = vld [vmem:[#allocation6 + $0x2e50] sm:$0xff]
    %v2145 = vld [vmem:[#allocation6 + $0x2e58] sm:$0xff]
    %v2146 = vld [vmem:[#allocation6 + $0x2e60] sm:$0xff]
    %v2147 = vld [vmem:[#allocation6 + $0x2e68] sm:$0xff]
    %v2148 = vld [vmem:[#allocation6 + $0x2e70] sm:$0xff]
    %v2149 = vld [vmem:[#allocation6 + $0x2e78] sm:$0xff]
    %v2150 = vld [vmem:[#allocation6 + $0x2e80] sm:$0xff]
    %v2151 = vld [vmem:[#allocation6 + $0x2e88] sm:$0xff]
    %v2152 = vld [vmem:[#allocation6 + $0x2e90] sm:$0xff]
    %v2153 = vld [vmem:[#allocation6 + $0x2e98] sm:$0xff]
    %v2154 = vld [vmem:[#allocation6 + $0x2ea0] sm:$0xff]
    %v2155 = vld [vmem:[#allocation6 + $0x2ea8] sm:$0xff]
    %v2156 = vld [vmem:[#allocation6 + $0x2eb0] sm:$0xff]
    %v2157 = vld [vmem:[#allocation6 + $0x2eb8] sm:$0xff]
    %v2158 = vld [vmem:[#allocation6 + $0x2ec0] sm:$0xff]
    %v2159 = vld [vmem:[#allocation6 + $0x2ec8] sm:$0xff]
    %v2160 = vld [vmem:[#allocation6 + $0x2ed0] sm:$0xff]
    %v2161 = vld [vmem:[#allocation6 + $0x2ed8] sm:$0xff]
    %v2162 = vld [vmem:[#allocation6 + $0x2ee0] sm:$0xff]
    %v2163 = vld [vmem:[#allocation6 + $0x2ee8] sm:$0xff]
    %v2164 = vld [vmem:[#allocation6 + $0x2ef0] sm:$0xff]
    %v2165 = vld [vmem:[#allocation6 + $0x2ef8] sm:$0xff]
    %v2166 = vld [vmem:[#allocation6 + $0x2f00] sm:$0xff]
    %v2167 = vld [vmem:[#allocation6 + $0x2f08] sm:$0xff]
    %v2168 = vld [vmem:[#allocation6 + $0x2f10] sm:$0xff]
    %v2169 = vld [vmem:[#allocation6 + $0x2f18] sm:$0xff]
    %v2170 = vld [vmem:[#allocation6 + $0x2f20] sm:$0xff]
    %v2171 = vld [vmem:[#allocation6 + $0x2f28] sm:$0xff]
    %v2172 = vld [vmem:[#allocation6 + $0x2f30] sm:$0xff]
    %v2173 = vld [vmem:[#allocation6 + $0x2f38] sm:$0xff]
    %v2174 = vld [vmem:[#allocation6 + $0x2f40] sm:$0xff]
    %v2175 = vld [vmem:[#allocation6 + $0x2f48] sm:$0xff]
    %v2176 = vld [vmem:[#allocation6 + $0x2f50] sm:$0xff]
    %v2177 = vld [vmem:[#allocation6 + $0x2f58] sm:$0xff]
    %v2178 = vld [vmem:[#allocation6 + $0x2f60] sm:$0xff]
    %v2179 = vld [vmem:[#allocation6 + $0x2f68] sm:$0xff]
    %v2180 = vld [vmem:[#allocation6 + $0x2f70] sm:$0xff]
    %v2181 = vld [vmem:[#allocation6 + $0x2f78] sm:$0xff]
    %v2182 = vld [vmem:[#allocation6 + $0x2f80] sm:$0xff]
    %v2183 = vld [vmem:[#allocation6 + $0x2f88] sm:$0xff]
    %v2184 = vld [vmem:[#allocation6 + $0x2f90] sm:$0xff]
    %v2185 = vld [vmem:[#allocation6 + $0x2f98] sm:$0xff]
    %v2186 = vld [vmem:[#allocation6 + $0x2fa0] sm:$0xff]
    %v2187 = vld [vmem:[#allocation6 + $0x2fa8] sm:$0xff]
    %v2188 = vld [vmem:[#allocation6 + $0x2fb0] sm:$0xff]
    %v2189 = vld [vmem:[#allocation6 + $0x2fb8] sm:$0xff]
    %v2190 = vld [vmem:[#allocation6 + $0x2fc0] sm:$0xff]
    %v2191 = vld [vmem:[#allocation6 + $0x2fc8] sm:$0xff]
    %v2192 = vld [vmem:[#allocation6 + $0x2fd0] sm:$0xff]
    %v2193 = vld [vmem:[#allocation6 + $0x2fd8] sm:$0xff]
    %v2194 = vld [vmem:[#allocation6 + $0x2fe0] sm:$0xff]
    %v2195 = vld [vmem:[#allocation6 + $0x2fe8] sm:$0xff]
    %v2196 = vld [vmem:[#allocation6 + $0x2ff0] sm:$0xff]
    %v2197 = vld [vmem:[#allocation6 + $0x2ff8] sm:$0xff]
    %v2198 = vld [vmem:[#allocation6 + $0x3000] sm:$0xff]
    %v2199 = vld [vmem:[#allocation6 + $0x3008] sm:$0xff]
    %v2200 = vld [vmem:[#allocation6 + $0x3010] sm:$0xff]
    %v2201 = vld [vmem:[#allocation6 + $0x3018] sm:$0xff]
    %v2202 = vld [vmem:[#allocation6 + $0x3020] sm:$0xff]
    %v2203 = vld [vmem:[#allocation6 + $0x3028] sm:$0xff]
    %v2204 = vld [vmem:[#allocation6 + $0x3030] sm:$0xff]
    %v2205 = vld [vmem:[#allocation6 + $0x3038] sm:$0xff]
    %v2206 = vld [vmem:[#allocation6 + $0x3040] sm:$0xff]
    %v2207 = vld [vmem:[#allocation6 + $0x3048] sm:$0xff]
    %v2208 = vld [vmem:[#allocation6 + $0x3050] sm:$0xff]
    %v2209 = vld [vmem:[#allocation6 + $0x3058] sm:$0xff]
    %v2210 = vld [vmem:[#allocation6 + $0x3060] sm:$0xff]
    %v2211 = vld [vmem:[#allocation6 + $0x3068] sm:$0xff]
    %v2212 = vld [vmem:[#allocation6 + $0x3070] sm:$0xff]
    %v2213 = vld [vmem:[#allocation6 + $0x3078] sm:$0xff]
    %v2214 = vld [vmem:[#allocation6 + $0x3080] sm:$0xff]
    %v2215 = vld [vmem:[#allocation6 + $0x3088] sm:$0xff]
    %v2216 = vld [vmem:[#allocation6 + $0x3090] sm:$0xff]
    %v2217 = vld [vmem:[#allocation6 + $0x3098] sm:$0xff]
    %v2218 = vld [vmem:[#allocation6 + $0x30a0] sm:$0xff]
    %v2219 = vld [vmem:[#allocation6 + $0x30a8] sm:$0xff]
    %v2220 = vld [vmem:[#allocation6 + $0x30b0] sm:$0xff]
    %v2221 = vld [vmem:[#allocation6 + $0x30b8] sm:$0xff]
    %v2222 = vld [vmem:[#allocation6 + $0x30c0] sm:$0xff]
    %v2223 = vld [vmem:[#allocation6 + $0x30c8] sm:$0xff]
    %v2224 = vld [vmem:[#allocation6 + $0x30d0] sm:$0xff]
    %v2225 = vld [vmem:[#allocation6 + $0x30d8] sm:$0xff]
    %v2226 = vld [vmem:[#allocation6 + $0x30e0] sm:$0xff]
    %v2227 = vld [vmem:[#allocation6 + $0x30e8] sm:$0xff]
    %v2228 = vld [vmem:[#allocation6 + $0x30f0] sm:$0xff]
    %v2229 = vld [vmem:[#allocation6 + $0x30f8] sm:$0xff]
    %v2230 = vld [vmem:[#allocation6 + $0x3100] sm:$0xff]
    %v2231 = vld [vmem:[#allocation6 + $0x3108] sm:$0xff]
    %v2232 = vld [vmem:[#allocation6 + $0x3110] sm:$0xff]
    %v2233 = vld [vmem:[#allocation6 + $0x3118] sm:$0xff]
    %v2234 = vld [vmem:[#allocation6 + $0x3120] sm:$0xff]
    %v2235 = vld [vmem:[#allocation6 + $0x3128] sm:$0xff]
    %v2236 = vld [vmem:[#allocation6 + $0x3130] sm:$0xff]
    %v2237 = vld [vmem:[#allocation6 + $0x3138] sm:$0xff]
    %v2238 = vld [vmem:[#allocation6 + $0x3140] sm:$0xff]
    %v2239 = vld [vmem:[#allocation6 + $0x3148] sm:$0xff]
    %v2240 = vld [vmem:[#allocation6 + $0x3150] sm:$0xff]
    %v2241 = vld [vmem:[#allocation6 + $0x3158] sm:$0xff]
    %v2242 = vld [vmem:[#allocation6 + $0x3160] sm:$0xff]
    %v2243 = vld [vmem:[#allocation6 + $0x3168] sm:$0xff]
    %v2244 = vld [vmem:[#allocation6 + $0x3170] sm:$0xff]
    %v2245 = vld [vmem:[#allocation6 + $0x3178] sm:$0xff]
    %v2246 = vld [vmem:[#allocation6 + $0x3180] sm:$0xff]
    %v2247 = vld [vmem:[#allocation6 + $0x3188] sm:$0xff]
    %v2248 = vld [vmem:[#allocation6 + $0x3190] sm:$0xff]
    %v2249 = vld [vmem:[#allocation6 + $0x3198] sm:$0xff]
    %v2250 = vld [vmem:[#allocation6 + $0x31a0] sm:$0xff]
    %v2251 = vld [vmem:[#allocation6 + $0x31a8] sm:$0xff]
    %v2252 = vld [vmem:[#allocation6 + $0x31b0] sm:$0xff]
    %v2253 = vld [vmem:[#allocation6 + $0x31b8] sm:$0xff]
    %v2254 = vld [vmem:[#allocation6 + $0x31c0] sm:$0xff]
    %v2255 = vld [vmem:[#allocation6 + $0x31c8] sm:$0xff]
    %v2256 = vld [vmem:[#allocation6 + $0x31d0] sm:$0xff]
    %v2257 = vld [vmem:[#allocation6 + $0x31d8] sm:$0xff]
    %v2258 = vld [vmem:[#allocation6 + $0x31e0] sm:$0xff]
    %v2259 = vld [vmem:[#allocation6 + $0x31e8] sm:$0xff]
    %v2260 = vld [vmem:[#allocation6 + $0x31f0] sm:$0xff]
    %v2261 = vld [vmem:[#allocation6 + $0x31f8] sm:$0xff]
    %v2262 = vld [vmem:[#allocation6 + $0x3200] sm:$0xff]
    %v2263 = vld [vmem:[#allocation6 + $0x3208] sm:$0xff]
    %v2264 = vld [vmem:[#allocation6 + $0x3210] sm:$0xff]
    %v2265 = vld [vmem:[#allocation6 + $0x3218] sm:$0xff]
    %v2266 = vld [vmem:[#allocation6 + $0x3220] sm:$0xff]
    %v2267 = vld [vmem:[#allocation6 + $0x3228] sm:$0xff]
    %v2268 = vld [vmem:[#allocation6 + $0x3230] sm:$0xff]
    %v2269 = vld [vmem:[#allocation6 + $0x3238] sm:$0xff]
    %v2270 = vld [vmem:[#allocation6 + $0x3240] sm:$0xff]
    %v2271 = vld [vmem:[#allocation6 + $0x3248] sm:$0xff]
    %v2272 = vld [vmem:[#allocation6 + $0x3250] sm:$0xff]
    %v2273 = vld [vmem:[#allocation6 + $0x3258] sm:$0xff]
    %v2274 = vld [vmem:[#allocation6 + $0x3260] sm:$0xff]
    %v2275 = vld [vmem:[#allocation6 + $0x3268] sm:$0xff]
    %v2276 = vld [vmem:[#allocation6 + $0x3270] sm:$0xff]
    %v2277 = vld [vmem:[#allocation6 + $0x3278] sm:$0xff]
    %v2278 = vld [vmem:[#allocation6 + $0x3280] sm:$0xff]
    %v2279 = vld [vmem:[#allocation6 + $0x3288] sm:$0xff]
    %v2280 = vld [vmem:[#allocation6 + $0x3290] sm:$0xff]
    %v2281 = vld [vmem:[#allocation6 + $0x3298] sm:$0xff]
    %v2282 = vld [vmem:[#allocation6 + $0x32a0] sm:$0xff]
    %v2283 = vld [vmem:[#allocation6 + $0x32a8] sm:$0xff]
    %v2284 = vld [vmem:[#allocation6 + $0x32b0] sm:$0xff]
    %v2285 = vld [vmem:[#allocation6 + $0x32b8] sm:$0xff]
    %v2286 = vld [vmem:[#allocation6 + $0x32c0] sm:$0xff]
    %v2287 = vld [vmem:[#allocation6 + $0x32c8] sm:$0xff]
    %v2288 = vld [vmem:[#allocation6 + $0x32d0] sm:$0xff]
    %v2289 = vld [vmem:[#allocation6 + $0x32d8] sm:$0xff]
    %v2290 = vld [vmem:[#allocation6 + $0x32e0] sm:$0xff]
    %v2291 = vld [vmem:[#allocation6 + $0x32e8] sm:$0xff]
    %v2292 = vld [vmem:[#allocation6 + $0x32f0] sm:$0xff]
    %v2293 = vld [vmem:[#allocation6 + $0x32f8] sm:$0xff]
    %v2294 = vld [vmem:[#allocation6 + $0x3300] sm:$0xff]
    %v2295 = vld [vmem:[#allocation6 + $0x3308] sm:$0xff]
    %v2296 = vld [vmem:[#allocation6 + $0x3310] sm:$0xff]
    %v2297 = vld [vmem:[#allocation6 + $0x3318] sm:$0xff]
    %v2298 = vld [vmem:[#allocation6 + $0x3320] sm:$0xff]
    %v2299 = vld [vmem:[#allocation6 + $0x3328] sm:$0xff]
    %v2300 = vld [vmem:[#allocation6 + $0x3330] sm:$0xff]
    %v2301 = vld [vmem:[#allocation6 + $0x3338] sm:$0xff]
    %v2302 = vld [vmem:[#allocation6 + $0x3340] sm:$0xff]
    %v2303 = vld [vmem:[#allocation6 + $0x3348] sm:$0xff]
    %v2304 = vld [vmem:[#allocation6 + $0x3350] sm:$0xff]
    %v2305 = vld [vmem:[#allocation6 + $0x3358] sm:$0xff]
    %v2306 = vld [vmem:[#allocation6 + $0x3360] sm:$0xff]
    %v2307 = vld [vmem:[#allocation6 + $0x3368] sm:$0xff]
    %v2308 = vld [vmem:[#allocation6 + $0x3370] sm:$0xff]
    %v2309 = vld [vmem:[#allocation6 + $0x3378] sm:$0xff]
    %v2310 = vld [vmem:[#allocation6 + $0x3380] sm:$0xff]
    %v2311 = vld [vmem:[#allocation6 + $0x3388] sm:$0xff]
    %v2312 = vld [vmem:[#allocation6 + $0x3390] sm:$0xff]
    %v2313 = vld [vmem:[#allocation6 + $0x3398] sm:$0xff]
    %v2314 = vld [vmem:[#allocation6 + $0x33a0] sm:$0xff]
    %v2315 = vld [vmem:[#allocation6 + $0x33a8] sm:$0xff]
    %v2316 = vld [vmem:[#allocation6 + $0x33b0] sm:$0xff]
    %v2317 = vld [vmem:[#allocation6 + $0x33b8] sm:$0xff]
    %v2318 = vld [vmem:[#allocation6 + $0x33c0] sm:$0xff]
    %v2319 = vld [vmem:[#allocation6 + $0x33c8] sm:$0xff]
    %v2320 = vld [vmem:[#allocation6 + $0x33d0] sm:$0xff]
    %v2321 = vld [vmem:[#allocation6 + $0x33d8] sm:$0xff]
    %v2322 = vld [vmem:[#allocation6 + $0x33e0] sm:$0xff]
    %v2323 = vld [vmem:[#allocation6 + $0x33e8] sm:$0xff]
    %v2324 = vld [vmem:[#allocation6 + $0x33f0] sm:$0xff]
    %v2325 = vld [vmem:[#allocation6 + $0x33f8] sm:$0xff]
    %v2326 = vld [vmem:[#allocation6 + $0x3400] sm:$0xff]
    %v2327 = vld [vmem:[#allocation6 + $0x3408] sm:$0xff]
    %v2328 = vld [vmem:[#allocation6 + $0x3410] sm:$0xff]
    %v2329 = vld [vmem:[#allocation6 + $0x3418] sm:$0xff]
    %v2330 = vld [vmem:[#allocation6 + $0x3420] sm:$0xff]
    %v2331 = vld [vmem:[#allocation6 + $0x3428] sm:$0xff]
    %v2332 = vld [vmem:[#allocation6 + $0x3430] sm:$0xff]
    %v2333 = vld [vmem:[#allocation6 + $0x3438] sm:$0xff]
    %v2334 = vld [vmem:[#allocation6 + $0x3440] sm:$0xff]
    %v2335 = vld [vmem:[#allocation6 + $0x3448] sm:$0xff]
    %v2336 = vld [vmem:[#allocation6 + $0x3450] sm:$0xff]
    %v2337 = vld [vmem:[#allocation6 + $0x3458] sm:$0xff]
    %v2338 = vld [vmem:[#allocation6 + $0x3460] sm:$0xff]
    %v2339 = vld [vmem:[#allocation6 + $0x3468] sm:$0xff]
    %v2340 = vld [vmem:[#allocation6 + $0x3470] sm:$0xff]
    %v2341 = vld [vmem:[#allocation6 + $0x3478] sm:$0xff]
    %v2342 = vld [vmem:[#allocation6 + $0x3480] sm:$0xff]
    %v2343 = vld [vmem:[#allocation6 + $0x3488] sm:$0xff]
    %v2344 = vld [vmem:[#allocation6 + $0x3490] sm:$0xff]
    %v2345 = vld [vmem:[#allocation6 + $0x3498] sm:$0xff]
    %v2346 = vld [vmem:[#allocation6 + $0x34a0] sm:$0xff]
    %v2347 = vld [vmem:[#allocation6 + $0x34a8] sm:$0xff]
    %v2348 = vld [vmem:[#allocation6 + $0x34b0] sm:$0xff]
    %v2349 = vld [vmem:[#allocation6 + $0x34b8] sm:$0xff]
    %v2350 = vld [vmem:[#allocation6 + $0x34c0] sm:$0xff]
    %v2351 = vld [vmem:[#allocation6 + $0x34c8] sm:$0xff]
    %v2352 = vld [vmem:[#allocation6 + $0x34d0] sm:$0xff]
    %v2353 = vld [vmem:[#allocation6 + $0x34d8] sm:$0xff]
    %v2354 = vld [vmem:[#allocation6 + $0x34e0] sm:$0xff]
    %v2355 = vld [vmem:[#allocation6 + $0x34e8] sm:$0xff]
    %v2356 = vld [vmem:[#allocation6 + $0x34f0] sm:$0xff]
    %v2357 = vld [vmem:[#allocation6 + $0x34f8] sm:$0xff]
    %v2358 = vld [vmem:[#allocation6 + $0x3500] sm:$0xff]
    %v2359 = vld [vmem:[#allocation6 + $0x3508] sm:$0xff]
    %v2360 = vld [vmem:[#allocation6 + $0x3510] sm:$0xff]
    %v2361 = vld [vmem:[#allocation6 + $0x3518] sm:$0xff]
    %v2362 = vld [vmem:[#allocation6 + $0x3520] sm:$0xff]
    %v2363 = vld [vmem:[#allocation6 + $0x3528] sm:$0xff]
    %v2364 = vld [vmem:[#allocation6 + $0x3530] sm:$0xff]
    %v2365 = vld [vmem:[#allocation6 + $0x3538] sm:$0xff]
    %v2366 = vld [vmem:[#allocation6 + $0x3540] sm:$0xff]
    %v2367 = vld [vmem:[#allocation6 + $0x3548] sm:$0xff]
    %v2368 = vld [vmem:[#allocation6 + $0x3550] sm:$0xff]
    %v2369 = vld [vmem:[#allocation6 + $0x3558] sm:$0xff]
    %v2370 = vld [vmem:[#allocation6 + $0x3560] sm:$0xff]
    %v2371 = vld [vmem:[#allocation6 + $0x3568] sm:$0xff]
    %v2372 = vld [vmem:[#allocation6 + $0x3570] sm:$0xff]
    %v2373 = vld [vmem:[#allocation6 + $0x3578] sm:$0xff]
    %v2374 = vld [vmem:[#allocation6 + $0x3580] sm:$0xff]
    %v2375 = vld [vmem:[#allocation6 + $0x3588] sm:$0xff]
    %v2376 = vld [vmem:[#allocation6 + $0x3590] sm:$0xff]
    %v2377 = vld [vmem:[#allocation6 + $0x3598] sm:$0xff]
    %v2378 = vld [vmem:[#allocation6 + $0x35a0] sm:$0xff]
    %v2379 = vld [vmem:[#allocation6 + $0x35a8] sm:$0xff]
    %v2380 = vld [vmem:[#allocation6 + $0x35b0] sm:$0xff]
    %v2381 = vld [vmem:[#allocation6 + $0x35b8] sm:$0xff]
    %v2382 = vld [vmem:[#allocation6 + $0x35c0] sm:$0xff]
    %v2383 = vld [vmem:[#allocation6 + $0x35c8] sm:$0xff]
    %v2384 = vld [vmem:[#allocation6 + $0x35d0] sm:$0xff]
    %v2385 = vld [vmem:[#allocation6 + $0x35d8] sm:$0xff]
    %v2386 = vld [vmem:[#allocation6 + $0x35e0] sm:$0xff]
    %v2387 = vld [vmem:[#allocation6 + $0x35e8] sm:$0xff]
    %v2388 = vld [vmem:[#allocation6 + $0x35f0] sm:$0xff]
    %v2389 = vld [vmem:[#allocation6 + $0x35f8] sm:$0xff]
    %v2390 = vld [vmem:[#allocation6 + $0x3600] sm:$0xff]
    %v2391 = vld [vmem:[#allocation6 + $0x3608] sm:$0xff]
    %v2392 = vld [vmem:[#allocation6 + $0x3610] sm:$0xff]
    %v2393 = vld [vmem:[#allocation6 + $0x3618] sm:$0xff]
    %v2394 = vld [vmem:[#allocation6 + $0x3620] sm:$0xff]
    %v2395 = vld [vmem:[#allocation6 + $0x3628] sm:$0xff]
    %v2396 = vld [vmem:[#allocation6 + $0x3630] sm:$0xff]
    %v2397 = vld [vmem:[#allocation6 + $0x3638] sm:$0xff]
    %v2398 = vld [vmem:[#allocation6 + $0x3640] sm:$0xff]
    %v2399 = vld [vmem:[#allocation6 + $0x3648] sm:$0xff]
    %v2400 = vld [vmem:[#allocation6 + $0x3650] sm:$0xff]
    %v2401 = vld [vmem:[#allocation6 + $0x3658] sm:$0xff]
    %v2402 = vld [vmem:[#allocation6 + $0x3660] sm:$0xff]
    %v2403 = vld [vmem:[#allocation6 + $0x3668] sm:$0xff]
    %v2404 = vld [vmem:[#allocation6 + $0x3670] sm:$0xff]
    %v2405 = vld [vmem:[#allocation6 + $0x3678] sm:$0xff]
    %v2406 = vld [vmem:[#allocation6 + $0x3680] sm:$0xff]
    %v2407 = vld [vmem:[#allocation6 + $0x3688] sm:$0xff]
    %v2408 = vld [vmem:[#allocation6 + $0x3690] sm:$0xff]
    %v2409 = vld [vmem:[#allocation6 + $0x3698] sm:$0xff]
    %v2410 = vld [vmem:[#allocation6 + $0x36a0] sm:$0xff]
    %v2411 = vld [vmem:[#allocation6 + $0x36a8] sm:$0xff]
    %v2412 = vld [vmem:[#allocation6 + $0x36b0] sm:$0xff]
    %v2413 = vld [vmem:[#allocation6 + $0x36b8] sm:$0xff]
    %v2414 = vld [vmem:[#allocation6 + $0x36c0] sm:$0xff]
    %v2415 = vld [vmem:[#allocation6 + $0x36c8] sm:$0xff]
    %v2416 = vld [vmem:[#allocation6 + $0x36d0] sm:$0xff]
    %v2417 = vld [vmem:[#allocation6 + $0x36d8] sm:$0xff]
    %v2418 = vld [vmem:[#allocation6 + $0x36e0] sm:$0xff]
    %v2419 = vld [vmem:[#allocation6 + $0x36e8] sm:$0xff]
    %v2420 = vld [vmem:[#allocation6 + $0x36f0] sm:$0xff]
    %v2421 = vld [vmem:[#allocation6 + $0x36f8] sm:$0xff]
    %v2422 = vld [vmem:[#allocation6 + $0x3700] sm:$0xff]
    %v2423 = vld [vmem:[#allocation6 + $0x3708] sm:$0xff]
    %v2424 = vld [vmem:[#allocation6 + $0x3710] sm:$0xff]
    %v2425 = vld [vmem:[#allocation6 + $0x3718] sm:$0xff]
    %v2426 = vld [vmem:[#allocation6 + $0x3720] sm:$0xff]
    %v2427 = vld [vmem:[#allocation6 + $0x3728] sm:$0xff]
    %v2428 = vld [vmem:[#allocation6 + $0x3730] sm:$0xff]
    %v2429 = vld [vmem:[#allocation6 + $0x3738] sm:$0xff]
    %v2430 = vld [vmem:[#allocation6 + $0x3740] sm:$0xff]
    %v2431 = vld [vmem:[#allocation6 + $0x3748] sm:$0xff]
    %v2432 = vld [vmem:[#allocation6 + $0x3750] sm:$0xff]
    %v2433 = vld [vmem:[#allocation6 + $0x3758] sm:$0xff]
    %v2434 = vld [vmem:[#allocation6 + $0x3760] sm:$0xff]
    %v2435 = vld [vmem:[#allocation6 + $0x3768] sm:$0xff]
    %v2436 = vld [vmem:[#allocation6 + $0x3770] sm:$0xff]
    %v2437 = vld [vmem:[#allocation6 + $0x3778] sm:$0xff]
    %v2438 = vld [vmem:[#allocation6 + $0x3780] sm:$0xff]
    %v2439 = vld [vmem:[#allocation6 + $0x3788] sm:$0xff]
    %v2440 = vld [vmem:[#allocation6 + $0x3790] sm:$0xff]
    %v2441 = vld [vmem:[#allocation6 + $0x3798] sm:$0xff]
    %v2442 = vld [vmem:[#allocation6 + $0x37a0] sm:$0xff]
    %v2443 = vld [vmem:[#allocation6 + $0x37a8] sm:$0xff]
    %v2444 = vld [vmem:[#allocation6 + $0x37b0] sm:$0xff]
    %v2445 = vld [vmem:[#allocation6 + $0x37b8] sm:$0xff]
    %v2446 = vld [vmem:[#allocation6 + $0x37c0] sm:$0xff]
    %v2447 = vld [vmem:[#allocation6 + $0x37c8] sm:$0xff]
    %v2448 = vld [vmem:[#allocation6 + $0x37d0] sm:$0xff]
    %v2449 = vld [vmem:[#allocation6 + $0x37d8] sm:$0xff]
    %v2450 = vld [vmem:[#allocation6 + $0x37e0] sm:$0xff]
    %v2451 = vld [vmem:[#allocation6 + $0x37e8] sm:$0xff]
    %v2452 = vld [vmem:[#allocation6 + $0x37f0] sm:$0xff]
    %v2453 = vld [vmem:[#allocation6 + $0x37f8] sm:$0xff]
    %v2454 = vld [vmem:[#allocation6 + $0x3800] sm:$0xff]
    %v2455 = vld [vmem:[#allocation6 + $0x3808] sm:$0xff]
    %v2456 = vld [vmem:[#allocation6 + $0x3810] sm:$0xff]
    %v2457 = vld [vmem:[#allocation6 + $0x3818] sm:$0xff]
    %v2458 = vld [vmem:[#allocation6 + $0x3820] sm:$0xff]
    %v2459 = vld [vmem:[#allocation6 + $0x3828] sm:$0xff]
    %v2460 = vld [vmem:[#allocation6 + $0x3830] sm:$0xff]
    %v2461 = vld [vmem:[#allocation6 + $0x3838] sm:$0xff]
    %v2462 = vld [vmem:[#allocation6 + $0x3840] sm:$0xff]
    %v2463 = vld [vmem:[#allocation6 + $0x3848] sm:$0xff]
    %v2464 = vld [vmem:[#allocation6 + $0x3850] sm:$0xff]
    %v2465 = vld [vmem:[#allocation6 + $0x3858] sm:$0xff]
    %v2466 = vld [vmem:[#allocation6 + $0x3860] sm:$0xff]
    %v2467 = vld [vmem:[#allocation6 + $0x3868] sm:$0xff]
    %v2468 = vld [vmem:[#allocation6 + $0x3870] sm:$0xff]
    %v2469 = vld [vmem:[#allocation6 + $0x3878] sm:$0xff]
    %v2470 = vld [vmem:[#allocation6 + $0x3880] sm:$0xff]
    %v2471 = vld [vmem:[#allocation6 + $0x3888] sm:$0xff]
    %v2472 = vld [vmem:[#allocation6 + $0x3890] sm:$0xff]
    %v2473 = vld [vmem:[#allocation6 + $0x3898] sm:$0xff]
    %v2474 = vld [vmem:[#allocation6 + $0x38a0] sm:$0xff]
    %v2475 = vld [vmem:[#allocation6 + $0x38a8] sm:$0xff]
    %v2476 = vld [vmem:[#allocation6 + $0x38b0] sm:$0xff]
    %v2477 = vld [vmem:[#allocation6 + $0x38b8] sm:$0xff]
    %v2478 = vld [vmem:[#allocation6 + $0x38c0] sm:$0xff]
    %v2479 = vld [vmem:[#allocation6 + $0x38c8] sm:$0xff]
    %v2480 = vld [vmem:[#allocation6 + $0x38d0] sm:$0xff]
    %v2481 = vld [vmem:[#allocation6 + $0x38d8] sm:$0xff]
    %v2482 = vld [vmem:[#allocation6 + $0x38e0] sm:$0xff]
    %v2483 = vld [vmem:[#allocation6 + $0x38e8] sm:$0xff]
    %v2484 = vld [vmem:[#allocation6 + $0x38f0] sm:$0xff]
    %v2485 = vld [vmem:[#allocation6 + $0x38f8] sm:$0xff]
    %v2486 = vld [vmem:[#allocation6 + $0x3900] sm:$0xff]
    %v2487 = vld [vmem:[#allocation6 + $0x3908] sm:$0xff]
    %v2488 = vld [vmem:[#allocation6 + $0x3910] sm:$0xff]
    %v2489 = vld [vmem:[#allocation6 + $0x3918] sm:$0xff]
    %v2490 = vld [vmem:[#allocation6 + $0x3920] sm:$0xff]
    %v2491 = vld [vmem:[#allocation6 + $0x3928] sm:$0xff]
    %v2492 = vld [vmem:[#allocation6 + $0x3930] sm:$0xff]
    %v2493 = vld [vmem:[#allocation6 + $0x3938] sm:$0xff]
    %v2494 = vld [vmem:[#allocation6 + $0x3940] sm:$0xff]
    %v2495 = vld [vmem:[#allocation6 + $0x3948] sm:$0xff]
    %v2496 = vld [vmem:[#allocation6 + $0x3950] sm:$0xff]
    %v2497 = vld [vmem:[#allocation6 + $0x3958] sm:$0xff]
    %v2498 = vld [vmem:[#allocation6 + $0x3960] sm:$0xff]
    %v2499 = vld [vmem:[#allocation6 + $0x3968] sm:$0xff]
    %v2500 = vld [vmem:[#allocation6 + $0x3970] sm:$0xff]
    %v2501 = vld [vmem:[#allocation6 + $0x3978] sm:$0xff]
    %v2502 = vld [vmem:[#allocation6 + $0x3980] sm:$0xff]
    %v2503 = vld [vmem:[#allocation6 + $0x3988] sm:$0xff]
    %v2504 = vld [vmem:[#allocation6 + $0x3990] sm:$0xff]
    %v2505 = vld [vmem:[#allocation6 + $0x3998] sm:$0xff]
    %v2506 = vld [vmem:[#allocation6 + $0x39a0] sm:$0xff]
    %v2507 = vld [vmem:[#allocation6 + $0x39a8] sm:$0xff]
    %v2508 = vld [vmem:[#allocation6 + $0x39b0] sm:$0xff]
    %v2509 = vld [vmem:[#allocation6 + $0x39b8] sm:$0xff]
    %v2510 = vld [vmem:[#allocation6 + $0x39c0] sm:$0xff]
    %v2511 = vld [vmem:[#allocation6 + $0x39c8] sm:$0xff]
    %v2512 = vld [vmem:[#allocation6 + $0x39d0] sm:$0xff]
    %v2513 = vld [vmem:[#allocation6 + $0x39d8] sm:$0xff]
    %v2514 = vld [vmem:[#allocation6 + $0x39e0] sm:$0xff]
    %v2515 = vld [vmem:[#allocation6 + $0x39e8] sm:$0xff]
    %v2516 = vld [vmem:[#allocation6 + $0x39f0] sm:$0xff]
    %v2517 = vld [vmem:[#allocation6 + $0x39f8] sm:$0xff]
    %v2518 = vld [vmem:[#allocation6 + $0x3a00] sm:$0xff]
    %v2519 = vld [vmem:[#allocation6 + $0x3a08] sm:$0xff]
    %v2520 = vld [vmem:[#allocation6 + $0x3a10] sm:$0xff]
    %v2521 = vld [vmem:[#allocation6 + $0x3a18] sm:$0xff]
    %v2522 = vld [vmem:[#allocation6 + $0x3a20] sm:$0xff]
    %v2523 = vld [vmem:[#allocation6 + $0x3a28] sm:$0xff]
    %v2524 = vld [vmem:[#allocation6 + $0x3a30] sm:$0xff]
    %v2525 = vld [vmem:[#allocation6 + $0x3a38] sm:$0xff]
    %v2526 = vld [vmem:[#allocation6 + $0x3a40] sm:$0xff]
    %v2527 = vld [vmem:[#allocation6 + $0x3a48] sm:$0xff]
    %v2528 = vld [vmem:[#allocation6 + $0x3a50] sm:$0xff]
    %v2529 = vld [vmem:[#allocation6 + $0x3a58] sm:$0xff]
    %v2530 = vld [vmem:[#allocation6 + $0x3a60] sm:$0xff]
    %v2531 = vld [vmem:[#allocation6 + $0x3a68] sm:$0xff]
    %v2532 = vld [vmem:[#allocation6 + $0x3a70] sm:$0xff]
    %v2533 = vld [vmem:[#allocation6 + $0x3a78] sm:$0xff]
    %v2534 = vld [vmem:[#allocation6 + $0x3a80] sm:$0xff]
    %v2535 = vld [vmem:[#allocation6 + $0x3a88] sm:$0xff]
    %v2536 = vld [vmem:[#allocation6 + $0x3a90] sm:$0xff]
    %v2537 = vld [vmem:[#allocation6 + $0x3a98] sm:$0xff]
    %v2538 = vld [vmem:[#allocation6 + $0x3aa0] sm:$0xff]
    %v2539 = vld [vmem:[#allocation6 + $0x3aa8] sm:$0xff]
    %v2540 = vld [vmem:[#allocation6 + $0x3ab0] sm:$0xff]
    %v2541 = vld [vmem:[#allocation6 + $0x3ab8] sm:$0xff]
    %v2542 = vld [vmem:[#allocation6 + $0x3ac0] sm:$0xff]
    %v2543 = vld [vmem:[#allocation6 + $0x3ac8] sm:$0xff]
    %v2544 = vld [vmem:[#allocation6 + $0x3ad0] sm:$0xff]
    %v2545 = vld [vmem:[#allocation6 + $0x3ad8] sm:$0xff]
    %v2546 = vld [vmem:[#allocation6 + $0x3ae0] sm:$0xff]
    %v2547 = vld [vmem:[#allocation6 + $0x3ae8] sm:$0xff]
    %v2548 = vld [vmem:[#allocation6 + $0x3af0] sm:$0xff]
    %v2549 = vld [vmem:[#allocation6 + $0x3af8] sm:$0xff]
    %v2550 = vld [vmem:[#allocation6 + $0x3b00] sm:$0xff]
    %v2551 = vld [vmem:[#allocation6 + $0x3b08] sm:$0xff]
    %v2552 = vld [vmem:[#allocation6 + $0x3b10] sm:$0xff]
    %v2553 = vld [vmem:[#allocation6 + $0x3b18] sm:$0xff]
    %v2554 = vld [vmem:[#allocation6 + $0x3b20] sm:$0xff]
    %v2555 = vld [vmem:[#allocation6 + $0x3b28] sm:$0xff]
    %v2556 = vld [vmem:[#allocation6 + $0x3b30] sm:$0xff]
    %v2557 = vld [vmem:[#allocation6 + $0x3b38] sm:$0xff]
    %v2558 = vld [vmem:[#allocation6 + $0x3b40] sm:$0xff]
    %v2559 = vld [vmem:[#allocation6 + $0x3b48] sm:$0xff]
    %v2560 = vld [vmem:[#allocation6 + $0x3b50] sm:$0xff]
    %v2561 = vld [vmem:[#allocation6 + $0x3b58] sm:$0xff]
    %v2562 = vld [vmem:[#allocation6 + $0x3b60] sm:$0xff]
    %v2563 = vld [vmem:[#allocation6 + $0x3b68] sm:$0xff]
    %v2564 = vld [vmem:[#allocation6 + $0x3b70] sm:$0xff]
    %v2565 = vld [vmem:[#allocation6 + $0x3b78] sm:$0xff]
    %v2566 = vld [vmem:[#allocation6 + $0x3b80] sm:$0xff]
    %v2567 = vld [vmem:[#allocation6 + $0x3b88] sm:$0xff]
    %v2568 = vld [vmem:[#allocation6 + $0x3b90] sm:$0xff]
    %v2569 = vld [vmem:[#allocation6 + $0x3b98] sm:$0xff]
    %v2570 = vld [vmem:[#allocation6 + $0x3ba0] sm:$0xff]
    %v2571 = vld [vmem:[#allocation6 + $0x3ba8] sm:$0xff]
    %v2572 = vld [vmem:[#allocation6 + $0x3bb0] sm:$0xff]
    %v2573 = vld [vmem:[#allocation6 + $0x3bb8] sm:$0xff]
    %v2574 = vld [vmem:[#allocation6 + $0x3bc0] sm:$0xff]
    %v2575 = vld [vmem:[#allocation6 + $0x3bc8] sm:$0xff]
    %v2576 = vld [vmem:[#allocation6 + $0x3bd0] sm:$0xff]
    %v2577 = vld [vmem:[#allocation6 + $0x3bd8] sm:$0xff]
    %v2578 = vld [vmem:[#allocation6 + $0x3be0] sm:$0xff]
    %v2579 = vld [vmem:[#allocation6 + $0x3be8] sm:$0xff]
    %v2580 = vld [vmem:[#allocation6 + $0x3bf0] sm:$0xff]
    %v2581 = vld [vmem:[#allocation6 + $0x3bf8] sm:$0xff]
    %v2582 = vld [vmem:[#allocation6 + $0x3c00] sm:$0xff]
    %v2583 = vld [vmem:[#allocation6 + $0x3c08] sm:$0xff]
    %v2584 = vld [vmem:[#allocation6 + $0x3c10] sm:$0xff]
    %v2585 = vld [vmem:[#allocation6 + $0x3c18] sm:$0xff]
    %v2586 = vld [vmem:[#allocation6 + $0x3c20] sm:$0xff]
    %v2587 = vld [vmem:[#allocation6 + $0x3c28] sm:$0xff]
    %v2588 = vld [vmem:[#allocation6 + $0x3c30] sm:$0xff]
    %v2589 = vld [vmem:[#allocation6 + $0x3c38] sm:$0xff]
    %v2590 = vld [vmem:[#allocation6 + $0x3c40] sm:$0xff]
    %v2591 = vld [vmem:[#allocation6 + $0x3c48] sm:$0xff]
    %v2592 = vld [vmem:[#allocation6 + $0x3c50] sm:$0xff]
    %v2593 = vld [vmem:[#allocation6 + $0x3c58] sm:$0xff]
    %v2594 = vld [vmem:[#allocation6 + $0x3c60] sm:$0xff]
    %v2595 = vld [vmem:[#allocation6 + $0x3c68] sm:$0xff]
    %v2596 = vld [vmem:[#allocation6 + $0x3c70] sm:$0xff]
    %v2597 = vld [vmem:[#allocation6 + $0x3c78] sm:$0xff]
    %v2598 = vld [vmem:[#allocation6 + $0x3c80] sm:$0xff]
    %v2599 = vld [vmem:[#allocation6 + $0x3c88] sm:$0xff]
    %v2600 = vld [vmem:[#allocation6 + $0x3c90] sm:$0xff]
    %v2601 = vld [vmem:[#allocation6 + $0x3c98] sm:$0xff]
    %v2602 = vld [vmem:[#allocation6 + $0x3ca0] sm:$0xff]
    %v2603 = vld [vmem:[#allocation6 + $0x3ca8] sm:$0xff]
    %v2604 = vld [vmem:[#allocation6 + $0x3cb0] sm:$0xff]
    %v2605 = vld [vmem:[#allocation6 + $0x3cb8] sm:$0xff]
    %v2606 = vld [vmem:[#allocation6 + $0x3cc0] sm:$0xff]
    %v2607 = vld [vmem:[#allocation6 + $0x3cc8] sm:$0xff]
    %v2608 = vld [vmem:[#allocation6 + $0x3cd0] sm:$0xff]
    %v2609 = vld [vmem:[#allocation6 + $0x3cd8] sm:$0xff]
    %v2610 = vld [vmem:[#allocation6 + $0x3ce0] sm:$0xff]
    %v2611 = vld [vmem:[#allocation6 + $0x3ce8] sm:$0xff]
    %v2612 = vld [vmem:[#allocation6 + $0x3cf0] sm:$0xff]
    %v2613 = vld [vmem:[#allocation6 + $0x3cf8] sm:$0xff]
    %v2614 = vld [vmem:[#allocation6 + $0x3d00] sm:$0xff]
    %v2615 = vld [vmem:[#allocation6 + $0x3d08] sm:$0xff]
    %v2616 = vld [vmem:[#allocation6 + $0x3d10] sm:$0xff]
    %v2617 = vld [vmem:[#allocation6 + $0x3d18] sm:$0xff]
    %v2618 = vld [vmem:[#allocation6 + $0x3d20] sm:$0xff]
    %v2619 = vld [vmem:[#allocation6 + $0x3d28] sm:$0xff]
    %v2620 = vld [vmem:[#allocation6 + $0x3d30] sm:$0xff]
    %v2621 = vld [vmem:[#allocation6 + $0x3d38] sm:$0xff]
    %v2622 = vld [vmem:[#allocation6 + $0x3d40] sm:$0xff]
    %v2623 = vld [vmem:[#allocation6 + $0x3d48] sm:$0xff]
    %v2624 = vld [vmem:[#allocation6 + $0x3d50] sm:$0xff]
    %v2625 = vld [vmem:[#allocation6 + $0x3d58] sm:$0xff]
    %v2626 = vld [vmem:[#allocation6 + $0x3d60] sm:$0xff]
    %v2627 = vld [vmem:[#allocation6 + $0x3d68] sm:$0xff]
    %v2628 = vld [vmem:[#allocation6 + $0x3d70] sm:$0xff]
    %v2629 = vld [vmem:[#allocation6 + $0x3d78] sm:$0xff]
    %v2630 = vld [vmem:[#allocation6 + $0x3d80] sm:$0xff]
    %v2631 = vld [vmem:[#allocation6 + $0x3d88] sm:$0xff]
    %v2632 = vld [vmem:[#allocation6 + $0x3d90] sm:$0xff]
    %v2633 = vld [vmem:[#allocation6 + $0x3d98] sm:$0xff]
    %v2634 = vld [vmem:[#allocation6 + $0x3da0] sm:$0xff]
    %v2635 = vld [vmem:[#allocation6 + $0x3da8] sm:$0xff]
    %v2636 = vld [vmem:[#allocation6 + $0x3db0] sm:$0xff]
    %v2637 = vld [vmem:[#allocation6 + $0x3db8] sm:$0xff]
    %v2638 = vld [vmem:[#allocation6 + $0x3dc0] sm:$0xff]
    %v2639 = vld [vmem:[#allocation6 + $0x3dc8] sm:$0xff]
    %v2640 = vld [vmem:[#allocation6 + $0x3dd0] sm:$0xff]
    %v2641 = vld [vmem:[#allocation6 + $0x3dd8] sm:$0xff]
    %v2642 = vld [vmem:[#allocation6 + $0x3de0] sm:$0xff]
    %v2643 = vld [vmem:[#allocation6 + $0x3de8] sm:$0xff]
    %v2644 = vld [vmem:[#allocation6 + $0x3df0] sm:$0xff]
    %v2645 = vld [vmem:[#allocation6 + $0x3df8] sm:$0xff]
    %v2646 = vld [vmem:[#allocation6 + $0x3e00] sm:$0xff]
    %v2647 = vld [vmem:[#allocation6 + $0x3e08] sm:$0xff]
    %v2648 = vld [vmem:[#allocation6 + $0x3e10] sm:$0xff]
    %v2649 = vld [vmem:[#allocation6 + $0x3e18] sm:$0xff]
    %v2650 = vld [vmem:[#allocation6 + $0x3e20] sm:$0xff]
    %v2651 = vld [vmem:[#allocation6 + $0x3e28] sm:$0xff]
    %v2652 = vld [vmem:[#allocation6 + $0x3e30] sm:$0xff]
    %v2653 = vld [vmem:[#allocation6 + $0x3e38] sm:$0xff]
    %v2654 = vld [vmem:[#allocation6 + $0x3e40] sm:$0xff]
    %v2655 = vld [vmem:[#allocation6 + $0x3e48] sm:$0xff]
    %v2656 = vld [vmem:[#allocation6 + $0x3e50] sm:$0xff]
    %v2657 = vld [vmem:[#allocation6 + $0x3e58] sm:$0xff]
    %v2658 = vld [vmem:[#allocation6 + $0x3e60] sm:$0xff]
    %v2659 = vld [vmem:[#allocation6 + $0x3e68] sm:$0xff]
    %v2660 = vld [vmem:[#allocation6 + $0x3e70] sm:$0xff]
    %v2661 = vld [vmem:[#allocation6 + $0x3e78] sm:$0xff]
    %v2662 = vld [vmem:[#allocation6 + $0x3e80] sm:$0xff]
    %v2663 = vld [vmem:[#allocation6 + $0x3e88] sm:$0xff]
    %v2664 = vld [vmem:[#allocation6 + $0x3e90] sm:$0xff]
    %v2665 = vld [vmem:[#allocation6 + $0x3e98] sm:$0xff]
    %v2666 = vld [vmem:[#allocation6 + $0x3ea0] sm:$0xff]
    %v2667 = vld [vmem:[#allocation6 + $0x3ea8] sm:$0xff]
    %v2668 = vld [vmem:[#allocation6 + $0x3eb0] sm:$0xff]
    %v2669 = vld [vmem:[#allocation6 + $0x3eb8] sm:$0xff]
    %v2670 = vld [vmem:[#allocation6 + $0x3ec0] sm:$0xff]
    %v2671 = vld [vmem:[#allocation6 + $0x3ec8] sm:$0xff]
    %v2672 = vld [vmem:[#allocation6 + $0x3ed0] sm:$0xff]
    %v2673 = vld [vmem:[#allocation6 + $0x3ed8] sm:$0xff]
    %v2674 = vld [vmem:[#allocation6 + $0x3ee0] sm:$0xff]
    %v2675 = vld [vmem:[#allocation6 + $0x3ee8] sm:$0xff]
    %v2676 = vld [vmem:[#allocation6 + $0x3ef0] sm:$0xff]
    %v2677 = vld [vmem:[#allocation6 + $0x3ef8] sm:$0xff]
    %v2678 = vld [vmem:[#allocation6 + $0x3f00] sm:$0xff]
    %v2679 = vld [vmem:[#allocation6 + $0x3f08] sm:$0xff]
    %v2680 = vld [vmem:[#allocation6 + $0x3f10] sm:$0xff]
    %v2681 = vld [vmem:[#allocation6 + $0x3f18] sm:$0xff]
    %v2682 = vld [vmem:[#allocation6 + $0x3f20] sm:$0xff]
    %v2683 = vld [vmem:[#allocation6 + $0x3f28] sm:$0xff]
    %v2684 = vld [vmem:[#allocation6 + $0x3f30] sm:$0xff]
    %v2685 = vld [vmem:[#allocation6 + $0x3f38] sm:$0xff]
    %v2686 = vld [vmem:[#allocation6 + $0x3f40] sm:$0xff]
    %v2687 = vld [vmem:[#allocation6 + $0x3f48] sm:$0xff]
    %v2688 = vld [vmem:[#allocation6 + $0x3f50] sm:$0xff]
    %v2689 = vld [vmem:[#allocation6 + $0x3f58] sm:$0xff]
    %v2690 = vld [vmem:[#allocation6 + $0x3f60] sm:$0xff]
    %v2691 = vld [vmem:[#allocation6 + $0x3f68] sm:$0xff]
    %v2692 = vld [vmem:[#allocation6 + $0x3f70] sm:$0xff]
    %v2693 = vld [vmem:[#allocation6 + $0x3f78] sm:$0xff]
    %v2694 = vld [vmem:[#allocation6 + $0x3f80] sm:$0xff]
    %v2695 = vld [vmem:[#allocation6 + $0x3f88] sm:$0xff]
    %v2696 = vld [vmem:[#allocation6 + $0x3f90] sm:$0xff]
    %v2697 = vld [vmem:[#allocation6 + $0x3f98] sm:$0xff]
    %v2698 = vld [vmem:[#allocation6 + $0x3fa0] sm:$0xff]
    %v2699 = vld [vmem:[#allocation6 + $0x3fa8] sm:$0xff]
    %v2700 = vld [vmem:[#allocation6 + $0x3fb0] sm:$0xff]
    %v2701 = vld [vmem:[#allocation6 + $0x3fb8] sm:$0xff]
    %v2702 = vld [vmem:[#allocation6 + $0x3fc0] sm:$0xff]
    %v2703 = vld [vmem:[#allocation6 + $0x3fc8] sm:$0xff]
    %v2704 = vld [vmem:[#allocation6 + $0x3fd0] sm:$0xff]
    %v2705 = vld [vmem:[#allocation6 + $0x3fd8] sm:$0xff]
    %v2706 = vld [vmem:[#allocation6 + $0x3fe0] sm:$0xff]
    %v2707 = vld [vmem:[#allocation6 + $0x3fe8] sm:$0xff]
    %v2708 = vld [vmem:[#allocation6 + $0x3ff0] sm:$0xff]
    %v2709 = vld [vmem:[#allocation6 + $0x3ff8] sm:$0xff]
    %v2710 = vld [vmem:[#allocation7] sm:$0xff]
    %v2711 = vld [vmem:[#allocation7 + $0x8] sm:$0xff]
    %v2714 = vlaneseq
    %v2715 = vshrl.u32 %v2714, 7
    %v2716 = vsub.s32 0, %v2715
    %v2717 = vrot.slane %v2710, %v2716
    %v2718 = vlaneseq
    %v2719 = vshrl.u32 %v2718, 7
    %v2720 = vsub.s32 1, %v2719
    %v2721 = vrot.slane %v2710, %v2720
    %v2722 = vlaneseq
    %v2723 = vshrl.u32 %v2722, 7
    %v2724 = vsub.s32 2, %v2723
    %v2725 = vrot.slane %v2710, %v2724
    %v2726 = vlaneseq
    %v2727 = vshrl.u32 %v2726, 7
    %v2728 = vsub.s32 3, %v2727
    %v2729 = vrot.slane %v2710, %v2728
    %v2730 = vlaneseq
    %v2731 = vshrl.u32 %v2730, 7
    %v2732 = vsub.s32 4, %v2731
    %v2733 = vrot.slane %v2710, %v2732
    %v2734 = vlaneseq
    %v2735 = vshrl.u32 %v2734, 7
    %v2736 = vsub.s32 5, %v2735
    %v2737 = vrot.slane %v2710, %v2736
    %v2738 = vlaneseq
    %v2739 = vshrl.u32 %v2738, 7
    %v2740 = vsub.s32 6, %v2739
    %v2741 = vrot.slane %v2710, %v2740
    %v2742 = vlaneseq
    %v2743 = vshrl.u32 %v2742, 7
    %v2744 = vsub.s32 7, %v2743
    %v2745 = vrot.slane %v2710, %v2744
    %v2746 = vlaneseq
    %v2747 = vshrl.u32 %v2746, 7
    %v2748 = vsub.s32 0, %v2747
    %v2749 = vrot.slane %v2711, %v2748
    %v2750 = vlaneseq
    %v2751 = vshrl.u32 %v2750, 7
    %v2752 = vsub.s32 1, %v2751
    %v2753 = vrot.slane %v2711, %v2752
    %v2754 = vlaneseq
    %v2755 = vshrl.u32 %v2754, 7
    %v2756 = vsub.s32 2, %v2755
    %v2757 = vrot.slane %v2711, %v2756
    %v2758 = vlaneseq
    %v2759 = vshrl.u32 %v2758, 7
    %v2760 = vsub.s32 3, %v2759
    %v2761 = vrot.slane %v2711, %v2760
    %v2762 = vlaneseq
    %v2763 = vshrl.u32 %v2762, 7
    %v2764 = vsub.s32 4, %v2763
    %v2765 = vrot.slane %v2711, %v2764
    %v2766 = vlaneseq
    %v2767 = vshrl.u32 %v2766, 7
    %v2768 = vsub.s32 5, %v2767
    %v2769 = vrot.slane %v2711, %v2768
    %v2770 = vlaneseq
    %v2771 = vshrl.u32 %v2770, 7
    %v2772 = vsub.s32 6, %v2771
    %v2773 = vrot.slane %v2711, %v2772
    %v2774 = vlaneseq
    %v2775 = vshrl.u32 %v2774, 7
    %v2776 = vsub.s32 7, %v2775
    %v2777 = vrot.slane %v2711, %v2776
    %2794 = vmatprep.subr.mxu0 %v663
    %2795 = vmatpush1.msra.mxu0 %v662
    %2796 = vmatprep.subr.mxu0 %v679
    %2797 = vmatpush1.msra.mxu0 %v678
    %2798 = vmatprep.subr.mxu0 %v695
    %2799 = vmatpush1.msra.mxu0 %v694
    %2800 = vmatprep.subr.mxu0 %v711
    %2801 = vmatpush1.msra.mxu0 %v710
    %2802 = vmatprep.subr.mxu0 %v727
    %2803 = vmatpush1.msra.mxu0 %v726
    %2804 = vmatprep.subr.mxu0 %v743
    %2805 = vmatpush1.msra.mxu0 %v742
    %2806 = vmatprep.subr.mxu0 %v759
    %2807 = vmatpush1.msra.mxu0 %v758
    %2808 = vmatprep.subr.mxu0 %v775
    %2809 = vmatpush1.msra.mxu0 %v774
    %2810 = vmatprep.subr.mxu0 %v791
    %2811 = vmatpush1.msra.mxu0 %v790
    %2812 = vmatprep.subr.mxu0 %v807
    %2813 = vmatpush1.msra.mxu0 %v806
    %2814 = vmatprep.subr.mxu0 %v823
    %2815 = vmatpush1.msra.mxu0 %v822
    %2816 = vmatprep.subr.mxu0 %v839
    %2817 = vmatpush1.msra.mxu0 %v838
    %2818 = vmatprep.subr.mxu0 %v855
    %2819 = vmatpush1.msra.mxu0 %v854
    %2820 = vmatprep.subr.mxu0 %v871
    %2821 = vmatpush1.msra.mxu0 %v870
    %2822 = vmatprep.subr.mxu0 %v887
    %2823 = vmatpush1.msra.mxu0 %v886
    %2824 = vmatprep.subr.mxu0 %v903
    %2825 = vmatpush1.msra.mxu0 %v902
    %2826 = vmatprep.subr.mxu0 %v919
    %2827 = vmatpush1.msra.mxu0 %v918
    %2828 = vmatprep.subr.mxu0 %v935
    %2829 = vmatpush1.msra.mxu0 %v934
    %2830 = vmatprep.subr.mxu0 %v951
    %2831 = vmatpush1.msra.mxu0 %v950
    %2832 = vmatprep.subr.mxu0 %v967
    %2833 = vmatpush1.msra.mxu0 %v966
    %2834 = vmatprep.subr.mxu0 %v983
    %2835 = vmatpush1.msra.mxu0 %v982
    %2836 = vmatprep.subr.mxu0 %v999
    %2837 = vmatpush1.msra.mxu0 %v998
    %2838 = vmatprep.subr.mxu0 %v1015
    %2839 = vmatpush1.msra.mxu0 %v1014
    %2840 = vmatprep.subr.mxu0 %v1031
    %2841 = vmatpush1.msra.mxu0 %v1030
    %2842 = vmatprep.subr.mxu0 %v1047
    %2843 = vmatpush1.msra.mxu0 %v1046
    %2844 = vmatprep.subr.mxu0 %v1063
    %2845 = vmatpush1.msra.mxu0 %v1062
    %2846 = vmatprep.subr.mxu0 %v1079
    %2847 = vmatpush1.msra.mxu0 %v1078
    %2848 = vmatprep.subr.mxu0 %v1095
    %2849 = vmatpush1.msra.mxu0 %v1094
    %2850 = vmatprep.subr.mxu0 %v1111
    %2851 = vmatpush1.msra.mxu0 %v1110
    %2852 = vmatprep.subr.mxu0 %v1127
    %2853 = vmatpush1.msra.mxu0 %v1126
    %2854 = vmatprep.subr.mxu0 %v1143
    %2855 = vmatpush1.msra.mxu0 %v1142
    %2856 = vmatprep.subr.mxu0 %v1159
    %2857 = vmatpush1.msra.mxu0 %v1158
    %2858 = vmatprep.mubr.f32.mxu0 %v647
    %2859 = vmatmul.mubr.f32.gmra.mrb[0].mxu0 %v646
    %v2860 = vpop.f32.mrb[0].mxu0
    %v2861 = vadd.f32 %v2717, %v2860
    %v2862 = vpop.f32.mrb[0].mxu0
    %v2863 = vadd.f32 %v2721, %v2862
    %2864 = vmatprep.mubr.f32.mxu0 %v655
    %2865 = vmatmul.mubr.f32.gmra.mrb[0].mxu0 %v654
    %v2866 = vpop.f32.mrb[0].mxu0
    %v2867 = vadd.f32 %v2717, %v2866
    %v2868 = vpop.f32.mrb[0].mxu0
    %v2869 = vadd.f32 %v2721, %v2868
    %2870 = vdwg.mxu0
    %2871 = vmatprep.subr.mxu0 %v1175
    %2872 = vmatpush1.msra.mxu0 %v1174
    %2873 = vmatprep.subr.mxu0 %v1191
    %2874 = vmatpush1.msra.mxu0 %v1190
    %2875 = vmatprep.subr.mxu0 %v1207
    %2876 = vmatpush1.msra.mxu0 %v1206
    %2877 = vmatprep.subr.mxu0 %v1223
    %2878 = vmatpush1.msra.mxu0 %v1222
    %2879 = vmatprep.subr.mxu0 %v1239
    %2880 = vmatpush1.msra.mxu0 %v1238
    %2881 = vmatprep.subr.mxu0 %v1255
    %2882 = vmatpush1.msra.mxu0 %v1254
    %2883 = vmatprep.subr.mxu0 %v1271
    %2884 = vmatpush1.msra.mxu0 %v1270
    %2885 = vmatprep.subr.mxu0 %v1287
    %2886 = vmatpush1.msra.mxu0 %v1286
    %2887 = vmatprep.subr.mxu0 %v1303
    %2888 = vmatpush1.msra.mxu0 %v1302
    %2889 = vmatprep.subr.mxu0 %v1319
    %2890 = vmatpush1.msra.mxu0 %v1318
    %2891 = vmatprep.subr.mxu0 %v1335
    %2892 = vmatpush1.msra.mxu0 %v1334
    %2893 = vmatprep.subr.mxu0 %v1351
    %2894 = vmatpush1.msra.mxu0 %v1350
    %2895 = vmatprep.subr.mxu0 %v1367
    %2896 = vmatpush1.msra.mxu0 %v1366
    %2897 = vmatprep.subr.mxu0 %v1383
    %2898 = vmatpush1.msra.mxu0 %v1382
    %2899 = vmatprep.subr.mxu0 %v1399
    %2900 = vmatpush1.msra.mxu0 %v1398
    %2901 = vmatprep.subr.mxu0 %v1415
    %2902 = vmatpush1.msra.mxu0 %v1414
    %2903 = vmatprep.subr.mxu0 %v1431
    %2904 = vmatpush1.msra.mxu0 %v1430
    %2905 = vmatprep.subr.mxu0 %v1447
    %2906 = vmatpush1.msra.mxu0 %v1446
    %2907 = vmatprep.subr.mxu0 %v1463
    %2908 = vmatpush1.msra.mxu0 %v1462
    %2909 = vmatprep.subr.mxu0 %v1479
    %2910 = vmatpush1.msra.mxu0 %v1478
    %2911 = vmatprep.subr.mxu0 %v1495
    %2912 = vmatpush1.msra.mxu0 %v1494
    %2913 = vmatprep.subr.mxu0 %v1511
    %2914 = vmatpush1.msra.mxu0 %v1510
    %2915 = vmatprep.subr.mxu0 %v1527
    %2916 = vmatpush1.msra.mxu0 %v1526
    %2917 = vmatprep.subr.mxu0 %v1543
    %2918 = vmatpush1.msra.mxu0 %v1542
    %2919 = vmatprep.subr.mxu0 %v1559
    %2920 = vmatpush1.msra.mxu0 %v1558
    %2921 = vmatprep.subr.mxu0 %v1575
    %2922 = vmatpush1.msra.mxu0 %v1574
    %2923 = vmatprep.subr.mxu0 %v1591
    %2924 = vmatpush1.msra.mxu0 %v1590
    %2925 = vmatprep.subr.mxu0 %v1607
    %2926 = vmatpush1.msra.mxu0 %v1606
    %2927 = vmatprep.subr.mxu0 %v1623
    %2928 = vmatpush1.msra.mxu0 %v1622
    %2929 = vmatprep.subr.mxu0 %v1639
    %2930 = vmatpush1.msra.mxu0 %v1638
    %2931 = vmatprep.subr.mxu0 %v1655
    %2932 = vmatpush1.msra.mxu0 %v1654
    %2933 = vmatprep.subr.mxu0 %v1671
    %2934 = vmatpush1.msra.mxu0 %v1670
    %2935 = vmatprep.mubr.f32.mxu0 %v649
    %2936 = vmatmul.mubr.f32.gmra.mrb[0].mxu0 %v648
    %v2937 = vpop.f32.mrb[0].mxu0
    %v2938 = vadd.f32 %v2861, %v2937
    %v2939 = vpop.f32.mrb[0].mxu0
    %v2940 = vadd.f32 %v2863, %v2939
    %2941 = vmatprep.mubr.f32.mxu0 %v657
    %2942 = vmatmul.mubr.f32.gmra.mrb[0].mxu0 %v656
    %v2943 = vpop.f32.mrb[0].mxu0
    %v2944 = vadd.f32 %v2867, %v2943
    %v2945 = vpop.f32.mrb[0].mxu0
    %v2946 = vadd.f32 %v2869, %v2945
    %2947 = vdwg.mxu0
    %2948 = vmatprep.subr.mxu0 %v1687
    %2949 = vmatpush1.msra.mxu0 %v1686
    %2950 = vmatprep.subr.mxu0 %v1703
    %2951 = vmatpush1.msra.mxu0 %v1702
    %2952 = vmatprep.subr.mxu0 %v1719
    %2953 = vmatpush1.msra.mxu0 %v1718
    %2954 = vmatprep.subr.mxu0 %v1735
    %2955 = vmatpush1.msra.mxu0 %v1734
    %2956 = vmatprep.subr.mxu0 %v1751
    %2957 = vmatpush1.msra.mxu0 %v1750
    %2958 = vmatprep.subr.mxu0 %v1767
    %2959 = vmatpush1.msra.mxu0 %v1766
    %2960 = vmatprep.subr.mxu0 %v1783
    %2961 = vmatpush1.msra.mxu0 %v1782
    %2962 = vmatprep.subr.mxu0 %v1799
    %2963 = vmatpush1.msra.mxu0 %v1798
    %2964 = vmatprep.subr.mxu0 %v1815
    %2965 = vmatpush1.msra.mxu0 %v1814
    %2966 = vmatprep.subr.mxu0 %v1831
    %2967 = vmatpush1.msra.mxu0 %v1830
    %2968 = vmatprep.subr.mxu0 %v1847
    %2969 = vmatpush1.msra.mxu0 %v1846
    %2970 = vmatprep.subr.mxu0 %v1863
    %2971 = vmatpush1.msra.mxu0 %v1862
    %2972 = vmatprep.subr.mxu0 %v1879
    %2973 = vmatpush1.msra.mxu0 %v1878
    %2974 = vmatprep.subr.mxu0 %v1895
    %2975 = vmatpush1.msra.mxu0 %v1894
    %2976 = vmatprep.subr.mxu0 %v1911
    %2977 = vmatpush1.msra.mxu0 %v1910
    %2978 = vmatprep.subr.mxu0 %v1927
    %2979 = vmatpush1.msra.mxu0 %v1926
    %2980 = vmatprep.subr.mxu0 %v1943
    %2981 = vmatpush1.msra.mxu0 %v1942
    %2982 = vmatprep.subr.mxu0 %v1959
    %2983 = vmatpush1.msra.mxu0 %v1958
    %2984 = vmatprep.subr.mxu0 %v1975
    %2985 = vmatpush1.msra.mxu0 %v1974
    %2986 = vmatprep.subr.mxu0 %v1991
    %2987 = vmatpush1.msra.mxu0 %v1990
    %2988 = vmatprep.subr.mxu0 %v2007
    %2989 = vmatpush1.msra.mxu0 %v2006
    %2990 = vmatprep.subr.mxu0 %v2023
    %2991 = vmatpush1.msra.mxu0 %v2022
    %2992 = vmatprep.subr.mxu0 %v2039
    %2993 = vmatpush1.msra.mxu0 %v2038
    %2994 = vmatprep.subr.mxu0 %v2055
    %2995 = vmatpush1.msra.mxu0 %v2054
    %2996 = vmatprep.subr.mxu0 %v2071
    %2997 = vmatpush1.msra.mxu0 %v2070
    %2998 = vmatprep.subr.mxu0 %v2087
    %2999 = vmatpush1.msra.mxu0 %v2086
    %3000 = vmatprep.subr.mxu0 %v2103
    %3001 = vmatpush1.msra.mxu0 %v2102
    %3002 = vmatprep.subr.mxu0 %v2119
    %3003 = vmatpush1.msra.mxu0 %v2118
    %3004 = vmatprep.subr.mxu0 %v2135
    %3005 = vmatpush1.msra.mxu0 %v2134
    %3006 = vmatprep.subr.mxu0 %v2151
    %3007 = vmatpush1.msra.mxu0 %v2150
    %3008 = vmatprep.subr.mxu0 %v2167
    %3009 = vmatpush1.msra.mxu0 %v2166
    %3010 = vmatprep.subr.mxu0 %v2183
    %3011 = vmatpush1.msra.mxu0 %v2182
    %3012 = vmatprep.mubr.f32.mxu0 %v651
    %3013 = vmatmul.mubr.f32.gmra.mrb[0].mxu0 %v650
    %v3014 = vpop.f32.mrb[0].mxu0
    %v3015 = vadd.f32 %v2938, %v3014
    %v3016 = vpop.f32.mrb[0].mxu0
    %v3017 = vadd.f32 %v2940, %v3016
    %3018 = vmatprep.mubr.f32.mxu0 %v659
    %3019 = vmatmul.mubr.f32.gmra.mrb[0].mxu0 %v658
    %v3020 = vpop.f32.mrb[0].mxu0
    %v3021 = vadd.f32 %v2944, %v3020
    %v3022 = vpop.f32.mrb[0].mxu0
    %v3023 = vadd.f32 %v2946, %v3022
    %3024 = vdwg.mxu0
    %3025 = vmatprep.subr.mxu0 %v2199
    %3026 = vmatpush1.msra.mxu0 %v2198
    %3027 = vmatprep.subr.mxu0 %v2215
    %3028 = vmatpush1.msra.mxu0 %v2214
    %3029 = vmatprep.subr.mxu0 %v2231
    %3030 = vmatpush1.msra.mxu0 %v2230
    %3031 = vmatprep.subr.mxu0 %v2247
    %3032 = vmatpush1.msra.mxu0 %v2246
    %3033 = vmatprep.subr.mxu0 %v2263
    %3034 = vmatpush1.msra.mxu0 %v2262
    %3035 = vmatprep.subr.mxu0 %v2279
    %3036 = vmatpush1.msra.mxu0 %v2278
    %3037 = vmatprep.subr.mxu0 %v2295
    %3038 = vmatpush1.msra.mxu0 %v2294
    %3039 = vmatprep.subr.mxu0 %v2311
    %3040 = vmatpush1.msra.mxu0 %v2310
    %3041 = vmatprep.subr.mxu0 %v2327
    %3042 = vmatpush1.msra.mxu0 %v2326
    %3043 = vmatprep.subr.mxu0 %v2343
    %3044 = vmatpush1.msra.mxu0 %v2342
    %3045 = vmatprep.subr.mxu0 %v2359
    %3046 = vmatpush1.msra.mxu0 %v2358
    %3047 = vmatprep.subr.mxu0 %v2375
    %3048 = vmatpush1.msra.mxu0 %v2374
    %3049 = vmatprep.subr.mxu0 %v2391
    %3050 = vmatpush1.msra.mxu0 %v2390
    %3051 = vmatprep.subr.mxu0 %v2407
    %3052 = vmatpush1.msra.mxu0 %v2406
    %3053 = vmatprep.subr.mxu0 %v2423
    %3054 = vmatpush1.msra.mxu0 %v2422
    %3055 = vmatprep.subr.mxu0 %v2439
    %3056 = vmatpush1.msra.mxu0 %v2438
    %3057 = vmatprep.subr.mxu0 %v2455
    %3058 = vmatpush1.msra.mxu0 %v2454
    %3059 = vmatprep.subr.mxu0 %v2471
    %3060 = vmatpush1.msra.mxu0 %v2470
    %3061 = vmatprep.subr.mxu0 %v2487
    %3062 = vmatpush1.msra.mxu0 %v2486
    %3063 = vmatprep.subr.mxu0 %v2503
    %3064 = vmatpush1.msra.mxu0 %v2502
    %3065 = vmatprep.subr.mxu0 %v2519
    %3066 = vmatpush1.msra.mxu0 %v2518
    %3067 = vmatprep.subr.mxu0 %v2535
    %3068 = vmatpush1.msra.mxu0 %v2534
    %3069 = vmatprep.subr.mxu0 %v2551
    %3070 = vmatpush1.msra.mxu0 %v2550
    %3071 = vmatprep.subr.mxu0 %v2567
    %3072 = vmatpush1.msra.mxu0 %v2566
    %3073 = vmatprep.subr.mxu0 %v2583
    %3074 = vmatpush1.msra.mxu0 %v2582
    %3075 = vmatprep.subr.mxu0 %v2599
    %3076 = vmatpush1.msra.mxu0 %v2598
    %3077 = vmatprep.subr.mxu0 %v2615
    %3078 = vmatpush1.msra.mxu0 %v2614
    %3079 = vmatprep.subr.mxu0 %v2631
    %3080 = vmatpush1.msra.mxu0 %v2630
    %3081 = vmatprep.subr.mxu0 %v2647
    %3082 = vmatpush1.msra.mxu0 %v2646
    %3083 = vmatprep.subr.mxu0 %v2663
    %3084 = vmatpush1.msra.mxu0 %v2662
    %3085 = vmatprep.subr.mxu0 %v2679
    %3086 = vmatpush1.msra.mxu0 %v2678
    %3087 = vmatprep.subr.mxu0 %v2695
    %3088 = vmatpush1.msra.mxu0 %v2694
    %3089 = vmatprep.mubr.f32.mxu0 %v653
    %3090 = vmatmul.mubr.f32.gmra.mrb[0].mxu0 %v652
    %v3091 = vpop.f32.mrb[0].mxu0
    %v3092 = vadd.f32 %v3015, %v3091
    %v3093 = vpop.f32.mrb[0].mxu0
    %v3094 = vadd.f32 %v3017, %v3093
    %3095 = vmatprep.mubr.f32.mxu0 %v661
    %3096 = vmatmul.mubr.f32.gmra.mrb[0].mxu0 %v660
    %v3097 = vpop.f32.mrb[0].mxu0
    %v3098 = vadd.f32 %v3021, %v3097
    %v3099 = vpop.f32.mrb[0].mxu0
    %v3100 = vadd.f32 %v3023, %v3099
    %3101 = vdwg.mxu0
    %3102 = vmatprep.subr.mxu0 %v665
    %3103 = vmatpush1.msra.mxu0 %v664
    %3104 = vmatprep.subr.mxu0 %v681
    %3105 = vmatpush1.msra.mxu0 %v680
    %3106 = vmatprep.subr.mxu0 %v697
    %3107 = vmatpush1.msra.mxu0 %v696
    %3108 = vmatprep.subr.mxu0 %v713
    %3109 = vmatpush1.msra.mxu0 %v712
    %3110 = vmatprep.subr.mxu0 %v729
    %3111 = vmatpush1.msra.mxu0 %v728
    %3112 = vmatprep.subr.mxu0 %v745
    %3113 = vmatpush1.msra.mxu0 %v744
    %3114 = vmatprep.subr.mxu0 %v761
    %3115 = vmatpush1.msra.mxu0 %v760
    %3116 = vmatprep.subr.mxu0 %v777
    %3117 = vmatpush1.msra.mxu0 %v776
    %3118 = vmatprep.subr.mxu0 %v793
    %3119 = vmatpush1.msra.mxu0 %v792
    %3120 = vmatprep.subr.mxu0 %v809
    %3121 = vmatpush1.msra.mxu0 %v808
    %3122 = vmatprep.subr.mxu0 %v825
    %3123 = vmatpush1.msra.mxu0 %v824
    %3124 = vmatprep.subr.mxu0 %v841
    %3125 = vmatpush1.msra.mxu0 %v840
    %3126 = vmatprep.subr.mxu0 %v857
    %3127 = vmatpush1.msra.mxu0 %v856
    %3128 = vmatprep.subr.mxu0 %v873
    %3129 = vmatpush1.msra.mxu0 %v872
    %3130 = vmatprep.subr.mxu0 %v889
    %3131 = vmatpush1.msra.mxu0 %v888
    %3132 = vmatprep.subr.mxu0 %v905
    %3133 = vmatpush1.msra.mxu0 %v904
    %3134 = vmatprep.subr.mxu0 %v921
    %3135 = vmatpush1.msra.mxu0 %v920
    %3136 = vmatprep.subr.mxu0 %v937
    %3137 = vmatpush1.msra.mxu0 %v936
    %3138 = vmatprep.subr.mxu0 %v953
    %3139 = vmatpush1.msra.mxu0 %v952
    %3140 = vmatprep.subr.mxu0 %v969
    %3141 = vmatpush1.msra.mxu0 %v968
    %3142 = vmatprep.subr.mxu0 %v985
    %3143 = vmatpush1.msra.mxu0 %v984
    %3144 = vmatprep.subr.mxu0 %v1001
    %3145 = vmatpush1.msra.mxu0 %v1000
    %3146 = vmatprep.subr.mxu0 %v1017
    %3147 = vmatpush1.msra.mxu0 %v1016
    %3148 = vmatprep.subr.mxu0 %v1033
    %3149 = vmatpush1.msra.mxu0 %v1032
    %3150 = vmatprep.subr.mxu0 %v1049
    %3151 = vmatpush1.msra.mxu0 %v1048
    %3152 = vmatprep.subr.mxu0 %v1065
    %3153 = vmatpush1.msra.mxu0 %v1064
    %3154 = vmatprep.subr.mxu0 %v1081
    %3155 = vmatpush1.msra.mxu0 %v1080
    %3156 = vmatprep.subr.mxu0 %v1097
    %3157 = vmatpush1.msra.mxu0 %v1096
    %3158 = vmatprep.subr.mxu0 %v1113
    %3159 = vmatpush1.msra.mxu0 %v1112
    %3160 = vmatprep.subr.mxu0 %v1129
    %3161 = vmatpush1.msra.mxu0 %v1128
    %3162 = vmatprep.subr.mxu0 %v1145
    %3163 = vmatpush1.msra.mxu0 %v1144
    %3164 = vmatprep.subr.mxu0 %v1161
    %3165 = vmatpush1.msra.mxu0 %v1160
    %3166 = vmatprep.mubr.f32.mxu0 %v647
    %3167 = vmatmul.mubr.f32.gmra.mrb[0].mxu0 %v646
    %v3168 = vpop.f32.mrb[0].mxu0
    %v3169 = vadd.f32 %v2725, %v3168
    %v3170 = vpop.f32.mrb[0].mxu0
    %v3171 = vadd.f32 %v2729, %v3170
    %3172 = vmatprep.mubr.f32.mxu0 %v655
    %3173 = vmatmul.mubr.f32.gmra.mrb[0].mxu0 %v654
    %v3174 = vpop.f32.mrb[0].mxu0
    %v3175 = vadd.f32 %v2725, %v3174
    %v3176 = vpop.f32.mrb[0].mxu0
    %v3177 = vadd.f32 %v2729, %v3176
    %3178 = vdwg.mxu0
    %3179 = vmatprep.subr.mxu0 %v1177
    %3180 = vmatpush1.msra.mxu0 %v1176
    %3181 = vmatprep.subr.mxu0 %v1193
    %3182 = vmatpush1.msra.mxu0 %v1192
    %3183 = vmatprep.subr.mxu0 %v1209
    %3184 = vmatpush1.msra.mxu0 %v1208
    %3185 = vmatprep.subr.mxu0 %v1225
    %3186 = vmatpush1.msra.mxu0 %v1224
    %3187 = vmatprep.subr.mxu0 %v1241
    %3188 = vmatpush1.msra.mxu0 %v1240
    %3189 = vmatprep.subr.mxu0 %v1257
    %3190 = vmatpush1.msra.mxu0 %v1256
    %3191 = vmatprep.subr.mxu0 %v1273
    %3192 = vmatpush1.msra.mxu0 %v1272
    %3193 = vmatprep.subr.mxu0 %v1289
    %3194 = vmatpush1.msra.mxu0 %v1288
    %3195 = vmatprep.subr.mxu0 %v1305
    %3196 = vmatpush1.msra.mxu0 %v1304
    %3197 = vmatprep.subr.mxu0 %v1321
    %3198 = vmatpush1.msra.mxu0 %v1320
    %3199 = vmatprep.subr.mxu0 %v1337
    %3200 = vmatpush1.msra.mxu0 %v1336
    %3201 = vmatprep.subr.mxu0 %v1353
    %3202 = vmatpush1.msra.mxu0 %v1352
    %3203 = vmatprep.subr.mxu0 %v1369
    %3204 = vmatpush1.msra.mxu0 %v1368
    %3205 = vmatprep.subr.mxu0 %v1385
    %3206 = vmatpush1.msra.mxu0 %v1384
    %3207 = vmatprep.subr.mxu0 %v1401
    %3208 = vmatpush1.msra.mxu0 %v1400
    %3209 = vmatprep.subr.mxu0 %v1417
    %3210 = vmatpush1.msra.mxu0 %v1416
    %3211 = vmatprep.subr.mxu0 %v1433
    %3212 = vmatpush1.msra.mxu0 %v1432
    %3213 = vmatprep.subr.mxu0 %v1449
    %3214 = vmatpush1.msra.mxu0 %v1448
    %3215 = vmatprep.subr.mxu0 %v1465
    %3216 = vmatpush1.msra.mxu0 %v1464
    %3217 = vmatprep.subr.mxu0 %v1481
    %3218 = vmatpush1.msra.mxu0 %v1480
    %3219 = vmatprep.subr.mxu0 %v1497
    %3220 = vmatpush1.msra.mxu0 %v1496
    %3221 = vmatprep.subr.mxu0 %v1513
    %3222 = vmatpush1.msra.mxu0 %v1512
    %3223 = vmatprep.subr.mxu0 %v1529
    %3224 = vmatpush1.msra.mxu0 %v1528
    %3225 = vmatprep.subr.mxu0 %v1545
    %3226 = vmatpush1.msra.mxu0 %v1544
    %3227 = vmatprep.subr.mxu0 %v1561
    %3228 = vmatpush1.msra.mxu0 %v1560
    %3229 = vmatprep.subr.mxu0 %v1577
    %3230 = vmatpush1.msra.mxu0 %v1576
    %3231 = vmatprep.subr.mxu0 %v1593
    %3232 = vmatpush1.msra.mxu0 %v1592
    %3233 = vmatprep.subr.mxu0 %v1609
    %3234 = vmatpush1.msra.mxu0 %v1608
    %3235 = vmatprep.subr.mxu0 %v1625
    %3236 = vmatpush1.msra.mxu0 %v1624
    %3237 = vmatprep.subr.mxu0 %v1641
    %3238 = vmatpush1.msra.mxu0 %v1640
    %3239 = vmatprep.subr.mxu0 %v1657
    %3240 = vmatpush1.msra.mxu0 %v1656
    %3241 = vmatprep.subr.mxu0 %v1673
    %3242 = vmatpush1.msra.mxu0 %v1672
    %3243 = vmatprep.mubr.f32.mxu0 %v649
    %3244 = vmatmul.mubr.f32.gmra.mrb[0].mxu0 %v648
    %v3245 = vpop.f32.mrb[0].mxu0
    %v3246 = vadd.f32 %v3169, %v3245
    %v3247 = vpop.f32.mrb[0].mxu0
    %v3248 = vadd.f32 %v3171, %v3247
    %3249 = vmatprep.mubr.f32.mxu0 %v657
    %3250 = vmatmul.mubr.f32.gmra.mrb[0].mxu0 %v656
    %v3251 = vpop.f32.mrb[0].mxu0
    %v3252 = vadd.f32 %v3175, %v3251
    %v3253 = vpop.f32.mrb[0].mxu0
    %v3254 = vadd.f32 %v3177, %v3253
    %3255 = vdwg.mxu0
    %3256 = vmatprep.subr.mxu0 %v1689
    %3257 = vmatpush1.msra.mxu0 %v1688
    %3258 = vmatprep.subr.mxu0 %v1705
    %3259 = vmatpush1.msra.mxu0 %v1704
    %3260 = vmatprep.subr.mxu0 %v1721
    %3261 = vmatpush1.msra.mxu0 %v1720
    %3262 = vmatprep.subr.mxu0 %v1737
    %3263 = vmatpush1.msra.mxu0 %v1736
    %3264 = vmatprep.subr.mxu0 %v1753
    %3265 = vmatpush1.msra.mxu0 %v1752
    %3266 = vmatprep.subr.mxu0 %v1769
    %3267 = vmatpush1.msra.mxu0 %v1768
    %3268 = vmatprep.subr.mxu0 %v1785
    %3269 = vmatpush1.msra.mxu0 %v1784
    %3270 = vmatprep.subr.mxu0 %v1801
    %3271 = vmatpush1.msra.mxu0 %v1800
    %3272 = vmatprep.subr.mxu0 %v1817
    %3273 = vmatpush1.msra.mxu0 %v1816
    %3274 = vmatprep.subr.mxu0 %v1833
    %3275 = vmatpush1.msra.mxu0 %v1832
    %3276 = vmatprep.subr.mxu0 %v1849
    %3277 = vmatpush1.msra.mxu0 %v1848
    %3278 = vmatprep.subr.mxu0 %v1865
    %3279 = vmatpush1.msra.mxu0 %v1864
    %3280 = vmatprep.subr.mxu0 %v1881
    %3281 = vmatpush1.msra.mxu0 %v1880
    %3282 = vmatprep.subr.mxu0 %v1897
    %3283 = vmatpush1.msra.mxu0 %v1896
    %3284 = vmatprep.subr.mxu0 %v1913
    %3285 = vmatpush1.msra.mxu0 %v1912
    %3286 = vmatprep.subr.mxu0 %v1929
    %3287 = vmatpush1.msra.mxu0 %v1928
    %3288 = vmatprep.subr.mxu0 %v1945
    %3289 = vmatpush1.msra.mxu0 %v1944
    %3290 = vmatprep.subr.mxu0 %v1961
    %3291 = vmatpush1.msra.mxu0 %v1960
    %3292 = vmatprep.subr.mxu0 %v1977
    %3293 = vmatpush1.msra.mxu0 %v1976
    %3294 = vmatprep.subr.mxu0 %v1993
    %3295 = vmatpush1.msra.mxu0 %v1992
    %3296 = vmatprep.subr.mxu0 %v2009
    %3297 = vmatpush1.msra.mxu0 %v2008
    %3298 = vmatprep.subr.mxu0 %v2025
    %3299 = vmatpush1.msra.mxu0 %v2024
    %3300 = vmatprep.subr.mxu0 %v2041
    %3301 = vmatpush1.msra.mxu0 %v2040
    %3302 = vmatprep.subr.mxu0 %v2057
    %3303 = vmatpush1.msra.mxu0 %v2056
    %3304 = vmatprep.subr.mxu0 %v2073
    %3305 = vmatpush1.msra.mxu0 %v2072
    %3306 = vmatprep.subr.mxu0 %v2089
    %3307 = vmatpush1.msra.mxu0 %v2088
    %3308 = vmatprep.subr.mxu0 %v2105
    %3309 = vmatpush1.msra.mxu0 %v2104
    %3310 = vmatprep.subr.mxu0 %v2121
    %3311 = vmatpush1.msra.mxu0 %v2120
    %3312 = vmatprep.subr.mxu0 %v2137
    %3313 = vmatpush1.msra.mxu0 %v2136
    %3314 = vmatprep.subr.mxu0 %v2153
    %3315 = vmatpush1.msra.mxu0 %v2152
    %3316 = vmatprep.subr.mxu0 %v2169
    %3317 = vmatpush1.msra.mxu0 %v2168
    %3318 = vmatprep.subr.mxu0 %v2185
    %3319 = vmatpush1.msra.mxu0 %v2184
    %3320 = vmatprep.mubr.f32.mxu0 %v651
    %3321 = vmatmul.mubr.f32.gmra.mrb[0].mxu0 %v650
    %v3322 = vpop.f32.mrb[0].mxu0
    %v3323 = vadd.f32 %v3246, %v3322
    %v3324 = vpop.f32.mrb[0].mxu0
    %v3325 = vadd.f32 %v3248, %v3324
    %3326 = vmatprep.mubr.f32.mxu0 %v659
    %3327 = vmatmul.mubr.f32.gmra.mrb[0].mxu0 %v658
    %v3328 = vpop.f32.mrb[0].mxu0
    %v3329 = vadd.f32 %v3252, %v3328
    %v3330 = vpop.f32.mrb[0].mxu0
    %v3331 = vadd.f32 %v3254, %v3330
    %3332 = vdwg.mxu0
    %3333 = vmatprep.subr.mxu0 %v2201
    %3334 = vmatpush1.msra.mxu0 %v2200
    %3335 = vmatprep.subr.mxu0 %v2217
    %3336 = vmatpush1.msra.mxu0 %v2216
    %3337 = vmatprep.subr.mxu0 %v2233
    %3338 = vmatpush1.msra.mxu0 %v2232
    %3339 = vmatprep.subr.mxu0 %v2249
    %3340 = vmatpush1.msra.mxu0 %v2248
    %3341 = vmatprep.subr.mxu0 %v2265
    %3342 = vmatpush1.msra.mxu0 %v2264
    %3343 = vmatprep.subr.mxu0 %v2281
    %3344 = vmatpush1.msra.mxu0 %v2280
    %3345 = vmatprep.subr.mxu0 %v2297
    %3346 = vmatpush1.msra.mxu0 %v2296
    %3347 = vmatprep.subr.mxu0 %v2313
    %3348 = vmatpush1.msra.mxu0 %v2312
    %3349 = vmatprep.subr.mxu0 %v2329
    %3350 = vmatpush1.msra.mxu0 %v2328
    %3351 = vmatprep.subr.mxu0 %v2345
    %3352 = vmatpush1.msra.mxu0 %v2344
    %3353 = vmatprep.subr.mxu0 %v2361
    %3354 = vmatpush1.msra.mxu0 %v2360
    %3355 = vmatprep.subr.mxu0 %v2377
    %3356 = vmatpush1.msra.mxu0 %v2376
    %3357 = vmatprep.subr.mxu0 %v2393
    %3358 = vmatpush1.msra.mxu0 %v2392
    %3359 = vmatprep.subr.mxu0 %v2409
    %3360 = vmatpush1.msra.mxu0 %v2408
    %3361 = vmatprep.subr.mxu0 %v2425
    %3362 = vmatpush1.msra.mxu0 %v2424
    %3363 = vmatprep.subr.mxu0 %v2441
    %3364 = vmatpush1.msra.mxu0 %v2440
    %3365 = vmatprep.subr.mxu0 %v2457
    %3366 = vmatpush1.msra.mxu0 %v2456
    %3367 = vmatprep.subr.mxu0 %v2473
    %3368 = vmatpush1.msra.mxu0 %v2472
    %3369 = vmatprep.subr.mxu0 %v2489
    %3370 = vmatpush1.msra.mxu0 %v2488
    %3371 = vmatprep.subr.mxu0 %v2505
    %3372 = vmatpush1.msra.mxu0 %v2504
    %3373 = vmatprep.subr.mxu0 %v2521
    %3374 = vmatpush1.msra.mxu0 %v2520
    %3375 = vmatprep.subr.mxu0 %v2537
    %3376 = vmatpush1.msra.mxu0 %v2536
    %3377 = vmatprep.subr.mxu0 %v2553
    %3378 = vmatpush1.msra.mxu0 %v2552
    %3379 = vmatprep.subr.mxu0 %v2569
    %3380 = vmatpush1.msra.mxu0 %v2568
    %3381 = vmatprep.subr.mxu0 %v2585
    %3382 = vmatpush1.msra.mxu0 %v2584
    %3383 = vmatprep.subr.mxu0 %v2601
    %3384 = vmatpush1.msra.mxu0 %v2600
    %3385 = vmatprep.subr.mxu0 %v2617
    %3386 = vmatpush1.msra.mxu0 %v2616
    %3387 = vmatprep.subr.mxu0 %v2633
    %3388 = vmatpush1.msra.mxu0 %v2632
    %3389 = vmatprep.subr.mxu0 %v2649
    %3390 = vmatpush1.msra.mxu0 %v2648
    %3391 = vmatprep.subr.mxu0 %v2665
    %3392 = vmatpush1.msra.mxu0 %v2664
    %3393 = vmatprep.subr.mxu0 %v2681
    %3394 = vmatpush1.msra.mxu0 %v2680
    %3395 = vmatprep.subr.mxu0 %v2697
    %3396 = vmatpush1.msra.mxu0 %v2696
    %3397 = vmatprep.mubr.f32.mxu0 %v653
    %3398 = vmatmul.mubr.f32.gmra.mrb[0].mxu0 %v652
    %v3399 = vpop.f32.mrb[0].mxu0
    %v3400 = vadd.f32 %v3323, %v3399
    %v3401 = vpop.f32.mrb[0].mxu0
    %v3402 = vadd.f32 %v3325, %v3401
    %3403 = vmatprep.mubr.f32.mxu0 %v661
    %3404 = vmatmul.mubr.f32.gmra.mrb[0].mxu0 %v660
    %v3405 = vpop.f32.mrb[0].mxu0
    %v3406 = vadd.f32 %v3329, %v3405
    %v3407 = vpop.f32.mrb[0].mxu0
    %v3408 = vadd.f32 %v3331, %v3407
    %3409 = vdwg.mxu0
    %3410 = vmatprep.subr.mxu0 %v667
    %3411 = vmatpush1.msra.mxu0 %v666
    %3412 = vmatprep.subr.mxu0 %v683
    %3413 = vmatpush1.msra.mxu0 %v682
    %3414 = vmatprep.subr.mxu0 %v699
    %3415 = vmatpush1.msra.mxu0 %v698
    %3416 = vmatprep.subr.mxu0 %v715
    %3417 = vmatpush1.msra.mxu0 %v714
    %3418 = vmatprep.subr.mxu0 %v731
    %3419 = vmatpush1.msra.mxu0 %v730
    %3420 = vmatprep.subr.mxu0 %v747
    %3421 = vmatpush1.msra.mxu0 %v746
    %3422 = vmatprep.subr.mxu0 %v763
    %3423 = vmatpush1.msra.mxu0 %v762
    %3424 = vmatprep.subr.mxu0 %v779
    %3425 = vmatpush1.msra.mxu0 %v778
    %3426 = vmatprep.subr.mxu0 %v795
    %3427 = vmatpush1.msra.mxu0 %v794
    %3428 = vmatprep.subr.mxu0 %v811
    %3429 = vmatpush1.msra.mxu0 %v810
    %3430 = vmatprep.subr.mxu0 %v827
    %3431 = vmatpush1.msra.mxu0 %v826
    %3432 = vmatprep.subr.mxu0 %v843
    %3433 = vmatpush1.msra.mxu0 %v842
    %3434 = vmatprep.subr.mxu0 %v859
    %3435 = vmatpush1.msra.mxu0 %v858
    %3436 = vmatprep.subr.mxu0 %v875
    %3437 = vmatpush1.msra.mxu0 %v874
    %3438 = vmatprep.subr.mxu0 %v891
    %3439 = vmatpush1.msra.mxu0 %v890
    %3440 = vmatprep.subr.mxu0 %v907
    %3441 = vmatpush1.msra.mxu0 %v906
    %3442 = vmatprep.subr.mxu0 %v923
    %3443 = vmatpush1.msra.mxu0 %v922
    %3444 = vmatprep.subr.mxu0 %v939
    %3445 = vmatpush1.msra.mxu0 %v938
    %3446 = vmatprep.subr.mxu0 %v955
    %3447 = vmatpush1.msra.mxu0 %v954
    %3448 = vmatprep.subr.mxu0 %v971
    %3449 = vmatpush1.msra.mxu0 %v970
    %3450 = vmatprep.subr.mxu0 %v987
    %3451 = vmatpush1.msra.mxu0 %v986
    %3452 = vmatprep.subr.mxu0 %v1003
    %3453 = vmatpush1.msra.mxu0 %v1002
    %3454 = vmatprep.subr.mxu0 %v1019
    %3455 = vmatpush1.msra.mxu0 %v1018
    %3456 = vmatprep.subr.mxu0 %v1035
    %3457 = vmatpush1.msra.mxu0 %v1034
    %3458 = vmatprep.subr.mxu0 %v1051
    %3459 = vmatpush1.msra.mxu0 %v1050
    %3460 = vmatprep.subr.mxu0 %v1067
    %3461 = vmatpush1.msra.mxu0 %v1066
    %3462 = vmatprep.subr.mxu0 %v1083
    %3463 = vmatpush1.msra.mxu0 %v1082
    %3464 = vmatprep.subr.mxu0 %v1099
    %3465 = vmatpush1.msra.mxu0 %v1098
    %3466 = vmatprep.subr.mxu0 %v1115
    %3467 = vmatpush1.msra.mxu0 %v1114
    %3468 = vmatprep.subr.mxu0 %v1131
    %3469 = vmatpush1.msra.mxu0 %v1130
    %3470 = vmatprep.subr.mxu0 %v1147
    %3471 = vmatpush1.msra.mxu0 %v1146
    %3472 = vmatprep.subr.mxu0 %v1163
    %3473 = vmatpush1.msra.mxu0 %v1162
    %3474 = vmatprep.mubr.f32.mxu0 %v647
    %3475 = vmatmul.mubr.f32.gmra.mrb[0].mxu0 %v646
    %v3476 = vpop.f32.mrb[0].mxu0
    %v3477 = vadd.f32 %v2733, %v3476
    %v3478 = vpop.f32.mrb[0].mxu0
    %v3479 = vadd.f32 %v2737, %v3478
    %3480 = vmatprep.mubr.f32.mxu0 %v655
    %3481 = vmatmul.mubr.f32.gmra.mrb[0].mxu0 %v654
    %v3482 = vpop.f32.mrb[0].mxu0
    %v3483 = vadd.f32 %v2733, %v3482
    %v3484 = vpop.f32.mrb[0].mxu0
    %v3485 = vadd.f32 %v2737, %v3484
    %3486 = vdwg.mxu0
    %3487 = vmatprep.subr.mxu0 %v1179
    %3488 = vmatpush1.msra.mxu0 %v1178
    %3489 = vmatprep.subr.mxu0 %v1195
    %3490 = vmatpush1.msra.mxu0 %v1194
    %3491 = vmatprep.subr.mxu0 %v1211
    %3492 = vmatpush1.msra.mxu0 %v1210
    %3493 = vmatprep.subr.mxu0 %v1227
    %3494 = vmatpush1.msra.mxu0 %v1226
    %3495 = vmatprep.subr.mxu0 %v1243
    %3496 = vmatpush1.msra.mxu0 %v1242
    %3497 = vmatprep.subr.mxu0 %v1259
    %3498 = vmatpush1.msra.mxu0 %v1258
    %3499 = vmatprep.subr.mxu0 %v1275
    %3500 = vmatpush1.msra.mxu0 %v1274
    %3501 = vmatprep.subr.mxu0 %v1291
    %3502 = vmatpush1.msra.mxu0 %v1290
    %3503 = vmatprep.subr.mxu0 %v1307
    %3504 = vmatpush1.msra.mxu0 %v1306
    %3505 = vmatprep.subr.mxu0 %v1323
    %3506 = vmatpush1.msra.mxu0 %v1322
    %3507 = vmatprep.subr.mxu0 %v1339
    %3508 = vmatpush1.msra.mxu0 %v1338
    %3509 = vmatprep.subr.mxu0 %v1355
    %3510 = vmatpush1.msra.mxu0 %v1354
    %3511 = vmatprep.subr.mxu0 %v1371
    %3512 = vmatpush1.msra.mxu0 %v1370
    %3513 = vmatprep.subr.mxu0 %v1387
    %3514 = vmatpush1.msra.mxu0 %v1386
    %3515 = vmatprep.subr.mxu0 %v1403
    %3516 = vmatpush1.msra.mxu0 %v1402
    %3517 = vmatprep.subr.mxu0 %v1419
    %3518 = vmatpush1.msra.mxu0 %v1418
    %3519 = vmatprep.subr.mxu0 %v1435
    %3520 = vmatpush1.msra.mxu0 %v1434
    %3521 = vmatprep.subr.mxu0 %v1451
    %3522 = vmatpush1.msra.mxu0 %v1450
    %3523 = vmatprep.subr.mxu0 %v1467
    %3524 = vmatpush1.msra.mxu0 %v1466
    %3525 = vmatprep.subr.mxu0 %v1483
    %3526 = vmatpush1.msra.mxu0 %v1482
    %3527 = vmatprep.subr.mxu0 %v1499
    %3528 = vmatpush1.msra.mxu0 %v1498
    %3529 = vmatprep.subr.mxu0 %v1515
    %3530 = vmatpush1.msra.mxu0 %v1514
    %3531 = vmatprep.subr.mxu0 %v1531
    %3532 = vmatpush1.msra.mxu0 %v1530
    %3533 = vmatprep.subr.mxu0 %v1547
    %3534 = vmatpush1.msra.mxu0 %v1546
    %3535 = vmatprep.subr.mxu0 %v1563
    %3536 = vmatpush1.msra.mxu0 %v1562
    %3537 = vmatprep.subr.mxu0 %v1579
    %3538 = vmatpush1.msra.mxu0 %v1578
    %3539 = vmatprep.subr.mxu0 %v1595
    %3540 = vmatpush1.msra.mxu0 %v1594
    %3541 = vmatprep.subr.mxu0 %v1611
    %3542 = vmatpush1.msra.mxu0 %v1610
    %3543 = vmatprep.subr.mxu0 %v1627
    %3544 = vmatpush1.msra.mxu0 %v1626
    %3545 = vmatprep.subr.mxu0 %v1643
    %3546 = vmatpush1.msra.mxu0 %v1642
    %3547 = vmatprep.subr.mxu0 %v1659
    %3548 = vmatpush1.msra.mxu0 %v1658
    %3549 = vmatprep.subr.mxu0 %v1675
    %3550 = vmatpush1.msra.mxu0 %v1674
    %3551 = vmatprep.mubr.f32.mxu0 %v649
    %3552 = vmatmul.mubr.f32.gmra.mrb[0].mxu0 %v648
    %v3553 = vpop.f32.mrb[0].mxu0
    %v3554 = vadd.f32 %v3477, %v3553
    %v3555 = vpop.f32.mrb[0].mxu0
    %v3556 = vadd.f32 %v3479, %v3555
    %3557 = vmatprep.mubr.f32.mxu0 %v657
    %3558 = vmatmul.mubr.f32.gmra.mrb[0].mxu0 %v656
    %v3559 = vpop.f32.mrb[0].mxu0
    %v3560 = vadd.f32 %v3483, %v3559
    %v3561 = vpop.f32.mrb[0].mxu0
    %v3562 = vadd.f32 %v3485, %v3561
    %3563 = vdwg.mxu0
    %3564 = vmatprep.subr.mxu0 %v1691
    %3565 = vmatpush1.msra.mxu0 %v1690
    %3566 = vmatprep.subr.mxu0 %v1707
    %3567 = vmatpush1.msra.mxu0 %v1706
    %3568 = vmatprep.subr.mxu0 %v1723
    %3569 = vmatpush1.msra.mxu0 %v1722
    %3570 = vmatprep.subr.mxu0 %v1739
    %3571 = vmatpush1.msra.mxu0 %v1738
    %3572 = vmatprep.subr.mxu0 %v1755
    %3573 = vmatpush1.msra.mxu0 %v1754
    %3574 = vmatprep.subr.mxu0 %v1771
    %3575 = vmatpush1.msra.mxu0 %v1770
    %3576 = vmatprep.subr.mxu0 %v1787
    %3577 = vmatpush1.msra.mxu0 %v1786
    %3578 = vmatprep.subr.mxu0 %v1803
    %3579 = vmatpush1.msra.mxu0 %v1802
    %3580 = vmatprep.subr.mxu0 %v1819
    %3581 = vmatpush1.msra.mxu0 %v1818
    %3582 = vmatprep.subr.mxu0 %v1835
    %3583 = vmatpush1.msra.mxu0 %v1834
    %3584 = vmatprep.subr.mxu0 %v1851
    %3585 = vmatpush1.msra.mxu0 %v1850
    %3586 = vmatprep.subr.mxu0 %v1867
    %3587 = vmatpush1.msra.mxu0 %v1866
    %3588 = vmatprep.subr.mxu0 %v1883
    %3589 = vmatpush1.msra.mxu0 %v1882
    %3590 = vmatprep.subr.mxu0 %v1899
    %3591 = vmatpush1.msra.mxu0 %v1898
    %3592 = vmatprep.subr.mxu0 %v1915
    %3593 = vmatpush1.msra.mxu0 %v1914
    %3594 = vmatprep.subr.mxu0 %v1931
    %3595 = vmatpush1.msra.mxu0 %v1930
    %3596 = vmatprep.subr.mxu0 %v1947
    %3597 = vmatpush1.msra.mxu0 %v1946
    %3598 = vmatprep.subr.mxu0 %v1963
    %3599 = vmatpush1.msra.mxu0 %v1962
    %3600 = vmatprep.subr.mxu0 %v1979
    %3601 = vmatpush1.msra.mxu0 %v1978
    %3602 = vmatprep.subr.mxu0 %v1995
    %3603 = vmatpush1.msra.mxu0 %v1994
    %3604 = vmatprep.subr.mxu0 %v2011
    %3605 = vmatpush1.msra.mxu0 %v2010
    %3606 = vmatprep.subr.mxu0 %v2027
    %3607 = vmatpush1.msra.mxu0 %v2026
    %3608 = vmatprep.subr.mxu0 %v2043
    %3609 = vmatpush1.msra.mxu0 %v2042
    %3610 = vmatprep.subr.mxu0 %v2059
    %3611 = vmatpush1.msra.mxu0 %v2058
    %3612 = vmatprep.subr.mxu0 %v2075
    %3613 = vmatpush1.msra.mxu0 %v2074
    %3614 = vmatprep.subr.mxu0 %v2091
    %3615 = vmatpush1.msra.mxu0 %v2090
    %3616 = vmatprep.subr.mxu0 %v2107
    %3617 = vmatpush1.msra.mxu0 %v2106
    %3618 = vmatprep.subr.mxu0 %v2123
    %3619 = vmatpush1.msra.mxu0 %v2122
    %3620 = vmatprep.subr.mxu0 %v2139
    %3621 = vmatpush1.msra.mxu0 %v2138
    %3622 = vmatprep.subr.mxu0 %v2155
    %3623 = vmatpush1.msra.mxu0 %v2154
    %3624 = vmatprep.subr.mxu0 %v2171
    %3625 = vmatpush1.msra.mxu0 %v2170
    %3626 = vmatprep.subr.mxu0 %v2187
    %3627 = vmatpush1.msra.mxu0 %v2186
    %3628 = vmatprep.mubr.f32.mxu0 %v651
    %3629 = vmatmul.mubr.f32.gmra.mrb[0].mxu0 %v650
    %v3630 = vpop.f32.mrb[0].mxu0
    %v3631 = vadd.f32 %v3554, %v3630
    %v3632 = vpop.f32.mrb[0].mxu0
    %v3633 = vadd.f32 %v3556, %v3632
    %3634 = vmatprep.mubr.f32.mxu0 %v659
    %3635 = vmatmul.mubr.f32.gmra.mrb[0].mxu0 %v658
    %v3636 = vpop.f32.mrb[0].mxu0
    %v3637 = vadd.f32 %v3560, %v3636
    %v3638 = vpop.f32.mrb[0].mxu0
    %v3639 = vadd.f32 %v3562, %v3638
    %3640 = vdwg.mxu0
    %3641 = vmatprep.subr.mxu0 %v2203
    %3642 = vmatpush1.msra.mxu0 %v2202
    %3643 = vmatprep.subr.mxu0 %v2219
    %3644 = vmatpush1.msra.mxu0 %v2218
    %3645 = vmatprep.subr.mxu0 %v2235
    %3646 = vmatpush1.msra.mxu0 %v2234
    %3647 = vmatprep.subr.mxu0 %v2251
    %3648 = vmatpush1.msra.mxu0 %v2250
    %3649 = vmatprep.subr.mxu0 %v2267
    %3650 = vmatpush1.msra.mxu0 %v2266
    %3651 = vmatprep.subr.mxu0 %v2283
    %3652 = vmatpush1.msra.mxu0 %v2282
    %3653 = vmatprep.subr.mxu0 %v2299
    %3654 = vmatpush1.msra.mxu0 %v2298
    %3655 = vmatprep.subr.mxu0 %v2315
    %3656 = vmatpush1.msra.mxu0 %v2314
    %3657 = vmatprep.subr.mxu0 %v2331
    %3658 = vmatpush1.msra.mxu0 %v2330
    %3659 = vmatprep.subr.mxu0 %v2347
    %3660 = vmatpush1.msra.mxu0 %v2346
    %3661 = vmatprep.subr.mxu0 %v2363
    %3662 = vmatpush1.msra.mxu0 %v2362
    %3663 = vmatprep.subr.mxu0 %v2379
    %3664 = vmatpush1.msra.mxu0 %v2378
    %3665 = vmatprep.subr.mxu0 %v2395
    %3666 = vmatpush1.msra.mxu0 %v2394
    %3667 = vmatprep.subr.mxu0 %v2411
    %3668 = vmatpush1.msra.mxu0 %v2410
    %3669 = vmatprep.subr.mxu0 %v2427
    %3670 = vmatpush1.msra.mxu0 %v2426
    %3671 = vmatprep.subr.mxu0 %v2443
    %3672 = vmatpush1.msra.mxu0 %v2442
    %3673 = vmatprep.subr.mxu0 %v2459
    %3674 = vmatpush1.msra.mxu0 %v2458
    %3675 = vmatprep.subr.mxu0 %v2475
    %3676 = vmatpush1.msra.mxu0 %v2474
    %3677 = vmatprep.subr.mxu0 %v2491
    %3678 = vmatpush1.msra.mxu0 %v2490
    %3679 = vmatprep.subr.mxu0 %v2507
    %3680 = vmatpush1.msra.mxu0 %v2506
    %3681 = vmatprep.subr.mxu0 %v2523
    %3682 = vmatpush1.msra.mxu0 %v2522
    %3683 = vmatprep.subr.mxu0 %v2539
    %3684 = vmatpush1.msra.mxu0 %v2538
    %3685 = vmatprep.subr.mxu0 %v2555
    %3686 = vmatpush1.msra.mxu0 %v2554
    %3687 = vmatprep.subr.mxu0 %v2571
    %3688 = vmatpush1.msra.mxu0 %v2570
    %3689 = vmatprep.subr.mxu0 %v2587
    %3690 = vmatpush1.msra.mxu0 %v2586
    %3691 = vmatprep.subr.mxu0 %v2603
    %3692 = vmatpush1.msra.mxu0 %v2602
    %3693 = vmatprep.subr.mxu0 %v2619
    %3694 = vmatpush1.msra.mxu0 %v2618
    %3695 = vmatprep.subr.mxu0 %v2635
    %3696 = vmatpush1.msra.mxu0 %v2634
    %3697 = vmatprep.subr.mxu0 %v2651
    %3698 = vmatpush1.msra.mxu0 %v2650
    %3699 = vmatprep.subr.mxu0 %v2667
    %3700 = vmatpush1.msra.mxu0 %v2666
    %3701 = vmatprep.subr.mxu0 %v2683
    %3702 = vmatpush1.msra.mxu0 %v2682
    %3703 = vmatprep.subr.mxu0 %v2699
    %3704 = vmatpush1.msra.mxu0 %v2698
    %3705 = vmatprep.mubr.f32.mxu0 %v653
    %3706 = vmatmul.mubr.f32.gmra.mrb[0].mxu0 %v652
    %v3707 = vpop.f32.mrb[0].mxu0
    %v3708 = vadd.f32 %v3631, %v3707
    %v3709 = vpop.f32.mrb[0].mxu0
    %v3710 = vadd.f32 %v3633, %v3709
    %3711 = vmatprep.mubr.f32.mxu0 %v661
    %3712 = vmatmul.mubr.f32.gmra.mrb[0].mxu0 %v660
    %v3713 = vpop.f32.mrb[0].mxu0
    %v3714 = vadd.f32 %v3637, %v3713
    %v3715 = vpop.f32.mrb[0].mxu0
    %v3716 = vadd.f32 %v3639, %v3715
    %3717 = vdwg.mxu0
    %3718 = vmatprep.subr.mxu0 %v669
    %3719 = vmatpush1.msra.mxu0 %v668
    %3720 = vmatprep.subr.mxu0 %v685
    %3721 = vmatpush1.msra.mxu0 %v684
    %3722 = vmatprep.subr.mxu0 %v701
    %3723 = vmatpush1.msra.mxu0 %v700
    %3724 = vmatprep.subr.mxu0 %v717
    %3725 = vmatpush1.msra.mxu0 %v716
    %3726 = vmatprep.subr.mxu0 %v733
    %3727 = vmatpush1.msra.mxu0 %v732
    %3728 = vmatprep.subr.mxu0 %v749
    %3729 = vmatpush1.msra.mxu0 %v748
    %3730 = vmatprep.subr.mxu0 %v765
    %3731 = vmatpush1.msra.mxu0 %v764
    %3732 = vmatprep.subr.mxu0 %v781
    %3733 = vmatpush1.msra.mxu0 %v780
    %3734 = vmatprep.subr.mxu0 %v797
    %3735 = vmatpush1.msra.mxu0 %v796
    %3736 = vmatprep.subr.mxu0 %v813
    %3737 = vmatpush1.msra.mxu0 %v812
    %3738 = vmatprep.subr.mxu0 %v829
    %3739 = vmatpush1.msra.mxu0 %v828
    %3740 = vmatprep.subr.mxu0 %v845
    %3741 = vmatpush1.msra.mxu0 %v844
    %3742 = vmatprep.subr.mxu0 %v861
    %3743 = vmatpush1.msra.mxu0 %v860
    %3744 = vmatprep.subr.mxu0 %v877
    %3745 = vmatpush1.msra.mxu0 %v876
    %3746 = vmatprep.subr.mxu0 %v893
    %3747 = vmatpush1.msra.mxu0 %v892
    %3748 = vmatprep.subr.mxu0 %v909
    %3749 = vmatpush1.msra.mxu0 %v908
    %3750 = vmatprep.subr.mxu0 %v925
    %3751 = vmatpush1.msra.mxu0 %v924
    %3752 = vmatprep.subr.mxu0 %v941
    %3753 = vmatpush1.msra.mxu0 %v940
    %3754 = vmatprep.subr.mxu0 %v957
    %3755 = vmatpush1.msra.mxu0 %v956
    %3756 = vmatprep.subr.mxu0 %v973
    %3757 = vmatpush1.msra.mxu0 %v972
    %3758 = vmatprep.subr.mxu0 %v989
    %3759 = vmatpush1.msra.mxu0 %v988
    %3760 = vmatprep.subr.mxu0 %v1005
    %3761 = vmatpush1.msra.mxu0 %v1004
    %3762 = vmatprep.subr.mxu0 %v1021
    %3763 = vmatpush1.msra.mxu0 %v1020
    %3764 = vmatprep.subr.mxu0 %v1037
    %3765 = vmatpush1.msra.mxu0 %v1036
    %3766 = vmatprep.subr.mxu0 %v1053
    %3767 = vmatpush1.msra.mxu0 %v1052
    %3768 = vmatprep.subr.mxu0 %v1069
    %3769 = vmatpush1.msra.mxu0 %v1068
    %3770 = vmatprep.subr.mxu0 %v1085
    %3771 = vmatpush1.msra.mxu0 %v1084
    %3772 = vmatprep.subr.mxu0 %v1101
    %3773 = vmatpush1.msra.mxu0 %v1100
    %3774 = vmatprep.subr.mxu0 %v1117
    %3775 = vmatpush1.msra.mxu0 %v1116
    %3776 = vmatprep.subr.mxu0 %v1133
    %3777 = vmatpush1.msra.mxu0 %v1132
    %3778 = vmatprep.subr.mxu0 %v1149
    %3779 = vmatpush1.msra.mxu0 %v1148
    %3780 = vmatprep.subr.mxu0 %v1165
    %3781 = vmatpush1.msra.mxu0 %v1164
    %3782 = vmatprep.mubr.f32.mxu0 %v647
    %3783 = vmatmul.mubr.f32.gmra.mrb[0].mxu0 %v646
    %v3784 = vpop.f32.mrb[0].mxu0
    %v3785 = vadd.f32 %v2741, %v3784
    %v3786 = vpop.f32.mrb[0].mxu0
    %v3787 = vadd.f32 %v2745, %v3786
    %3788 = vmatprep.mubr.f32.mxu0 %v655
    %3789 = vmatmul.mubr.f32.gmra.mrb[0].mxu0 %v654
    %v3790 = vpop.f32.mrb[0].mxu0
    %v3791 = vadd.f32 %v2741, %v3790
    %v3792 = vpop.f32.mrb[0].mxu0
    %v3793 = vadd.f32 %v2745, %v3792
    %3794 = vdwg.mxu0
    %3795 = vmatprep.subr.mxu0 %v1181
    %3796 = vmatpush1.msra.mxu0 %v1180
    %3797 = vmatprep.subr.mxu0 %v1197
    %3798 = vmatpush1.msra.mxu0 %v1196
    %3799 = vmatprep.subr.mxu0 %v1213
    %3800 = vmatpush1.msra.mxu0 %v1212
    %3801 = vmatprep.subr.mxu0 %v1229
    %3802 = vmatpush1.msra.mxu0 %v1228
    %3803 = vmatprep.subr.mxu0 %v1245
    %3804 = vmatpush1.msra.mxu0 %v1244
    %3805 = vmatprep.subr.mxu0 %v1261
    %3806 = vmatpush1.msra.mxu0 %v1260
    %3807 = vmatprep.subr.mxu0 %v1277
    %3808 = vmatpush1.msra.mxu0 %v1276
    %3809 = vmatprep.subr.mxu0 %v1293
    %3810 = vmatpush1.msra.mxu0 %v1292
    %3811 = vmatprep.subr.mxu0 %v1309
    %3812 = vmatpush1.msra.mxu0 %v1308
    %3813 = vmatprep.subr.mxu0 %v1325
    %3814 = vmatpush1.msra.mxu0 %v1324
    %3815 = vmatprep.subr.mxu0 %v1341
    %3816 = vmatpush1.msra.mxu0 %v1340
    %3817 = vmatprep.subr.mxu0 %v1357
    %3818 = vmatpush1.msra.mxu0 %v1356
    %3819 = vmatprep.subr.mxu0 %v1373
    %3820 = vmatpush1.msra.mxu0 %v1372
    %3821 = vmatprep.subr.mxu0 %v1389
    %3822 = vmatpush1.msra.mxu0 %v1388
    %3823 = vmatprep.subr.mxu0 %v1405
    %3824 = vmatpush1.msra.mxu0 %v1404
    %3825 = vmatprep.subr.mxu0 %v1421
    %3826 = vmatpush1.msra.mxu0 %v1420
    %3827 = vmatprep.subr.mxu0 %v1437
    %3828 = vmatpush1.msra.mxu0 %v1436
    %3829 = vmatprep.subr.mxu0 %v1453
    %3830 = vmatpush1.msra.mxu0 %v1452
    %3831 = vmatprep.subr.mxu0 %v1469
    %3832 = vmatpush1.msra.mxu0 %v1468
    %3833 = vmatprep.subr.mxu0 %v1485
    %3834 = vmatpush1.msra.mxu0 %v1484
    %3835 = vmatprep.subr.mxu0 %v1501
    %3836 = vmatpush1.msra.mxu0 %v1500
    %3837 = vmatprep.subr.mxu0 %v1517
    %3838 = vmatpush1.msra.mxu0 %v1516
    %3839 = vmatprep.subr.mxu0 %v1533
    %3840 = vmatpush1.msra.mxu0 %v1532
    %3841 = vmatprep.subr.mxu0 %v1549
    %3842 = vmatpush1.msra.mxu0 %v1548
    %3843 = vmatprep.subr.mxu0 %v1565
    %3844 = vmatpush1.msra.mxu0 %v1564
    %3845 = vmatprep.subr.mxu0 %v1581
    %3846 = vmatpush1.msra.mxu0 %v1580
    %3847 = vmatprep.subr.mxu0 %v1597
    %3848 = vmatpush1.msra.mxu0 %v1596
    %3849 = vmatprep.subr.mxu0 %v1613
    %3850 = vmatpush1.msra.mxu0 %v1612
    %3851 = vmatprep.subr.mxu0 %v1629
    %3852 = vmatpush1.msra.mxu0 %v1628
    %3853 = vmatprep.subr.mxu0 %v1645
    %3854 = vmatpush1.msra.mxu0 %v1644
    %3855 = vmatprep.subr.mxu0 %v1661
    %3856 = vmatpush1.msra.mxu0 %v1660
    %3857 = vmatprep.subr.mxu0 %v1677
    %3858 = vmatpush1.msra.mxu0 %v1676
    %3859 = vmatprep.mubr.f32.mxu0 %v649
    %3860 = vmatmul.mubr.f32.gmra.mrb[0].mxu0 %v648
    %v3861 = vpop.f32.mrb[0].mxu0
    %v3862 = vadd.f32 %v3785, %v3861
    %v3863 = vpop.f32.mrb[0].mxu0
    %v3864 = vadd.f32 %v3787, %v3863
    %3865 = vmatprep.mubr.f32.mxu0 %v657
    %3866 = vmatmul.mubr.f32.gmra.mrb[0].mxu0 %v656
    %v3867 = vpop.f32.mrb[0].mxu0
    %v3868 = vadd.f32 %v3791, %v3867
    %v3869 = vpop.f32.mrb[0].mxu0
    %v3870 = vadd.f32 %v3793, %v3869
    %3871 = vdwg.mxu0
    %3872 = vmatprep.subr.mxu0 %v1693
    %3873 = vmatpush1.msra.mxu0 %v1692
    %3874 = vmatprep.subr.mxu0 %v1709
    %3875 = vmatpush1.msra.mxu0 %v1708
    %3876 = vmatprep.subr.mxu0 %v1725
    %3877 = vmatpush1.msra.mxu0 %v1724
    %3878 = vmatprep.subr.mxu0 %v1741
    %3879 = vmatpush1.msra.mxu0 %v1740
    %3880 = vmatprep.subr.mxu0 %v1757
    %3881 = vmatpush1.msra.mxu0 %v1756
    %3882 = vmatprep.subr.mxu0 %v1773
    %3883 = vmatpush1.msra.mxu0 %v1772
    %3884 = vmatprep.subr.mxu0 %v1789
    %3885 = vmatpush1.msra.mxu0 %v1788
    %3886 = vmatprep.subr.mxu0 %v1805
    %3887 = vmatpush1.msra.mxu0 %v1804
    %3888 = vmatprep.subr.mxu0 %v1821
    %3889 = vmatpush1.msra.mxu0 %v1820
    %3890 = vmatprep.subr.mxu0 %v1837
    %3891 = vmatpush1.msra.mxu0 %v1836
    %3892 = vmatprep.subr.mxu0 %v1853
    %3893 = vmatpush1.msra.mxu0 %v1852
    %3894 = vmatprep.subr.mxu0 %v1869
    %3895 = vmatpush1.msra.mxu0 %v1868
    %3896 = vmatprep.subr.mxu0 %v1885
    %3897 = vmatpush1.msra.mxu0 %v1884
    %3898 = vmatprep.subr.mxu0 %v1901
    %3899 = vmatpush1.msra.mxu0 %v1900
    %3900 = vmatprep.subr.mxu0 %v1917
    %3901 = vmatpush1.msra.mxu0 %v1916
    %3902 = vmatprep.subr.mxu0 %v1933
    %3903 = vmatpush1.msra.mxu0 %v1932
    %3904 = vmatprep.subr.mxu0 %v1949
    %3905 = vmatpush1.msra.mxu0 %v1948
    %3906 = vmatprep.subr.mxu0 %v1965
    %3907 = vmatpush1.msra.mxu0 %v1964
    %3908 = vmatprep.subr.mxu0 %v1981
    %3909 = vmatpush1.msra.mxu0 %v1980
    %3910 = vmatprep.subr.mxu0 %v1997
    %3911 = vmatpush1.msra.mxu0 %v1996
    %3912 = vmatprep.subr.mxu0 %v2013
    %3913 = vmatpush1.msra.mxu0 %v2012
    %3914 = vmatprep.subr.mxu0 %v2029
    %3915 = vmatpush1.msra.mxu0 %v2028
    %3916 = vmatprep.subr.mxu0 %v2045
    %3917 = vmatpush1.msra.mxu0 %v2044
    %3918 = vmatprep.subr.mxu0 %v2061
    %3919 = vmatpush1.msra.mxu0 %v2060
    %3920 = vmatprep.subr.mxu0 %v2077
    %3921 = vmatpush1.msra.mxu0 %v2076
    %3922 = vmatprep.subr.mxu0 %v2093
    %3923 = vmatpush1.msra.mxu0 %v2092
    %3924 = vmatprep.subr.mxu0 %v2109
    %3925 = vmatpush1.msra.mxu0 %v2108
    %3926 = vmatprep.subr.mxu0 %v2125
    %3927 = vmatpush1.msra.mxu0 %v2124
    %3928 = vmatprep.subr.mxu0 %v2141
    %3929 = vmatpush1.msra.mxu0 %v2140
    %3930 = vmatprep.subr.mxu0 %v2157
    %3931 = vmatpush1.msra.mxu0 %v2156
    %3932 = vmatprep.subr.mxu0 %v2173
    %3933 = vmatpush1.msra.mxu0 %v2172
    %3934 = vmatprep.subr.mxu0 %v2189
    %3935 = vmatpush1.msra.mxu0 %v2188
    %3936 = vmatprep.mubr.f32.mxu0 %v651
    %3937 = vmatmul.mubr.f32.gmra.mrb[0].mxu0 %v650
    %v3938 = vpop.f32.mrb[0].mxu0
    %v3939 = vadd.f32 %v3862, %v3938
    %v3940 = vpop.f32.mrb[0].mxu0
    %v3941 = vadd.f32 %v3864, %v3940
    %3942 = vmatprep.mubr.f32.mxu0 %v659
    %3943 = vmatmul.mubr.f32.gmra.mrb[0].mxu0 %v658
    %v3944 = vpop.f32.mrb[0].mxu0
    %v3945 = vadd.f32 %v3868, %v3944
    %v3946 = vpop.f32.mrb[0].mxu0
    %v3947 = vadd.f32 %v3870, %v3946
    %3948 = vdwg.mxu0
    %3949 = vmatprep.subr.mxu0 %v2205
    %3950 = vmatpush1.msra.mxu0 %v2204
    %3951 = vmatprep.subr.mxu0 %v2221
    %3952 = vmatpush1.msra.mxu0 %v2220
    %3953 = vmatprep.subr.mxu0 %v2237
    %3954 = vmatpush1.msra.mxu0 %v2236
    %3955 = vmatprep.subr.mxu0 %v2253
    %3956 = vmatpush1.msra.mxu0 %v2252
    %3957 = vmatprep.subr.mxu0 %v2269
    %3958 = vmatpush1.msra.mxu0 %v2268
    %3959 = vmatprep.subr.mxu0 %v2285
    %3960 = vmatpush1.msra.mxu0 %v2284
    %3961 = vmatprep.subr.mxu0 %v2301
    %3962 = vmatpush1.msra.mxu0 %v2300
    %3963 = vmatprep.subr.mxu0 %v2317
    %3964 = vmatpush1.msra.mxu0 %v2316
    %3965 = vmatprep.subr.mxu0 %v2333
    %3966 = vmatpush1.msra.mxu0 %v2332
    %3967 = vmatprep.subr.mxu0 %v2349
    %3968 = vmatpush1.msra.mxu0 %v2348
    %3969 = vmatprep.subr.mxu0 %v2365
    %3970 = vmatpush1.msra.mxu0 %v2364
    %3971 = vmatprep.subr.mxu0 %v2381
    %3972 = vmatpush1.msra.mxu0 %v2380
    %3973 = vmatprep.subr.mxu0 %v2397
    %3974 = vmatpush1.msra.mxu0 %v2396
    %3975 = vmatprep.subr.mxu0 %v2413
    %3976 = vmatpush1.msra.mxu0 %v2412
    %3977 = vmatprep.subr.mxu0 %v2429
    %3978 = vmatpush1.msra.mxu0 %v2428
    %3979 = vmatprep.subr.mxu0 %v2445
    %3980 = vmatpush1.msra.mxu0 %v2444
    %3981 = vmatprep.subr.mxu0 %v2461
    %3982 = vmatpush1.msra.mxu0 %v2460
    %3983 = vmatprep.subr.mxu0 %v2477
    %3984 = vmatpush1.msra.mxu0 %v2476
    %3985 = vmatprep.subr.mxu0 %v2493
    %3986 = vmatpush1.msra.mxu0 %v2492
    %3987 = vmatprep.subr.mxu0 %v2509
    %3988 = vmatpush1.msra.mxu0 %v2508
    %3989 = vmatprep.subr.mxu0 %v2525
    %3990 = vmatpush1.msra.mxu0 %v2524
    %3991 = vmatprep.subr.mxu0 %v2541
    %3992 = vmatpush1.msra.mxu0 %v2540
    %3993 = vmatprep.subr.mxu0 %v2557
    %3994 = vmatpush1.msra.mxu0 %v2556
    %3995 = vmatprep.subr.mxu0 %v2573
    %3996 = vmatpush1.msra.mxu0 %v2572
    %3997 = vmatprep.subr.mxu0 %v2589
    %3998 = vmatpush1.msra.mxu0 %v2588
    %3999 = vmatprep.subr.mxu0 %v2605
    %4000 = vmatpush1.msra.mxu0 %v2604
    %4001 = vmatprep.subr.mxu0 %v2621
    %4002 = vmatpush1.msra.mxu0 %v2620
    %4003 = vmatprep.subr.mxu0 %v2637
    %4004 = vmatpush1.msra.mxu0 %v2636
    %4005 = vmatprep.subr.mxu0 %v2653
    %4006 = vmatpush1.msra.mxu0 %v2652
    %4007 = vmatprep.subr.mxu0 %v2669
    %4008 = vmatpush1.msra.mxu0 %v2668
    %4009 = vmatprep.subr.mxu0 %v2685
    %4010 = vmatpush1.msra.mxu0 %v2684
    %4011 = vmatprep.subr.mxu0 %v2701
    %4012 = vmatpush1.msra.mxu0 %v2700
    %4013 = vmatprep.mubr.f32.mxu0 %v653
    %4014 = vmatmul.mubr.f32.gmra.mrb[0].mxu0 %v652
    %v4015 = vpop.f32.mrb[0].mxu0
    %v4016 = vadd.f32 %v3939, %v4015
    %v4017 = vpop.f32.mrb[0].mxu0
    %v4018 = vadd.f32 %v3941, %v4017
    %4019 = vmatprep.mubr.f32.mxu0 %v661
    %4020 = vmatmul.mubr.f32.gmra.mrb[0].mxu0 %v660
    %v4021 = vpop.f32.mrb[0].mxu0
    %v4022 = vadd.f32 %v3945, %v4021
    %v4023 = vpop.f32.mrb[0].mxu0
    %v4024 = vadd.f32 %v3947, %v4023
    %4025 = vdwg.mxu0
    %4026 = vmatprep.subr.mxu0 %v671
    %4027 = vmatpush1.msra.mxu0 %v670
    %4028 = vmatprep.subr.mxu0 %v687
    %4029 = vmatpush1.msra.mxu0 %v686
    %4030 = vmatprep.subr.mxu0 %v703
    %4031 = vmatpush1.msra.mxu0 %v702
    %4032 = vmatprep.subr.mxu0 %v719
    %4033 = vmatpush1.msra.mxu0 %v718
    %4034 = vmatprep.subr.mxu0 %v735
    %4035 = vmatpush1.msra.mxu0 %v734
    %4036 = vmatprep.subr.mxu0 %v751
    %4037 = vmatpush1.msra.mxu0 %v750
    %4038 = vmatprep.subr.mxu0 %v767
    %4039 = vmatpush1.msra.mxu0 %v766
    %4040 = vmatprep.subr.mxu0 %v783
    %4041 = vmatpush1.msra.mxu0 %v782
    %4042 = vmatprep.subr.mxu0 %v799
    %4043 = vmatpush1.msra.mxu0 %v798
    %4044 = vmatprep.subr.mxu0 %v815
    %4045 = vmatpush1.msra.mxu0 %v814
    %4046 = vmatprep.subr.mxu0 %v831
    %4047 = vmatpush1.msra.mxu0 %v830
    %4048 = vmatprep.subr.mxu0 %v847
    %4049 = vmatpush1.msra.mxu0 %v846
    %4050 = vmatprep.subr.mxu0 %v863
    %4051 = vmatpush1.msra.mxu0 %v862
    %4052 = vmatprep.subr.mxu0 %v879
    %4053 = vmatpush1.msra.mxu0 %v878
    %4054 = vmatprep.subr.mxu0 %v895
    %4055 = vmatpush1.msra.mxu0 %v894
    %4056 = vmatprep.subr.mxu0 %v911
    %4057 = vmatpush1.msra.mxu0 %v910
    %4058 = vmatprep.subr.mxu0 %v927
    %4059 = vmatpush1.msra.mxu0 %v926
    %4060 = vmatprep.subr.mxu0 %v943
    %4061 = vmatpush1.msra.mxu0 %v942
    %4062 = vmatprep.subr.mxu0 %v959
    %4063 = vmatpush1.msra.mxu0 %v958
    %4064 = vmatprep.subr.mxu0 %v975
    %4065 = vmatpush1.msra.mxu0 %v974
    %4066 = vmatprep.subr.mxu0 %v991
    %4067 = vmatpush1.msra.mxu0 %v990
    %4068 = vmatprep.subr.mxu0 %v1007
    %4069 = vmatpush1.msra.mxu0 %v1006
    %4070 = vmatprep.subr.mxu0 %v1023
    %4071 = vmatpush1.msra.mxu0 %v1022
    %4072 = vmatprep.subr.mxu0 %v1039
    %4073 = vmatpush1.msra.mxu0 %v1038
    %4074 = vmatprep.subr.mxu0 %v1055
    %4075 = vmatpush1.msra.mxu0 %v1054
    %4076 = vmatprep.subr.mxu0 %v1071
    %4077 = vmatpush1.msra.mxu0 %v1070
    %4078 = vmatprep.subr.mxu0 %v1087
    %4079 = vmatpush1.msra.mxu0 %v1086
    %4080 = vmatprep.subr.mxu0 %v1103
    %4081 = vmatpush1.msra.mxu0 %v1102
    %4082 = vmatprep.subr.mxu0 %v1119
    %4083 = vmatpush1.msra.mxu0 %v1118
    %4084 = vmatprep.subr.mxu0 %v1135
    %4085 = vmatpush1.msra.mxu0 %v1134
    %4086 = vmatprep.subr.mxu0 %v1151
    %4087 = vmatpush1.msra.mxu0 %v1150
    %4088 = vmatprep.subr.mxu0 %v1167
    %4089 = vmatpush1.msra.mxu0 %v1166
    %4090 = vmatprep.mubr.f32.mxu0 %v647
    %4091 = vmatmul.mubr.f32.gmra.mrb[0].mxu0 %v646
    %v4092 = vpop.f32.mrb[0].mxu0
    %v4093 = vadd.f32 %v2749, %v4092
    %v4094 = vpop.f32.mrb[0].mxu0
    %v4095 = vadd.f32 %v2753, %v4094
    %4096 = vmatprep.mubr.f32.mxu0 %v655
    %4097 = vmatmul.mubr.f32.gmra.mrb[0].mxu0 %v654
    %v4098 = vpop.f32.mrb[0].mxu0
    %v4099 = vadd.f32 %v2749, %v4098
    %v4100 = vpop.f32.mrb[0].mxu0
    %v4101 = vadd.f32 %v2753, %v4100
    %4102 = vdwg.mxu0
    %4103 = vmatprep.subr.mxu0 %v1183
    %4104 = vmatpush1.msra.mxu0 %v1182
    %4105 = vmatprep.subr.mxu0 %v1199
    %4106 = vmatpush1.msra.mxu0 %v1198
    %4107 = vmatprep.subr.mxu0 %v1215
    %4108 = vmatpush1.msra.mxu0 %v1214
    %4109 = vmatprep.subr.mxu0 %v1231
    %4110 = vmatpush1.msra.mxu0 %v1230
    %4111 = vmatprep.subr.mxu0 %v1247
    %4112 = vmatpush1.msra.mxu0 %v1246
    %4113 = vmatprep.subr.mxu0 %v1263
    %4114 = vmatpush1.msra.mxu0 %v1262
    %4115 = vmatprep.subr.mxu0 %v1279
    %4116 = vmatpush1.msra.mxu0 %v1278
    %4117 = vmatprep.subr.mxu0 %v1295
    %4118 = vmatpush1.msra.mxu0 %v1294
    %4119 = vmatprep.subr.mxu0 %v1311
    %4120 = vmatpush1.msra.mxu0 %v1310
    %4121 = vmatprep.subr.mxu0 %v1327
    %4122 = vmatpush1.msra.mxu0 %v1326
    %4123 = vmatprep.subr.mxu0 %v1343
    %4124 = vmatpush1.msra.mxu0 %v1342
    %4125 = vmatprep.subr.mxu0 %v1359
    %4126 = vmatpush1.msra.mxu0 %v1358
    %4127 = vmatprep.subr.mxu0 %v1375
    %4128 = vmatpush1.msra.mxu0 %v1374
    %4129 = vmatprep.subr.mxu0 %v1391
    %4130 = vmatpush1.msra.mxu0 %v1390
    %4131 = vmatprep.subr.mxu0 %v1407
    %4132 = vmatpush1.msra.mxu0 %v1406
    %4133 = vmatprep.subr.mxu0 %v1423
    %4134 = vmatpush1.msra.mxu0 %v1422
    %4135 = vmatprep.subr.mxu0 %v1439
    %4136 = vmatpush1.msra.mxu0 %v1438
    %4137 = vmatprep.subr.mxu0 %v1455
    %4138 = vmatpush1.msra.mxu0 %v1454
    %4139 = vmatprep.subr.mxu0 %v1471
    %4140 = vmatpush1.msra.mxu0 %v1470
    %4141 = vmatprep.subr.mxu0 %v1487
    %4142 = vmatpush1.msra.mxu0 %v1486
    %4143 = vmatprep.subr.mxu0 %v1503
    %4144 = vmatpush1.msra.mxu0 %v1502
    %4145 = vmatprep.subr.mxu0 %v1519
    %4146 = vmatpush1.msra.mxu0 %v1518
    %4147 = vmatprep.subr.mxu0 %v1535
    %4148 = vmatpush1.msra.mxu0 %v1534
    %4149 = vmatprep.subr.mxu0 %v1551
    %4150 = vmatpush1.msra.mxu0 %v1550
    %4151 = vmatprep.subr.mxu0 %v1567
    %4152 = vmatpush1.msra.mxu0 %v1566
    %4153 = vmatprep.subr.mxu0 %v1583
    %4154 = vmatpush1.msra.mxu0 %v1582
    %4155 = vmatprep.subr.mxu0 %v1599
    %4156 = vmatpush1.msra.mxu0 %v1598
    %4157 = vmatprep.subr.mxu0 %v1615
    %4158 = vmatpush1.msra.mxu0 %v1614
    %4159 = vmatprep.subr.mxu0 %v1631
    %4160 = vmatpush1.msra.mxu0 %v1630
    %4161 = vmatprep.subr.mxu0 %v1647
    %4162 = vmatpush1.msra.mxu0 %v1646
    %4163 = vmatprep.subr.mxu0 %v1663
    %4164 = vmatpush1.msra.mxu0 %v1662
    %4165 = vmatprep.subr.mxu0 %v1679
    %4166 = vmatpush1.msra.mxu0 %v1678
    %4167 = vmatprep.mubr.f32.mxu0 %v649
    %4168 = vmatmul.mubr.f32.gmra.mrb[0].mxu0 %v648
    %v4169 = vpop.f32.mrb[0].mxu0
    %v4170 = vadd.f32 %v4093, %v4169
    %v4171 = vpop.f32.mrb[0].mxu0
    %v4172 = vadd.f32 %v4095, %v4171
    %4173 = vmatprep.mubr.f32.mxu0 %v657
    %4174 = vmatmul.mubr.f32.gmra.mrb[0].mxu0 %v656
    %v4175 = vpop.f32.mrb[0].mxu0
    %v4176 = vadd.f32 %v4099, %v4175
    %v4177 = vpop.f32.mrb[0].mxu0
    %v4178 = vadd.f32 %v4101, %v4177
    %4179 = vdwg.mxu0
    %4180 = vmatprep.subr.mxu0 %v1695
    %4181 = vmatpush1.msra.mxu0 %v1694
    %4182 = vmatprep.subr.mxu0 %v1711
    %4183 = vmatpush1.msra.mxu0 %v1710
    %4184 = vmatprep.subr.mxu0 %v1727
    %4185 = vmatpush1.msra.mxu0 %v1726
    %4186 = vmatprep.subr.mxu0 %v1743
    %4187 = vmatpush1.msra.mxu0 %v1742
    %4188 = vmatprep.subr.mxu0 %v1759
    %4189 = vmatpush1.msra.mxu0 %v1758
    %4190 = vmatprep.subr.mxu0 %v1775
    %4191 = vmatpush1.msra.mxu0 %v1774
    %4192 = vmatprep.subr.mxu0 %v1791
    %4193 = vmatpush1.msra.mxu0 %v1790
    %4194 = vmatprep.subr.mxu0 %v1807
    %4195 = vmatpush1.msra.mxu0 %v1806
    %4196 = vmatprep.subr.mxu0 %v1823
    %4197 = vmatpush1.msra.mxu0 %v1822
    %4198 = vmatprep.subr.mxu0 %v1839
    %4199 = vmatpush1.msra.mxu0 %v1838
    %4200 = vmatprep.subr.mxu0 %v1855
    %4201 = vmatpush1.msra.mxu0 %v1854
    %4202 = vmatprep.subr.mxu0 %v1871
    %4203 = vmatpush1.msra.mxu0 %v1870
    %4204 = vmatprep.subr.mxu0 %v1887
    %4205 = vmatpush1.msra.mxu0 %v1886
    %4206 = vmatprep.subr.mxu0 %v1903
    %4207 = vmatpush1.msra.mxu0 %v1902
    %4208 = vmatprep.subr.mxu0 %v1919
    %4209 = vmatpush1.msra.mxu0 %v1918
    %4210 = vmatprep.subr.mxu0 %v1935
    %4211 = vmatpush1.msra.mxu0 %v1934
    %4212 = vmatprep.subr.mxu0 %v1951
    %4213 = vmatpush1.msra.mxu0 %v1950
    %4214 = vmatprep.subr.mxu0 %v1967
    %4215 = vmatpush1.msra.mxu0 %v1966
    %4216 = vmatprep.subr.mxu0 %v1983
    %4217 = vmatpush1.msra.mxu0 %v1982
    %4218 = vmatprep.subr.mxu0 %v1999
    %4219 = vmatpush1.msra.mxu0 %v1998
    %4220 = vmatprep.subr.mxu0 %v2015
    %4221 = vmatpush1.msra.mxu0 %v2014
    %4222 = vmatprep.subr.mxu0 %v2031
    %4223 = vmatpush1.msra.mxu0 %v2030
    %4224 = vmatprep.subr.mxu0 %v2047
    %4225 = vmatpush1.msra.mxu0 %v2046
    %4226 = vmatprep.subr.mxu0 %v2063
    %4227 = vmatpush1.msra.mxu0 %v2062
    %4228 = vmatprep.subr.mxu0 %v2079
    %4229 = vmatpush1.msra.mxu0 %v2078
    %4230 = vmatprep.subr.mxu0 %v2095
    %4231 = vmatpush1.msra.mxu0 %v2094
    %4232 = vmatprep.subr.mxu0 %v2111
    %4233 = vmatpush1.msra.mxu0 %v2110
    %4234 = vmatprep.subr.mxu0 %v2127
    %4235 = vmatpush1.msra.mxu0 %v2126
    %4236 = vmatprep.subr.mxu0 %v2143
    %4237 = vmatpush1.msra.mxu0 %v2142
    %4238 = vmatprep.subr.mxu0 %v2159
    %4239 = vmatpush1.msra.mxu0 %v2158
    %4240 = vmatprep.subr.mxu0 %v2175
    %4241 = vmatpush1.msra.mxu0 %v2174
    %4242 = vmatprep.subr.mxu0 %v2191
    %4243 = vmatpush1.msra.mxu0 %v2190
    %4244 = vmatprep.mubr.f32.mxu0 %v651
    %4245 = vmatmul.mubr.f32.gmra.mrb[0].mxu0 %v650
    %v4246 = vpop.f32.mrb[0].mxu0
    %v4247 = vadd.f32 %v4170, %v4246
    %v4248 = vpop.f32.mrb[0].mxu0
    %v4249 = vadd.f32 %v4172, %v4248
    %4250 = vmatprep.mubr.f32.mxu0 %v659
    %4251 = vmatmul.mubr.f32.gmra.mrb[0].mxu0 %v658
    %v4252 = vpop.f32.mrb[0].mxu0
    %v4253 = vadd.f32 %v4176, %v4252
    %v4254 = vpop.f32.mrb[0].mxu0
    %v4255 = vadd.f32 %v4178, %v4254
    %4256 = vdwg.mxu0
    %4257 = vmatprep.subr.mxu0 %v2207
    %4258 = vmatpush1.msra.mxu0 %v2206
    %4259 = vmatprep.subr.mxu0 %v2223
    %4260 = vmatpush1.msra.mxu0 %v2222
    %4261 = vmatprep.subr.mxu0 %v2239
    %4262 = vmatpush1.msra.mxu0 %v2238
    %4263 = vmatprep.subr.mxu0 %v2255
    %4264 = vmatpush1.msra.mxu0 %v2254
    %4265 = vmatprep.subr.mxu0 %v2271
    %4266 = vmatpush1.msra.mxu0 %v2270
    %4267 = vmatprep.subr.mxu0 %v2287
    %4268 = vmatpush1.msra.mxu0 %v2286
    %4269 = vmatprep.subr.mxu0 %v2303
    %4270 = vmatpush1.msra.mxu0 %v2302
    %4271 = vmatprep.subr.mxu0 %v2319
    %4272 = vmatpush1.msra.mxu0 %v2318
    %4273 = vmatprep.subr.mxu0 %v2335
    %4274 = vmatpush1.msra.mxu0 %v2334
    %4275 = vmatprep.subr.mxu0 %v2351
    %4276 = vmatpush1.msra.mxu0 %v2350
    %4277 = vmatprep.subr.mxu0 %v2367
    %4278 = vmatpush1.msra.mxu0 %v2366
    %4279 = vmatprep.subr.mxu0 %v2383
    %4280 = vmatpush1.msra.mxu0 %v2382
    %4281 = vmatprep.subr.mxu0 %v2399
    %4282 = vmatpush1.msra.mxu0 %v2398
    %4283 = vmatprep.subr.mxu0 %v2415
    %4284 = vmatpush1.msra.mxu0 %v2414
    %4285 = vmatprep.subr.mxu0 %v2431
    %4286 = vmatpush1.msra.mxu0 %v2430
    %4287 = vmatprep.subr.mxu0 %v2447
    %4288 = vmatpush1.msra.mxu0 %v2446
    %4289 = vmatprep.subr.mxu0 %v2463
    %4290 = vmatpush1.msra.mxu0 %v2462
    %4291 = vmatprep.subr.mxu0 %v2479
    %4292 = vmatpush1.msra.mxu0 %v2478
    %4293 = vmatprep.subr.mxu0 %v2495
    %4294 = vmatpush1.msra.mxu0 %v2494
    %4295 = vmatprep.subr.mxu0 %v2511
    %4296 = vmatpush1.msra.mxu0 %v2510
    %4297 = vmatprep.subr.mxu0 %v2527
    %4298 = vmatpush1.msra.mxu0 %v2526
    %4299 = vmatprep.subr.mxu0 %v2543
    %4300 = vmatpush1.msra.mxu0 %v2542
    %4301 = vmatprep.subr.mxu0 %v2559
    %4302 = vmatpush1.msra.mxu0 %v2558
    %4303 = vmatprep.subr.mxu0 %v2575
    %4304 = vmatpush1.msra.mxu0 %v2574
    %4305 = vmatprep.subr.mxu0 %v2591
    %4306 = vmatpush1.msra.mxu0 %v2590
    %4307 = vmatprep.subr.mxu0 %v2607
    %4308 = vmatpush1.msra.mxu0 %v2606
    %4309 = vmatprep.subr.mxu0 %v2623
    %4310 = vmatpush1.msra.mxu0 %v2622
    %4311 = vmatprep.subr.mxu0 %v2639
    %4312 = vmatpush1.msra.mxu0 %v2638
    %4313 = vmatprep.subr.mxu0 %v2655
    %4314 = vmatpush1.msra.mxu0 %v2654
    %4315 = vmatprep.subr.mxu0 %v2671
    %4316 = vmatpush1.msra.mxu0 %v2670
    %4317 = vmatprep.subr.mxu0 %v2687
    %4318 = vmatpush1.msra.mxu0 %v2686
    %4319 = vmatprep.subr.mxu0 %v2703
    %4320 = vmatpush1.msra.mxu0 %v2702
    %4321 = vmatprep.mubr.f32.mxu0 %v653
    %4322 = vmatmul.mubr.f32.gmra.mrb[0].mxu0 %v652
    %v4323 = vpop.f32.mrb[0].mxu0
    %v4324 = vadd.f32 %v4247, %v4323
    %v4325 = vpop.f32.mrb[0].mxu0
    %v4326 = vadd.f32 %v4249, %v4325
    %4327 = vmatprep.mubr.f32.mxu0 %v661
    %4328 = vmatmul.mubr.f32.gmra.mrb[0].mxu0 %v660
    %v4329 = vpop.f32.mrb[0].mxu0
    %v4330 = vadd.f32 %v4253, %v4329
    %v4331 = vpop.f32.mrb[0].mxu0
    %v4332 = vadd.f32 %v4255, %v4331
    %4333 = vdwg.mxu0
    %4334 = vmatprep.subr.mxu0 %v673
    %4335 = vmatpush1.msra.mxu0 %v672
    %4336 = vmatprep.subr.mxu0 %v689
    %4337 = vmatpush1.msra.mxu0 %v688
    %4338 = vmatprep.subr.mxu0 %v705
    %4339 = vmatpush1.msra.mxu0 %v704
    %4340 = vmatprep.subr.mxu0 %v721
    %4341 = vmatpush1.msra.mxu0 %v720
    %4342 = vmatprep.subr.mxu0 %v737
    %4343 = vmatpush1.msra.mxu0 %v736
    %4344 = vmatprep.subr.mxu0 %v753
    %4345 = vmatpush1.msra.mxu0 %v752
    %4346 = vmatprep.subr.mxu0 %v769
    %4347 = vmatpush1.msra.mxu0 %v768
    %4348 = vmatprep.subr.mxu0 %v785
    %4349 = vmatpush1.msra.mxu0 %v784
    %4350 = vmatprep.subr.mxu0 %v801
    %4351 = vmatpush1.msra.mxu0 %v800
    %4352 = vmatprep.subr.mxu0 %v817
    %4353 = vmatpush1.msra.mxu0 %v816
    %4354 = vmatprep.subr.mxu0 %v833
    %4355 = vmatpush1.msra.mxu0 %v832
    %4356 = vmatprep.subr.mxu0 %v849
    %4357 = vmatpush1.msra.mxu0 %v848
    %4358 = vmatprep.subr.mxu0 %v865
    %4359 = vmatpush1.msra.mxu0 %v864
    %4360 = vmatprep.subr.mxu0 %v881
    %4361 = vmatpush1.msra.mxu0 %v880
    %4362 = vmatprep.subr.mxu0 %v897
    %4363 = vmatpush1.msra.mxu0 %v896
    %4364 = vmatprep.subr.mxu0 %v913
    %4365 = vmatpush1.msra.mxu0 %v912
    %4366 = vmatprep.subr.mxu0 %v929
    %4367 = vmatpush1.msra.mxu0 %v928
    %4368 = vmatprep.subr.mxu0 %v945
    %4369 = vmatpush1.msra.mxu0 %v944
    %4370 = vmatprep.subr.mxu0 %v961
    %4371 = vmatpush1.msra.mxu0 %v960
    %4372 = vmatprep.subr.mxu0 %v977
    %4373 = vmatpush1.msra.mxu0 %v976
    %4374 = vmatprep.subr.mxu0 %v993
    %4375 = vmatpush1.msra.mxu0 %v992
    %4376 = vmatprep.subr.mxu0 %v1009
    %4377 = vmatpush1.msra.mxu0 %v1008
    %4378 = vmatprep.subr.mxu0 %v1025
    %4379 = vmatpush1.msra.mxu0 %v1024
    %4380 = vmatprep.subr.mxu0 %v1041
    %4381 = vmatpush1.msra.mxu0 %v1040
    %4382 = vmatprep.subr.mxu0 %v1057
    %4383 = vmatpush1.msra.mxu0 %v1056
    %4384 = vmatprep.subr.mxu0 %v1073
    %4385 = vmatpush1.msra.mxu0 %v1072
    %4386 = vmatprep.subr.mxu0 %v1089
    %4387 = vmatpush1.msra.mxu0 %v1088
    %4388 = vmatprep.subr.mxu0 %v1105
    %4389 = vmatpush1.msra.mxu0 %v1104
    %4390 = vmatprep.subr.mxu0 %v1121
    %4391 = vmatpush1.msra.mxu0 %v1120
    %4392 = vmatprep.subr.mxu0 %v1137
    %4393 = vmatpush1.msra.mxu0 %v1136
    %4394 = vmatprep.subr.mxu0 %v1153
    %4395 = vmatpush1.msra.mxu0 %v1152
    %4396 = vmatprep.subr.mxu0 %v1169
    %4397 = vmatpush1.msra.mxu0 %v1168
    %4398 = vmatprep.mubr.f32.mxu0 %v647
    %4399 = vmatmul.mubr.f32.gmra.mrb[0].mxu0 %v646
    %v4400 = vpop.f32.mrb[0].mxu0
    %v4401 = vadd.f32 %v2757, %v4400
    %v4402 = vpop.f32.mrb[0].mxu0
    %v4403 = vadd.f32 %v2761, %v4402
    %4404 = vmatprep.mubr.f32.mxu0 %v655
    %4405 = vmatmul.mubr.f32.gmra.mrb[0].mxu0 %v654
    %v4406 = vpop.f32.mrb[0].mxu0
    %v4407 = vadd.f32 %v2757, %v4406
    %v4408 = vpop.f32.mrb[0].mxu0
    %v4409 = vadd.f32 %v2761, %v4408
    %4410 = vdwg.mxu0
    %4411 = vmatprep.subr.mxu0 %v1185
    %4412 = vmatpush1.msra.mxu0 %v1184
    %4413 = vmatprep.subr.mxu0 %v1201
    %4414 = vmatpush1.msra.mxu0 %v1200
    %4415 = vmatprep.subr.mxu0 %v1217
    %4416 = vmatpush1.msra.mxu0 %v1216
    %4417 = vmatprep.subr.mxu0 %v1233
    %4418 = vmatpush1.msra.mxu0 %v1232
    %4419 = vmatprep.subr.mxu0 %v1249
    %4420 = vmatpush1.msra.mxu0 %v1248
    %4421 = vmatprep.subr.mxu0 %v1265
    %4422 = vmatpush1.msra.mxu0 %v1264
    %4423 = vmatprep.subr.mxu0 %v1281
    %4424 = vmatpush1.msra.mxu0 %v1280
    %4425 = vmatprep.subr.mxu0 %v1297
    %4426 = vmatpush1.msra.mxu0 %v1296
    %4427 = vmatprep.subr.mxu0 %v1313
    %4428 = vmatpush1.msra.mxu0 %v1312
    %4429 = vmatprep.subr.mxu0 %v1329
    %4430 = vmatpush1.msra.mxu0 %v1328
    %4431 = vmatprep.subr.mxu0 %v1345
    %4432 = vmatpush1.msra.mxu0 %v1344
    %4433 = vmatprep.subr.mxu0 %v1361
    %4434 = vmatpush1.msra.mxu0 %v1360
    %4435 = vmatprep.subr.mxu0 %v1377
    %4436 = vmatpush1.msra.mxu0 %v1376
    %4437 = vmatprep.subr.mxu0 %v1393
    %4438 = vmatpush1.msra.mxu0 %v1392
    %4439 = vmatprep.subr.mxu0 %v1409
    %4440 = vmatpush1.msra.mxu0 %v1408
    %4441 = vmatprep.subr.mxu0 %v1425
    %4442 = vmatpush1.msra.mxu0 %v1424
    %4443 = vmatprep.subr.mxu0 %v1441
    %4444 = vmatpush1.msra.mxu0 %v1440
    %4445 = vmatprep.subr.mxu0 %v1457
    %4446 = vmatpush1.msra.mxu0 %v1456
    %4447 = vmatprep.subr.mxu0 %v1473
    %4448 = vmatpush1.msra.mxu0 %v1472
    %4449 = vmatprep.subr.mxu0 %v1489
    %4450 = vmatpush1.msra.mxu0 %v1488
    %4451 = vmatprep.subr.mxu0 %v1505
    %4452 = vmatpush1.msra.mxu0 %v1504
    %4453 = vmatprep.subr.mxu0 %v1521
    %4454 = vmatpush1.msra.mxu0 %v1520
    %4455 = vmatprep.subr.mxu0 %v1537
    %4456 = vmatpush1.msra.mxu0 %v1536
    %4457 = vmatprep.subr.mxu0 %v1553
    %4458 = vmatpush1.msra.mxu0 %v1552
    %4459 = vmatprep.subr.mxu0 %v1569
    %4460 = vmatpush1.msra.mxu0 %v1568
    %4461 = vmatprep.subr.mxu0 %v1585
    %4462 = vmatpush1.msra.mxu0 %v1584
    %4463 = vmatprep.subr.mxu0 %v1601
    %4464 = vmatpush1.msra.mxu0 %v1600
    %4465 = vmatprep.subr.mxu0 %v1617
    %4466 = vmatpush1.msra.mxu0 %v1616
    %4467 = vmatprep.subr.mxu0 %v1633
    %4468 = vmatpush1.msra.mxu0 %v1632
    %4469 = vmatprep.subr.mxu0 %v1649
    %4470 = vmatpush1.msra.mxu0 %v1648
    %4471 = vmatprep.subr.mxu0 %v1665
    %4472 = vmatpush1.msra.mxu0 %v1664
    %4473 = vmatprep.subr.mxu0 %v1681
    %4474 = vmatpush1.msra.mxu0 %v1680
    %4475 = vmatprep.mubr.f32.mxu0 %v649
    %4476 = vmatmul.mubr.f32.gmra.mrb[0].mxu0 %v648
    %v4477 = vpop.f32.mrb[0].mxu0
    %v4478 = vadd.f32 %v4401, %v4477
    %v4479 = vpop.f32.mrb[0].mxu0
    %v4480 = vadd.f32 %v4403, %v4479
    %4481 = vmatprep.mubr.f32.mxu0 %v657
    %4482 = vmatmul.mubr.f32.gmra.mrb[0].mxu0 %v656
    %v4483 = vpop.f32.mrb[0].mxu0
    %v4484 = vadd.f32 %v4407, %v4483
    %v4485 = vpop.f32.mrb[0].mxu0
    %v4486 = vadd.f32 %v4409, %v4485
    %4487 = vdwg.mxu0
    %4488 = vmatprep.subr.mxu0 %v1697
    %4489 = vmatpush1.msra.mxu0 %v1696
    %4490 = vmatprep.subr.mxu0 %v1713
    %4491 = vmatpush1.msra.mxu0 %v1712
    %4492 = vmatprep.subr.mxu0 %v1729
    %4493 = vmatpush1.msra.mxu0 %v1728
    %4494 = vmatprep.subr.mxu0 %v1745
    %4495 = vmatpush1.msra.mxu0 %v1744
    %4496 = vmatprep.subr.mxu0 %v1761
    %4497 = vmatpush1.msra.mxu0 %v1760
    %4498 = vmatprep.subr.mxu0 %v1777
    %4499 = vmatpush1.msra.mxu0 %v1776
    %4500 = vmatprep.subr.mxu0 %v1793
    %4501 = vmatpush1.msra.mxu0 %v1792
    %4502 = vmatprep.subr.mxu0 %v1809
    %4503 = vmatpush1.msra.mxu0 %v1808
    %4504 = vmatprep.subr.mxu0 %v1825
    %4505 = vmatpush1.msra.mxu0 %v1824
    %4506 = vmatprep.subr.mxu0 %v1841
    %4507 = vmatpush1.msra.mxu0 %v1840
    %4508 = vmatprep.subr.mxu0 %v1857
    %4509 = vmatpush1.msra.mxu0 %v1856
    %4510 = vmatprep.subr.mxu0 %v1873
    %4511 = vmatpush1.msra.mxu0 %v1872
    %4512 = vmatprep.subr.mxu0 %v1889
    %4513 = vmatpush1.msra.mxu0 %v1888
    %4514 = vmatprep.subr.mxu0 %v1905
    %4515 = vmatpush1.msra.mxu0 %v1904
    %4516 = vmatprep.subr.mxu0 %v1921
    %4517 = vmatpush1.msra.mxu0 %v1920
    %4518 = vmatprep.subr.mxu0 %v1937
    %4519 = vmatpush1.msra.mxu0 %v1936
    %4520 = vmatprep.subr.mxu0 %v1953
    %4521 = vmatpush1.msra.mxu0 %v1952
    %4522 = vmatprep.subr.mxu0 %v1969
    %4523 = vmatpush1.msra.mxu0 %v1968
    %4524 = vmatprep.subr.mxu0 %v1985
    %4525 = vmatpush1.msra.mxu0 %v1984
    %4526 = vmatprep.subr.mxu0 %v2001
    %4527 = vmatpush1.msra.mxu0 %v2000
    %4528 = vmatprep.subr.mxu0 %v2017
    %4529 = vmatpush1.msra.mxu0 %v2016
    %4530 = vmatprep.subr.mxu0 %v2033
    %4531 = vmatpush1.msra.mxu0 %v2032
    %4532 = vmatprep.subr.mxu0 %v2049
    %4533 = vmatpush1.msra.mxu0 %v2048
    %4534 = vmatprep.subr.mxu0 %v2065
    %4535 = vmatpush1.msra.mxu0 %v2064
    %4536 = vmatprep.subr.mxu0 %v2081
    %4537 = vmatpush1.msra.mxu0 %v2080
    %4538 = vmatprep.subr.mxu0 %v2097
    %4539 = vmatpush1.msra.mxu0 %v2096
    %4540 = vmatprep.subr.mxu0 %v2113
    %4541 = vmatpush1.msra.mxu0 %v2112
    %4542 = vmatprep.subr.mxu0 %v2129
    %4543 = vmatpush1.msra.mxu0 %v2128
    %4544 = vmatprep.subr.mxu0 %v2145
    %4545 = vmatpush1.msra.mxu0 %v2144
    %4546 = vmatprep.subr.mxu0 %v2161
    %4547 = vmatpush1.msra.mxu0 %v2160
    %4548 = vmatprep.subr.mxu0 %v2177
    %4549 = vmatpush1.msra.mxu0 %v2176
    %4550 = vmatprep.subr.mxu0 %v2193
    %4551 = vmatpush1.msra.mxu0 %v2192
    %4552 = vmatprep.mubr.f32.mxu0 %v651
    %4553 = vmatmul.mubr.f32.gmra.mrb[0].mxu0 %v650
    %v4554 = vpop.f32.mrb[0].mxu0
    %v4555 = vadd.f32 %v4478, %v4554
    %v4556 = vpop.f32.mrb[0].mxu0
    %v4557 = vadd.f32 %v4480, %v4556
    %4558 = vmatprep.mubr.f32.mxu0 %v659
    %4559 = vmatmul.mubr.f32.gmra.mrb[0].mxu0 %v658
    %v4560 = vpop.f32.mrb[0].mxu0
    %v4561 = vadd.f32 %v4484, %v4560
    %v4562 = vpop.f32.mrb[0].mxu0
    %v4563 = vadd.f32 %v4486, %v4562
    %4564 = vdwg.mxu0
    %4565 = vmatprep.subr.mxu0 %v2209
    %4566 = vmatpush1.msra.mxu0 %v2208
    %4567 = vmatprep.subr.mxu0 %v2225
    %4568 = vmatpush1.msra.mxu0 %v2224
    %4569 = vmatprep.subr.mxu0 %v2241
    %4570 = vmatpush1.msra.mxu0 %v2240
    %4571 = vmatprep.subr.mxu0 %v2257
    %4572 = vmatpush1.msra.mxu0 %v2256
    %4573 = vmatprep.subr.mxu0 %v2273
    %4574 = vmatpush1.msra.mxu0 %v2272
    %4575 = vmatprep.subr.mxu0 %v2289
    %4576 = vmatpush1.msra.mxu0 %v2288
    %4577 = vmatprep.subr.mxu0 %v2305
    %4578 = vmatpush1.msra.mxu0 %v2304
    %4579 = vmatprep.subr.mxu0 %v2321
    %4580 = vmatpush1.msra.mxu0 %v2320
    %4581 = vmatprep.subr.mxu0 %v2337
    %4582 = vmatpush1.msra.mxu0 %v2336
    %4583 = vmatprep.subr.mxu0 %v2353
    %4584 = vmatpush1.msra.mxu0 %v2352
    %4585 = vmatprep.subr.mxu0 %v2369
    %4586 = vmatpush1.msra.mxu0 %v2368
    %4587 = vmatprep.subr.mxu0 %v2385
    %4588 = vmatpush1.msra.mxu0 %v2384
    %4589 = vmatprep.subr.mxu0 %v2401
    %4590 = vmatpush1.msra.mxu0 %v2400
    %4591 = vmatprep.subr.mxu0 %v2417
    %4592 = vmatpush1.msra.mxu0 %v2416
    %4593 = vmatprep.subr.mxu0 %v2433
    %4594 = vmatpush1.msra.mxu0 %v2432
    %4595 = vmatprep.subr.mxu0 %v2449
    %4596 = vmatpush1.msra.mxu0 %v2448
    %4597 = vmatprep.subr.mxu0 %v2465
    %4598 = vmatpush1.msra.mxu0 %v2464
    %4599 = vmatprep.subr.mxu0 %v2481
    %4600 = vmatpush1.msra.mxu0 %v2480
    %4601 = vmatprep.subr.mxu0 %v2497
    %4602 = vmatpush1.msra.mxu0 %v2496
    %4603 = vmatprep.subr.mxu0 %v2513
    %4604 = vmatpush1.msra.mxu0 %v2512
    %4605 = vmatprep.subr.mxu0 %v2529
    %4606 = vmatpush1.msra.mxu0 %v2528
    %4607 = vmatprep.subr.mxu0 %v2545
    %4608 = vmatpush1.msra.mxu0 %v2544
    %4609 = vmatprep.subr.mxu0 %v2561
    %4610 = vmatpush1.msra.mxu0 %v2560
    %4611 = vmatprep.subr.mxu0 %v2577
    %4612 = vmatpush1.msra.mxu0 %v2576
    %4613 = vmatprep.subr.mxu0 %v2593
    %4614 = vmatpush1.msra.mxu0 %v2592
    %4615 = vmatprep.subr.mxu0 %v2609
    %4616 = vmatpush1.msra.mxu0 %v2608
    %4617 = vmatprep.subr.mxu0 %v2625
    %4618 = vmatpush1.msra.mxu0 %v2624
    %4619 = vmatprep.subr.mxu0 %v2641
    %4620 = vmatpush1.msra.mxu0 %v2640
    %4621 = vmatprep.subr.mxu0 %v2657
    %4622 = vmatpush1.msra.mxu0 %v2656
    %4623 = vmatprep.subr.mxu0 %v2673
    %4624 = vmatpush1.msra.mxu0 %v2672
    %4625 = vmatprep.subr.mxu0 %v2689
    %4626 = vmatpush1.msra.mxu0 %v2688
    %4627 = vmatprep.subr.mxu0 %v2705
    %4628 = vmatpush1.msra.mxu0 %v2704
    %4629 = vmatprep.mubr.f32.mxu0 %v653
    %4630 = vmatmul.mubr.f32.gmra.mrb[0].mxu0 %v652
    %v4631 = vpop.f32.mrb[0].mxu0
    %v4632 = vadd.f32 %v4555, %v4631
    %v4633 = vpop.f32.mrb[0].mxu0
    %v4634 = vadd.f32 %v4557, %v4633
    %4635 = vmatprep.mubr.f32.mxu0 %v661
    %4636 = vmatmul.mubr.f32.gmra.mrb[0].mxu0 %v660
    %v4637 = vpop.f32.mrb[0].mxu0
    %v4638 = vadd.f32 %v4561, %v4637
    %v4639 = vpop.f32.mrb[0].mxu0
    %v4640 = vadd.f32 %v4563, %v4639
    %4641 = vdwg.mxu0
    %4642 = vmatprep.subr.mxu0 %v675
    %4643 = vmatpush1.msra.mxu0 %v674
    %4644 = vmatprep.subr.mxu0 %v691
    %4645 = vmatpush1.msra.mxu0 %v690
    %4646 = vmatprep.subr.mxu0 %v707
    %4647 = vmatpush1.msra.mxu0 %v706
    %4648 = vmatprep.subr.mxu0 %v723
    %4649 = vmatpush1.msra.mxu0 %v722
    %4650 = vmatprep.subr.mxu0 %v739
    %4651 = vmatpush1.msra.mxu0 %v738
    %4652 = vmatprep.subr.mxu0 %v755
    %4653 = vmatpush1.msra.mxu0 %v754
    %4654 = vmatprep.subr.mxu0 %v771
    %4655 = vmatpush1.msra.mxu0 %v770
    %4656 = vmatprep.subr.mxu0 %v787
    %4657 = vmatpush1.msra.mxu0 %v786
    %4658 = vmatprep.subr.mxu0 %v803
    %4659 = vmatpush1.msra.mxu0 %v802
    %4660 = vmatprep.subr.mxu0 %v819
    %4661 = vmatpush1.msra.mxu0 %v818
    %4662 = vmatprep.subr.mxu0 %v835
    %4663 = vmatpush1.msra.mxu0 %v834
    %4664 = vmatprep.subr.mxu0 %v851
    %4665 = vmatpush1.msra.mxu0 %v850
    %4666 = vmatprep.subr.mxu0 %v867
    %4667 = vmatpush1.msra.mxu0 %v866
    %4668 = vmatprep.subr.mxu0 %v883
    %4669 = vmatpush1.msra.mxu0 %v882
    %4670 = vmatprep.subr.mxu0 %v899
    %4671 = vmatpush1.msra.mxu0 %v898
    %4672 = vmatprep.subr.mxu0 %v915
    %4673 = vmatpush1.msra.mxu0 %v914
    %4674 = vmatprep.subr.mxu0 %v931
    %4675 = vmatpush1.msra.mxu0 %v930
    %4676 = vmatprep.subr.mxu0 %v947
    %4677 = vmatpush1.msra.mxu0 %v946
    %4678 = vmatprep.subr.mxu0 %v963
    %4679 = vmatpush1.msra.mxu0 %v962
    %4680 = vmatprep.subr.mxu0 %v979
    %4681 = vmatpush1.msra.mxu0 %v978
    %4682 = vmatprep.subr.mxu0 %v995
    %4683 = vmatpush1.msra.mxu0 %v994
    %4684 = vmatprep.subr.mxu0 %v1011
    %4685 = vmatpush1.msra.mxu0 %v1010
    %4686 = vmatprep.subr.mxu0 %v1027
    %4687 = vmatpush1.msra.mxu0 %v1026
    %4688 = vmatprep.subr.mxu0 %v1043
    %4689 = vmatpush1.msra.mxu0 %v1042
    %4690 = vmatprep.subr.mxu0 %v1059
    %4691 = vmatpush1.msra.mxu0 %v1058
    %4692 = vmatprep.subr.mxu0 %v1075
    %4693 = vmatpush1.msra.mxu0 %v1074
    %4694 = vmatprep.subr.mxu0 %v1091
    %4695 = vmatpush1.msra.mxu0 %v1090
    %4696 = vmatprep.subr.mxu0 %v1107
    %4697 = vmatpush1.msra.mxu0 %v1106
    %4698 = vmatprep.subr.mxu0 %v1123
    %4699 = vmatpush1.msra.mxu0 %v1122
    %4700 = vmatprep.subr.mxu0 %v1139
    %4701 = vmatpush1.msra.mxu0 %v1138
    %4702 = vmatprep.subr.mxu0 %v1155
    %4703 = vmatpush1.msra.mxu0 %v1154
    %4704 = vmatprep.subr.mxu0 %v1171
    %4705 = vmatpush1.msra.mxu0 %v1170
    %4706 = vmatprep.mubr.f32.mxu0 %v647
    %4707 = vmatmul.mubr.f32.gmra.mrb[0].mxu0 %v646
    %v4708 = vpop.f32.mrb[0].mxu0
    %v4709 = vadd.f32 %v2765, %v4708
    %v4710 = vpop.f32.mrb[0].mxu0
    %v4711 = vadd.f32 %v2769, %v4710
    %4712 = vmatprep.mubr.f32.mxu0 %v655
    %4713 = vmatmul.mubr.f32.gmra.mrb[0].mxu0 %v654
    %v4714 = vpop.f32.mrb[0].mxu0
    %v4715 = vadd.f32 %v2765, %v4714
    %v4716 = vpop.f32.mrb[0].mxu0
    %v4717 = vadd.f32 %v2769, %v4716
    %4718 = vdwg.mxu0
    %4719 = vmatprep.subr.mxu0 %v1187
    %4720 = vmatpush1.msra.mxu0 %v1186
    %4721 = vmatprep.subr.mxu0 %v1203
    %4722 = vmatpush1.msra.mxu0 %v1202
    %4723 = vmatprep.subr.mxu0 %v1219
    %4724 = vmatpush1.msra.mxu0 %v1218
    %4725 = vmatprep.subr.mxu0 %v1235
    %4726 = vmatpush1.msra.mxu0 %v1234
    %4727 = vmatprep.subr.mxu0 %v1251
    %4728 = vmatpush1.msra.mxu0 %v1250
    %4729 = vmatprep.subr.mxu0 %v1267
    %4730 = vmatpush1.msra.mxu0 %v1266
    %4731 = vmatprep.subr.mxu0 %v1283
    %4732 = vmatpush1.msra.mxu0 %v1282
    %4733 = vmatprep.subr.mxu0 %v1299
    %4734 = vmatpush1.msra.mxu0 %v1298
    %4735 = vmatprep.subr.mxu0 %v1315
    %4736 = vmatpush1.msra.mxu0 %v1314
    %4737 = vmatprep.subr.mxu0 %v1331
    %4738 = vmatpush1.msra.mxu0 %v1330
    %4739 = vmatprep.subr.mxu0 %v1347
    %4740 = vmatpush1.msra.mxu0 %v1346
    %4741 = vmatprep.subr.mxu0 %v1363
    %4742 = vmatpush1.msra.mxu0 %v1362
    %4743 = vmatprep.subr.mxu0 %v1379
    %4744 = vmatpush1.msra.mxu0 %v1378
    %4745 = vmatprep.subr.mxu0 %v1395
    %4746 = vmatpush1.msra.mxu0 %v1394
    %4747 = vmatprep.subr.mxu0 %v1411
    %4748 = vmatpush1.msra.mxu0 %v1410
    %4749 = vmatprep.subr.mxu0 %v1427
    %4750 = vmatpush1.msra.mxu0 %v1426
    %4751 = vmatprep.subr.mxu0 %v1443
    %4752 = vmatpush1.msra.mxu0 %v1442
    %4753 = vmatprep.subr.mxu0 %v1459
    %4754 = vmatpush1.msra.mxu0 %v1458
    %4755 = vmatprep.subr.mxu0 %v1475
    %4756 = vmatpush1.msra.mxu0 %v1474
    %4757 = vmatprep.subr.mxu0 %v1491
    %4758 = vmatpush1.msra.mxu0 %v1490
    %4759 = vmatprep.subr.mxu0 %v1507
    %4760 = vmatpush1.msra.mxu0 %v1506
    %4761 = vmatprep.subr.mxu0 %v1523
    %4762 = vmatpush1.msra.mxu0 %v1522
    %4763 = vmatprep.subr.mxu0 %v1539
    %4764 = vmatpush1.msra.mxu0 %v1538
    %4765 = vmatprep.subr.mxu0 %v1555
    %4766 = vmatpush1.msra.mxu0 %v1554
    %4767 = vmatprep.subr.mxu0 %v1571
    %4768 = vmatpush1.msra.mxu0 %v1570
    %4769 = vmatprep.subr.mxu0 %v1587
    %4770 = vmatpush1.msra.mxu0 %v1586
    %4771 = vmatprep.subr.mxu0 %v1603
    %4772 = vmatpush1.msra.mxu0 %v1602
    %4773 = vmatprep.subr.mxu0 %v1619
    %4774 = vmatpush1.msra.mxu0 %v1618
    %4775 = vmatprep.subr.mxu0 %v1635
    %4776 = vmatpush1.msra.mxu0 %v1634
    %4777 = vmatprep.subr.mxu0 %v1651
    %4778 = vmatpush1.msra.mxu0 %v1650
    %4779 = vmatprep.subr.mxu0 %v1667
    %4780 = vmatpush1.msra.mxu0 %v1666
    %4781 = vmatprep.subr.mxu0 %v1683
    %4782 = vmatpush1.msra.mxu0 %v1682
    %4783 = vmatprep.mubr.f32.mxu0 %v649
    %4784 = vmatmul.mubr.f32.gmra.mrb[0].mxu0 %v648
    %v4785 = vpop.f32.mrb[0].mxu0
    %v4786 = vadd.f32 %v4709, %v4785
    %v4787 = vpop.f32.mrb[0].mxu0
    %v4788 = vadd.f32 %v4711, %v4787
    %4789 = vmatprep.mubr.f32.mxu0 %v657
    %4790 = vmatmul.mubr.f32.gmra.mrb[0].mxu0 %v656
    %v4791 = vpop.f32.mrb[0].mxu0
    %v4792 = vadd.f32 %v4715, %v4791
    %v4793 = vpop.f32.mrb[0].mxu0
    %v4794 = vadd.f32 %v4717, %v4793
    %4795 = vdwg.mxu0
    %4796 = vmatprep.subr.mxu0 %v1699
    %4797 = vmatpush1.msra.mxu0 %v1698
    %4798 = vmatprep.subr.mxu0 %v1715
    %4799 = vmatpush1.msra.mxu0 %v1714
    %4800 = vmatprep.subr.mxu0 %v1731
    %4801 = vmatpush1.msra.mxu0 %v1730
    %4802 = vmatprep.subr.mxu0 %v1747
    %4803 = vmatpush1.msra.mxu0 %v1746
    %4804 = vmatprep.subr.mxu0 %v1763
    %4805 = vmatpush1.msra.mxu0 %v1762
    %4806 = vmatprep.subr.mxu0 %v1779
    %4807 = vmatpush1.msra.mxu0 %v1778
    %4808 = vmatprep.subr.mxu0 %v1795
    %4809 = vmatpush1.msra.mxu0 %v1794
    %4810 = vmatprep.subr.mxu0 %v1811
    %4811 = vmatpush1.msra.mxu0 %v1810
    %4812 = vmatprep.subr.mxu0 %v1827
    %4813 = vmatpush1.msra.mxu0 %v1826
    %4814 = vmatprep.subr.mxu0 %v1843
    %4815 = vmatpush1.msra.mxu0 %v1842
    %4816 = vmatprep.subr.mxu0 %v1859
    %4817 = vmatpush1.msra.mxu0 %v1858
    %4818 = vmatprep.subr.mxu0 %v1875
    %4819 = vmatpush1.msra.mxu0 %v1874
    %4820 = vmatprep.subr.mxu0 %v1891
    %4821 = vmatpush1.msra.mxu0 %v1890
    %4822 = vmatprep.subr.mxu0 %v1907
    %4823 = vmatpush1.msra.mxu0 %v1906
    %4824 = vmatprep.subr.mxu0 %v1923
    %4825 = vmatpush1.msra.mxu0 %v1922
    %4826 = vmatprep.subr.mxu0 %v1939
    %4827 = vmatpush1.msra.mxu0 %v1938
    %4828 = vmatprep.subr.mxu0 %v1955
    %4829 = vmatpush1.msra.mxu0 %v1954
    %4830 = vmatprep.subr.mxu0 %v1971
    %4831 = vmatpush1.msra.mxu0 %v1970
    %4832 = vmatprep.subr.mxu0 %v1987
    %4833 = vmatpush1.msra.mxu0 %v1986
    %4834 = vmatprep.subr.mxu0 %v2003
    %4835 = vmatpush1.msra.mxu0 %v2002
    %4836 = vmatprep.subr.mxu0 %v2019
    %4837 = vmatpush1.msra.mxu0 %v2018
    %4838 = vmatprep.subr.mxu0 %v2035
    %4839 = vmatpush1.msra.mxu0 %v2034
    %4840 = vmatprep.subr.mxu0 %v2051
    %4841 = vmatpush1.msra.mxu0 %v2050
    %4842 = vmatprep.subr.mxu0 %v2067
    %4843 = vmatpush1.msra.mxu0 %v2066
    %4844 = vmatprep.subr.mxu0 %v2083
    %4845 = vmatpush1.msra.mxu0 %v2082
    %4846 = vmatprep.subr.mxu0 %v2099
    %4847 = vmatpush1.msra.mxu0 %v2098
    %4848 = vmatprep.subr.mxu0 %v2115
    %4849 = vmatpush1.msra.mxu0 %v2114
    %4850 = vmatprep.subr.mxu0 %v2131
    %4851 = vmatpush1.msra.mxu0 %v2130
    %4852 = vmatprep.subr.mxu0 %v2147
    %4853 = vmatpush1.msra.mxu0 %v2146
    %4854 = vmatprep.subr.mxu0 %v2163
    %4855 = vmatpush1.msra.mxu0 %v2162
    %4856 = vmatprep.subr.mxu0 %v2179
    %4857 = vmatpush1.msra.mxu0 %v2178
    %4858 = vmatprep.subr.mxu0 %v2195
    %4859 = vmatpush1.msra.mxu0 %v2194
    %4860 = vmatprep.mubr.f32.mxu0 %v651
    %4861 = vmatmul.mubr.f32.gmra.mrb[0].mxu0 %v650
    %v4862 = vpop.f32.mrb[0].mxu0
    %v4863 = vadd.f32 %v4786, %v4862
    %v4864 = vpop.f32.mrb[0].mxu0
    %v4865 = vadd.f32 %v4788, %v4864
    %4866 = vmatprep.mubr.f32.mxu0 %v659
    %4867 = vmatmul.mubr.f32.gmra.mrb[0].mxu0 %v658
    %v4868 = vpop.f32.mrb[0].mxu0
    %v4869 = vadd.f32 %v4792, %v4868
    %v4870 = vpop.f32.mrb[0].mxu0
    %v4871 = vadd.f32 %v4794, %v4870
    %4872 = vdwg.mxu0
    %4873 = vmatprep.subr.mxu0 %v2211
    %4874 = vmatpush1.msra.mxu0 %v2210
    %4875 = vmatprep.subr.mxu0 %v2227
    %4876 = vmatpush1.msra.mxu0 %v2226
    %4877 = vmatprep.subr.mxu0 %v2243
    %4878 = vmatpush1.msra.mxu0 %v2242
    %4879 = vmatprep.subr.mxu0 %v2259
    %4880 = vmatpush1.msra.mxu0 %v2258
    %4881 = vmatprep.subr.mxu0 %v2275
    %4882 = vmatpush1.msra.mxu0 %v2274
    %4883 = vmatprep.subr.mxu0 %v2291
    %4884 = vmatpush1.msra.mxu0 %v2290
    %4885 = vmatprep.subr.mxu0 %v2307
    %4886 = vmatpush1.msra.mxu0 %v2306
    %4887 = vmatprep.subr.mxu0 %v2323
    %4888 = vmatpush1.msra.mxu0 %v2322
    %4889 = vmatprep.subr.mxu0 %v2339
    %4890 = vmatpush1.msra.mxu0 %v2338
    %4891 = vmatprep.subr.mxu0 %v2355
    %4892 = vmatpush1.msra.mxu0 %v2354
    %4893 = vmatprep.subr.mxu0 %v2371
    %4894 = vmatpush1.msra.mxu0 %v2370
    %4895 = vmatprep.subr.mxu0 %v2387
    %4896 = vmatpush1.msra.mxu0 %v2386
    %4897 = vmatprep.subr.mxu0 %v2403
    %4898 = vmatpush1.msra.mxu0 %v2402
    %4899 = vmatprep.subr.mxu0 %v2419
    %4900 = vmatpush1.msra.mxu0 %v2418
    %4901 = vmatprep.subr.mxu0 %v2435
    %4902 = vmatpush1.msra.mxu0 %v2434
    %4903 = vmatprep.subr.mxu0 %v2451
    %4904 = vmatpush1.msra.mxu0 %v2450
    %4905 = vmatprep.subr.mxu0 %v2467
    %4906 = vmatpush1.msra.mxu0 %v2466
    %4907 = vmatprep.subr.mxu0 %v2483
    %4908 = vmatpush1.msra.mxu0 %v2482
    %4909 = vmatprep.subr.mxu0 %v2499
    %4910 = vmatpush1.msra.mxu0 %v2498
    %4911 = vmatprep.subr.mxu0 %v2515
    %4912 = vmatpush1.msra.mxu0 %v2514
    %4913 = vmatprep.subr.mxu0 %v2531
    %4914 = vmatpush1.msra.mxu0 %v2530
    %4915 = vmatprep.subr.mxu0 %v2547
    %4916 = vmatpush1.msra.mxu0 %v2546
    %4917 = vmatprep.subr.mxu0 %v2563
    %4918 = vmatpush1.msra.mxu0 %v2562
    %4919 = vmatprep.subr.mxu0 %v2579
    %4920 = vmatpush1.msra.mxu0 %v2578
    %4921 = vmatprep.subr.mxu0 %v2595
    %4922 = vmatpush1.msra.mxu0 %v2594
    %4923 = vmatprep.subr.mxu0 %v2611
    %4924 = vmatpush1.msra.mxu0 %v2610
    %4925 = vmatprep.subr.mxu0 %v2627
    %4926 = vmatpush1.msra.mxu0 %v2626
    %4927 = vmatprep.subr.mxu0 %v2643
    %4928 = vmatpush1.msra.mxu0 %v2642
    %4929 = vmatprep.subr.mxu0 %v2659
    %4930 = vmatpush1.msra.mxu0 %v2658
    %4931 = vmatprep.subr.mxu0 %v2675
    %4932 = vmatpush1.msra.mxu0 %v2674
    %4933 = vmatprep.subr.mxu0 %v2691
    %4934 = vmatpush1.msra.mxu0 %v2690
    %4935 = vmatprep.subr.mxu0 %v2707
    %4936 = vmatpush1.msra.mxu0 %v2706
    %4937 = vmatprep.mubr.f32.mxu0 %v653
    %4938 = vmatmul.mubr.f32.gmra.mrb[0].mxu0 %v652
    %v4939 = vpop.f32.mrb[0].mxu0
    %v4940 = vadd.f32 %v4863, %v4939
    %v4941 = vpop.f32.mrb[0].mxu0
    %v4942 = vadd.f32 %v4865, %v4941
    %4943 = vmatprep.mubr.f32.mxu0 %v661
    %4944 = vmatmul.mubr.f32.gmra.mrb[0].mxu0 %v660
    %v4945 = vpop.f32.mrb[0].mxu0
    %v4946 = vadd.f32 %v4869, %v4945
    %v4947 = vpop.f32.mrb[0].mxu0
    %v4948 = vadd.f32 %v4871, %v4947
    %4949 = vdwg.mxu0
    %4950 = vmatprep.subr.mxu0 %v677
    %4951 = vmatpush1.msra.mxu0 %v676
    %4952 = vmatprep.subr.mxu0 %v693
    %4953 = vmatpush1.msra.mxu0 %v692
    %4954 = vmatprep.subr.mxu0 %v709
    %4955 = vmatpush1.msra.mxu0 %v708
    %4956 = vmatprep.subr.mxu0 %v725
    %4957 = vmatpush1.msra.mxu0 %v724
    %4958 = vmatprep.subr.mxu0 %v741
    %4959 = vmatpush1.msra.mxu0 %v740
    %4960 = vmatprep.subr.mxu0 %v757
    %4961 = vmatpush1.msra.mxu0 %v756
    %4962 = vmatprep.subr.mxu0 %v773
    %4963 = vmatpush1.msra.mxu0 %v772
    %4964 = vmatprep.subr.mxu0 %v789
    %4965 = vmatpush1.msra.mxu0 %v788
    %4966 = vmatprep.subr.mxu0 %v805
    %4967 = vmatpush1.msra.mxu0 %v804
    %4968 = vmatprep.subr.mxu0 %v821
    %4969 = vmatpush1.msra.mxu0 %v820
    %4970 = vmatprep.subr.mxu0 %v837
    %4971 = vmatpush1.msra.mxu0 %v836
    %4972 = vmatprep.subr.mxu0 %v853
    %4973 = vmatpush1.msra.mxu0 %v852
    %4974 = vmatprep.subr.mxu0 %v869
    %4975 = vmatpush1.msra.mxu0 %v868
    %4976 = vmatprep.subr.mxu0 %v885
    %4977 = vmatpush1.msra.mxu0 %v884
    %4978 = vmatprep.subr.mxu0 %v901
    %4979 = vmatpush1.msra.mxu0 %v900
    %4980 = vmatprep.subr.mxu0 %v917
    %4981 = vmatpush1.msra.mxu0 %v916
    %4982 = vmatprep.subr.mxu0 %v933
    %4983 = vmatpush1.msra.mxu0 %v932
    %4984 = vmatprep.subr.mxu0 %v949
    %4985 = vmatpush1.msra.mxu0 %v948
    %4986 = vmatprep.subr.mxu0 %v965
    %4987 = vmatpush1.msra.mxu0 %v964
    %4988 = vmatprep.subr.mxu0 %v981
    %4989 = vmatpush1.msra.mxu0 %v980
    %4990 = vmatprep.subr.mxu0 %v997
    %4991 = vmatpush1.msra.mxu0 %v996
    %4992 = vmatprep.subr.mxu0 %v1013
    %4993 = vmatpush1.msra.mxu0 %v1012
    %4994 = vmatprep.subr.mxu0 %v1029
    %4995 = vmatpush1.msra.mxu0 %v1028
    %4996 = vmatprep.subr.mxu0 %v1045
    %4997 = vmatpush1.msra.mxu0 %v1044
    %4998 = vmatprep.subr.mxu0 %v1061
    %4999 = vmatpush1.msra.mxu0 %v1060
    %5000 = vmatprep.subr.mxu0 %v1077
    %5001 = vmatpush1.msra.mxu0 %v1076
    %5002 = vmatprep.subr.mxu0 %v1093
    %5003 = vmatpush1.msra.mxu0 %v1092
    %5004 = vmatprep.subr.mxu0 %v1109
    %5005 = vmatpush1.msra.mxu0 %v1108
    %5006 = vmatprep.subr.mxu0 %v1125
    %5007 = vmatpush1.msra.mxu0 %v1124
    %5008 = vmatprep.subr.mxu0 %v1141
    %5009 = vmatpush1.msra.mxu0 %v1140
    %5010 = vmatprep.subr.mxu0 %v1157
    %5011 = vmatpush1.msra.mxu0 %v1156
    %5012 = vmatprep.subr.mxu0 %v1173
    %5013 = vmatpush1.msra.mxu0 %v1172
    %5014 = vmatprep.mubr.f32.mxu0 %v647
    %5015 = vmatmul.mubr.f32.gmra.mrb[0].mxu0 %v646
    %v5016 = vpop.f32.mrb[0].mxu0
    %v5017 = vadd.f32 %v2773, %v5016
    %v5018 = vpop.f32.mrb[0].mxu0
    %v5019 = vadd.f32 %v2777, %v5018
    %5020 = vmatprep.mubr.f32.mxu0 %v655
    %5021 = vmatmul.mubr.f32.gmra.mrb[0].mxu0 %v654
    %v5022 = vpop.f32.mrb[0].mxu0
    %v5023 = vadd.f32 %v2773, %v5022
    %v5024 = vpop.f32.mrb[0].mxu0
    %v5025 = vadd.f32 %v2777, %v5024
    %5026 = vdwg.mxu0
    %5027 = vmatprep.subr.mxu0 %v1189
    %5028 = vmatpush1.msra.mxu0 %v1188
    %5029 = vmatprep.subr.mxu0 %v1205
    %5030 = vmatpush1.msra.mxu0 %v1204
    %5031 = vmatprep.subr.mxu0 %v1221
    %5032 = vmatpush1.msra.mxu0 %v1220
    %5033 = vmatprep.subr.mxu0 %v1237
    %5034 = vmatpush1.msra.mxu0 %v1236
    %5035 = vmatprep.subr.mxu0 %v1253
    %5036 = vmatpush1.msra.mxu0 %v1252
    %5037 = vmatprep.subr.mxu0 %v1269
    %5038 = vmatpush1.msra.mxu0 %v1268
    %5039 = vmatprep.subr.mxu0 %v1285
    %5040 = vmatpush1.msra.mxu0 %v1284
    %5041 = vmatprep.subr.mxu0 %v1301
    %5042 = vmatpush1.msra.mxu0 %v1300
    %5043 = vmatprep.subr.mxu0 %v1317
    %5044 = vmatpush1.msra.mxu0 %v1316
    %5045 = vmatprep.subr.mxu0 %v1333
    %5046 = vmatpush1.msra.mxu0 %v1332
    %5047 = vmatprep.subr.mxu0 %v1349
    %5048 = vmatpush1.msra.mxu0 %v1348
    %5049 = vmatprep.subr.mxu0 %v1365
    %5050 = vmatpush1.msra.mxu0 %v1364
    %5051 = vmatprep.subr.mxu0 %v1381
    %5052 = vmatpush1.msra.mxu0 %v1380
    %5053 = vmatprep.subr.mxu0 %v1397
    %5054 = vmatpush1.msra.mxu0 %v1396
    %5055 = vmatprep.subr.mxu0 %v1413
    %5056 = vmatpush1.msra.mxu0 %v1412
    %5057 = vmatprep.subr.mxu0 %v1429
    %5058 = vmatpush1.msra.mxu0 %v1428
    %5059 = vmatprep.subr.mxu0 %v1445
    %5060 = vmatpush1.msra.mxu0 %v1444
    %5061 = vmatprep.subr.mxu0 %v1461
    %5062 = vmatpush1.msra.mxu0 %v1460
    %5063 = vmatprep.subr.mxu0 %v1477
    %5064 = vmatpush1.msra.mxu0 %v1476
    %5065 = vmatprep.subr.mxu0 %v1493
    %5066 = vmatpush1.msra.mxu0 %v1492
    %5067 = vmatprep.subr.mxu0 %v1509
    %5068 = vmatpush1.msra.mxu0 %v1508
    %5069 = vmatprep.subr.mxu0 %v1525
    %5070 = vmatpush1.msra.mxu0 %v1524
    %5071 = vmatprep.subr.mxu0 %v1541
    %5072 = vmatpush1.msra.mxu0 %v1540
    %5073 = vmatprep.subr.mxu0 %v1557
    %5074 = vmatpush1.msra.mxu0 %v1556
    %5075 = vmatprep.subr.mxu0 %v1573
    %5076 = vmatpush1.msra.mxu0 %v1572
    %5077 = vmatprep.subr.mxu0 %v1589
    %5078 = vmatpush1.msra.mxu0 %v1588
    %5079 = vmatprep.subr.mxu0 %v1605
    %5080 = vmatpush1.msra.mxu0 %v1604
    %5081 = vmatprep.subr.mxu0 %v1621
    %5082 = vmatpush1.msra.mxu0 %v1620
    %5083 = vmatprep.subr.mxu0 %v1637
    %5084 = vmatpush1.msra.mxu0 %v1636
    %5085 = vmatprep.subr.mxu0 %v1653
    %5086 = vmatpush1.msra.mxu0 %v1652
    %5087 = vmatprep.subr.mxu0 %v1669
    %5088 = vmatpush1.msra.mxu0 %v1668
    %5089 = vmatprep.subr.mxu0 %v1685
    %5090 = vmatpush1.msra.mxu0 %v1684
    %5091 = vmatprep.mubr.f32.mxu0 %v649
    %5092 = vmatmul.mubr.f32.gmra.mrb[0].mxu0 %v648
    %v5093 = vpop.f32.mrb[0].mxu0
    %v5094 = vadd.f32 %v5017, %v5093
    %v5095 = vpop.f32.mrb[0].mxu0
    %v5096 = vadd.f32 %v5019, %v5095
    %5097 = vmatprep.mubr.f32.mxu0 %v657
    %5098 = vmatmul.mubr.f32.gmra.mrb[0].mxu0 %v656
    %v5099 = vpop.f32.mrb[0].mxu0
    %v5100 = vadd.f32 %v5023, %v5099
    %v5101 = vpop.f32.mrb[0].mxu0
    %v5102 = vadd.f32 %v5025, %v5101
    %5103 = vdwg.mxu0
    %5104 = vmatprep.subr.mxu0 %v1701
    %5105 = vmatpush1.msra.mxu0 %v1700
    %5106 = vmatprep.subr.mxu0 %v1717
    %5107 = vmatpush1.msra.mxu0 %v1716
    %5108 = vmatprep.subr.mxu0 %v1733
    %5109 = vmatpush1.msra.mxu0 %v1732
    %5110 = vmatprep.subr.mxu0 %v1749
    %5111 = vmatpush1.msra.mxu0 %v1748
    %5112 = vmatprep.subr.mxu0 %v1765
    %5113 = vmatpush1.msra.mxu0 %v1764
    %5114 = vmatprep.subr.mxu0 %v1781
    %5115 = vmatpush1.msra.mxu0 %v1780
    %5116 = vmatprep.subr.mxu0 %v1797
    %5117 = vmatpush1.msra.mxu0 %v1796
    %5118 = vmatprep.subr.mxu0 %v1813
    %5119 = vmatpush1.msra.mxu0 %v1812
    %5120 = vmatprep.subr.mxu0 %v1829
    %5121 = vmatpush1.msra.mxu0 %v1828
    %5122 = vmatprep.subr.mxu0 %v1845
    %5123 = vmatpush1.msra.mxu0 %v1844
    %5124 = vmatprep.subr.mxu0 %v1861
    %5125 = vmatpush1.msra.mxu0 %v1860
    %5126 = vmatprep.subr.mxu0 %v1877
    %5127 = vmatpush1.msra.mxu0 %v1876
    %5128 = vmatprep.subr.mxu0 %v1893
    %5129 = vmatpush1.msra.mxu0 %v1892
    %5130 = vmatprep.subr.mxu0 %v1909
    %5131 = vmatpush1.msra.mxu0 %v1908
    %5132 = vmatprep.subr.mxu0 %v1925
    %5133 = vmatpush1.msra.mxu0 %v1924
    %5134 = vmatprep.subr.mxu0 %v1941
    %5135 = vmatpush1.msra.mxu0 %v1940
    %5136 = vmatprep.subr.mxu0 %v1957
    %5137 = vmatpush1.msra.mxu0 %v1956
    %5138 = vmatprep.subr.mxu0 %v1973
    %5139 = vmatpush1.msra.mxu0 %v1972
    %5140 = vmatprep.subr.mxu0 %v1989
    %5141 = vmatpush1.msra.mxu0 %v1988
    %5142 = vmatprep.subr.mxu0 %v2005
    %5143 = vmatpush1.msra.mxu0 %v2004
    %5144 = vmatprep.subr.mxu0 %v2021
    %5145 = vmatpush1.msra.mxu0 %v2020
    %5146 = vmatprep.subr.mxu0 %v2037
    %5147 = vmatpush1.msra.mxu0 %v2036
    %5148 = vmatprep.subr.mxu0 %v2053
    %5149 = vmatpush1.msra.mxu0 %v2052
    %5150 = vmatprep.subr.mxu0 %v2069
    %5151 = vmatpush1.msra.mxu0 %v2068
    %5152 = vmatprep.subr.mxu0 %v2085
    %5153 = vmatpush1.msra.mxu0 %v2084
    %5154 = vmatprep.subr.mxu0 %v2101
    %5155 = vmatpush1.msra.mxu0 %v2100
    %5156 = vmatprep.subr.mxu0 %v2117
    %5157 = vmatpush1.msra.mxu0 %v2116
    %5158 = vmatprep.subr.mxu0 %v2133
    %5159 = vmatpush1.msra.mxu0 %v2132
    %5160 = vmatprep.subr.mxu0 %v2149
    %5161 = vmatpush1.msra.mxu0 %v2148
    %5162 = vmatprep.subr.mxu0 %v2165
    %5163 = vmatpush1.msra.mxu0 %v2164
    %5164 = vmatprep.subr.mxu0 %v2181
    %5165 = vmatpush1.msra.mxu0 %v2180
    %5166 = vmatprep.subr.mxu0 %v2197
    %5167 = vmatpush1.msra.mxu0 %v2196
    %5168 = vmatprep.mubr.f32.mxu0 %v651
    %5169 = vmatmul.mubr.f32.gmra.mrb[0].mxu0 %v650
    %v5170 = vpop.f32.mrb[0].mxu0
    %v5171 = vadd.f32 %v5094, %v5170
    %v5172 = vpop.f32.mrb[0].mxu0
    %v5173 = vadd.f32 %v5096, %v5172
    %5174 = vmatprep.mubr.f32.mxu0 %v659
    %5175 = vmatmul.mubr.f32.gmra.mrb[0].mxu0 %v658
    %v5176 = vpop.f32.mrb[0].mxu0
    %v5177 = vadd.f32 %v5100, %v5176
    %v5178 = vpop.f32.mrb[0].mxu0
    %v5179 = vadd.f32 %v5102, %v5178
    %5180 = vdwg.mxu0
    %5181 = vmatprep.subr.mxu0 %v2213
    %5182 = vmatpush1.msra.mxu0 %v2212
    %5183 = vmatprep.subr.mxu0 %v2229
    %5184 = vmatpush1.msra.mxu0 %v2228
    %5185 = vmatprep.subr.mxu0 %v2245
    %5186 = vmatpush1.msra.mxu0 %v2244
    %5187 = vmatprep.subr.mxu0 %v2261
    %5188 = vmatpush1.msra.mxu0 %v2260
    %5189 = vmatprep.subr.mxu0 %v2277
    %5190 = vmatpush1.msra.mxu0 %v2276
    %5191 = vmatprep.subr.mxu0 %v2293
    %5192 = vmatpush1.msra.mxu0 %v2292
    %5193 = vmatprep.subr.mxu0 %v2309
    %5194 = vmatpush1.msra.mxu0 %v2308
    %5195 = vmatprep.subr.mxu0 %v2325
    %5196 = vmatpush1.msra.mxu0 %v2324
    %5197 = vmatprep.subr.mxu0 %v2341
    %5198 = vmatpush1.msra.mxu0 %v2340
    %5199 = vmatprep.subr.mxu0 %v2357
    %5200 = vmatpush1.msra.mxu0 %v2356
    %5201 = vmatprep.subr.mxu0 %v2373
    %5202 = vmatpush1.msra.mxu0 %v2372
    %5203 = vmatprep.subr.mxu0 %v2389
    %5204 = vmatpush1.msra.mxu0 %v2388
    %5205 = vmatprep.subr.mxu0 %v2405
    %5206 = vmatpush1.msra.mxu0 %v2404
    %5207 = vmatprep.subr.mxu0 %v2421
    %5208 = vmatpush1.msra.mxu0 %v2420
    %5209 = vmatprep.subr.mxu0 %v2437
    %5210 = vmatpush1.msra.mxu0 %v2436
    %5211 = vmatprep.subr.mxu0 %v2453
    %5212 = vmatpush1.msra.mxu0 %v2452
    %5213 = vmatprep.subr.mxu0 %v2469
    %5214 = vmatpush1.msra.mxu0 %v2468
    %5215 = vmatprep.subr.mxu0 %v2485
    %5216 = vmatpush1.msra.mxu0 %v2484
    %5217 = vmatprep.subr.mxu0 %v2501
    %5218 = vmatpush1.msra.mxu0 %v2500
    %5219 = vmatprep.subr.mxu0 %v2517
    %5220 = vmatpush1.msra.mxu0 %v2516
    %5221 = vmatprep.subr.mxu0 %v2533
    %5222 = vmatpush1.msra.mxu0 %v2532
    %5223 = vmatprep.subr.mxu0 %v2549
    %5224 = vmatpush1.msra.mxu0 %v2548
    %5225 = vmatprep.subr.mxu0 %v2565
    %5226 = vmatpush1.msra.mxu0 %v2564
    %5227 = vmatprep.subr.mxu0 %v2581
    %5228 = vmatpush1.msra.mxu0 %v2580
    %5229 = vmatprep.subr.mxu0 %v2597
    %5230 = vmatpush1.msra.mxu0 %v2596
    %5231 = vmatprep.subr.mxu0 %v2613
    %5232 = vmatpush1.msra.mxu0 %v2612
    %5233 = vmatprep.subr.mxu0 %v2629
    %5234 = vmatpush1.msra.mxu0 %v2628
    %5235 = vmatprep.subr.mxu0 %v2645
    %5236 = vmatpush1.msra.mxu0 %v2644
    %5237 = vmatprep.subr.mxu0 %v2661
    %5238 = vmatpush1.msra.mxu0 %v2660
    %5239 = vmatprep.subr.mxu0 %v2677
    %5240 = vmatpush1.msra.mxu0 %v2676
    %5241 = vmatprep.subr.mxu0 %v2693
    %5242 = vmatpush1.msra.mxu0 %v2692
    %5243 = vmatprep.subr.mxu0 %v2709
    %5244 = vmatpush1.msra.mxu0 %v2708
    %5245 = vmatprep.mubr.f32.mxu0 %v653
    %5246 = vmatmul.mubr.f32.gmra.mrb[0].mxu0 %v652
    %v5247 = vpop.f32.mrb[0].mxu0
    %v5248 = vadd.f32 %v5171, %v5247
    %v5249 = vpop.f32.mrb[0].mxu0
    %v5250 = vadd.f32 %v5173, %v5249
    %5251 = vmatprep.mubr.f32.mxu0 %v661
    %5252 = vmatmul.mubr.f32.gmra.mrb[0].mxu0 %v660
    %v5253 = vpop.f32.mrb[0].mxu0
    %v5254 = vadd.f32 %v5177, %v5253
    %v5255 = vpop.f32.mrb[0].mxu0
    %v5256 = vadd.f32 %v5179, %v5255
    %5257 = vdwg.mxu0
    %v5258 = vld [vmem:[#allocation9] sm:$0xff]
    %v5259 = vld [vmem:[#allocation9 + $0x8] sm:$0xff]
    %v5260 = vld [vmem:[#allocation9 + $0x10] sm:$0xff]
    %v5261 = vld [vmem:[#allocation9 + $0x18] sm:$0xff]
    %v5262 = vld [vmem:[#allocation9 + $0x20] sm:$0xff]
    %v5263 = vld [vmem:[#allocation9 + $0x28] sm:$0xff]
    %v5264 = vld [vmem:[#allocation9 + $0x30] sm:$0xff]
    %v5265 = vld [vmem:[#allocation9 + $0x38] sm:$0xff]
    %v5266 = vld [vmem:[#allocation9 + $0x40] sm:$0xff]
    %v5267 = vld [vmem:[#allocation9 + $0x48] sm:$0xff]
    %v5268 = vld [vmem:[#allocation9 + $0x50] sm:$0xff]
    %v5269 = vld [vmem:[#allocation9 + $0x58] sm:$0xff]
    %v5270 = vld [vmem:[#allocation9 + $0x60] sm:$0xff]
    %v5271 = vld [vmem:[#allocation9 + $0x68] sm:$0xff]
    %v5272 = vld [vmem:[#allocation9 + $0x70] sm:$0xff]
    %v5273 = vld [vmem:[#allocation9 + $0x78] sm:$0xff]
    %v5274 = vld [vmem:[#allocation9 + $0x80] sm:$0xff]
    %v5275 = vld [vmem:[#allocation9 + $0x88] sm:$0xff]
    %v5276 = vld [vmem:[#allocation9 + $0x90] sm:$0xff]
    %v5277 = vld [vmem:[#allocation9 + $0x98] sm:$0xff]
    %v5278 = vld [vmem:[#allocation9 + $0xa0] sm:$0xff]
    %v5279 = vld [vmem:[#allocation9 + $0xa8] sm:$0xff]
    %v5280 = vld [vmem:[#allocation9 + $0xb0] sm:$0xff]
    %v5281 = vld [vmem:[#allocation9 + $0xb8] sm:$0xff]
    %v5282 = vld [vmem:[#allocation9 + $0xc0] sm:$0xff]
    %v5283 = vld [vmem:[#allocation9 + $0xc8] sm:$0xff]
    %v5284 = vld [vmem:[#allocation9 + $0xd0] sm:$0xff]
    %v5285 = vld [vmem:[#allocation9 + $0xd8] sm:$0xff]
    %v5286 = vld [vmem:[#allocation9 + $0xe0] sm:$0xff]
    %v5287 = vld [vmem:[#allocation9 + $0xe8] sm:$0xff]
    %v5288 = vld [vmem:[#allocation9 + $0xf0] sm:$0xff]
    %v5289 = vld [vmem:[#allocation9 + $0xf8] sm:$0xff]
    %v5290 = vld [vmem:[#allocation9 + $0x100] sm:$0xff]
    %v5291 = vld [vmem:[#allocation9 + $0x108] sm:$0xff]
    %v5292 = vld [vmem:[#allocation9 + $0x110] sm:$0xff]
    %v5293 = vld [vmem:[#allocation9 + $0x118] sm:$0xff]
    %v5294 = vld [vmem:[#allocation9 + $0x120] sm:$0xff]
    %v5295 = vld [vmem:[#allocation9 + $0x128] sm:$0xff]
    %v5296 = vld [vmem:[#allocation9 + $0x130] sm:$0xff]
    %v5297 = vld [vmem:[#allocation9 + $0x138] sm:$0xff]
    %v5298 = vld [vmem:[#allocation9 + $0x140] sm:$0xff]
    %v5299 = vld [vmem:[#allocation9 + $0x148] sm:$0xff]
    %v5300 = vld [vmem:[#allocation9 + $0x150] sm:$0xff]
    %v5301 = vld [vmem:[#allocation9 + $0x158] sm:$0xff]
    %v5302 = vld [vmem:[#allocation9 + $0x160] sm:$0xff]
    %v5303 = vld [vmem:[#allocation9 + $0x168] sm:$0xff]
    %v5304 = vld [vmem:[#allocation9 + $0x170] sm:$0xff]
    %v5305 = vld [vmem:[#allocation9 + $0x178] sm:$0xff]
    %v5306 = vld [vmem:[#allocation9 + $0x180] sm:$0xff]
    %v5307 = vld [vmem:[#allocation9 + $0x188] sm:$0xff]
    %v5308 = vld [vmem:[#allocation9 + $0x190] sm:$0xff]
    %v5309 = vld [vmem:[#allocation9 + $0x198] sm:$0xff]
    %v5310 = vld [vmem:[#allocation9 + $0x1a0] sm:$0xff]
    %v5311 = vld [vmem:[#allocation9 + $0x1a8] sm:$0xff]
    %v5312 = vld [vmem:[#allocation9 + $0x1b0] sm:$0xff]
    %v5313 = vld [vmem:[#allocation9 + $0x1b8] sm:$0xff]
    %v5314 = vld [vmem:[#allocation9 + $0x1c0] sm:$0xff]
    %v5315 = vld [vmem:[#allocation9 + $0x1c8] sm:$0xff]
    %v5316 = vld [vmem:[#allocation9 + $0x1d0] sm:$0xff]
    %v5317 = vld [vmem:[#allocation9 + $0x1d8] sm:$0xff]
    %v5318 = vld [vmem:[#allocation9 + $0x1e0] sm:$0xff]
    %v5319 = vld [vmem:[#allocation9 + $0x1e8] sm:$0xff]
    %v5320 = vld [vmem:[#allocation9 + $0x1f0] sm:$0xff]
    %v5321 = vld [vmem:[#allocation9 + $0x1f8] sm:$0xff]
    %v5322 = vld [vmem:[#allocation9 + $0x200] sm:$0xff]
    %v5323 = vld [vmem:[#allocation9 + $0x208] sm:$0xff]
    %v5324 = vld [vmem:[#allocation9 + $0x210] sm:$0xff]
    %v5325 = vld [vmem:[#allocation9 + $0x218] sm:$0xff]
    %v5326 = vld [vmem:[#allocation9 + $0x220] sm:$0xff]
    %v5327 = vld [vmem:[#allocation9 + $0x228] sm:$0xff]
    %v5328 = vld [vmem:[#allocation9 + $0x230] sm:$0xff]
    %v5329 = vld [vmem:[#allocation9 + $0x238] sm:$0xff]
    %v5330 = vld [vmem:[#allocation9 + $0x240] sm:$0xff]
    %v5331 = vld [vmem:[#allocation9 + $0x248] sm:$0xff]
    %v5332 = vld [vmem:[#allocation9 + $0x250] sm:$0xff]
    %v5333 = vld [vmem:[#allocation9 + $0x258] sm:$0xff]
    %v5334 = vld [vmem:[#allocation9 + $0x260] sm:$0xff]
    %v5335 = vld [vmem:[#allocation9 + $0x268] sm:$0xff]
    %v5336 = vld [vmem:[#allocation9 + $0x270] sm:$0xff]
    %v5337 = vld [vmem:[#allocation9 + $0x278] sm:$0xff]
    %v5338 = vld [vmem:[#allocation9 + $0x280] sm:$0xff]
    %v5339 = vld [vmem:[#allocation9 + $0x288] sm:$0xff]
    %v5340 = vld [vmem:[#allocation9 + $0x290] sm:$0xff]
    %v5341 = vld [vmem:[#allocation9 + $0x298] sm:$0xff]
    %v5342 = vld [vmem:[#allocation9 + $0x2a0] sm:$0xff]
    %v5343 = vld [vmem:[#allocation9 + $0x2a8] sm:$0xff]
    %v5344 = vld [vmem:[#allocation9 + $0x2b0] sm:$0xff]
    %v5345 = vld [vmem:[#allocation9 + $0x2b8] sm:$0xff]
    %v5346 = vld [vmem:[#allocation9 + $0x2c0] sm:$0xff]
    %v5347 = vld [vmem:[#allocation9 + $0x2c8] sm:$0xff]
    %v5348 = vld [vmem:[#allocation9 + $0x2d0] sm:$0xff]
    %v5349 = vld [vmem:[#allocation9 + $0x2d8] sm:$0xff]
    %v5350 = vld [vmem:[#allocation9 + $0x2e0] sm:$0xff]
    %v5351 = vld [vmem:[#allocation9 + $0x2e8] sm:$0xff]
    %v5352 = vld [vmem:[#allocation9 + $0x2f0] sm:$0xff]
    %v5353 = vld [vmem:[#allocation9 + $0x2f8] sm:$0xff]
    %v5354 = vld [vmem:[#allocation9 + $0x300] sm:$0xff]
    %v5355 = vld [vmem:[#allocation9 + $0x308] sm:$0xff]
    %v5356 = vld [vmem:[#allocation9 + $0x310] sm:$0xff]
    %v5357 = vld [vmem:[#allocation9 + $0x318] sm:$0xff]
    %v5358 = vld [vmem:[#allocation9 + $0x320] sm:$0xff]
    %v5359 = vld [vmem:[#allocation9 + $0x328] sm:$0xff]
    %v5360 = vld [vmem:[#allocation9 + $0x330] sm:$0xff]
    %v5361 = vld [vmem:[#allocation9 + $0x338] sm:$0xff]
    %v5362 = vld [vmem:[#allocation9 + $0x340] sm:$0xff]
    %v5363 = vld [vmem:[#allocation9 + $0x348] sm:$0xff]
    %v5364 = vld [vmem:[#allocation9 + $0x350] sm:$0xff]
    %v5365 = vld [vmem:[#allocation9 + $0x358] sm:$0xff]
    %v5366 = vld [vmem:[#allocation9 + $0x360] sm:$0xff]
    %v5367 = vld [vmem:[#allocation9 + $0x368] sm:$0xff]
    %v5368 = vld [vmem:[#allocation9 + $0x370] sm:$0xff]
    %v5369 = vld [vmem:[#allocation9 + $0x378] sm:$0xff]
    %v5370 = vld [vmem:[#allocation9 + $0x380] sm:$0xff]
    %v5371 = vld [vmem:[#allocation9 + $0x388] sm:$0xff]
    %v5372 = vld [vmem:[#allocation9 + $0x390] sm:$0xff]
    %v5373 = vld [vmem:[#allocation9 + $0x398] sm:$0xff]
    %v5374 = vld [vmem:[#allocation9 + $0x3a0] sm:$0xff]
    %v5375 = vld [vmem:[#allocation9 + $0x3a8] sm:$0xff]
    %v5376 = vld [vmem:[#allocation9 + $0x3b0] sm:$0xff]
    %v5377 = vld [vmem:[#allocation9 + $0x3b8] sm:$0xff]
    %v5378 = vld [vmem:[#allocation9 + $0x3c0] sm:$0xff]
    %v5379 = vld [vmem:[#allocation9 + $0x3c8] sm:$0xff]
    %v5380 = vld [vmem:[#allocation9 + $0x3d0] sm:$0xff]
    %v5381 = vld [vmem:[#allocation9 + $0x3d8] sm:$0xff]
    %v5382 = vld [vmem:[#allocation9 + $0x3e0] sm:$0xff]
    %v5383 = vld [vmem:[#allocation9 + $0x3e8] sm:$0xff]
    %v5384 = vld [vmem:[#allocation9 + $0x3f0] sm:$0xff]
    %v5385 = vld [vmem:[#allocation9 + $0x3f8] sm:$0xff]
    %v5386 = vld [vmem:[#allocation9 + $0x400] sm:$0xff]
    %v5387 = vld [vmem:[#allocation9 + $0x408] sm:$0xff]
    %v5388 = vld [vmem:[#allocation9 + $0x410] sm:$0xff]
    %v5389 = vld [vmem:[#allocation9 + $0x418] sm:$0xff]
    %v5390 = vld [vmem:[#allocation9 + $0x420] sm:$0xff]
    %v5391 = vld [vmem:[#allocation9 + $0x428] sm:$0xff]
    %v5392 = vld [vmem:[#allocation9 + $0x430] sm:$0xff]
    %v5393 = vld [vmem:[#allocation9 + $0x438] sm:$0xff]
    %v5394 = vld [vmem:[#allocation9 + $0x440] sm:$0xff]
    %v5395 = vld [vmem:[#allocation9 + $0x448] sm:$0xff]
    %v5396 = vld [vmem:[#allocation9 + $0x450] sm:$0xff]
    %v5397 = vld [vmem:[#allocation9 + $0x458] sm:$0xff]
    %v5398 = vld [vmem:[#allocation9 + $0x460] sm:$0xff]
    %v5399 = vld [vmem:[#allocation9 + $0x468] sm:$0xff]
    %v5400 = vld [vmem:[#allocation9 + $0x470] sm:$0xff]
    %v5401 = vld [vmem:[#allocation9 + $0x478] sm:$0xff]
    %v5402 = vld [vmem:[#allocation9 + $0x480] sm:$0xff]
    %v5403 = vld [vmem:[#allocation9 + $0x488] sm:$0xff]
    %v5404 = vld [vmem:[#allocation9 + $0x490] sm:$0xff]
    %v5405 = vld [vmem:[#allocation9 + $0x498] sm:$0xff]
    %v5406 = vld [vmem:[#allocation9 + $0x4a0] sm:$0xff]
    %v5407 = vld [vmem:[#allocation9 + $0x4a8] sm:$0xff]
    %v5408 = vld [vmem:[#allocation9 + $0x4b0] sm:$0xff]
    %v5409 = vld [vmem:[#allocation9 + $0x4b8] sm:$0xff]
    %v5410 = vld [vmem:[#allocation9 + $0x4c0] sm:$0xff]
    %v5411 = vld [vmem:[#allocation9 + $0x4c8] sm:$0xff]
    %v5412 = vld [vmem:[#allocation9 + $0x4d0] sm:$0xff]
    %v5413 = vld [vmem:[#allocation9 + $0x4d8] sm:$0xff]
    %v5414 = vld [vmem:[#allocation9 + $0x4e0] sm:$0xff]
    %v5415 = vld [vmem:[#allocation9 + $0x4e8] sm:$0xff]
    %v5416 = vld [vmem:[#allocation9 + $0x4f0] sm:$0xff]
    %v5417 = vld [vmem:[#allocation9 + $0x4f8] sm:$0xff]
    %v5418 = vld [vmem:[#allocation9 + $0x500] sm:$0xff]
    %v5419 = vld [vmem:[#allocation9 + $0x508] sm:$0xff]
    %v5420 = vld [vmem:[#allocation9 + $0x510] sm:$0xff]
    %v5421 = vld [vmem:[#allocation9 + $0x518] sm:$0xff]
    %v5422 = vld [vmem:[#allocation9 + $0x520] sm:$0xff]
    %v5423 = vld [vmem:[#allocation9 + $0x528] sm:$0xff]
    %v5424 = vld [vmem:[#allocation9 + $0x530] sm:$0xff]
    %v5425 = vld [vmem:[#allocation9 + $0x538] sm:$0xff]
    %v5426 = vld [vmem:[#allocation9 + $0x540] sm:$0xff]
    %v5427 = vld [vmem:[#allocation9 + $0x548] sm:$0xff]
    %v5428 = vld [vmem:[#allocation9 + $0x550] sm:$0xff]
    %v5429 = vld [vmem:[#allocation9 + $0x558] sm:$0xff]
    %v5430 = vld [vmem:[#allocation9 + $0x560] sm:$0xff]
    %v5431 = vld [vmem:[#allocation9 + $0x568] sm:$0xff]
    %v5432 = vld [vmem:[#allocation9 + $0x570] sm:$0xff]
    %v5433 = vld [vmem:[#allocation9 + $0x578] sm:$0xff]
    %v5434 = vld [vmem:[#allocation9 + $0x580] sm:$0xff]
    %v5435 = vld [vmem:[#allocation9 + $0x588] sm:$0xff]
    %v5436 = vld [vmem:[#allocation9 + $0x590] sm:$0xff]
    %v5437 = vld [vmem:[#allocation9 + $0x598] sm:$0xff]
    %v5438 = vld [vmem:[#allocation9 + $0x5a0] sm:$0xff]
    %v5439 = vld [vmem:[#allocation9 + $0x5a8] sm:$0xff]
    %v5440 = vld [vmem:[#allocation9 + $0x5b0] sm:$0xff]
    %v5441 = vld [vmem:[#allocation9 + $0x5b8] sm:$0xff]
    %v5442 = vld [vmem:[#allocation9 + $0x5c0] sm:$0xff]
    %v5443 = vld [vmem:[#allocation9 + $0x5c8] sm:$0xff]
    %v5444 = vld [vmem:[#allocation9 + $0x5d0] sm:$0xff]
    %v5445 = vld [vmem:[#allocation9 + $0x5d8] sm:$0xff]
    %v5446 = vld [vmem:[#allocation9 + $0x5e0] sm:$0xff]
    %v5447 = vld [vmem:[#allocation9 + $0x5e8] sm:$0xff]
    %v5448 = vld [vmem:[#allocation9 + $0x5f0] sm:$0xff]
    %v5449 = vld [vmem:[#allocation9 + $0x5f8] sm:$0xff]
    %v5450 = vld [vmem:[#allocation9 + $0x600] sm:$0xff]
    %v5451 = vld [vmem:[#allocation9 + $0x608] sm:$0xff]
    %v5452 = vld [vmem:[#allocation9 + $0x610] sm:$0xff]
    %v5453 = vld [vmem:[#allocation9 + $0x618] sm:$0xff]
    %v5454 = vld [vmem:[#allocation9 + $0x620] sm:$0xff]
    %v5455 = vld [vmem:[#allocation9 + $0x628] sm:$0xff]
    %v5456 = vld [vmem:[#allocation9 + $0x630] sm:$0xff]
    %v5457 = vld [vmem:[#allocation9 + $0x638] sm:$0xff]
    %v5458 = vld [vmem:[#allocation9 + $0x640] sm:$0xff]
    %v5459 = vld [vmem:[#allocation9 + $0x648] sm:$0xff]
    %v5460 = vld [vmem:[#allocation9 + $0x650] sm:$0xff]
    %v5461 = vld [vmem:[#allocation9 + $0x658] sm:$0xff]
    %v5462 = vld [vmem:[#allocation9 + $0x660] sm:$0xff]
    %v5463 = vld [vmem:[#allocation9 + $0x668] sm:$0xff]
    %v5464 = vld [vmem:[#allocation9 + $0x670] sm:$0xff]
    %v5465 = vld [vmem:[#allocation9 + $0x678] sm:$0xff]
    %v5466 = vld [vmem:[#allocation9 + $0x680] sm:$0xff]
    %v5467 = vld [vmem:[#allocation9 + $0x688] sm:$0xff]
    %v5468 = vld [vmem:[#allocation9 + $0x690] sm:$0xff]
    %v5469 = vld [vmem:[#allocation9 + $0x698] sm:$0xff]
    %v5470 = vld [vmem:[#allocation9 + $0x6a0] sm:$0xff]
    %v5471 = vld [vmem:[#allocation9 + $0x6a8] sm:$0xff]
    %v5472 = vld [vmem:[#allocation9 + $0x6b0] sm:$0xff]
    %v5473 = vld [vmem:[#allocation9 + $0x6b8] sm:$0xff]
    %v5474 = vld [vmem:[#allocation9 + $0x6c0] sm:$0xff]
    %v5475 = vld [vmem:[#allocation9 + $0x6c8] sm:$0xff]
    %v5476 = vld [vmem:[#allocation9 + $0x6d0] sm:$0xff]
    %v5477 = vld [vmem:[#allocation9 + $0x6d8] sm:$0xff]
    %v5478 = vld [vmem:[#allocation9 + $0x6e0] sm:$0xff]
    %v5479 = vld [vmem:[#allocation9 + $0x6e8] sm:$0xff]
    %v5480 = vld [vmem:[#allocation9 + $0x6f0] sm:$0xff]
    %v5481 = vld [vmem:[#allocation9 + $0x6f8] sm:$0xff]
    %v5482 = vld [vmem:[#allocation9 + $0x700] sm:$0xff]
    %v5483 = vld [vmem:[#allocation9 + $0x708] sm:$0xff]
    %v5484 = vld [vmem:[#allocation9 + $0x710] sm:$0xff]
    %v5485 = vld [vmem:[#allocation9 + $0x718] sm:$0xff]
    %v5486 = vld [vmem:[#allocation9 + $0x720] sm:$0xff]
    %v5487 = vld [vmem:[#allocation9 + $0x728] sm:$0xff]
    %v5488 = vld [vmem:[#allocation9 + $0x730] sm:$0xff]
    %v5489 = vld [vmem:[#allocation9 + $0x738] sm:$0xff]
    %v5490 = vld [vmem:[#allocation9 + $0x740] sm:$0xff]
    %v5491 = vld [vmem:[#allocation9 + $0x748] sm:$0xff]
    %v5492 = vld [vmem:[#allocation9 + $0x750] sm:$0xff]
    %v5493 = vld [vmem:[#allocation9 + $0x758] sm:$0xff]
    %v5494 = vld [vmem:[#allocation9 + $0x760] sm:$0xff]
    %v5495 = vld [vmem:[#allocation9 + $0x768] sm:$0xff]
    %v5496 = vld [vmem:[#allocation9 + $0x770] sm:$0xff]
    %v5497 = vld [vmem:[#allocation9 + $0x778] sm:$0xff]
    %v5498 = vld [vmem:[#allocation9 + $0x780] sm:$0xff]
    %v5499 = vld [vmem:[#allocation9 + $0x788] sm:$0xff]
    %v5500 = vld [vmem:[#allocation9 + $0x790] sm:$0xff]
    %v5501 = vld [vmem:[#allocation9 + $0x798] sm:$0xff]
    %v5502 = vld [vmem:[#allocation9 + $0x7a0] sm:$0xff]
    %v5503 = vld [vmem:[#allocation9 + $0x7a8] sm:$0xff]
    %v5504 = vld [vmem:[#allocation9 + $0x7b0] sm:$0xff]
    %v5505 = vld [vmem:[#allocation9 + $0x7b8] sm:$0xff]
    %v5506 = vld [vmem:[#allocation9 + $0x7c0] sm:$0xff]
    %v5507 = vld [vmem:[#allocation9 + $0x7c8] sm:$0xff]
    %v5508 = vld [vmem:[#allocation9 + $0x7d0] sm:$0xff]
    %v5509 = vld [vmem:[#allocation9 + $0x7d8] sm:$0xff]
    %v5510 = vld [vmem:[#allocation9 + $0x7e0] sm:$0xff]
    %v5511 = vld [vmem:[#allocation9 + $0x7e8] sm:$0xff]
    %v5512 = vld [vmem:[#allocation9 + $0x7f0] sm:$0xff]
    %v5513 = vld [vmem:[#allocation9 + $0x7f8] sm:$0xff]
    %v5514 = vld [vmem:[#allocation10] sm:$0x1]
    %v5516 = vlaneseq
    %v5517 = vshrl.u32 %v5516, 7
    %v5518 = vsub.s32 0, %v5517
    %v5519 = vrot.slane %v5514, %v5518
    %5521 = vmatprep.subr.mxu0 0.0
    %5522 = vmatpush1.msra.mxu0 %v5258
    %5523 = vmatprep.subr.mxu0 0.0
    %5524 = vmatpush1.msra.mxu0 %v5259
    %5525 = vmatprep.subr.mxu0 0.0
    %5526 = vmatpush1.msra.mxu0 %v5260
    %5527 = vmatprep.subr.mxu0 0.0
    %5528 = vmatpush1.msra.mxu0 %v5261
    %5529 = vmatprep.subr.mxu0 0.0
    %5530 = vmatpush1.msra.mxu0 %v5262
    %5531 = vmatprep.subr.mxu0 0.0
    %5532 = vmatpush1.msra.mxu0 %v5263
    %5533 = vmatprep.subr.mxu0 0.0
    %5534 = vmatpush1.msra.mxu0 %v5264
    %5535 = vmatprep.subr.mxu0 0.0
    %5536 = vmatpush1.msra.mxu0 %v5265
    %5537 = vmatprep.subr.mxu0 0.0
    %5538 = vmatpush1.msra.mxu0 %v5266
    %5539 = vmatprep.subr.mxu0 0.0
    %5540 = vmatpush1.msra.mxu0 %v5267
    %5541 = vmatprep.subr.mxu0 0.0
    %5542 = vmatpush1.msra.mxu0 %v5268
    %5543 = vmatprep.subr.mxu0 0.0
    %5544 = vmatpush1.msra.mxu0 %v5269
    %5545 = vmatprep.subr.mxu0 0.0
    %5546 = vmatpush1.msra.mxu0 %v5270
    %5547 = vmatprep.subr.mxu0 0.0
    %5548 = vmatpush1.msra.mxu0 %v5271
    %5549 = vmatprep.subr.mxu0 0.0
    %5550 = vmatpush1.msra.mxu0 %v5272
    %5551 = vmatprep.subr.mxu0 0.0
    %5552 = vmatpush1.msra.mxu0 %v5273
    %5553 = vmatprep.subr.mxu0 0.0
    %5554 = vmatpush1.msra.mxu0 %v5274
    %5555 = vmatprep.subr.mxu0 0.0
    %5556 = vmatpush1.msra.mxu0 %v5275
    %5557 = vmatprep.subr.mxu0 0.0
    %5558 = vmatpush1.msra.mxu0 %v5276
    %5559 = vmatprep.subr.mxu0 0.0
    %5560 = vmatpush1.msra.mxu0 %v5277
    %5561 = vmatprep.subr.mxu0 0.0
    %5562 = vmatpush1.msra.mxu0 %v5278
    %5563 = vmatprep.subr.mxu0 0.0
    %5564 = vmatpush1.msra.mxu0 %v5279
    %5565 = vmatprep.subr.mxu0 0.0
    %5566 = vmatpush1.msra.mxu0 %v5280
    %5567 = vmatprep.subr.mxu0 0.0
    %5568 = vmatpush1.msra.mxu0 %v5281
    %5569 = vmatprep.subr.mxu0 0.0
    %5570 = vmatpush1.msra.mxu0 %v5282
    %5571 = vmatprep.subr.mxu0 0.0
    %5572 = vmatpush1.msra.mxu0 %v5283
    %5573 = vmatprep.subr.mxu0 0.0
    %5574 = vmatpush1.msra.mxu0 %v5284
    %5575 = vmatprep.subr.mxu0 0.0
    %5576 = vmatpush1.msra.mxu0 %v5285
    %5577 = vmatprep.subr.mxu0 0.0
    %5578 = vmatpush1.msra.mxu0 %v5286
    %5579 = vmatprep.subr.mxu0 0.0
    %5580 = vmatpush1.msra.mxu0 %v5287
    %5581 = vmatprep.subr.mxu0 0.0
    %5582 = vmatpush1.msra.mxu0 %v5288
    %5583 = vmatprep.subr.mxu0 0.0
    %5584 = vmatpush1.msra.mxu0 %v5289
    %5585 = vmatprep.mubr.f32.mxu0 %v3094
    %5586 = vmatmul.mubr.f32.gmra.mrb[0].mxu0 %v3092
    %v5587 = vpop.f32.mrb[0].mxu0
    %v5588 = vadd.f32 %v5519, %v5587
    %v5589 = vpop.f32.mrb[0].mxu0
    %5590 = vmatprep.mubr.f32.mxu0 %v3100
    %5591 = vmatmul.mubr.f32.gmra.mrb[0].mxu0 %v3098
    %v5592 = vpop.f32.mrb[0].mxu0
    %v5593 = vadd.f32 %v5519, %v5592
    %v5594 = vpop.f32.mrb[0].mxu0
    %5595 = vdwg.mxu0
    %5596 = vmatprep.subr.mxu0 0.0
    %5597 = vmatpush1.msra.mxu0 %v5290
    %5598 = vmatprep.subr.mxu0 0.0
    %5599 = vmatpush1.msra.mxu0 %v5291
    %5600 = vmatprep.subr.mxu0 0.0
    %5601 = vmatpush1.msra.mxu0 %v5292
    %5602 = vmatprep.subr.mxu0 0.0
    %5603 = vmatpush1.msra.mxu0 %v5293
    %5604 = vmatprep.subr.mxu0 0.0
    %5605 = vmatpush1.msra.mxu0 %v5294
    %5606 = vmatprep.subr.mxu0 0.0
    %5607 = vmatpush1.msra.mxu0 %v5295
    %5608 = vmatprep.subr.mxu0 0.0
    %5609 = vmatpush1.msra.mxu0 %v5296
    %5610 = vmatprep.subr.mxu0 0.0
    %5611 = vmatpush1.msra.mxu0 %v5297
    %5612 = vmatprep.subr.mxu0 0.0
    %5613 = vmatpush1.msra.mxu0 %v5298
    %5614 = vmatprep.subr.mxu0 0.0
    %5615 = vmatpush1.msra.mxu0 %v5299
    %5616 = vmatprep.subr.mxu0 0.0
    %5617 = vmatpush1.msra.mxu0 %v5300
    %5618 = vmatprep.subr.mxu0 0.0
    %5619 = vmatpush1.msra.mxu0 %v5301
    %5620 = vmatprep.subr.mxu0 0.0
    %5621 = vmatpush1.msra.mxu0 %v5302
    %5622 = vmatprep.subr.mxu0 0.0
    %5623 = vmatpush1.msra.mxu0 %v5303
    %5624 = vmatprep.subr.mxu0 0.0
    %5625 = vmatpush1.msra.mxu0 %v5304
    %5626 = vmatprep.subr.mxu0 0.0
    %5627 = vmatpush1.msra.mxu0 %v5305
    %5628 = vmatprep.subr.mxu0 0.0
    %5629 = vmatpush1.msra.mxu0 %v5306
    %5630 = vmatprep.subr.mxu0 0.0
    %5631 = vmatpush1.msra.mxu0 %v5307
    %5632 = vmatprep.subr.mxu0 0.0
    %5633 = vmatpush1.msra.mxu0 %v5308
    %5634 = vmatprep.subr.mxu0 0.0
    %5635 = vmatpush1.msra.mxu0 %v5309
    %5636 = vmatprep.subr.mxu0 0.0
    %5637 = vmatpush1.msra.mxu0 %v5310
    %5638 = vmatprep.subr.mxu0 0.0
    %5639 = vmatpush1.msra.mxu0 %v5311
    %5640 = vmatprep.subr.mxu0 0.0
    %5641 = vmatpush1.msra.mxu0 %v5312
    %5642 = vmatprep.subr.mxu0 0.0
    %5643 = vmatpush1.msra.mxu0 %v5313
    %5644 = vmatprep.subr.mxu0 0.0
    %5645 = vmatpush1.msra.mxu0 %v5314
    %5646 = vmatprep.subr.mxu0 0.0
    %5647 = vmatpush1.msra.mxu0 %v5315
    %5648 = vmatprep.subr.mxu0 0.0
    %5649 = vmatpush1.msra.mxu0 %v5316
    %5650 = vmatprep.subr.mxu0 0.0
    %5651 = vmatpush1.msra.mxu0 %v5317
    %5652 = vmatprep.subr.mxu0 0.0
    %5653 = vmatpush1.msra.mxu0 %v5318
    %5654 = vmatprep.subr.mxu0 0.0
    %5655 = vmatpush1.msra.mxu0 %v5319
    %5656 = vmatprep.subr.mxu0 0.0
    %5657 = vmatpush1.msra.mxu0 %v5320
    %5658 = vmatprep.subr.mxu0 0.0
    %5659 = vmatpush1.msra.mxu0 %v5321
    %5660 = vmatprep.mubr.f32.mxu0 %v3402
    %5661 = vmatmul.mubr.f32.gmra.mrb[0].mxu0 %v3400
    %v5662 = vpop.f32.mrb[0].mxu0
    %v5663 = vadd.f32 %v5588, %v5662
    %v5664 = vpop.f32.mrb[0].mxu0
    %5665 = vmatprep.mubr.f32.mxu0 %v3408
    %5666 = vmatmul.mubr.f32.gmra.mrb[0].mxu0 %v3406
    %v5667 = vpop.f32.mrb[0].mxu0
    %v5668 = vadd.f32 %v5593, %v5667
    %v5669 = vpop.f32.mrb[0].mxu0
    %5670 = vdwg.mxu0
    %5671 = vmatprep.subr.mxu0 0.0
    %5672 = vmatpush1.msra.mxu0 %v5322
    %5673 = vmatprep.subr.mxu0 0.0
    %5674 = vmatpush1.msra.mxu0 %v5323
    %5675 = vmatprep.subr.mxu0 0.0
    %5676 = vmatpush1.msra.mxu0 %v5324
    %5677 = vmatprep.subr.mxu0 0.0
    %5678 = vmatpush1.msra.mxu0 %v5325
    %5679 = vmatprep.subr.mxu0 0.0
    %5680 = vmatpush1.msra.mxu0 %v5326
    %5681 = vmatprep.subr.mxu0 0.0
    %5682 = vmatpush1.msra.mxu0 %v5327
    %5683 = vmatprep.subr.mxu0 0.0
    %5684 = vmatpush1.msra.mxu0 %v5328
    %5685 = vmatprep.subr.mxu0 0.0
    %5686 = vmatpush1.msra.mxu0 %v5329
    %5687 = vmatprep.subr.mxu0 0.0
    %5688 = vmatpush1.msra.mxu0 %v5330
    %5689 = vmatprep.subr.mxu0 0.0
    %5690 = vmatpush1.msra.mxu0 %v5331
    %5691 = vmatprep.subr.mxu0 0.0
    %5692 = vmatpush1.msra.mxu0 %v5332
    %5693 = vmatprep.subr.mxu0 0.0
    %5694 = vmatpush1.msra.mxu0 %v5333
    %5695 = vmatprep.subr.mxu0 0.0
    %5696 = vmatpush1.msra.mxu0 %v5334
    %5697 = vmatprep.subr.mxu0 0.0
    %5698 = vmatpush1.msra.mxu0 %v5335
    %5699 = vmatprep.subr.mxu0 0.0
    %5700 = vmatpush1.msra.mxu0 %v5336
    %5701 = vmatprep.subr.mxu0 0.0
    %5702 = vmatpush1.msra.mxu0 %v5337
    %5703 = vmatprep.subr.mxu0 0.0
    %5704 = vmatpush1.msra.mxu0 %v5338
    %5705 = vmatprep.subr.mxu0 0.0
    %5706 = vmatpush1.msra.mxu0 %v5339
    %5707 = vmatprep.subr.mxu0 0.0
    %5708 = vmatpush1.msra.mxu0 %v5340
    %5709 = vmatprep.subr.mxu0 0.0
    %5710 = vmatpush1.msra.mxu0 %v5341
    %5711 = vmatprep.subr.mxu0 0.0
    %5712 = vmatpush1.msra.mxu0 %v5342
    %5713 = vmatprep.subr.mxu0 0.0
    %5714 = vmatpush1.msra.mxu0 %v5343
    %5715 = vmatprep.subr.mxu0 0.0
    %5716 = vmatpush1.msra.mxu0 %v5344
    %5717 = vmatprep.subr.mxu0 0.0
    %5718 = vmatpush1.msra.mxu0 %v5345
    %5719 = vmatprep.subr.mxu0 0.0
    %5720 = vmatpush1.msra.mxu0 %v5346
    %5721 = vmatprep.subr.mxu0 0.0
    %5722 = vmatpush1.msra.mxu0 %v5347
    %5723 = vmatprep.subr.mxu0 0.0
    %5724 = vmatpush1.msra.mxu0 %v5348
    %5725 = vmatprep.subr.mxu0 0.0
    %5726 = vmatpush1.msra.mxu0 %v5349
    %5727 = vmatprep.subr.mxu0 0.0
    %5728 = vmatpush1.msra.mxu0 %v5350
    %5729 = vmatprep.subr.mxu0 0.0
    %5730 = vmatpush1.msra.mxu0 %v5351
    %5731 = vmatprep.subr.mxu0 0.0
    %5732 = vmatpush1.msra.mxu0 %v5352
    %5733 = vmatprep.subr.mxu0 0.0
    %5734 = vmatpush1.msra.mxu0 %v5353
    %5735 = vmatprep.mubr.f32.mxu0 %v3710
    %5736 = vmatmul.mubr.f32.gmra.mrb[0].mxu0 %v3708
    %v5737 = vpop.f32.mrb[0].mxu0
    %v5738 = vadd.f32 %v5663, %v5737
    %v5739 = vpop.f32.mrb[0].mxu0
    %5740 = vmatprep.mubr.f32.mxu0 %v3716
    %5741 = vmatmul.mubr.f32.gmra.mrb[0].mxu0 %v3714
    %v5742 = vpop.f32.mrb[0].mxu0
    %v5743 = vadd.f32 %v5668, %v5742
    %v5744 = vpop.f32.mrb[0].mxu0
    %5745 = vdwg.mxu0
    %5746 = vmatprep.subr.mxu0 0.0
    %5747 = vmatpush1.msra.mxu0 %v5354
    %5748 = vmatprep.subr.mxu0 0.0
    %5749 = vmatpush1.msra.mxu0 %v5355
    %5750 = vmatprep.subr.mxu0 0.0
    %5751 = vmatpush1.msra.mxu0 %v5356
    %5752 = vmatprep.subr.mxu0 0.0
    %5753 = vmatpush1.msra.mxu0 %v5357
    %5754 = vmatprep.subr.mxu0 0.0
    %5755 = vmatpush1.msra.mxu0 %v5358
    %5756 = vmatprep.subr.mxu0 0.0
    %5757 = vmatpush1.msra.mxu0 %v5359
    %5758 = vmatprep.subr.mxu0 0.0
    %5759 = vmatpush1.msra.mxu0 %v5360
    %5760 = vmatprep.subr.mxu0 0.0
    %5761 = vmatpush1.msra.mxu0 %v5361
    %5762 = vmatprep.subr.mxu0 0.0
    %5763 = vmatpush1.msra.mxu0 %v5362
    %5764 = vmatprep.subr.mxu0 0.0
    %5765 = vmatpush1.msra.mxu0 %v5363
    %5766 = vmatprep.subr.mxu0 0.0
    %5767 = vmatpush1.msra.mxu0 %v5364
    %5768 = vmatprep.subr.mxu0 0.0
    %5769 = vmatpush1.msra.mxu0 %v5365
    %5770 = vmatprep.subr.mxu0 0.0
    %5771 = vmatpush1.msra.mxu0 %v5366
    %5772 = vmatprep.subr.mxu0 0.0
    %5773 = vmatpush1.msra.mxu0 %v5367
    %5774 = vmatprep.subr.mxu0 0.0
    %5775 = vmatpush1.msra.mxu0 %v5368
    %5776 = vmatprep.subr.mxu0 0.0
    %5777 = vmatpush1.msra.mxu0 %v5369
    %5778 = vmatprep.subr.mxu0 0.0
    %5779 = vmatpush1.msra.mxu0 %v5370
    %5780 = vmatprep.subr.mxu0 0.0
    %5781 = vmatpush1.msra.mxu0 %v5371
    %5782 = vmatprep.subr.mxu0 0.0
    %5783 = vmatpush1.msra.mxu0 %v5372
    %5784 = vmatprep.subr.mxu0 0.0
    %5785 = vmatpush1.msra.mxu0 %v5373
    %5786 = vmatprep.subr.mxu0 0.0
    %5787 = vmatpush1.msra.mxu0 %v5374
    %5788 = vmatprep.subr.mxu0 0.0
    %5789 = vmatpush1.msra.mxu0 %v5375
    %5790 = vmatprep.subr.mxu0 0.0
    %5791 = vmatpush1.msra.mxu0 %v5376
    %5792 = vmatprep.subr.mxu0 0.0
    %5793 = vmatpush1.msra.mxu0 %v5377
    %5794 = vmatprep.subr.mxu0 0.0
    %5795 = vmatpush1.msra.mxu0 %v5378
    %5796 = vmatprep.subr.mxu0 0.0
    %5797 = vmatpush1.msra.mxu0 %v5379
    %5798 = vmatprep.subr.mxu0 0.0
    %5799 = vmatpush1.msra.mxu0 %v5380
    %5800 = vmatprep.subr.mxu0 0.0
    %5801 = vmatpush1.msra.mxu0 %v5381
    %5802 = vmatprep.subr.mxu0 0.0
    %5803 = vmatpush1.msra.mxu0 %v5382
    %5804 = vmatprep.subr.mxu0 0.0
    %5805 = vmatpush1.msra.mxu0 %v5383
    %5806 = vmatprep.subr.mxu0 0.0
    %5807 = vmatpush1.msra.mxu0 %v5384
    %5808 = vmatprep.subr.mxu0 0.0
    %5809 = vmatpush1.msra.mxu0 %v5385
    %5810 = vmatprep.mubr.f32.mxu0 %v4018
    %5811 = vmatmul.mubr.f32.gmra.mrb[0].mxu0 %v4016
    %v5812 = vpop.f32.mrb[0].mxu0
    %v5813 = vadd.f32 %v5738, %v5812
    %v5814 = vpop.f32.mrb[0].mxu0
    %5815 = vmatprep.mubr.f32.mxu0 %v4024
    %5816 = vmatmul.mubr.f32.gmra.mrb[0].mxu0 %v4022
    %v5817 = vpop.f32.mrb[0].mxu0
    %v5818 = vadd.f32 %v5743, %v5817
    %v5819 = vpop.f32.mrb[0].mxu0
    %5820 = vdwg.mxu0
    %5821 = vmatprep.subr.mxu0 0.0
    %5822 = vmatpush1.msra.mxu0 %v5386
    %5823 = vmatprep.subr.mxu0 0.0
    %5824 = vmatpush1.msra.mxu0 %v5387
    %5825 = vmatprep.subr.mxu0 0.0
    %5826 = vmatpush1.msra.mxu0 %v5388
    %5827 = vmatprep.subr.mxu0 0.0
    %5828 = vmatpush1.msra.mxu0 %v5389
    %5829 = vmatprep.subr.mxu0 0.0
    %5830 = vmatpush1.msra.mxu0 %v5390
    %5831 = vmatprep.subr.mxu0 0.0
    %5832 = vmatpush1.msra.mxu0 %v5391
    %5833 = vmatprep.subr.mxu0 0.0
    %5834 = vmatpush1.msra.mxu0 %v5392
    %5835 = vmatprep.subr.mxu0 0.0
    %5836 = vmatpush1.msra.mxu0 %v5393
    %5837 = vmatprep.subr.mxu0 0.0
    %5838 = vmatpush1.msra.mxu0 %v5394
    %5839 = vmatprep.subr.mxu0 0.0
    %5840 = vmatpush1.msra.mxu0 %v5395
    %5841 = vmatprep.subr.mxu0 0.0
    %5842 = vmatpush1.msra.mxu0 %v5396
    %5843 = vmatprep.subr.mxu0 0.0
    %5844 = vmatpush1.msra.mxu0 %v5397
    %5845 = vmatprep.subr.mxu0 0.0
    %5846 = vmatpush1.msra.mxu0 %v5398
    %5847 = vmatprep.subr.mxu0 0.0
    %5848 = vmatpush1.msra.mxu0 %v5399
    %5849 = vmatprep.subr.mxu0 0.0
    %5850 = vmatpush1.msra.mxu0 %v5400
    %5851 = vmatprep.subr.mxu0 0.0
    %5852 = vmatpush1.msra.mxu0 %v5401
    %5853 = vmatprep.subr.mxu0 0.0
    %5854 = vmatpush1.msra.mxu0 %v5402
    %5855 = vmatprep.subr.mxu0 0.0
    %5856 = vmatpush1.msra.mxu0 %v5403
    %5857 = vmatprep.subr.mxu0 0.0
    %5858 = vmatpush1.msra.mxu0 %v5404
    %5859 = vmatprep.subr.mxu0 0.0
    %5860 = vmatpush1.msra.mxu0 %v5405
    %5861 = vmatprep.subr.mxu0 0.0
    %5862 = vmatpush1.msra.mxu0 %v5406
    %5863 = vmatprep.subr.mxu0 0.0
    %5864 = vmatpush1.msra.mxu0 %v5407
    %5865 = vmatprep.subr.mxu0 0.0
    %5866 = vmatpush1.msra.mxu0 %v5408
    %5867 = vmatprep.subr.mxu0 0.0
    %5868 = vmatpush1.msra.mxu0 %v5409
    %5869 = vmatprep.subr.mxu0 0.0
    %5870 = vmatpush1.msra.mxu0 %v5410
    %5871 = vmatprep.subr.mxu0 0.0
    %5872 = vmatpush1.msra.mxu0 %v5411
    %5873 = vmatprep.subr.mxu0 0.0
    %5874 = vmatpush1.msra.mxu0 %v5412
    %5875 = vmatprep.subr.mxu0 0.0
    %5876 = vmatpush1.msra.mxu0 %v5413
    %5877 = vmatprep.subr.mxu0 0.0
    %5878 = vmatpush1.msra.mxu0 %v5414
    %5879 = vmatprep.subr.mxu0 0.0
    %5880 = vmatpush1.msra.mxu0 %v5415
    %5881 = vmatprep.subr.mxu0 0.0
    %5882 = vmatpush1.msra.mxu0 %v5416
    %5883 = vmatprep.subr.mxu0 0.0
    %5884 = vmatpush1.msra.mxu0 %v5417
    %5885 = vmatprep.mubr.f32.mxu0 %v4326
    %5886 = vmatmul.mubr.f32.gmra.mrb[0].mxu0 %v4324
    %v5887 = vpop.f32.mrb[0].mxu0
    %v5888 = vadd.f32 %v5813, %v5887
    %v5889 = vpop.f32.mrb[0].mxu0
    %5890 = vmatprep.mubr.f32.mxu0 %v4332
    %5891 = vmatmul.mubr.f32.gmra.mrb[0].mxu0 %v4330
    %v5892 = vpop.f32.mrb[0].mxu0
    %v5893 = vadd.f32 %v5818, %v5892
    %v5894 = vpop.f32.mrb[0].mxu0
    %5895 = vdwg.mxu0
    %5896 = vmatprep.subr.mxu0 0.0
    %5897 = vmatpush1.msra.mxu0 %v5418
    %5898 = vmatprep.subr.mxu0 0.0
    %5899 = vmatpush1.msra.mxu0 %v5419
    %5900 = vmatprep.subr.mxu0 0.0
    %5901 = vmatpush1.msra.mxu0 %v5420
    %5902 = vmatprep.subr.mxu0 0.0
    %5903 = vmatpush1.msra.mxu0 %v5421
    %5904 = vmatprep.subr.mxu0 0.0
    %5905 = vmatpush1.msra.mxu0 %v5422
    %5906 = vmatprep.subr.mxu0 0.0
    %5907 = vmatpush1.msra.mxu0 %v5423
    %5908 = vmatprep.subr.mxu0 0.0
    %5909 = vmatpush1.msra.mxu0 %v5424
    %5910 = vmatprep.subr.mxu0 0.0
    %5911 = vmatpush1.msra.mxu0 %v5425
    %5912 = vmatprep.subr.mxu0 0.0
    %5913 = vmatpush1.msra.mxu0 %v5426
    %5914 = vmatprep.subr.mxu0 0.0
    %5915 = vmatpush1.msra.mxu0 %v5427
    %5916 = vmatprep.subr.mxu0 0.0
    %5917 = vmatpush1.msra.mxu0 %v5428
    %5918 = vmatprep.subr.mxu0 0.0
    %5919 = vmatpush1.msra.mxu0 %v5429
    %5920 = vmatprep.subr.mxu0 0.0
    %5921 = vmatpush1.msra.mxu0 %v5430
    %5922 = vmatprep.subr.mxu0 0.0
    %5923 = vmatpush1.msra.mxu0 %v5431
    %5924 = vmatprep.subr.mxu0 0.0
    %5925 = vmatpush1.msra.mxu0 %v5432
    %5926 = vmatprep.subr.mxu0 0.0
    %5927 = vmatpush1.msra.mxu0 %v5433
    %5928 = vmatprep.subr.mxu0 0.0
    %5929 = vmatpush1.msra.mxu0 %v5434
    %5930 = vmatprep.subr.mxu0 0.0
    %5931 = vmatpush1.msra.mxu0 %v5435
    %5932 = vmatprep.subr.mxu0 0.0
    %5933 = vmatpush1.msra.mxu0 %v5436
    %5934 = vmatprep.subr.mxu0 0.0
    %5935 = vmatpush1.msra.mxu0 %v5437
    %5936 = vmatprep.subr.mxu0 0.0
    %5937 = vmatpush1.msra.mxu0 %v5438
    %5938 = vmatprep.subr.mxu0 0.0
    %5939 = vmatpush1.msra.mxu0 %v5439
    %5940 = vmatprep.subr.mxu0 0.0
    %5941 = vmatpush1.msra.mxu0 %v5440
    %5942 = vmatprep.subr.mxu0 0.0
    %5943 = vmatpush1.msra.mxu0 %v5441
    %5944 = vmatprep.subr.mxu0 0.0
    %5945 = vmatpush1.msra.mxu0 %v5442
    %5946 = vmatprep.subr.mxu0 0.0
    %5947 = vmatpush1.msra.mxu0 %v5443
    %5948 = vmatprep.subr.mxu0 0.0
    %5949 = vmatpush1.msra.mxu0 %v5444
    %5950 = vmatprep.subr.mxu0 0.0
    %5951 = vmatpush1.msra.mxu0 %v5445
    %5952 = vmatprep.subr.mxu0 0.0
    %5953 = vmatpush1.msra.mxu0 %v5446
    %5954 = vmatprep.subr.mxu0 0.0
    %5955 = vmatpush1.msra.mxu0 %v5447
    %5956 = vmatprep.subr.mxu0 0.0
    %5957 = vmatpush1.msra.mxu0 %v5448
    %5958 = vmatprep.subr.mxu0 0.0
    %5959 = vmatpush1.msra.mxu0 %v5449
    %5960 = vmatprep.mubr.f32.mxu0 %v4634
    %5961 = vmatmul.mubr.f32.gmra.mrb[0].mxu0 %v4632
    %v5962 = vpop.f32.mrb[0].mxu0
    %v5963 = vadd.f32 %v5888, %v5962
    %v5964 = vpop.f32.mrb[0].mxu0
    %5965 = vmatprep.mubr.f32.mxu0 %v4640
    %5966 = vmatmul.mubr.f32.gmra.mrb[0].mxu0 %v4638
    %v5967 = vpop.f32.mrb[0].mxu0
    %v5968 = vadd.f32 %v5893, %v5967
    %v5969 = vpop.f32.mrb[0].mxu0
    %5970 = vdwg.mxu0
    %5971 = vmatprep.subr.mxu0 0.0
    %5972 = vmatpush1.msra.mxu0 %v5450
    %5973 = vmatprep.subr.mxu0 0.0
    %5974 = vmatpush1.msra.mxu0 %v5451
    %5975 = vmatprep.subr.mxu0 0.0
    %5976 = vmatpush1.msra.mxu0 %v5452
    %5977 = vmatprep.subr.mxu0 0.0
    %5978 = vmatpush1.msra.mxu0 %v5453
    %5979 = vmatprep.subr.mxu0 0.0
    %5980 = vmatpush1.msra.mxu0 %v5454
    %5981 = vmatprep.subr.mxu0 0.0
    %5982 = vmatpush1.msra.mxu0 %v5455
    %5983 = vmatprep.subr.mxu0 0.0
    %5984 = vmatpush1.msra.mxu0 %v5456
    %5985 = vmatprep.subr.mxu0 0.0
    %5986 = vmatpush1.msra.mxu0 %v5457
    %5987 = vmatprep.subr.mxu0 0.0
    %5988 = vmatpush1.msra.mxu0 %v5458
    %5989 = vmatprep.subr.mxu0 0.0
    %5990 = vmatpush1.msra.mxu0 %v5459
    %5991 = vmatprep.subr.mxu0 0.0
    %5992 = vmatpush1.msra.mxu0 %v5460
    %5993 = vmatprep.subr.mxu0 0.0
    %5994 = vmatpush1.msra.mxu0 %v5461
    %5995 = vmatprep.subr.mxu0 0.0
    %5996 = vmatpush1.msra.mxu0 %v5462
    %5997 = vmatprep.subr.mxu0 0.0
    %5998 = vmatpush1.msra.mxu0 %v5463
    %5999 = vmatprep.subr.mxu0 0.0
    %6000 = vmatpush1.msra.mxu0 %v5464
    %6001 = vmatprep.subr.mxu0 0.0
    %6002 = vmatpush1.msra.mxu0 %v5465
    %6003 = vmatprep.subr.mxu0 0.0
    %6004 = vmatpush1.msra.mxu0 %v5466
    %6005 = vmatprep.subr.mxu0 0.0
    %6006 = vmatpush1.msra.mxu0 %v5467
    %6007 = vmatprep.subr.mxu0 0.0
    %6008 = vmatpush1.msra.mxu0 %v5468
    %6009 = vmatprep.subr.mxu0 0.0
    %6010 = vmatpush1.msra.mxu0 %v5469
    %6011 = vmatprep.subr.mxu0 0.0
    %6012 = vmatpush1.msra.mxu0 %v5470
    %6013 = vmatprep.subr.mxu0 0.0
    %6014 = vmatpush1.msra.mxu0 %v5471
    %6015 = vmatprep.subr.mxu0 0.0
    %6016 = vmatpush1.msra.mxu0 %v5472
    %6017 = vmatprep.subr.mxu0 0.0
    %6018 = vmatpush1.msra.mxu0 %v5473
    %6019 = vmatprep.subr.mxu0 0.0
    %6020 = vmatpush1.msra.mxu0 %v5474
    %6021 = vmatprep.subr.mxu0 0.0
    %6022 = vmatpush1.msra.mxu0 %v5475
    %6023 = vmatprep.subr.mxu0 0.0
    %6024 = vmatpush1.msra.mxu0 %v5476
    %6025 = vmatprep.subr.mxu0 0.0
    %6026 = vmatpush1.msra.mxu0 %v5477
    %6027 = vmatprep.subr.mxu0 0.0
    %6028 = vmatpush1.msra.mxu0 %v5478
    %6029 = vmatprep.subr.mxu0 0.0
    %6030 = vmatpush1.msra.mxu0 %v5479
    %6031 = vmatprep.subr.mxu0 0.0
    %6032 = vmatpush1.msra.mxu0 %v5480
    %6033 = vmatprep.subr.mxu0 0.0
    %6034 = vmatpush1.msra.mxu0 %v5481
    %6035 = vmatprep.mubr.f32.mxu0 %v4942
    %6036 = vmatmul.mubr.f32.gmra.mrb[0].mxu0 %v4940
    %v6037 = vpop.f32.mrb[0].mxu0
    %v6038 = vadd.f32 %v5963, %v6037
    %v6039 = vpop.f32.mrb[0].mxu0
    %6040 = vmatprep.mubr.f32.mxu0 %v4948
    %6041 = vmatmul.mubr.f32.gmra.mrb[0].mxu0 %v4946
    %v6042 = vpop.f32.mrb[0].mxu0
    %v6043 = vadd.f32 %v5968, %v6042
    %v6044 = vpop.f32.mrb[0].mxu0
    %6045 = vdwg.mxu0
    %6046 = vmatprep.subr.mxu0 0.0
    %6047 = vmatpush1.msra.mxu0 %v5482
    %6048 = vmatprep.subr.mxu0 0.0
    %6049 = vmatpush1.msra.mxu0 %v5483
    %6050 = vmatprep.subr.mxu0 0.0
    %6051 = vmatpush1.msra.mxu0 %v5484
    %6052 = vmatprep.subr.mxu0 0.0
    %6053 = vmatpush1.msra.mxu0 %v5485
    %6054 = vmatprep.subr.mxu0 0.0
    %6055 = vmatpush1.msra.mxu0 %v5486
    %6056 = vmatprep.subr.mxu0 0.0
    %6057 = vmatpush1.msra.mxu0 %v5487
    %6058 = vmatprep.subr.mxu0 0.0
    %6059 = vmatpush1.msra.mxu0 %v5488
    %6060 = vmatprep.subr.mxu0 0.0
    %6061 = vmatpush1.msra.mxu0 %v5489
    %6062 = vmatprep.subr.mxu0 0.0
    %6063 = vmatpush1.msra.mxu0 %v5490
    %6064 = vmatprep.subr.mxu0 0.0
    %6065 = vmatpush1.msra.mxu0 %v5491
    %6066 = vmatprep.subr.mxu0 0.0
    %6067 = vmatpush1.msra.mxu0 %v5492
    %6068 = vmatprep.subr.mxu0 0.0
    %6069 = vmatpush1.msra.mxu0 %v5493
    %6070 = vmatprep.subr.mxu0 0.0
    %6071 = vmatpush1.msra.mxu0 %v5494
    %6072 = vmatprep.subr.mxu0 0.0
    %6073 = vmatpush1.msra.mxu0 %v5495
    %6074 = vmatprep.subr.mxu0 0.0
    %6075 = vmatpush1.msra.mxu0 %v5496
    %6076 = vmatprep.subr.mxu0 0.0
    %6077 = vmatpush1.msra.mxu0 %v5497
    %6078 = vmatprep.subr.mxu0 0.0
    %6079 = vmatpush1.msra.mxu0 %v5498
    %6080 = vmatprep.subr.mxu0 0.0
    %6081 = vmatpush1.msra.mxu0 %v5499
    %6082 = vmatprep.subr.mxu0 0.0
    %6083 = vmatpush1.msra.mxu0 %v5500
    %6084 = vmatprep.subr.mxu0 0.0
    %6085 = vmatpush1.msra.mxu0 %v5501
    %6086 = vmatprep.subr.mxu0 0.0
    %6087 = vmatpush1.msra.mxu0 %v5502
    %6088 = vmatprep.subr.mxu0 0.0
    %6089 = vmatpush1.msra.mxu0 %v5503
    %6090 = vmatprep.subr.mxu0 0.0
    %6091 = vmatpush1.msra.mxu0 %v5504
    %6092 = vmatprep.subr.mxu0 0.0
    %6093 = vmatpush1.msra.mxu0 %v5505
    %6094 = vmatprep.subr.mxu0 0.0
    %6095 = vmatpush1.msra.mxu0 %v5506
    %6096 = vmatprep.subr.mxu0 0.0
    %6097 = vmatpush1.msra.mxu0 %v5507
    %6098 = vmatprep.subr.mxu0 0.0
    %6099 = vmatpush1.msra.mxu0 %v5508
    %6100 = vmatprep.subr.mxu0 0.0
    %6101 = vmatpush1.msra.mxu0 %v5509
    %6102 = vmatprep.subr.mxu0 0.0
    %6103 = vmatpush1.msra.mxu0 %v5510
    %6104 = vmatprep.subr.mxu0 0.0
    %6105 = vmatpush1.msra.mxu0 %v5511
    %6106 = vmatprep.subr.mxu0 0.0
    %6107 = vmatpush1.msra.mxu0 %v5512
    %6108 = vmatprep.subr.mxu0 0.0
    %6109 = vmatpush1.msra.mxu0 %v5513
    %6110 = vmatprep.mubr.f32.mxu0 %v5250
    %6111 = vmatmul.mubr.f32.gmra.mrb[0].mxu0 %v5248
    %v6112 = vpop.f32.mrb[0].mxu0
    %v6113 = vadd.f32 %v6038, %v6112
    %v6114 = vpop.f32.mrb[0].mxu0
    %6115 = vmatprep.mubr.f32.mxu0 %v5256
    %6116 = vmatmul.mubr.f32.gmra.mrb[0].mxu0 %v5254
    %v6117 = vpop.f32.mrb[0].mxu0
    %v6118 = vadd.f32 %v6043, %v6117
    %v6119 = vpop.f32.mrb[0].mxu0
    %6120 = vdwg.mxu0
    %6121 = vst [vmem:[%s7] sm:$0xff] %v6113
    %6122 = vst [vmem:[%s7 + $0x8] sm:$0xff] %v6118
    // Predicated region
    $region54: #{_actor_forward_padded.1} parent=1 // pred_check
      _
    $region55: #{_actor_forward_padded.1} parent=1 // pred_check_branch
      %6124 = sbr.rel (0) target = $region57
    $region56: #{_actor_forward_padded.1} parent=1 // pred_region
      _
    $region57: #{_actor_forward_padded.1} parent=1 // pred_fallthru
      _
    // Predicated region
    $region58: #{_actor_forward_padded.1} parent=1 // pred_check
      _
    $region59: #{_actor_forward_padded.1} parent=1 // pred_check_branch
      %6126 = sbr.rel (0) target = $region61
    $region60: #{_actor_forward_padded.1} parent=1 // pred_region
      _
    $region61: #{_actor_forward_padded.1} parent=1 // pred_fallthru
      _
    %6127 = vsyncpa [#allocation3], 1
    %6128 = vsyncpa [#allocation5], 1
    %6129 = vsyncpa [#allocation8], 1
    %6130 = vsyncpa [#allocation11], 1

</llo_original>
